<compile_context>
chip_gen: v5e
topology: v5e:2x2
jax: 0.10.0
libtpu: 0.0.40
codegen_flags: <defaults>
</compile_context>

<pallas_src>
import functools

import jax
import jax.numpy as jnp
from jax.experimental import pallas as pl
from jax.experimental.pallas import tpu as pltpu

VMEM_SPEC = pl.BlockSpec(memory_space=pltpu.MemorySpace.VMEM)
VMEM_LIMIT = 48 * 1024 * 1024   # explicit scoped-VMEM budget (safe on v5e/v6e/v7x)
RGB_PAD = 128                   # to_rgb output channels padded 3 -> 128 (lane-dense)


def _pixelnorm(x):
    # y = x * rsqrt(mean(x^2, channel) + 1e-8)   (PixelwiseNorm, alpha=1e-8)
    return x * jax.lax.rsqrt(jnp.mean(x * x, axis=-1, keepdims=True) + 1e-8)


# --------------------------------------------------------------------------
# Kernel 1: base head = PixelwiseNorm -> Linear(latent, 4096) -> LeakyReLU(0.2)
#                       -> PixelwiseNorm               (tiny; whole-array VMEM)
# --------------------------------------------------------------------------
def _base_head_kernel(z_ref, w_ref, b_ref, o_ref):
    z = z_ref[...].astype(jnp.float32)
    z = _pixelnorm(z)
    h = jnp.dot(z.astype(jnp.bfloat16), w_ref[...],
                preferred_element_type=jnp.float32) + b_ref[...]
    h = jnp.maximum(h, 0.2 * h)          # LeakyReLU(0.2)
    o_ref[...] = _pixelnorm(h).astype(o_ref.dtype)


def base_head(z, w_bf16, b_f32):
    B = z.shape[0]
    Nout = w_bf16.shape[1]
    return pl.pallas_call(
        _base_head_kernel,
        out_shape=jax.ShapeDtypeStruct((B, Nout), jnp.bfloat16),
        in_specs=[VMEM_SPEC] * 3,
        out_specs=VMEM_SPEC,
        compiler_params=pltpu.CompilerParams(vmem_limit_bytes=VMEM_LIMIT),
    )(z, w_bf16, b_f32.reshape(1, Nout))


# --------------------------------------------------------------------------
# Kernel 2: 3x3 / stride 1 / pad 1 conv as 9 shifted-slab matmuls on the
#           flattened padded image, with fused bias + LeakyReLU(0.2)
#           + PixelwiseNorm + tanh epilogues.
# --------------------------------------------------------------------------
def _conv3x3_kernel(x_ref, w_ref, b_ref, o_ref, *, shifts, leaky, pn, tanh):
    # x_ref: (1, Mp, Cin) bf16   flattened zero-padded image (rows of width W+2)
    # w_ref: (9, Cin, Cout) bf16
    # b_ref: (1, Cout)      f32
    # o_ref: (1, Mo, Cout)  where Mo = H*(W+2); wrap columns are discarded later
    Mo = o_ref.shape[1]
    acc = jnp.dot(x_ref[0, pl.ds(shifts[0], Mo), :], w_ref[0],
                  preferred_element_type=jnp.float32)
    for t in range(1, 9):                       # unrolled: 9 MXU matmuls
        acc = acc + jnp.dot(x_ref[0, pl.ds(shifts[t], Mo), :], w_ref[t],
                            preferred_element_type=jnp.float32)
    acc = acc + b_ref[...]
    if leaky:
        acc = jnp.maximum(acc, 0.2 * acc)       # LeakyReLU(0.2)
    if pn:
        acc = _pixelnorm(acc)                   # per-pixel over channels (lanes)
    if tanh:
        acc = jnp.tanh(acc)
    o_ref[0] = acc.astype(o_ref.dtype)


def conv3x3_fused(x_nhwc, w_bf16_hwio, b_f32, *, leaky=False, pn=False,
                  tanh=False, out_dtype=jnp.bfloat16):
    x_nhwc = x_nhwc.astype(jnp.bfloat16)
    N, H, W, Cin = x_nhwc.shape
    Cout = w_bf16_hwio.shape[-1]
    Wp = W + 2
    # pad 1 on each side + 2 extra bottom rows so every shifted slab
    # xf[s : s + H*Wp] stays in bounds (extra rows only feed discarded columns).
    xp = jnp.pad(x_nhwc, ((0, 0), (1, 2), (1, 1), (0, 0)))
    Mp = (H + 3) * Wp
    Mo = H * Wp
    xf = xp.reshape(N, Mp, Cin)
    wt = w_bf16_hwio.reshape(9, Cin, Cout)
    shifts = tuple(dy * Wp + dx for dy in range(3) for dx in range(3))

    kern = functools.partial(_conv3x3_kernel, shifts=shifts,
                             leaky=leaky, pn=pn, tanh=tanh)
    out = pl.pallas_call(
        kern,
        grid=(N,),                                   # one image per grid step
        in_specs=[
            pl.BlockSpec((1, Mp, Cin), lambda n: (n, 0, 0)),
            pl.BlockSpec((9, Cin, Cout), lambda n: (0, 0, 0)),
            pl.BlockSpec((1, Cout), lambda n: (0, 0)),
        ],
        out_specs=pl.BlockSpec((1, Mo, Cout), lambda n: (n, 0, 0)),
        out_shape=jax.ShapeDtypeStruct((N, Mo, Cout), out_dtype),
        compiler_params=pltpu.CompilerParams(
            dimension_semantics=("parallel",),
            vmem_limit_bytes=VMEM_LIMIT),
    )(xf, wt, b_f32.reshape(1, Cout))
    # drop the 2 wrap-around columns per row
    return out.reshape(N, H, Wp, Cout)[:, :, :W, :]


# --------------------------------------------------------------------------
# Kernel 3: fade-in blend + tanh on a sublane/lane-dense (M, 128) slab.
# --------------------------------------------------------------------------
def _blend_tanh_kernel(a_ref, b_ref, o_ref, *, alpha):
    a = a_ref[...].astype(jnp.float32)
    b = b_ref[...].astype(jnp.float32)
    o_ref[...] = jnp.tanh(alpha * a + (1.0 - alpha) * b)


def blend_tanh(a_nhwc, b_nhwc, alpha):
    N, H, W, C = a_nhwc.shape
    M = N * H * W
    a2 = a_nhwc.reshape(M, C)
    b2 = b_nhwc.reshape(M, C)
    TM = min(M, 512)
    while M % TM:
        TM //= 2
    out = pl.pallas_call(
        functools.partial(_blend_tanh_kernel, alpha=float(alpha)),
        grid=(M // TM,),
        in_specs=[pl.BlockSpec((TM, C), lambda i: (i, 0))] * 2,
        out_specs=pl.BlockSpec((TM, C), lambda i: (i, 0)),
        out_shape=jax.ShapeDtypeStruct((M, C), jnp.float32),
        compiler_params=pltpu.CompilerParams(
            dimension_semantics=("parallel",),
            vmem_limit_bytes=VMEM_LIMIT),
    )(a2, b2)
    return out.reshape(N, H, W, C)


# --------------------------------------------------------------------------
# Glue helpers (pure data movement kept in plain JAX)
# --------------------------------------------------------------------------
def upsample2x_nhwc(x):
    # UpsamplingNearest2d(scale_factor=2): out[y, x] = in[y // 2, x // 2]
    return jnp.repeat(jnp.repeat(x, 2, axis=1), 2, axis=2)


# --------------------------------------------------------------------------
# Parameters (deterministic synthetic init; shapes follow Generator.__init__)
# Conv weights stored HWIO bf16: w[dy, dx, ci, co] == torch_w[co, ci, dy, dx].
# to_rgb weights/biases are zero-padded from 3 -> RGB_PAD output channels.
# --------------------------------------------------------------------------
RGB_IN = (512, 256, 128, 64, 32)
CONV1_IO = ((512, 256), (256, 128), (128, 64), (64, 32))
CONV2_IO = ((256, 256), (128, 128), (64, 64), (32, 32))


def init_params(key, latent_dim):
    keys = iter(jax.random.split(key, 64))

    def nrm(shape, std=0.02, dtype=jnp.bfloat16):
        return (std * jax.random.normal(next(keys), shape, jnp.float32)).astype(dtype)

    def rgb_w(ci):
        w = nrm((3, 3, ci, 3))
        return jnp.pad(w, ((0, 0), (0, 0), (0, 0), (0, RGB_PAD - 3)))

    def rgb_b():
        b = nrm((3,), 0.02, jnp.float32)
        return jnp.pad(b, (0, RGB_PAD - 3))

    return {
        "lin_w": nrm((latent_dim, 4096), 0.05),
        "lin_b": nrm((4096,), 0.02, jnp.float32),
        "base_conv_w": nrm((3, 3, 256, 512)),
        "base_conv_b": nrm((512,), 0.02, jnp.float32),
        "rgb_w": [rgb_w(ci) for ci in RGB_IN],
        "rgb_b": [rgb_b() for _ in RGB_IN],
        "conv1_w": [nrm((3, 3, ci, co)) for ci, co in CONV1_IO],
        "conv1_b": [nrm((co,), 0.02, jnp.float32) for _, co in CONV1_IO],
        "conv2_w": [nrm((3, 3, ci, co)) for ci, co in CONV2_IO],
        "conv2_b": [nrm((co,), 0.02, jnp.float32) for _, co in CONV2_IO],
    }


# --------------------------------------------------------------------------
# Generator.forward(z, block=0, alpha=0.0)  (returns NCHW float32, like PyTorch)
# --------------------------------------------------------------------------
def generator_forward(params, z, block=0, alpha=0.0):
    B = z.shape[0]
    # base: PN -> Linear -> LeakyReLU -> PN -> Reshape(256,4,4)
    #       -> Conv(256,512) -> LeakyReLU -> PN
    x = base_head(z, params["lin_w"], params["lin_b"])             # (B, 4096) bf16
    x = x.reshape(B, 256, 4, 4).transpose(0, 2, 3, 1)              # NCHW view -> NHWC
    x = conv3x3_fused(x, params["base_conv_w"], params["base_conv_b"],
                      leaky=True, pn=True)                         # (B, 4, 4, 512)

    if block == 0:
        rgb = conv3x3_fused(x, params["rgb_w"][0], params["rgb_b"][0],
                            tanh=True, out_dtype=jnp.float32)      # (B,4,4,128)
        return rgb[..., :3].transpose(0, 3, 1, 2)                  # NCHW

    prev = None
    for i in range(block):
        prev = x
        x = upsample2x_nhwc(x)                                     # Block(scale=2)
        x = conv3x3_fused(x, params["conv1_w"][i], params["conv1_b"][i],
                          leaky=True, pn=True)
        x = conv3x3_fused(x, params["conv2_w"][i], params["conv2_b"][i],
                          leaky=True, pn=True)

    a = conv3x3_fused(x, params["rgb_w"][block], params["rgb_b"][block])
    b = conv3x3_fused(prev, params["rgb_w"][block - 1], params["rgb_b"][block - 1])
    b = upsample2x_nhwc(b)
    out = blend_tanh(a, b, alpha)                                  # (B,H,W,128) f32
    return out[..., :3].transpose(0, 3, 1, 2)                      # NCHW


if __name__ == "__main__":
    key = jax.random.PRNGKey(0)
    latent_dim = 32
    batch = 2

    params = init_params(key, latent_dim)
    z = jax.random.normal(jax.random.fold_in(key, 999), (batch, latent_dim),
                          jnp.float32)

    fwd = jax.jit(generator_forward, static_argnames=("block", "alpha"))

    # block=0 path: base -> to_rgb[0] -> tanh
    out0 = fwd(params, z, block=0, alpha=0.0)
    jax.block_until_ready(out0)
    assert out0.shape == (batch, 3, 4, 4), out0.shape

    # block=1 path: grow one stage + fade-in blend
    out1 = fwd(params, z, block=1, alpha=0.3)
    jax.block_until_ready(out1)
    assert out1.shape == (batch, 3, 8, 8), out1.shape

    # block=4 path: full depth (64x64), exercises the largest conv stages
    out4 = fwd(params, z, block=4, alpha=0.7)
    jax.block_until_ready(out4)
    assert out4.shape == (batch, 3, 64, 64), out4.shape

    print("KERNEL_OK")
</pallas_src>

<mosaic_0001>
module attributes {stable_mosaic.version = 11 : i64} {
  func.func @_base_head_kernel(%arg0: memref<2x32xf32, #tpu.memory_space<vmem>>, %arg1: memref<32x4096xbf16, #tpu.memory_space<vmem>>, %arg2: memref<1x4096xf32, #tpu.memory_space<vmem>>, %arg3: memref<2x4096xbf16, #tpu.memory_space<vmem>>) attributes {dimension_semantics = [], scalar_prefetch = 0 : i64, scratch_operands = 0 : i64, tpu.core_type = #tpu.core_type<tc>} {
    %c0 = arith.constant 0 : index
    %c0_0 = arith.constant 0 : index
    %0 = vector.load %arg0[%c0, %c0_0] : memref<2x32xf32, #tpu.memory_space<vmem>>, vector<2x32xf32>
    %1 = arith.mulf %0, %0 : vector<2x32xf32>
    %cst = arith.constant dense<0.000000e+00> : vector<2xf32>
    %2 = vector.multi_reduction <add>, %1, %cst [1] : vector<2x32xf32> to vector<2xf32>
    %3 = vector.shape_cast %2 : vector<2xf32> to vector<2x1xf32>
    %cst_1 = arith.constant 3.200000e+01 : f32
    %4 = vector.broadcast %cst_1 : f32 to vector<2x1xf32>
    %5 = arith.divf %3, %4 : vector<2x1xf32>
    %cst_2 = arith.constant 9.99999993E-9 : f32
    %6 = vector.broadcast %cst_2 : f32 to vector<2x1xf32>
    %7 = arith.addf %5, %6 : vector<2x1xf32>
    %8 = math.rsqrt %7 : vector<2x1xf32>
    %9 = vector.broadcast %8 : vector<2x1xf32> to vector<2x32xf32>
    %10 = arith.mulf %0, %9 : vector<2x32xf32>
    %11 = arith.truncf %10 : vector<2x32xf32> to vector<2x32xbf16>
    %c0_3 = arith.constant 0 : index
    %c0_4 = arith.constant 0 : index
    %12 = vector.load %arg1[%c0_3, %c0_4] : memref<32x4096xbf16, #tpu.memory_space<vmem>>, vector<32x4096xbf16>
    %cst_5 = arith.constant dense<0.000000e+00> : vector<2x4096xf32>
    %13 = tpu.matmul %11, %12, %cst_5 {dimension_numbers = #tpu.dot_dimension_numbers<[1], [0], [0], [1], [0, 0, 1, 1], [], []>} : vector<2x32xbf16>, vector<32x4096xbf16>, vector<2x4096xf32> -> vector<2x4096xf32>
    %c0_6 = arith.constant 0 : index
    %c0_7 = arith.constant 0 : index
    %14 = vector.load %arg2[%c0_6, %c0_7] : memref<1x4096xf32, #tpu.memory_space<vmem>>, vector<1x4096xf32>
    %15 = vector.broadcast %14 : vector<1x4096xf32> to vector<2x4096xf32>
    %16 = arith.addf %13, %15 : vector<2x4096xf32>
    %cst_8 = arith.constant 2.000000e-01 : f32
    %17 = vector.broadcast %cst_8 : f32 to vector<2x4096xf32>
    %18 = arith.mulf %17, %16 : vector<2x4096xf32>
    %19 = arith.maximumf %16, %18 : vector<2x4096xf32>
    %20 = arith.mulf %19, %19 : vector<2x4096xf32>
    %cst_9 = arith.constant dense<0.000000e+00> : vector<2xf32>
    %21 = vector.multi_reduction <add>, %20, %cst_9 [1] : vector<2x4096xf32> to vector<2xf32>
    %22 = vector.shape_cast %21 : vector<2xf32> to vector<2x1xf32>
    %cst_10 = arith.constant 4.096000e+03 : f32
    %23 = vector.broadcast %cst_10 : f32 to vector<2x1xf32>
    %24 = arith.divf %22, %23 : vector<2x1xf32>
    %cst_11 = arith.constant 9.99999993E-9 : f32
    %25 = vector.broadcast %cst_11 : f32 to vector<2x1xf32>
    %26 = arith.addf %24, %25 : vector<2x1xf32>
    %27 = math.rsqrt %26 : vector<2x1xf32>
    %28 = vector.broadcast %27 : vector<2x1xf32> to vector<2x4096xf32>
    %29 = arith.mulf %19, %28 : vector<2x4096xf32>
    %30 = arith.truncf %29 : vector<2x4096xf32> to vector<2x4096xbf16>
    %c0_12 = arith.constant 0 : index
    %c0_13 = arith.constant 0 : index
    %31 = vector.load %arg3[%c0_12, %c0_13] : memref<2x4096xbf16, #tpu.memory_space<vmem>>, vector<2x4096xbf16>
    tpu.vector_store %arg3[%c0_12, %c0_13], %30 {strides = array<i32>} : memref<2x4096xbf16, #tpu.memory_space<vmem>>, vector<2x4096xbf16>,
    return
  }
}

module attributes {stable_mosaic.version = 11 : i64} {
  func.func @_conv3x3_kernel(%arg0: i32, %arg1: memref<1x42x256xbf16, #tpu.memory_space<vmem>>, %arg2: memref<9x256x512xbf16, #tpu.memory_space<vmem>>, %arg3: memref<1x512xf32, #tpu.memory_space<vmem>>, %arg4: memref<1x24x512xbf16, #tpu.memory_space<vmem>>) attributes {dimension_semantics = [#tpu.dimension_semantics<parallel>], iteration_bounds = array<i64: 2>, scalar_prefetch = 0 : i64, scratch_operands = 0 : i64, tpu.core_type = #tpu.core_type<tc>, window_params = [{transform_indices = @transform_0, window_bounds = array<i64: 1, 42, 256>}, {pipeline_mode = #tpu.pipeline_mode<synchronous>, transform_indices = @transform_1, window_bounds = array<i64: 9, 256, 512>}, {pipeline_mode = #tpu.pipeline_mode<synchronous>, transform_indices = @transform_2, window_bounds = array<i64: 1, 512>}, {transform_indices = @transform_3, window_bounds = array<i64: 1, 24, 512>}]} {
    %c0 = arith.constant 0 : index
    %c0_0 = arith.constant 0 : index
    %c0_1 = arith.constant 0 : index
    %0 = vector.load %arg1[%c0, %c0_0, %c0_1] : memref<1x42x256xbf16, #tpu.memory_space<vmem>>, vector<1x24x256xbf16>
    %1 = vector.shape_cast %0 : vector<1x24x256xbf16> to vector<24x256xbf16>
    %c0_2 = arith.constant 0 : index
    %c0_3 = arith.constant 0 : index
    %c0_4 = arith.constant 0 : index
    %2 = vector.load %arg2[%c0_2, %c0_3, %c0_4] : memref<9x256x512xbf16, #tpu.memory_space<vmem>>, vector<1x256x512xbf16>
    %3 = vector.shape_cast %2 : vector<1x256x512xbf16> to vector<256x512xbf16>
    %cst = arith.constant dense<0.000000e+00> : vector<24x512xf32>
    %4 = tpu.matmul %1, %3, %cst {dimension_numbers = #tpu.dot_dimension_numbers<[1], [0], [0], [1], [0, 0, 1, 1], [], []>} : vector<24x256xbf16>, vector<256x512xbf16>, vector<24x512xf32> -> vector<24x512xf32>
    %c0_5 = arith.constant 0 : index
    %c1 = arith.constant 1 : index
    %c0_6 = arith.constant 0 : index
    %5 = vector.load %arg1[%c0_5, %c1, %c0_6] : memref<1x42x256xbf16, #tpu.memory_space<vmem>>, vector<1x24x256xbf16>
    %6 = vector.shape_cast %5 : vector<1x24x256xbf16> to vector<24x256xbf16>
    %c1_7 = arith.constant 1 : index
    %c0_8 = arith.constant 0 : index
    %c0_9 = arith.constant 0 : index
    %7 = vector.load %arg2[%c1_7, %c0_8, %c0_9] : memref<9x256x512xbf16, #tpu.memory_space<vmem>>, vector<1x256x512xbf16>
    %8 = vector.shape_cast %7 : vector<1x256x512xbf16> to vector<256x512xbf16>
    %cst_10 = arith.constant dense<0.000000e+00> : vector<24x512xf32>
    %9 = tpu.matmul %6, %8, %cst_10 {dimension_numbers = #tpu.dot_dimension_numbers<[1], [0], [0], [1], [0, 0, 1, 1], [], []>} : vector<24x256xbf16>, vector<256x512xbf16>, vector<24x512xf32> -> vector<24x512xf32>
    %10 = arith.addf %4, %9 : vector<24x512xf32>
    %c0_11 = arith.constant 0 : index
    %c2 = arith.constant 2 : index
    %c0_12 = arith.constant 0 : index
    %11 = vector.load %arg1[%c0_11, %c2, %c0_12] : memref<1x42x256xbf16, #tpu.memory_space<vmem>>, vector<1x24x256xbf16>
    %12 = vector.shape_cast %11 : vector<1x24x256xbf16> to vector<24x256xbf16>
    %c2_13 = arith.constant 2 : index
    %c0_14 = arith.constant 0 : index
    %c0_15 = arith.constant 0 : index
    %13 = vector.load %arg2[%c2_13, %c0_14, %c0_15] : memref<9x256x512xbf16, #tpu.memory_space<vmem>>, vector<1x256x512xbf16>
    %14 = vector.shape_cast %13 : vector<1x256x512xbf16> to vector<256x512xbf16>
    %cst_16 = arith.constant dense<0.000000e+00> : vector<24x512xf32>
    %15 = tpu.matmul %12, %14, %cst_16 {dimension_numbers = #tpu.dot_dimension_numbers<[1], [0], [0], [1], [0, 0, 1, 1], [], []>} : vector<24x256xbf16>, vector<256x512xbf16>, vector<24x512xf32> -> vector<24x512xf32>
    %16 = arith.addf %10, %15 : vector<24x512xf32>
    %c0_17 = arith.constant 0 : index
    %c6 = arith.constant 6 : index
    %c0_18 = arith.constant 0 : index
    %17 = vector.load %arg1[%c0_17, %c6, %c0_18] : memref<1x42x256xbf16, #tpu.memory_space<vmem>>, vector<1x24x256xbf16>
    %18 = vector.shape_cast %17 : vector<1x24x256xbf16> to vector<24x256xbf16>
    %c3 = arith.constant 3 : index
    %c0_19 = arith.constant 0 : index
    %c0_20 = arith.constant 0 : index
    %19 = vector.load %arg2[%c3, %c0_19, %c0_20] : memref<9x256x512xbf16, #tpu.memory_space<vmem>>, vector<1x256x512xbf16>
    %20 = vector.shape_cast %19 : vector<1x256x512xbf16> to vector<256x512xbf16>
    %cst_21 = arith.constant dense<0.000000e+00> : vector<24x512xf32>
    %21 = tpu.matmul %18, %20, %cst_21 {dimension_numbers = #tpu.dot_dimension_numbers<[1], [0], [0], [1], [0, 0, 1, 1], [], []>} : vector<24x256xbf16>, vector<256x512xbf16>, vector<24x512xf32> -> vector<24x512xf32>
    %22 = arith.addf %16, %21 : vector<24x512xf32>
    %c0_22 = arith.constant 0 : index
    %c7 = arith.constant 7 : index
    %c0_23 = arith.constant 0 : index
    %23 = vector.load %arg1[%c0_22, %c7, %c0_23] : memref<1x42x256xbf16, #tpu.memory_space<vmem>>, vector<1x24x256xbf16>
    %24 = vector.shape_cast %23 : vector<1x24x256xbf16> to vector<24x256xbf16>
    %c4 = arith.constant 4 : index
    %c0_24 = arith.constant 0 : index
    %c0_25 = arith.constant 0 : index
    %25 = vector.load %arg2[%c4, %c0_24, %c0_25] : memref<9x256x512xbf16, #tpu.memory_space<vmem>>, vector<1x256x512xbf16>
    %26 = vector.shape_cast %25 : vector<1x256x512xbf16> to vector<256x512xbf16>
    %cst_26 = arith.constant dense<0.000000e+00> : vector<24x512xf32>
    %27 = tpu.matmul %24, %26, %cst_26 {dimension_numbers = #tpu.dot_dimension_numbers<[1], [0], [0], [1], [0, 0, 1, 1], [], []>} : vector<24x256xbf16>, vector<256x512xbf16>, vector<24x512xf32> -> vector<24x512xf32>
    %28 = arith.addf %22, %27 : vector<24x512xf32>
    %c0_27 = arith.constant 0 : index
    %c8 = arith.constant 8 : index
    %c0_28 = arith.constant 0 : index
    %29 = vector.load %arg1[%c0_27, %c8, %c0_28] : memref<1x42x256xbf16, #tpu.memory_space<vmem>>, vector<1x24x256xbf16>
    %30 = vector.shape_cast %29 : vector<1x24x256xbf16> to vector<24x256xbf16>
    %c5 = arith.constant 5 : index
    %c0_29 = arith.constant 0 : index
    %c0_30 = arith.constant 0 : index
    %31 = vector.load %arg2[%c5, %c0_29, %c0_30] : memref<9x256x512xbf16, #tpu.memory_space<vmem>>, vector<1x256x512xbf16>
    %32 = vector.shape_cast %31 : vector<1x256x512xbf16> to vector<256x512xbf16>
    %cst_31 = arith.constant dense<0.000000e+00> : vector<24x512xf32>
    %33 = tpu.matmul %30, %32, %cst_31 {dimension_numbers = #tpu.dot_dimension_numbers<[1], [0], [0], [1], [0, 0, 1, 1], [], []>} : vector<24x256xbf16>, vector<256x512xbf16>, vector<24x512xf32> -> vector<24x512xf32>
    %34 = arith.addf %28, %33 : vector<24x512xf32>
    %c0_32 = arith.constant 0 : index
    %c12 = arith.constant 12 : index
    %c0_33 = arith.constant 0 : index
    %35 = vector.load %arg1[%c0_32, %c12, %c0_33] : memref<1x42x256xbf16, #tpu.memory_space<vmem>>, vector<1x24x256xbf16>
    %36 = vector.shape_cast %35 : vector<1x24x256xbf16> to vector<24x256xbf16>
    %c6_34 = arith.constant 6 : index
    %c0_35 = arith.constant 0 : index
    %c0_36 = arith.constant 0 : index
    %37 = vector.load %arg2[%c6_34, %c0_35, %c0_36] : memref<9x256x512xbf16, #tpu.memory_space<vmem>>, vector<1x256x512xbf16>
    %38 = vector.shape_cast %37 : vector<1x256x512xbf16> to vector<256x512xbf16>
    %cst_37 = arith.constant dense<0.000000e+00> : vector<24x512xf32>
    %39 = tpu.matmul %36, %38, %cst_37 {dimension_numbers = #tpu.dot_dimension_numbers<[1], [0], [0], [1], [0, 0, 1, 1], [], []>} : vector<24x256xbf16>, vector<256x512xbf16>, vector<24x512xf32> -> vector<24x512xf32>
    %40 = arith.addf %34, %39 : vector<24x512xf32>
    %c0_38 = arith.constant 0 : index
    %c13 = arith.constant 13 : index
    %c0_39 = arith.constant 0 : index
    %41 = vector.load %arg1[%c0_38, %c13, %c0_39] : memref<1x42x256xbf16, #tpu.memory_space<vmem>>, vector<1x24x256xbf16>
    %42 = vector.shape_cast %41 : vector<1x24x256xbf16> to vector<24x256xbf16>
    %c7_40 = arith.constant 7 : index
    %c0_41 = arith.constant 0 : index
    %c0_42 = arith.constant 0 : index
    %43 = vector.load %arg2[%c7_40, %c0_41, %c0_42] : memref<9x256x512xbf16, #tpu.memory_space<vmem>>, vector<1x256x512xbf16>
    %44 = vector.shape_cast %43 : vector<1x256x512xbf16> to vector<256x512xbf16>
    %cst_43 = arith.constant dense<0.000000e+00> : vector<24x512xf32>
    %45 = tpu.matmul %42, %44, %cst_43 {dimension_numbers = #tpu.dot_dimension_numbers<[1], [0], [0], [1], [0, 0, 1, 1], [], []>} : vector<24x256xbf16>, vector<256x512xbf16>, vector<24x512xf32> -> vector<24x512xf32>
    %46 = arith.addf %40, %45 : vector<24x512xf32>
    %c0_44 = arith.constant 0 : index
    %c14 = arith.constant 14 : index
    %c0_45 = arith.constant 0 : index
    %47 = vector.load %arg1[%c0_44, %c14, %c0_45] : memref<1x42x256xbf16, #tpu.memory_space<vmem>>, vector<1x24x256xbf16>
    %48 = vector.shape_cast %47 : vector<1x24x256xbf16> to vector<24x256xbf16>
    %c8_46 = arith.constant 8 : index
    %c0_47 = arith.constant 0 : index
    %c0_48 = arith.constant 0 : index
    %49 = vector.load %arg2[%c8_46, %c0_47, %c0_48] : memref<9x256x512xbf16, #tpu.memory_space<vmem>>, vector<1x256x512xbf16>
    %50 = vector.shape_cast %49 : vector<1x256x512xbf16> to vector<256x512xbf16>
    %cst_49 = arith.constant dense<0.000000e+00> : vector<24x512xf32>
    %51 = tpu.matmul %48, %50, %cst_49 {dimension_numbers = #tpu.dot_dimension_numbers<[1], [0], [0], [1], [0, 0, 1, 1], [], []>} : vector<24x256xbf16>, vector<256x512xbf16>, vector<24x512xf32> -> vector<24x512xf32>
    %52 = arith.addf %46, %51 : vector<24x512xf32>
    %c0_50 = arith.constant 0 : index
    %c0_51 = arith.constant 0 : index
    %53 = vector.load %arg3[%c0_50, %c0_51] : memref<1x512xf32, #tpu.memory_space<vmem>>, vector<1x512xf32>
    %54 = vector.broadcast %53 : vector<1x512xf32> to vector<24x512xf32>
    %55 = arith.addf %52, %54 : vector<24x512xf32>
    %cst_52 = arith.constant 2.000000e-01 : f32
    %56 = vector.broadcast %cst_52 : f32 to vector<24x512xf32>
    %57 = arith.mulf %56, %55 : vector<24x512xf32>
    %58 = arith.maximumf %55, %57 : vector<24x512xf32>
    %59 = arith.mulf %58, %58 : vector<24x512xf32>
    %cst_53 = arith.constant dense<0.000000e+00> : vector<24xf32>
    %60 = vector.multi_reduction <add>, %59, %cst_53 [1] : vector<24x512xf32> to vector<24xf32>
    %61 = vector.shape_cast %60 : vector<24xf32> to vector<24x1xf32>
    %cst_54 = arith.constant 5.120000e+02 : f32
    %62 = vector.broadcast %cst_54 : f32 to vector<24x1xf32>
    %63 = arith.divf %61, %62 : vector<24x1xf32>
    %cst_55 = arith.constant 9.99999993E-9 : f32
    %64 = vector.broadcast %cst_55 : f32 to vector<24x1xf32>
    %65 = arith.addf %63, %64 : vector<24x1xf32>
    %66 = math.rsqrt %65 : vector<24x1xf32>
    %67 = vector.broadcast %66 : vector<24x1xf32> to vector<24x512xf32>
    %68 = arith.mulf %58, %67 : vector<24x512xf32>
    %69 = arith.truncf %68 : vector<24x512xf32> to vector<24x512xbf16>
    %c0_56 = arith.constant 0 : index
    %c0_57 = arith.constant 0 : index
    %c0_58 = arith.constant 0 : index
    %70 = vector.load %arg4[%c0_56, %c0_57, %c0_58] : memref<1x24x512xbf16, #tpu.memory_space<vmem>>, vector<1x24x512xbf16>
    %71 = vector.shape_cast %70 : vector<1x24x512xbf16> to vector<24x512xbf16>
    %72 = vector.shape_cast %69 : vector<24x512xbf16> to vector<1x24x512xbf16>
    tpu.vector_store %arg4[%c0_56, %c0_57, %c0_58], %72 {strides = array<i32>} : memref<1x24x512xbf16, #tpu.memory_space<vmem>>, vector<1x24x512xbf16>,
    return
  }
  func.func @transform_0(%arg0: i32) -> (i32, i32, i32) {
    %c0_i32 = arith.constant 0 : i32
    %c0_i32_0 = arith.constant 0 : i32
    %c0_i32_1 = arith.constant 0 : i32
    return %arg0, %c0_i32, %c0_i32_0 : i32, i32, i32
  }
  func.func @transform_1(%arg0: i32) -> (i32, i32, i32) {
    %c0_i32 = arith.constant 0 : i32
    %c0_i32_0 = arith.constant 0 : i32
    %c0_i32_1 = arith.constant 0 : i32
    %c0_i32_2 = arith.constant 0 : i32
    return %c0_i32, %c0_i32_0, %c0_i32_1 : i32, i32, i32
  }
  func.func @transform_2(%arg0: i32) -> (i32, i32) {
    %c0_i32 = arith.constant 0 : i32
    %c0_i32_0 = arith.constant 0 : i32
    %c0_i32_1 = arith.constant 0 : i32
    return %c0_i32, %c0_i32_0 : i32, i32
  }
  func.func @transform_3(%arg0: i32) -> (i32, i32, i32) {
    %c0_i32 = arith.constant 0 : i32
    %c0_i32_0 = arith.constant 0 : i32
    %c0_i32_1 = arith.constant 0 : i32
    return %arg0, %c0_i32, %c0_i32_0 : i32, i32, i32
  }
}

module attributes {stable_mosaic.version = 11 : i64} {
  func.func @_conv3x3_kernel(%arg0: i32, %arg1: memref<1x42x512xbf16, #tpu.memory_space<vmem>>, %arg2: memref<9x512x128xbf16, #tpu.memory_space<vmem>>, %arg3: memref<1x128xf32, #tpu.memory_space<vmem>>, %arg4: memref<1x24x128xf32, #tpu.memory_space<vmem>>) attributes {dimension_semantics = [#tpu.dimension_semantics<parallel>], iteration_bounds = array<i64: 2>, scalar_prefetch = 0 : i64, scratch_operands = 0 : i64, tpu.core_type = #tpu.core_type<tc>, window_params = [{transform_indices = @transform_0, window_bounds = array<i64: 1, 42, 512>}, {pipeline_mode = #tpu.pipeline_mode<synchronous>, transform_indices = @transform_1, window_bounds = array<i64: 9, 512, 128>}, {pipeline_mode = #tpu.pipeline_mode<synchronous>, transform_indices = @transform_2, window_bounds = array<i64: 1, 128>}, {transform_indices = @transform_3, window_bounds = array<i64: 1, 24, 128>}]} {
    %c0 = arith.constant 0 : index
    %c0_0 = arith.constant 0 : index
    %c0_1 = arith.constant 0 : index
    %0 = vector.load %arg1[%c0, %c0_0, %c0_1] : memref<1x42x512xbf16, #tpu.memory_space<vmem>>, vector<1x24x512xbf16>
    %1 = vector.shape_cast %0 : vector<1x24x512xbf16> to vector<24x512xbf16>
    %c0_2 = arith.constant 0 : index
    %c0_3 = arith.constant 0 : index
    %c0_4 = arith.constant 0 : index
    %2 = vector.load %arg2[%c0_2, %c0_3, %c0_4] : memref<9x512x128xbf16, #tpu.memory_space<vmem>>, vector<1x512x128xbf16>
    %3 = vector.shape_cast %2 : vector<1x512x128xbf16> to vector<512x128xbf16>
    %cst = arith.constant dense<0.000000e+00> : vector<24x128xf32>
    %4 = tpu.matmul %1, %3, %cst {dimension_numbers = #tpu.dot_dimension_numbers<[1], [0], [0], [1], [0, 0, 1, 1], [], []>} : vector<24x512xbf16>, vector<512x128xbf16>, vector<24x128xf32> -> vector<24x128xf32>
    %c0_5 = arith.constant 0 : index
    %c1 = arith.constant 1 : index
    %c0_6 = arith.constant 0 : index
    %5 = vector.load %arg1[%c0_5, %c1, %c0_6] : memref<1x42x512xbf16, #tpu.memory_space<vmem>>, vector<1x24x512xbf16>
    %6 = vector.shape_cast %5 : vector<1x24x512xbf16> to vector<24x512xbf16>
    %c1_7 = arith.constant 1 : index
    %c0_8 = arith.constant 0 : index
    %c0_9 = arith.constant 0 : index
    %7 = vector.load %arg2[%c1_7, %c0_8, %c0_9] : memref<9x512x128xbf16, #tpu.memory_space<vmem>>, vector<1x512x128xbf16>
    %8 = vector.shape_cast %7 : vector<1x512x128xbf16> to vector<512x128xbf16>
    %cst_10 = arith.constant dense<0.000000e+00> : vector<24x128xf32>
    %9 = tpu.matmul %6, %8, %cst_10 {dimension_numbers = #tpu.dot_dimension_numbers<[1], [0], [0], [1], [0, 0, 1, 1], [], []>} : vector<24x512xbf16>, vector<512x128xbf16>, vector<24x128xf32> -> vector<24x128xf32>
    %10 = arith.addf %4, %9 : vector<24x128xf32>
    %c0_11 = arith.constant 0 : index
    %c2 = arith.constant 2 : index
    %c0_12 = arith.constant 0 : index
    %11 = vector.load %arg1[%c0_11, %c2, %c0_12] : memref<1x42x512xbf16, #tpu.memory_space<vmem>>, vector<1x24x512xbf16>
    %12 = vector.shape_cast %11 : vector<1x24x512xbf16> to vector<24x512xbf16>
    %c2_13 = arith.constant 2 : index
    %c0_14 = arith.constant 0 : index
    %c0_15 = arith.constant 0 : index
    %13 = vector.load %arg2[%c2_13, %c0_14, %c0_15] : memref<9x512x128xbf16, #tpu.memory_space<vmem>>, vector<1x512x128xbf16>
    %14 = vector.shape_cast %13 : vector<1x512x128xbf16> to vector<512x128xbf16>
    %cst_16 = arith.constant dense<0.000000e+00> : vector<24x128xf32>
    %15 = tpu.matmul %12, %14, %cst_16 {dimension_numbers = #tpu.dot_dimension_numbers<[1], [0], [0], [1], [0, 0, 1, 1], [], []>} : vector<24x512xbf16>, vector<512x128xbf16>, vector<24x128xf32> -> vector<24x128xf32>
    %16 = arith.addf %10, %15 : vector<24x128xf32>
    %c0_17 = arith.constant 0 : index
    %c6 = arith.constant 6 : index
    %c0_18 = arith.constant 0 : index
    %17 = vector.load %arg1[%c0_17, %c6, %c0_18] : memref<1x42x512xbf16, #tpu.memory_space<vmem>>, vector<1x24x512xbf16>
    %18 = vector.shape_cast %17 : vector<1x24x512xbf16> to vector<24x512xbf16>
    %c3 = arith.constant 3 : index
    %c0_19 = arith.constant 0 : index
    %c0_20 = arith.constant 0 : index
    %19 = vector.load %arg2[%c3, %c0_19, %c0_20] : memref<9x512x128xbf16, #tpu.memory_space<vmem>>, vector<1x512x128xbf16>
    %20 = vector.shape_cast %19 : vector<1x512x128xbf16> to vector<512x128xbf16>
    %cst_21 = arith.constant dense<0.000000e+00> : vector<24x128xf32>
    %21 = tpu.matmul %18, %20, %cst_21 {dimension_numbers = #tpu.dot_dimension_numbers<[1], [0], [0], [1], [0, 0, 1, 1], [], []>} : vector<24x512xbf16>, vector<512x128xbf16>, vector<24x128xf32> -> vector<24x128xf32>
    %22 = arith.addf %16, %21 : vector<24x128xf32>
    %c0_22 = arith.constant 0 : index
    %c7 = arith.constant 7 : index
    %c0_23 = arith.constant 0 : index
    %23 = vector.load %arg1[%c0_22, %c7, %c0_23] : memref<1x42x512xbf16, #tpu.memory_space<vmem>>, vector<1x24x512xbf16>
    %24 = vector.shape_cast %23 : vector<1x24x512xbf16> to vector<24x512xbf16>
    %c4 = arith.constant 4 : index
    %c0_24 = arith.constant 0 : index
    %c0_25 = arith.constant 0 : index
    %25 = vector.load %arg2[%c4, %c0_24, %c0_25] : memref<9x512x128xbf16, #tpu.memory_space<vmem>>, vector<1x512x128xbf16>
    %26 = vector.shape_cast %25 : vector<1x512x128xbf16> to vector<512x128xbf16>
    %cst_26 = arith.constant dense<0.000000e+00> : vector<24x128xf32>
    %27 = tpu.matmul %24, %26, %cst_26 {dimension_numbers = #tpu.dot_dimension_numbers<[1], [0], [0], [1], [0, 0, 1, 1], [], []>} : vector<24x512xbf16>, vector<512x128xbf16>, vector<24x128xf32> -> vector<24x128xf32>
    %28 = arith.addf %22, %27 : vector<24x128xf32>
    %c0_27 = arith.constant 0 : index
    %c8 = arith.constant 8 : index
    %c0_28 = arith.constant 0 : index
    %29 = vector.load %arg1[%c0_27, %c8, %c0_28] : memref<1x42x512xbf16, #tpu.memory_space<vmem>>, vector<1x24x512xbf16>
    %30 = vector.shape_cast %29 : vector<1x24x512xbf16> to vector<24x512xbf16>
    %c5 = arith.constant 5 : index
    %c0_29 = arith.constant 0 : index
    %c0_30 = arith.constant 0 : index
    %31 = vector.load %arg2[%c5, %c0_29, %c0_30] : memref<9x512x128xbf16, #tpu.memory_space<vmem>>, vector<1x512x128xbf16>
    %32 = vector.shape_cast %31 : vector<1x512x128xbf16> to vector<512x128xbf16>
    %cst_31 = arith.constant dense<0.000000e+00> : vector<24x128xf32>
    %33 = tpu.matmul %30, %32, %cst_31 {dimension_numbers = #tpu.dot_dimension_numbers<[1], [0], [0], [1], [0, 0, 1, 1], [], []>} : vector<24x512xbf16>, vector<512x128xbf16>, vector<24x128xf32> -> vector<24x128xf32>
    %34 = arith.addf %28, %33 : vector<24x128xf32>
    %c0_32 = arith.constant 0 : index
    %c12 = arith.constant 12 : index
    %c0_33 = arith.constant 0 : index
    %35 = vector.load %arg1[%c0_32, %c12, %c0_33] : memref<1x42x512xbf16, #tpu.memory_space<vmem>>, vector<1x24x512xbf16>
    %36 = vector.shape_cast %35 : vector<1x24x512xbf16> to vector<24x512xbf16>
    %c6_34 = arith.constant 6 : index
    %c0_35 = arith.constant 0 : index
    %c0_36 = arith.constant 0 : index
    %37 = vector.load %arg2[%c6_34, %c0_35, %c0_36] : memref<9x512x128xbf16, #tpu.memory_space<vmem>>, vector<1x512x128xbf16>
    %38 = vector.shape_cast %37 : vector<1x512x128xbf16> to vector<512x128xbf16>
    %cst_37 = arith.constant dense<0.000000e+00> : vector<24x128xf32>
    %39 = tpu.matmul %36, %38, %cst_37 {dimension_numbers = #tpu.dot_dimension_numbers<[1], [0], [0], [1], [0, 0, 1, 1], [], []>} : vector<24x512xbf16>, vector<512x128xbf16>, vector<24x128xf32> -> vector<24x128xf32>
    %40 = arith.addf %34, %39 : vector<24x128xf32>
    %c0_38 = arith.constant 0 : index
    %c13 = arith.constant 13 : index
    %c0_39 = arith.constant 0 : index
    %41 = vector.load %arg1[%c0_38, %c13, %c0_39] : memref<1x42x512xbf16, #tpu.memory_space<vmem>>, vector<1x24x512xbf16>
    %42 = vector.shape_cast %41 : vector<1x24x512xbf16> to vector<24x512xbf16>
    %c7_40 = arith.constant 7 : index
    %c0_41 = arith.constant 0 : index
    %c0_42 = arith.constant 0 : index
    %43 = vector.load %arg2[%c7_40, %c0_41, %c0_42] : memref<9x512x128xbf16, #tpu.memory_space<vmem>>, vector<1x512x128xbf16>
    %44 = vector.shape_cast %43 : vector<1x512x128xbf16> to vector<512x128xbf16>
    %cst_43 = arith.constant dense<0.000000e+00> : vector<24x128xf32>
    %45 = tpu.matmul %42, %44, %cst_43 {dimension_numbers = #tpu.dot_dimension_numbers<[1], [0], [0], [1], [0, 0, 1, 1], [], []>} : vector<24x512xbf16>, vector<512x128xbf16>, vector<24x128xf32> -> vector<24x128xf32>
    %46 = arith.addf %40, %45 : vector<24x128xf32>
    %c0_44 = arith.constant 0 : index
    %c14 = arith.constant 14 : index
    %c0_45 = arith.constant 0 : index
    %47 = vector.load %arg1[%c0_44, %c14, %c0_45] : memref<1x42x512xbf16, #tpu.memory_space<vmem>>, vector<1x24x512xbf16>
    %48 = vector.shape_cast %47 : vector<1x24x512xbf16> to vector<24x512xbf16>
    %c8_46 = arith.constant 8 : index
    %c0_47 = arith.constant 0 : index
    %c0_48 = arith.constant 0 : index
    %49 = vector.load %arg2[%c8_46, %c0_47, %c0_48] : memref<9x512x128xbf16, #tpu.memory_space<vmem>>, vector<1x512x128xbf16>
    %50 = vector.shape_cast %49 : vector<1x512x128xbf16> to vector<512x128xbf16>
    %cst_49 = arith.constant dense<0.000000e+00> : vector<24x128xf32>
    %51 = tpu.matmul %48, %50, %cst_49 {dimension_numbers = #tpu.dot_dimension_numbers<[1], [0], [0], [1], [0, 0, 1, 1], [], []>} : vector<24x512xbf16>, vector<512x128xbf16>, vector<24x128xf32> -> vector<24x128xf32>
    %52 = arith.addf %46, %51 : vector<24x128xf32>
    %c0_50 = arith.constant 0 : index
    %c0_51 = arith.constant 0 : index
    %53 = vector.load %arg3[%c0_50, %c0_51] : memref<1x128xf32, #tpu.memory_space<vmem>>, vector<1x128xf32>
    %54 = vector.broadcast %53 : vector<1x128xf32> to vector<24x128xf32>
    %55 = arith.addf %52, %54 : vector<24x128xf32>
    %56 = math.tanh %55 : vector<24x128xf32>
    %c0_52 = arith.constant 0 : index
    %c0_53 = arith.constant 0 : index
    %c0_54 = arith.constant 0 : index
    %57 = vector.load %arg4[%c0_52, %c0_53, %c0_54] : memref<1x24x128xf32, #tpu.memory_space<vmem>>, vector<1x24x128xf32>
    %58 = vector.shape_cast %57 : vector<1x24x128xf32> to vector<24x128xf32>
    %59 = vector.shape_cast %56 : vector<24x128xf32> to vector<1x24x128xf32>
    tpu.vector_store %arg4[%c0_52, %c0_53, %c0_54], %59 {strides = array<i32>} : memref<1x24x128xf32, #tpu.memory_space<vmem>>, vector<1x24x128xf32>,
    return
  }
  func.func @transform_0(%arg0: i32) -> (i32, i32, i32) {
    %c0_i32 = arith.constant 0 : i32
    %c0_i32_0 = arith.constant 0 : i32
    %c0_i32_1 = arith.constant 0 : i32
    return %arg0, %c0_i32, %c0_i32_0 : i32, i32, i32
  }
  func.func @transform_1(%arg0: i32) -> (i32, i32, i32) {
    %c0_i32 = arith.constant 0 : i32
    %c0_i32_0 = arith.constant 0 : i32
    %c0_i32_1 = arith.constant 0 : i32
    %c0_i32_2 = arith.constant 0 : i32
    return %c0_i32, %c0_i32_0, %c0_i32_1 : i32, i32, i32
  }
  func.func @transform_2(%arg0: i32) -> (i32, i32) {
    %c0_i32 = arith.constant 0 : i32
    %c0_i32_0 = arith.constant 0 : i32
    %c0_i32_1 = arith.constant 0 : i32
    return %c0_i32, %c0_i32_0 : i32, i32
  }
  func.func @transform_3(%arg0: i32) -> (i32, i32, i32) {
    %c0_i32 = arith.constant 0 : i32
    %c0_i32_0 = arith.constant 0 : i32
    %c0_i32_1 = arith.constant 0 : i32
    return %arg0, %c0_i32, %c0_i32_0 : i32, i32, i32
  }
}

</mosaic_0001>

<llo_original>
// kernel: generator_forward.3
$region0: #{generator_forward.3}
  #allocation0 [shape = 'u32[]', space=smem, size = 0x4, offset = 0x4, fixed_abs, tag = 'smem constant byte address 0x4 - core index']
  #allocation1 [shape = 'u32[72,128]{1,0:T(1,128)}', space=vmem, size = 0x9000, scoped, tag = 'internal scratch']
  %s0 = inlined_call_operand.hbm [shape: f32[2,32], index: 0, kind: input, shape index: {}]
  %s1 = inlined_call_operand.hbm [shape: bf16[32,4096], index: 1, kind: input, shape index: {}]
  %s2 = inlined_call_operand.hbm [shape: f32[1,4096], index: 2, kind: input, shape index: {}]
  %s3 = inlined_call_operand.vmem [shape: bf16[2,4096], index: 3, kind: output, shape index: {}]
  %s4 = sld [smem:[#allocation0]]
  $region34: #{generator_forward.3} parent=0
    _
  %s6 = ssub.s32 1, %s4
  %s7 = scalar_select 0, %s6, %s4
  $region1: #{generator_forward.3} parent=0
    #allocation2 [shape = 'u8[1024]{0}', space=vmem, size = 0x400, scoped, tag = 'input window, operand 0, single buffered']
    #allocation3 [shape = 's32[1]{0}', space=sflag, size = 0x4, scoped, tag = 'scoped memory for generator_forward.3']
    #allocation4 [shape = 'u8[262144]{0}', space=vmem, size = 0x40000, scoped, tag = 'input window, operand 1, single buffered']
    #allocation5 [shape = 's32[1]{0}', space=sflag, size = 0x4, scoped, tag = 'scoped memory for generator_forward.3']
    #allocation6 [shape = 'u8[16384]{0}', space=vmem, size = 0x4000, scoped, tag = 'input window, operand 2, single buffered']
    %8 = vsyncpa [#allocation3], 0
    %9 = vsyncpa [#allocation5], 0
    // Predicated region
    $region2: #{generator_forward.3} parent=1 // pred_check
      _
    $region3: #{generator_forward.3} parent=1 // pred_check_branch
      %11 = sbr.rel (0) target = $region5
    $region4: #{generator_forward.3} parent=1 // pred_region
      %13 = vsyncadd [#allocation3], 0
      %s15 = sshll.u32 %s0, 4
      %s16 = int_to_ptr.hbm [resolvable:$true] %s15
      %s17 = sshll.u32 [#allocation2], 4
      %s18 = int_to_ptr.vmem [resolvable:$true] %s17
      %20 = dma.hbm_to_vmem [thread:$0]  %s16, 32, %s18, [#allocation3]
    $region5: #{generator_forward.3} parent=1 // pred_fallthru
      _
    // Predicated region
    $region6: #{generator_forward.3} parent=1 // pred_check
      _
    $region7: #{generator_forward.3} parent=1 // pred_check_branch
      %22 = sbr.rel (0) target = $region9
    $region8: #{generator_forward.3} parent=1 // pred_region
      %24 = vsyncadd [#allocation5], 0
      %s25 = sshll.u32 %s1, 4
      %s26 = int_to_ptr.hbm [resolvable:$true] %s25
      %s27 = sshll.u32 [#allocation4], 4
      %s28 = int_to_ptr.vmem [resolvable:$true] %s27
      %33 = dma.hbm_to_vmem [thread:$0]  %s26, 8192, %s28, [#allocation5], 2048, 2048, 128
    $region9: #{generator_forward.3} parent=1 // pred_fallthru
      _
    // Predicated region
    $region10: #{generator_forward.3} parent=1 // pred_check
      _
    $region11: #{generator_forward.3} parent=1 // pred_check_branch
      %35 = sbr.rel (0) target = $region13
    $region12: #{generator_forward.3} parent=1 // pred_region
      %37 = vsyncadd [#allocation5], 0
      %s39 = sshll.u32 %s2, 4
      %s40 = int_to_ptr.hbm [resolvable:$true] %s39
      %s41 = sshll.u32 [#allocation6], 4
      %s42 = int_to_ptr.vmem [resolvable:$true] %s41
      %44 = dma.hbm_to_vmem [thread:$0]  %s40, 512, %s42, [#allocation5]
    $region13: #{generator_forward.3} parent=1 // pred_fallthru
      _
    // Predicated region
    $region14: #{generator_forward.3} parent=1 // pred_check
      _
    $region15: #{generator_forward.3} parent=1 // pred_check_branch
      %46 = sbr.rel (0) target = $region17
    $region16: #{generator_forward.3} parent=1 // pred_region
      %48 = dma.done [#allocation3], 32
    $region17: #{generator_forward.3} parent=1 // pred_fallthru
      _
    // Predicated region
    $region18: #{generator_forward.3} parent=1 // pred_check
      _
    $region19: #{generator_forward.3} parent=1 // pred_check_branch
      %50 = sbr.rel (0) target = $region21
    $region20: #{generator_forward.3} parent=1 // pred_region
      %52 = dma.done [#allocation5], 8192
    $region21: #{generator_forward.3} parent=1 // pred_fallthru
      _
    // Predicated region
    $region22: #{generator_forward.3} parent=1 // pred_check
      _
    $region23: #{generator_forward.3} parent=1 // pred_check_branch
      %54 = sbr.rel (0) target = $region25
    $region24: #{generator_forward.3} parent=1 // pred_region
      %56 = dma.done [#allocation5], 512
    $region25: #{generator_forward.3} parent=1 // pred_fallthru
      _
    %v58 = vld [vmem:[#allocation2] sm:$0x3]
    %v59 = vmul.f32 %v58, %v58
    %vm60 = vcmask 254976
    %v61 = vsel %vm60, %v59, 0.0
    %62 = vadd.xlane.f32.xlu0 %v61
    %v63 = vpop.xlane.xlu0 %62
    %v64 = vrcp.pop 32.0
    %v65 = vmul.f32 32.0, %v64
    %v66 = vsub.f32 1.0, %v65
    %v67 = vmul.f32 %v64, %v66
    %v68 = vadd.f32 %v64, %v67
    %vm69 = vweird.f32 %v64
    %v70 = vsel %vm69, %v64, %v68
    %v71 = vmul.f32 %v63, %v70
    %v72 = vadd.f32 %v71, 1e-08
    %v73 = vrsqrt.pop %v72
    %v74 = vmul.f32 %v73, %v72
    %v75 = vmul.f32 %v74, %v73
    %v76 = vmul.f32 0.5, %v75
    %v77 = vsub.f32 1.5, %v76
    %v78 = vmul.f32 %v73, %v77
    %vm79 = vweird.f32 %v72
    %vm80 = vweird.f32 %v73
    %vm81 = vmor %vm79, %vm80
    %v82 = vsel %vm81, %v73, %v78
    %v83 = vmul.f32 %v58, %v82
    %v84 = vpack.c.bf16 %v83, %v83
    %v85 = vld [vmem:[#allocation4] sm:$0xff]
    %v86 = vld [vmem:[#allocation4 + $0x8] sm:$0xff]
    %v87 = vld [vmem:[#allocation4 + $0x10] sm:$0xff]
    %v88 = vld [vmem:[#allocation4 + $0x18] sm:$0xff]
    %v89 = vld [vmem:[#allocation4 + $0x20] sm:$0xff]
    %v90 = vld [vmem:[#allocation4 + $0x28] sm:$0xff]
    %v91 = vld [vmem:[#allocation4 + $0x30] sm:$0xff]
    %v92 = vld [vmem:[#allocation4 + $0x38] sm:$0xff]
    %v93 = vld [vmem:[#allocation4 + $0x40] sm:$0xff]
    %v94 = vld [vmem:[#allocation4 + $0x48] sm:$0xff]
    %v95 = vld [vmem:[#allocation4 + $0x50] sm:$0xff]
    %v96 = vld [vmem:[#allocation4 + $0x58] sm:$0xff]
    %v97 = vld [vmem:[#allocation4 + $0x60] sm:$0xff]
    %v98 = vld [vmem:[#allocation4 + $0x68] sm:$0xff]
    %v99 = vld [vmem:[#allocation4 + $0x70] sm:$0xff]
    %v100 = vld [vmem:[#allocation4 + $0x78] sm:$0xff]
    %v101 = vld [vmem:[#allocation4 + $0x80] sm:$0xff]
    %v102 = vld [vmem:[#allocation4 + $0x88] sm:$0xff]
    %v103 = vld [vmem:[#allocation4 + $0x90] sm:$0xff]
    %v104 = vld [vmem:[#allocation4 + $0x98] sm:$0xff]
    %v105 = vld [vmem:[#allocation4 + $0xa0] sm:$0xff]
    %v106 = vld [vmem:[#allocation4 + $0xa8] sm:$0xff]
    %v107 = vld [vmem:[#allocation4 + $0xb0] sm:$0xff]
    %v108 = vld [vmem:[#allocation4 + $0xb8] sm:$0xff]
    %v109 = vld [vmem:[#allocation4 + $0xc0] sm:$0xff]
    %v110 = vld [vmem:[#allocation4 + $0xc8] sm:$0xff]
    %v111 = vld [vmem:[#allocation4 + $0xd0] sm:$0xff]
    %v112 = vld [vmem:[#allocation4 + $0xd8] sm:$0xff]
    %v113 = vld [vmem:[#allocation4 + $0xe0] sm:$0xff]
    %v114 = vld [vmem:[#allocation4 + $0xe8] sm:$0xff]
    %v115 = vld [vmem:[#allocation4 + $0xf0] sm:$0xff]
    %v116 = vld [vmem:[#allocation4 + $0xf8] sm:$0xff]
    %v117 = vld [vmem:[#allocation4 + $0x100] sm:$0xff]
    %v118 = vld [vmem:[#allocation4 + $0x108] sm:$0xff]
    %v119 = vld [vmem:[#allocation4 + $0x110] sm:$0xff]
    %v120 = vld [vmem:[#allocation4 + $0x118] sm:$0xff]
    %v121 = vld [vmem:[#allocation4 + $0x120] sm:$0xff]
    %v122 = vld [vmem:[#allocation4 + $0x128] sm:$0xff]
    %v123 = vld [vmem:[#allocation4 + $0x130] sm:$0xff]
    %v124 = vld [vmem:[#allocation4 + $0x138] sm:$0xff]
    %v125 = vld [vmem:[#allocation4 + $0x140] sm:$0xff]
    %v126 = vld [vmem:[#allocation4 + $0x148] sm:$0xff]
    %v127 = vld [vmem:[#allocation4 + $0x150] sm:$0xff]
    %v128 = vld [vmem:[#allocation4 + $0x158] sm:$0xff]
    %v129 = vld [vmem:[#allocation4 + $0x160] sm:$0xff]
    %v130 = vld [vmem:[#allocation4 + $0x168] sm:$0xff]
    %v131 = vld [vmem:[#allocation4 + $0x170] sm:$0xff]
    %v132 = vld [vmem:[#allocation4 + $0x178] sm:$0xff]
    %v133 = vld [vmem:[#allocation4 + $0x180] sm:$0xff]
    %v134 = vld [vmem:[#allocation4 + $0x188] sm:$0xff]
    %v135 = vld [vmem:[#allocation4 + $0x190] sm:$0xff]
    %v136 = vld [vmem:[#allocation4 + $0x198] sm:$0xff]
    %v137 = vld [vmem:[#allocation4 + $0x1a0] sm:$0xff]
    %v138 = vld [vmem:[#allocation4 + $0x1a8] sm:$0xff]
    %v139 = vld [vmem:[#allocation4 + $0x1b0] sm:$0xff]
    %v140 = vld [vmem:[#allocation4 + $0x1b8] sm:$0xff]
    %v141 = vld [vmem:[#allocation4 + $0x1c0] sm:$0xff]
    %v142 = vld [vmem:[#allocation4 + $0x1c8] sm:$0xff]
    %v143 = vld [vmem:[#allocation4 + $0x1d0] sm:$0xff]
    %v144 = vld [vmem:[#allocation4 + $0x1d8] sm:$0xff]
    %v145 = vld [vmem:[#allocation4 + $0x1e0] sm:$0xff]
    %v146 = vld [vmem:[#allocation4 + $0x1e8] sm:$0xff]
    %v147 = vld [vmem:[#allocation4 + $0x1f0] sm:$0xff]
    %v148 = vld [vmem:[#allocation4 + $0x1f8] sm:$0xff]
    %v149 = vld [vmem:[#allocation6] sm:$0xff]
    %v150 = vld [vmem:[#allocation6 + $0x8] sm:$0xff]
    %v151 = vld [vmem:[#allocation6 + $0x10] sm:$0xff]
    %v152 = vld [vmem:[#allocation6 + $0x18] sm:$0xff]
    %v157 = vperm.slane %v149, 0
    %v158 = vperm.slane %v149, 1
    %v159 = vperm.slane %v149, 2
    %v160 = vperm.slane %v149, 3
    %v161 = vperm.slane %v149, 4
    %v162 = vperm.slane %v149, 5
    %v163 = vperm.slane %v149, 6
    %v164 = vperm.slane %v149, 7
    %v165 = vperm.slane %v150, 0
    %v166 = vperm.slane %v150, 1
    %v167 = vperm.slane %v150, 2
    %v168 = vperm.slane %v150, 3
    %v169 = vperm.slane %v150, 4
    %v170 = vperm.slane %v150, 5
    %v171 = vperm.slane %v150, 6
    %v172 = vperm.slane %v150, 7
    %v173 = vperm.slane %v151, 0
    %v174 = vperm.slane %v151, 1
    %v175 = vperm.slane %v151, 2
    %v176 = vperm.slane %v151, 3
    %v177 = vperm.slane %v151, 4
    %v178 = vperm.slane %v151, 5
    %v179 = vperm.slane %v151, 6
    %v180 = vperm.slane %v151, 7
    %v181 = vperm.slane %v152, 0
    %v182 = vperm.slane %v152, 1
    %v183 = vperm.slane %v152, 2
    %v184 = vperm.slane %v152, 3
    %v185 = vperm.slane %v152, 4
    %v186 = vperm.slane %v152, 5
    %v187 = vperm.slane %v152, 6
    %v188 = vperm.slane %v152, 7
    %v285 = vunpack.c.l.b16 %v85
    %v286 = vunpack.c.h.b16 %v85
    %v287 = vunpack.c.l.b16 %v86
    %v288 = vunpack.c.h.b16 %v86
    %v289 = vunpack.c.l.b16 %v87
    %v290 = vunpack.c.h.b16 %v87
    %v291 = vunpack.c.l.b16 %v88
    %v292 = vunpack.c.h.b16 %v88
    %v293 = vunpack.c.l.b16 %v89
    %v294 = vunpack.c.h.b16 %v89
    %v295 = vunpack.c.l.b16 %v90
    %v296 = vunpack.c.h.b16 %v90
    %v297 = vunpack.c.l.b16 %v91
    %v298 = vunpack.c.h.b16 %v91
    %v299 = vunpack.c.l.b16 %v92
    %v300 = vunpack.c.h.b16 %v92
    %v301 = vunpack.c.l.b16 %v93
    %v302 = vunpack.c.h.b16 %v93
    %v303 = vunpack.c.l.b16 %v94
    %v304 = vunpack.c.h.b16 %v94
    %v305 = vunpack.c.l.b16 %v95
    %v306 = vunpack.c.h.b16 %v95
    %v307 = vunpack.c.l.b16 %v96
    %v308 = vunpack.c.h.b16 %v96
    %v309 = vunpack.c.l.b16 %v97
    %v310 = vunpack.c.h.b16 %v97
    %v311 = vunpack.c.l.b16 %v98
    %v312 = vunpack.c.h.b16 %v98
    %v313 = vunpack.c.l.b16 %v99
    %v314 = vunpack.c.h.b16 %v99
    %v315 = vunpack.c.l.b16 %v100
    %v316 = vunpack.c.h.b16 %v100
    %v317 = vunpack.c.l.b16 %v101
    %v318 = vunpack.c.h.b16 %v101
    %v319 = vunpack.c.l.b16 %v102
    %v320 = vunpack.c.h.b16 %v102
    %v321 = vunpack.c.l.b16 %v103
    %v322 = vunpack.c.h.b16 %v103
    %v323 = vunpack.c.l.b16 %v104
    %v324 = vunpack.c.h.b16 %v104
    %v325 = vunpack.c.l.b16 %v105
    %v326 = vunpack.c.h.b16 %v105
    %v327 = vunpack.c.l.b16 %v106
    %v328 = vunpack.c.h.b16 %v106
    %v329 = vunpack.c.l.b16 %v107
    %v330 = vunpack.c.h.b16 %v107
    %v331 = vunpack.c.l.b16 %v108
    %v332 = vunpack.c.h.b16 %v108
    %v333 = vunpack.c.l.b16 %v109
    %v334 = vunpack.c.h.b16 %v109
    %v335 = vunpack.c.l.b16 %v110
    %v336 = vunpack.c.h.b16 %v110
    %v337 = vunpack.c.l.b16 %v111
    %v338 = vunpack.c.h.b16 %v111
    %v339 = vunpack.c.l.b16 %v112
    %v340 = vunpack.c.h.b16 %v112
    %v341 = vunpack.c.l.b16 %v113
    %v342 = vunpack.c.h.b16 %v113
    %v343 = vunpack.c.l.b16 %v114
    %v344 = vunpack.c.h.b16 %v114
    %v345 = vunpack.c.l.b16 %v115
    %v346 = vunpack.c.h.b16 %v115
    %v347 = vunpack.c.l.b16 %v116
    %v348 = vunpack.c.h.b16 %v116
    %v349 = vunpack.c.l.b16 %v117
    %v350 = vunpack.c.h.b16 %v117
    %v351 = vunpack.c.l.b16 %v118
    %v352 = vunpack.c.h.b16 %v118
    %v353 = vunpack.c.l.b16 %v119
    %v354 = vunpack.c.h.b16 %v119
    %v355 = vunpack.c.l.b16 %v120
    %v356 = vunpack.c.h.b16 %v120
    %v357 = vunpack.c.l.b16 %v121
    %v358 = vunpack.c.h.b16 %v121
    %v359 = vunpack.c.l.b16 %v122
    %v360 = vunpack.c.h.b16 %v122
    %v361 = vunpack.c.l.b16 %v123
    %v362 = vunpack.c.h.b16 %v123
    %v363 = vunpack.c.l.b16 %v124
    %v364 = vunpack.c.h.b16 %v124
    %v365 = vunpack.c.l.b16 %v125
    %v366 = vunpack.c.h.b16 %v125
    %v367 = vunpack.c.l.b16 %v126
    %v368 = vunpack.c.h.b16 %v126
    %v369 = vunpack.c.l.b16 %v127
    %v370 = vunpack.c.h.b16 %v127
    %v371 = vunpack.c.l.b16 %v128
    %v372 = vunpack.c.h.b16 %v128
    %v373 = vunpack.c.l.b16 %v129
    %v374 = vunpack.c.h.b16 %v129
    %v375 = vunpack.c.l.b16 %v130
    %v376 = vunpack.c.h.b16 %v130
    %v377 = vunpack.c.l.b16 %v131
    %v378 = vunpack.c.h.b16 %v131
    %v379 = vunpack.c.l.b16 %v132
    %v380 = vunpack.c.h.b16 %v132
    %v381 = vunpack.c.l.b16 %v133
    %v382 = vunpack.c.h.b16 %v133
    %v383 = vunpack.c.l.b16 %v134
    %v384 = vunpack.c.h.b16 %v134
    %v385 = vunpack.c.l.b16 %v135
    %v386 = vunpack.c.h.b16 %v135
    %v387 = vunpack.c.l.b16 %v136
    %v388 = vunpack.c.h.b16 %v136
    %v389 = vunpack.c.l.b16 %v137
    %v390 = vunpack.c.h.b16 %v137
    %v391 = vunpack.c.l.b16 %v138
    %v392 = vunpack.c.h.b16 %v138
    %v393 = vunpack.c.l.b16 %v139
    %v394 = vunpack.c.h.b16 %v139
    %v395 = vunpack.c.l.b16 %v140
    %v396 = vunpack.c.h.b16 %v140
    %v397 = vunpack.c.l.b16 %v141
    %v398 = vunpack.c.h.b16 %v141
    %v399 = vunpack.c.l.b16 %v142
    %v400 = vunpack.c.h.b16 %v142
    %v401 = vunpack.c.l.b16 %v143
    %v402 = vunpack.c.h.b16 %v143
    %v403 = vunpack.c.l.b16 %v144
    %v404 = vunpack.c.h.b16 %v144
    %v405 = vunpack.c.l.b16 %v145
    %v406 = vunpack.c.h.b16 %v145
    %v407 = vunpack.c.l.b16 %v146
    %v408 = vunpack.c.h.b16 %v146
    %v409 = vunpack.c.l.b16 %v147
    %v410 = vunpack.c.h.b16 %v147
    %v411 = vunpack.c.l.b16 %v148
    %v412 = vunpack.c.h.b16 %v148
    %v413 = vpack.c.b16 %v317, %v285
    %v414 = vpack.c.b16 %v318, %v286
    %v415 = vpack.c.b16 %v319, %v287
    %v416 = vpack.c.b16 %v320, %v288
    %v417 = vpack.c.b16 %v321, %v289
    %v418 = vpack.c.b16 %v322, %v290
    %v419 = vpack.c.b16 %v323, %v291
    %v420 = vpack.c.b16 %v324, %v292
    %v421 = vpack.c.b16 %v325, %v293
    %v422 = vpack.c.b16 %v326, %v294
    %v423 = vpack.c.b16 %v327, %v295
    %v424 = vpack.c.b16 %v328, %v296
    %v425 = vpack.c.b16 %v329, %v297
    %v426 = vpack.c.b16 %v330, %v298
    %v427 = vpack.c.b16 %v331, %v299
    %v428 = vpack.c.b16 %v332, %v300
    %v429 = vpack.c.b16 %v333, %v301
    %v430 = vpack.c.b16 %v334, %v302
    %v431 = vpack.c.b16 %v335, %v303
    %v432 = vpack.c.b16 %v336, %v304
    %v433 = vpack.c.b16 %v337, %v305
    %v434 = vpack.c.b16 %v338, %v306
    %v435 = vpack.c.b16 %v339, %v307
    %v436 = vpack.c.b16 %v340, %v308
    %v437 = vpack.c.b16 %v341, %v309
    %v438 = vpack.c.b16 %v342, %v310
    %v439 = vpack.c.b16 %v343, %v311
    %v440 = vpack.c.b16 %v344, %v312
    %v441 = vpack.c.b16 %v345, %v313
    %v442 = vpack.c.b16 %v346, %v314
    %v443 = vpack.c.b16 %v347, %v315
    %v444 = vpack.c.b16 %v348, %v316
    %v445 = vpack.c.b16 %v381, %v349
    %v446 = vpack.c.b16 %v382, %v350
    %v447 = vpack.c.b16 %v383, %v351
    %v448 = vpack.c.b16 %v384, %v352
    %v449 = vpack.c.b16 %v385, %v353
    %v450 = vpack.c.b16 %v386, %v354
    %v451 = vpack.c.b16 %v387, %v355
    %v452 = vpack.c.b16 %v388, %v356
    %v453 = vpack.c.b16 %v389, %v357
    %v454 = vpack.c.b16 %v390, %v358
    %v455 = vpack.c.b16 %v391, %v359
    %v456 = vpack.c.b16 %v392, %v360
    %v457 = vpack.c.b16 %v393, %v361
    %v458 = vpack.c.b16 %v394, %v362
    %v459 = vpack.c.b16 %v395, %v363
    %v460 = vpack.c.b16 %v396, %v364
    %v461 = vpack.c.b16 %v397, %v365
    %v462 = vpack.c.b16 %v398, %v366
    %v463 = vpack.c.b16 %v399, %v367
    %v464 = vpack.c.b16 %v400, %v368
    %v465 = vpack.c.b16 %v401, %v369
    %v466 = vpack.c.b16 %v402, %v370
    %v467 = vpack.c.b16 %v403, %v371
    %v468 = vpack.c.b16 %v404, %v372
    %v469 = vpack.c.b16 %v405, %v373
    %v470 = vpack.c.b16 %v406, %v374
    %v471 = vpack.c.b16 %v407, %v375
    %v472 = vpack.c.b16 %v408, %v376
    %v473 = vpack.c.b16 %v409, %v377
    %v474 = vpack.c.b16 %v410, %v378
    %v475 = vpack.c.b16 %v411, %v379
    %v476 = vpack.c.b16 %v412, %v380
    %vm541 = vcmask 261120
    %v543 = vsel %vm541, %v84, 0
    %545 = vmatpush.bf16.msra.mxu0 0
    %546 = vmatpush.bf16.msra.mxu0 0
    %547 = vmatpush.bf16.msra.mxu0 0
    %548 = vmatpush.bf16.msra.mxu0 0
    %549 = vmatpush.bf16.msra.mxu0 0
    %550 = vmatpush.bf16.msra.mxu0 0
    %551 = vmatpush.bf16.msra.mxu0 %v445
    %552 = vmatpush.bf16.msra.mxu0 %v413
    %553 = vmatmul.bf16.gmra.mxu0 %v543
    %v554 = vpop.f32.mrf.mxu0
    %v555 = vadd.f32 %v157, %v554
    %v556 = vpop.f32.mrf.mxu0
    %557 = vdwg.mxu0
    %558 = vmatpush.bf16.msra.mxu0 0
    %559 = vmatpush.bf16.msra.mxu0 0
    %560 = vmatpush.bf16.msra.mxu0 0
    %561 = vmatpush.bf16.msra.mxu0 0
    %562 = vmatpush.bf16.msra.mxu0 0
    %563 = vmatpush.bf16.msra.mxu0 0
    %564 = vmatpush.bf16.msra.mxu0 %v446
    %565 = vmatpush.bf16.msra.mxu0 %v414
    %566 = vmatmul.bf16.gmra.mxu0 %v543
    %v567 = vpop.f32.mrf.mxu0
    %v568 = vadd.f32 %v158, %v567
    %v569 = vpop.f32.mrf.mxu0
    %570 = vdwg.mxu0
    %571 = vmatpush.bf16.msra.mxu0 0
    %572 = vmatpush.bf16.msra.mxu0 0
    %573 = vmatpush.bf16.msra.mxu0 0
    %574 = vmatpush.bf16.msra.mxu0 0
    %575 = vmatpush.bf16.msra.mxu0 0
    %576 = vmatpush.bf16.msra.mxu0 0
    %577 = vmatpush.bf16.msra.mxu0 %v447
    %578 = vmatpush.bf16.msra.mxu0 %v415
    %579 = vmatmul.bf16.gmra.mxu0 %v543
    %v580 = vpop.f32.mrf.mxu0
    %v581 = vadd.f32 %v159, %v580
    %v582 = vpop.f32.mrf.mxu0
    %583 = vdwg.mxu0
    %584 = vmatpush.bf16.msra.mxu0 0
    %585 = vmatpush.bf16.msra.mxu0 0
    %586 = vmatpush.bf16.msra.mxu0 0
    %587 = vmatpush.bf16.msra.mxu0 0
    %588 = vmatpush.bf16.msra.mxu0 0
    %589 = vmatpush.bf16.msra.mxu0 0
    %590 = vmatpush.bf16.msra.mxu0 %v448
    %591 = vmatpush.bf16.msra.mxu0 %v416
    %592 = vmatmul.bf16.gmra.mxu0 %v543
    %v593 = vpop.f32.mrf.mxu0
    %v594 = vadd.f32 %v160, %v593
    %v595 = vpop.f32.mrf.mxu0
    %596 = vdwg.mxu0
    %597 = vmatpush.bf16.msra.mxu0 0
    %598 = vmatpush.bf16.msra.mxu0 0
    %599 = vmatpush.bf16.msra.mxu0 0
    %600 = vmatpush.bf16.msra.mxu0 0
    %601 = vmatpush.bf16.msra.mxu0 0
    %602 = vmatpush.bf16.msra.mxu0 0
    %603 = vmatpush.bf16.msra.mxu0 %v449
    %604 = vmatpush.bf16.msra.mxu0 %v417
    %605 = vmatmul.bf16.gmra.mxu0 %v543
    %v606 = vpop.f32.mrf.mxu0
    %v607 = vadd.f32 %v161, %v606
    %v608 = vpop.f32.mrf.mxu0
    %609 = vdwg.mxu0
    %610 = vmatpush.bf16.msra.mxu0 0
    %611 = vmatpush.bf16.msra.mxu0 0
    %612 = vmatpush.bf16.msra.mxu0 0
    %613 = vmatpush.bf16.msra.mxu0 0
    %614 = vmatpush.bf16.msra.mxu0 0
    %615 = vmatpush.bf16.msra.mxu0 0
    %616 = vmatpush.bf16.msra.mxu0 %v450
    %617 = vmatpush.bf16.msra.mxu0 %v418
    %618 = vmatmul.bf16.gmra.mxu0 %v543
    %v619 = vpop.f32.mrf.mxu0
    %v620 = vadd.f32 %v162, %v619
    %v621 = vpop.f32.mrf.mxu0
    %622 = vdwg.mxu0
    %623 = vmatpush.bf16.msra.mxu0 0
    %624 = vmatpush.bf16.msra.mxu0 0
    %625 = vmatpush.bf16.msra.mxu0 0
    %626 = vmatpush.bf16.msra.mxu0 0
    %627 = vmatpush.bf16.msra.mxu0 0
    %628 = vmatpush.bf16.msra.mxu0 0
    %629 = vmatpush.bf16.msra.mxu0 %v451
    %630 = vmatpush.bf16.msra.mxu0 %v419
    %631 = vmatmul.bf16.gmra.mxu0 %v543
    %v632 = vpop.f32.mrf.mxu0
    %v633 = vadd.f32 %v163, %v632
    %v634 = vpop.f32.mrf.mxu0
    %635 = vdwg.mxu0
    %636 = vmatpush.bf16.msra.mxu0 0
    %637 = vmatpush.bf16.msra.mxu0 0
    %638 = vmatpush.bf16.msra.mxu0 0
    %639 = vmatpush.bf16.msra.mxu0 0
    %640 = vmatpush.bf16.msra.mxu0 0
    %641 = vmatpush.bf16.msra.mxu0 0
    %642 = vmatpush.bf16.msra.mxu0 %v452
    %643 = vmatpush.bf16.msra.mxu0 %v420
    %644 = vmatmul.bf16.gmra.mxu0 %v543
    %v645 = vpop.f32.mrf.mxu0
    %v646 = vadd.f32 %v164, %v645
    %v647 = vpop.f32.mrf.mxu0
    %648 = vdwg.mxu0
    %649 = vmatpush.bf16.msra.mxu0 0
    %650 = vmatpush.bf16.msra.mxu0 0
    %651 = vmatpush.bf16.msra.mxu0 0
    %652 = vmatpush.bf16.msra.mxu0 0
    %653 = vmatpush.bf16.msra.mxu0 0
    %654 = vmatpush.bf16.msra.mxu0 0
    %655 = vmatpush.bf16.msra.mxu0 %v453
    %656 = vmatpush.bf16.msra.mxu0 %v421
    %657 = vmatmul.bf16.gmra.mxu0 %v543
    %v658 = vpop.f32.mrf.mxu0
    %v659 = vadd.f32 %v165, %v658
    %v660 = vpop.f32.mrf.mxu0
    %661 = vdwg.mxu0
    %662 = vmatpush.bf16.msra.mxu0 0
    %663 = vmatpush.bf16.msra.mxu0 0
    %664 = vmatpush.bf16.msra.mxu0 0
    %665 = vmatpush.bf16.msra.mxu0 0
    %666 = vmatpush.bf16.msra.mxu0 0
    %667 = vmatpush.bf16.msra.mxu0 0
    %668 = vmatpush.bf16.msra.mxu0 %v454
    %669 = vmatpush.bf16.msra.mxu0 %v422
    %670 = vmatmul.bf16.gmra.mxu0 %v543
    %v671 = vpop.f32.mrf.mxu0
    %v672 = vadd.f32 %v166, %v671
    %v673 = vpop.f32.mrf.mxu0
    %674 = vdwg.mxu0
    %675 = vmatpush.bf16.msra.mxu0 0
    %676 = vmatpush.bf16.msra.mxu0 0
    %677 = vmatpush.bf16.msra.mxu0 0
    %678 = vmatpush.bf16.msra.mxu0 0
    %679 = vmatpush.bf16.msra.mxu0 0
    %680 = vmatpush.bf16.msra.mxu0 0
    %681 = vmatpush.bf16.msra.mxu0 %v455
    %682 = vmatpush.bf16.msra.mxu0 %v423
    %683 = vmatmul.bf16.gmra.mxu0 %v543
    %v684 = vpop.f32.mrf.mxu0
    %v685 = vadd.f32 %v167, %v684
    %v686 = vpop.f32.mrf.mxu0
    %687 = vdwg.mxu0
    %688 = vmatpush.bf16.msra.mxu0 0
    %689 = vmatpush.bf16.msra.mxu0 0
    %690 = vmatpush.bf16.msra.mxu0 0
    %691 = vmatpush.bf16.msra.mxu0 0
    %692 = vmatpush.bf16.msra.mxu0 0
    %693 = vmatpush.bf16.msra.mxu0 0
    %694 = vmatpush.bf16.msra.mxu0 %v456
    %695 = vmatpush.bf16.msra.mxu0 %v424
    %696 = vmatmul.bf16.gmra.mxu0 %v543
    %v697 = vpop.f32.mrf.mxu0
    %v698 = vadd.f32 %v168, %v697
    %v699 = vpop.f32.mrf.mxu0
    %700 = vdwg.mxu0
    %701 = vmatpush.bf16.msra.mxu0 0
    %702 = vmatpush.bf16.msra.mxu0 0
    %703 = vmatpush.bf16.msra.mxu0 0
    %704 = vmatpush.bf16.msra.mxu0 0
    %705 = vmatpush.bf16.msra.mxu0 0
    %706 = vmatpush.bf16.msra.mxu0 0
    %707 = vmatpush.bf16.msra.mxu0 %v457
    %708 = vmatpush.bf16.msra.mxu0 %v425
    %709 = vmatmul.bf16.gmra.mxu0 %v543
    %v710 = vpop.f32.mrf.mxu0
    %v711 = vadd.f32 %v169, %v710
    %v712 = vpop.f32.mrf.mxu0
    %713 = vdwg.mxu0
    %714 = vmatpush.bf16.msra.mxu0 0
    %715 = vmatpush.bf16.msra.mxu0 0
    %716 = vmatpush.bf16.msra.mxu0 0
    %717 = vmatpush.bf16.msra.mxu0 0
    %718 = vmatpush.bf16.msra.mxu0 0
    %719 = vmatpush.bf16.msra.mxu0 0
    %720 = vmatpush.bf16.msra.mxu0 %v458
    %721 = vmatpush.bf16.msra.mxu0 %v426
    %722 = vmatmul.bf16.gmra.mxu0 %v543
    %v723 = vpop.f32.mrf.mxu0
    %v724 = vadd.f32 %v170, %v723
    %v725 = vpop.f32.mrf.mxu0
    %726 = vdwg.mxu0
    %727 = vmatpush.bf16.msra.mxu0 0
    %728 = vmatpush.bf16.msra.mxu0 0
    %729 = vmatpush.bf16.msra.mxu0 0
    %730 = vmatpush.bf16.msra.mxu0 0
    %731 = vmatpush.bf16.msra.mxu0 0
    %732 = vmatpush.bf16.msra.mxu0 0
    %733 = vmatpush.bf16.msra.mxu0 %v459
    %734 = vmatpush.bf16.msra.mxu0 %v427
    %735 = vmatmul.bf16.gmra.mxu0 %v543
    %v736 = vpop.f32.mrf.mxu0
    %v737 = vadd.f32 %v171, %v736
    %v738 = vpop.f32.mrf.mxu0
    %739 = vdwg.mxu0
    %740 = vmatpush.bf16.msra.mxu0 0
    %741 = vmatpush.bf16.msra.mxu0 0
    %742 = vmatpush.bf16.msra.mxu0 0
    %743 = vmatpush.bf16.msra.mxu0 0
    %744 = vmatpush.bf16.msra.mxu0 0
    %745 = vmatpush.bf16.msra.mxu0 0
    %746 = vmatpush.bf16.msra.mxu0 %v460
    %747 = vmatpush.bf16.msra.mxu0 %v428
    %748 = vmatmul.bf16.gmra.mxu0 %v543
    %v749 = vpop.f32.mrf.mxu0
    %v750 = vadd.f32 %v172, %v749
    %v751 = vpop.f32.mrf.mxu0
    %752 = vdwg.mxu0
    %753 = vmatpush.bf16.msra.mxu0 0
    %754 = vmatpush.bf16.msra.mxu0 0
    %755 = vmatpush.bf16.msra.mxu0 0
    %756 = vmatpush.bf16.msra.mxu0 0
    %757 = vmatpush.bf16.msra.mxu0 0
    %758 = vmatpush.bf16.msra.mxu0 0
    %759 = vmatpush.bf16.msra.mxu0 %v461
    %760 = vmatpush.bf16.msra.mxu0 %v429
    %761 = vmatmul.bf16.gmra.mxu0 %v543
    %v762 = vpop.f32.mrf.mxu0
    %v763 = vadd.f32 %v173, %v762
    %v764 = vpop.f32.mrf.mxu0
    %765 = vdwg.mxu0
    %766 = vmatpush.bf16.msra.mxu0 0
    %767 = vmatpush.bf16.msra.mxu0 0
    %768 = vmatpush.bf16.msra.mxu0 0
    %769 = vmatpush.bf16.msra.mxu0 0
    %770 = vmatpush.bf16.msra.mxu0 0
    %771 = vmatpush.bf16.msra.mxu0 0
    %772 = vmatpush.bf16.msra.mxu0 %v462
    %773 = vmatpush.bf16.msra.mxu0 %v430
    %774 = vmatmul.bf16.gmra.mxu0 %v543
    %v775 = vpop.f32.mrf.mxu0
    %v776 = vadd.f32 %v174, %v775
    %v777 = vpop.f32.mrf.mxu0
    %778 = vdwg.mxu0
    %779 = vmatpush.bf16.msra.mxu0 0
    %780 = vmatpush.bf16.msra.mxu0 0
    %781 = vmatpush.bf16.msra.mxu0 0
    %782 = vmatpush.bf16.msra.mxu0 0
    %783 = vmatpush.bf16.msra.mxu0 0
    %784 = vmatpush.bf16.msra.mxu0 0
    %785 = vmatpush.bf16.msra.mxu0 %v463
    %786 = vmatpush.bf16.msra.mxu0 %v431
    %787 = vmatmul.bf16.gmra.mxu0 %v543
    %v788 = vpop.f32.mrf.mxu0
    %v789 = vadd.f32 %v175, %v788
    %v790 = vpop.f32.mrf.mxu0
    %791 = vdwg.mxu0
    %792 = vmatpush.bf16.msra.mxu0 0
    %793 = vmatpush.bf16.msra.mxu0 0
    %794 = vmatpush.bf16.msra.mxu0 0
    %795 = vmatpush.bf16.msra.mxu0 0
    %796 = vmatpush.bf16.msra.mxu0 0
    %797 = vmatpush.bf16.msra.mxu0 0
    %798 = vmatpush.bf16.msra.mxu0 %v464
    %799 = vmatpush.bf16.msra.mxu0 %v432
    %800 = vmatmul.bf16.gmra.mxu0 %v543
    %v801 = vpop.f32.mrf.mxu0
    %v802 = vadd.f32 %v176, %v801
    %v803 = vpop.f32.mrf.mxu0
    %804 = vdwg.mxu0
    %805 = vmatpush.bf16.msra.mxu0 0
    %806 = vmatpush.bf16.msra.mxu0 0
    %807 = vmatpush.bf16.msra.mxu0 0
    %808 = vmatpush.bf16.msra.mxu0 0
    %809 = vmatpush.bf16.msra.mxu0 0
    %810 = vmatpush.bf16.msra.mxu0 0
    %811 = vmatpush.bf16.msra.mxu0 %v465
    %812 = vmatpush.bf16.msra.mxu0 %v433
    %813 = vmatmul.bf16.gmra.mxu0 %v543
    %v814 = vpop.f32.mrf.mxu0
    %v815 = vadd.f32 %v177, %v814
    %v816 = vpop.f32.mrf.mxu0
    %817 = vdwg.mxu0
    %818 = vmatpush.bf16.msra.mxu0 0
    %819 = vmatpush.bf16.msra.mxu0 0
    %820 = vmatpush.bf16.msra.mxu0 0
    %821 = vmatpush.bf16.msra.mxu0 0
    %822 = vmatpush.bf16.msra.mxu0 0
    %823 = vmatpush.bf16.msra.mxu0 0
    %824 = vmatpush.bf16.msra.mxu0 %v466
    %825 = vmatpush.bf16.msra.mxu0 %v434
    %826 = vmatmul.bf16.gmra.mxu0 %v543
    %v827 = vpop.f32.mrf.mxu0
    %v828 = vadd.f32 %v178, %v827
    %v829 = vpop.f32.mrf.mxu0
    %830 = vdwg.mxu0
    %831 = vmatpush.bf16.msra.mxu0 0
    %832 = vmatpush.bf16.msra.mxu0 0
    %833 = vmatpush.bf16.msra.mxu0 0
    %834 = vmatpush.bf16.msra.mxu0 0
    %835 = vmatpush.bf16.msra.mxu0 0
    %836 = vmatpush.bf16.msra.mxu0 0
    %837 = vmatpush.bf16.msra.mxu0 %v467
    %838 = vmatpush.bf16.msra.mxu0 %v435
    %839 = vmatmul.bf16.gmra.mxu0 %v543
    %v840 = vpop.f32.mrf.mxu0
    %v841 = vadd.f32 %v179, %v840
    %v842 = vpop.f32.mrf.mxu0
    %843 = vdwg.mxu0
    %844 = vmatpush.bf16.msra.mxu0 0
    %845 = vmatpush.bf16.msra.mxu0 0
    %846 = vmatpush.bf16.msra.mxu0 0
    %847 = vmatpush.bf16.msra.mxu0 0
    %848 = vmatpush.bf16.msra.mxu0 0
    %849 = vmatpush.bf16.msra.mxu0 0
    %850 = vmatpush.bf16.msra.mxu0 %v468
    %851 = vmatpush.bf16.msra.mxu0 %v436
    %852 = vmatmul.bf16.gmra.mxu0 %v543
    %v853 = vpop.f32.mrf.mxu0
    %v854 = vadd.f32 %v180, %v853
    %v855 = vpop.f32.mrf.mxu0
    %856 = vdwg.mxu0
    %857 = vmatpush.bf16.msra.mxu0 0
    %858 = vmatpush.bf16.msra.mxu0 0
    %859 = vmatpush.bf16.msra.mxu0 0
    %860 = vmatpush.bf16.msra.mxu0 0
    %861 = vmatpush.bf16.msra.mxu0 0
    %862 = vmatpush.bf16.msra.mxu0 0
    %863 = vmatpush.bf16.msra.mxu0 %v469
    %864 = vmatpush.bf16.msra.mxu0 %v437
    %865 = vmatmul.bf16.gmra.mxu0 %v543
    %v866 = vpop.f32.mrf.mxu0
    %v867 = vadd.f32 %v181, %v866
    %v868 = vpop.f32.mrf.mxu0
    %869 = vdwg.mxu0
    %870 = vmatpush.bf16.msra.mxu0 0
    %871 = vmatpush.bf16.msra.mxu0 0
    %872 = vmatpush.bf16.msra.mxu0 0
    %873 = vmatpush.bf16.msra.mxu0 0
    %874 = vmatpush.bf16.msra.mxu0 0
    %875 = vmatpush.bf16.msra.mxu0 0
    %876 = vmatpush.bf16.msra.mxu0 %v470
    %877 = vmatpush.bf16.msra.mxu0 %v438
    %878 = vmatmul.bf16.gmra.mxu0 %v543
    %v879 = vpop.f32.mrf.mxu0
    %v880 = vadd.f32 %v182, %v879
    %v881 = vpop.f32.mrf.mxu0
    %882 = vdwg.mxu0
    %883 = vmatpush.bf16.msra.mxu0 0
    %884 = vmatpush.bf16.msra.mxu0 0
    %885 = vmatpush.bf16.msra.mxu0 0
    %886 = vmatpush.bf16.msra.mxu0 0
    %887 = vmatpush.bf16.msra.mxu0 0
    %888 = vmatpush.bf16.msra.mxu0 0
    %889 = vmatpush.bf16.msra.mxu0 %v471
    %890 = vmatpush.bf16.msra.mxu0 %v439
    %891 = vmatmul.bf16.gmra.mxu0 %v543
    %v892 = vpop.f32.mrf.mxu0
    %v893 = vadd.f32 %v183, %v892
    %v894 = vpop.f32.mrf.mxu0
    %895 = vdwg.mxu0
    %896 = vmatpush.bf16.msra.mxu0 0
    %897 = vmatpush.bf16.msra.mxu0 0
    %898 = vmatpush.bf16.msra.mxu0 0
    %899 = vmatpush.bf16.msra.mxu0 0
    %900 = vmatpush.bf16.msra.mxu0 0
    %901 = vmatpush.bf16.msra.mxu0 0
    %902 = vmatpush.bf16.msra.mxu0 %v472
    %903 = vmatpush.bf16.msra.mxu0 %v440
    %904 = vmatmul.bf16.gmra.mxu0 %v543
    %v905 = vpop.f32.mrf.mxu0
    %v906 = vadd.f32 %v184, %v905
    %v907 = vpop.f32.mrf.mxu0
    %908 = vdwg.mxu0
    %909 = vmatpush.bf16.msra.mxu0 0
    %910 = vmatpush.bf16.msra.mxu0 0
    %911 = vmatpush.bf16.msra.mxu0 0
    %912 = vmatpush.bf16.msra.mxu0 0
    %913 = vmatpush.bf16.msra.mxu0 0
    %914 = vmatpush.bf16.msra.mxu0 0
    %915 = vmatpush.bf16.msra.mxu0 %v473
    %916 = vmatpush.bf16.msra.mxu0 %v441
    %917 = vmatmul.bf16.gmra.mxu0 %v543
    %v918 = vpop.f32.mrf.mxu0
    %v919 = vadd.f32 %v185, %v918
    %v920 = vpop.f32.mrf.mxu0
    %921 = vdwg.mxu0
    %922 = vmatpush.bf16.msra.mxu0 0
    %923 = vmatpush.bf16.msra.mxu0 0
    %924 = vmatpush.bf16.msra.mxu0 0
    %925 = vmatpush.bf16.msra.mxu0 0
    %926 = vmatpush.bf16.msra.mxu0 0
    %927 = vmatpush.bf16.msra.mxu0 0
    %928 = vmatpush.bf16.msra.mxu0 %v474
    %929 = vmatpush.bf16.msra.mxu0 %v442
    %930 = vmatmul.bf16.gmra.mxu0 %v543
    %v931 = vpop.f32.mrf.mxu0
    %v932 = vadd.f32 %v186, %v931
    %v933 = vpop.f32.mrf.mxu0
    %934 = vdwg.mxu0
    %935 = vmatpush.bf16.msra.mxu0 0
    %936 = vmatpush.bf16.msra.mxu0 0
    %937 = vmatpush.bf16.msra.mxu0 0
    %938 = vmatpush.bf16.msra.mxu0 0
    %939 = vmatpush.bf16.msra.mxu0 0
    %940 = vmatpush.bf16.msra.mxu0 0
    %941 = vmatpush.bf16.msra.mxu0 %v475
    %942 = vmatpush.bf16.msra.mxu0 %v443
    %943 = vmatmul.bf16.gmra.mxu0 %v543
    %v944 = vpop.f32.mrf.mxu0
    %v945 = vadd.f32 %v187, %v944
    %v946 = vpop.f32.mrf.mxu0
    %947 = vdwg.mxu0
    %948 = vmatpush.bf16.msra.mxu0 0
    %949 = vmatpush.bf16.msra.mxu0 0
    %950 = vmatpush.bf16.msra.mxu0 0
    %951 = vmatpush.bf16.msra.mxu0 0
    %952 = vmatpush.bf16.msra.mxu0 0
    %953 = vmatpush.bf16.msra.mxu0 0
    %954 = vmatpush.bf16.msra.mxu0 %v476
    %955 = vmatpush.bf16.msra.mxu0 %v444
    %956 = vmatmul.bf16.gmra.mxu0 %v543
    %v957 = vpop.f32.mrf.mxu0
    %v958 = vadd.f32 %v188, %v957
    %v959 = vpop.f32.mrf.mxu0
    %960 = vdwg.mxu0
    %v961 = vmul.f32 %v555, 0.2
    %v962 = vmul.f32 %v568, 0.2
    %v963 = vmul.f32 %v581, 0.2
    %v964 = vmul.f32 %v594, 0.2
    %v965 = vmul.f32 %v607, 0.2
    %v966 = vmul.f32 %v620, 0.2
    %v967 = vmul.f32 %v633, 0.2
    %v968 = vmul.f32 %v646, 0.2
    %v969 = vmul.f32 %v659, 0.2
    %v970 = vmul.f32 %v672, 0.2
    %v971 = vmul.f32 %v685, 0.2
    %v972 = vmul.f32 %v698, 0.2
    %v973 = vmul.f32 %v711, 0.2
    %v974 = vmul.f32 %v724, 0.2
    %v975 = vmul.f32 %v737, 0.2
    %v976 = vmul.f32 %v750, 0.2
    %v977 = vmul.f32 %v763, 0.2
    %v978 = vmul.f32 %v776, 0.2
    %v979 = vmul.f32 %v789, 0.2
    %v980 = vmul.f32 %v802, 0.2
    %v981 = vmul.f32 %v815, 0.2
    %v982 = vmul.f32 %v828, 0.2
    %v983 = vmul.f32 %v841, 0.2
    %v984 = vmul.f32 %v854, 0.2
    %v985 = vmul.f32 %v867, 0.2
    %v986 = vmul.f32 %v880, 0.2
    %v987 = vmul.f32 %v893, 0.2
    %v988 = vmul.f32 %v906, 0.2
    %v989 = vmul.f32 %v919, 0.2
    %v990 = vmul.f32 %v932, 0.2
    %v991 = vmul.f32 %v945, 0.2
    %v992 = vmul.f32 %v958, 0.2
    %v993 = vmax.f32 %v555, %v961
    %v994 = vmax.f32 %v568, %v962
    %v995 = vmax.f32 %v581, %v963
    %v996 = vmax.f32 %v594, %v964
    %v997 = vmax.f32 %v607, %v965
    %v998 = vmax.f32 %v620, %v966
    %v999 = vmax.f32 %v633, %v967
    %v1000 = vmax.f32 %v646, %v968
    %v1001 = vmax.f32 %v659, %v969
    %v1002 = vmax.f32 %v672, %v970
    %v1003 = vmax.f32 %v685, %v971
    %v1004 = vmax.f32 %v698, %v972
    %v1005 = vmax.f32 %v711, %v973
    %v1006 = vmax.f32 %v724, %v974
    %v1007 = vmax.f32 %v737, %v975
    %v1008 = vmax.f32 %v750, %v976
    %v1009 = vmax.f32 %v763, %v977
    %v1010 = vmax.f32 %v776, %v978
    %v1011 = vmax.f32 %v789, %v979
    %v1012 = vmax.f32 %v802, %v980
    %v1013 = vmax.f32 %v815, %v981
    %v1014 = vmax.f32 %v828, %v982
    %v1015 = vmax.f32 %v841, %v983
    %v1016 = vmax.f32 %v854, %v984
    %v1017 = vmax.f32 %v867, %v985
    %v1018 = vmax.f32 %v880, %v986
    %v1019 = vmax.f32 %v893, %v987
    %v1020 = vmax.f32 %v906, %v988
    %v1021 = vmax.f32 %v919, %v989
    %v1022 = vmax.f32 %v932, %v990
    %v1023 = vmax.f32 %v945, %v991
    %v1024 = vmax.f32 %v958, %v992
    %v1025 = vmul.f32 %v993, %v993
    %v1026 = vmul.f32 %v994, %v994
    %v1027 = vmul.f32 %v995, %v995
    %v1028 = vmul.f32 %v996, %v996
    %v1029 = vmul.f32 %v997, %v997
    %v1030 = vmul.f32 %v998, %v998
    %v1031 = vmul.f32 %v999, %v999
    %v1032 = vmul.f32 %v1000, %v1000
    %v1033 = vmul.f32 %v1001, %v1001
    %v1034 = vmul.f32 %v1002, %v1002
    %v1035 = vmul.f32 %v1003, %v1003
    %v1036 = vmul.f32 %v1004, %v1004
    %v1037 = vmul.f32 %v1005, %v1005
    %v1038 = vmul.f32 %v1006, %v1006
    %v1039 = vmul.f32 %v1007, %v1007
    %v1040 = vmul.f32 %v1008, %v1008
    %v1041 = vmul.f32 %v1009, %v1009
    %v1042 = vmul.f32 %v1010, %v1010
    %v1043 = vmul.f32 %v1011, %v1011
    %v1044 = vmul.f32 %v1012, %v1012
    %v1045 = vmul.f32 %v1013, %v1013
    %v1046 = vmul.f32 %v1014, %v1014
    %v1047 = vmul.f32 %v1015, %v1015
    %v1048 = vmul.f32 %v1016, %v1016
    %v1049 = vmul.f32 %v1017, %v1017
    %v1050 = vmul.f32 %v1018, %v1018
    %v1051 = vmul.f32 %v1019, %v1019
    %v1052 = vmul.f32 %v1020, %v1020
    %v1053 = vmul.f32 %v1021, %v1021
    %v1054 = vmul.f32 %v1022, %v1022
    %v1055 = vmul.f32 %v1023, %v1023
    %v1056 = vmul.f32 %v1024, %v1024
    %vm1057 = vcmask 1041408
    %v1058 = vsel %vm1057, %v1025, 0.0
    %v1059 = vsel %vm1057, %v1026, 0.0
    %v1060 = vadd.f32 %v1058, %v1059
    %v1061 = vsel %vm1057, %v1027, 0.0
    %v1062 = vadd.f32 %v1060, %v1061
    %v1063 = vsel %vm1057, %v1028, 0.0
    %v1064 = vadd.f32 %v1062, %v1063
    %v1065 = vsel %vm1057, %v1029, 0.0
    %v1066 = vadd.f32 %v1064, %v1065
    %v1067 = vsel %vm1057, %v1030, 0.0
    %v1068 = vadd.f32 %v1066, %v1067
    %v1069 = vsel %vm1057, %v1031, 0.0
    %v1070 = vadd.f32 %v1068, %v1069
    %v1071 = vsel %vm1057, %v1032, 0.0
    %v1072 = vadd.f32 %v1070, %v1071
    %v1073 = vsel %vm1057, %v1033, 0.0
    %v1074 = vadd.f32 %v1072, %v1073
    %v1075 = vsel %vm1057, %v1034, 0.0
    %v1076 = vadd.f32 %v1074, %v1075
    %v1077 = vsel %vm1057, %v1035, 0.0
    %v1078 = vadd.f32 %v1076, %v1077
    %v1079 = vsel %vm1057, %v1036, 0.0
    %v1080 = vadd.f32 %v1078, %v1079
    %v1081 = vsel %vm1057, %v1037, 0.0
    %v1082 = vadd.f32 %v1080, %v1081
    %v1083 = vsel %vm1057, %v1038, 0.0
    %v1084 = vadd.f32 %v1082, %v1083
    %v1085 = vsel %vm1057, %v1039, 0.0
    %v1086 = vadd.f32 %v1084, %v1085
    %v1087 = vsel %vm1057, %v1040, 0.0
    %v1088 = vadd.f32 %v1086, %v1087
    %v1089 = vsel %vm1057, %v1041, 0.0
    %v1090 = vadd.f32 %v1088, %v1089
    %v1091 = vsel %vm1057, %v1042, 0.0
    %v1092 = vadd.f32 %v1090, %v1091
    %v1093 = vsel %vm1057, %v1043, 0.0
    %v1094 = vadd.f32 %v1092, %v1093
    %v1095 = vsel %vm1057, %v1044, 0.0
    %v1096 = vadd.f32 %v1094, %v1095
    %v1097 = vsel %vm1057, %v1045, 0.0
    %v1098 = vadd.f32 %v1096, %v1097
    %v1099 = vsel %vm1057, %v1046, 0.0
    %v1100 = vadd.f32 %v1098, %v1099
    %v1101 = vsel %vm1057, %v1047, 0.0
    %v1102 = vadd.f32 %v1100, %v1101
    %v1103 = vsel %vm1057, %v1048, 0.0
    %v1104 = vadd.f32 %v1102, %v1103
    %v1105 = vsel %vm1057, %v1049, 0.0
    %v1106 = vadd.f32 %v1104, %v1105
    %v1107 = vsel %vm1057, %v1050, 0.0
    %v1108 = vadd.f32 %v1106, %v1107
    %v1109 = vsel %vm1057, %v1051, 0.0
    %v1110 = vadd.f32 %v1108, %v1109
    %v1111 = vsel %vm1057, %v1052, 0.0
    %v1112 = vadd.f32 %v1110, %v1111
    %v1113 = vsel %vm1057, %v1053, 0.0
    %v1114 = vadd.f32 %v1112, %v1113
    %v1115 = vsel %vm1057, %v1054, 0.0
    %v1116 = vadd.f32 %v1114, %v1115
    %v1117 = vsel %vm1057, %v1055, 0.0
    %v1118 = vadd.f32 %v1116, %v1117
    %v1119 = vsel %vm1057, %v1056, 0.0
    %v1120 = vadd.f32 %v1118, %v1119
    %1121 = vadd.xlane.f32.xlu0 %v1120
    %v1122 = vpop.xlane.xlu0 %1121
    %v1123 = vrcp.pop 4096.0
    %v1124 = vmul.f32 4096.0, %v1123
    %v1125 = vsub.f32 1.0, %v1124
    %v1126 = vmul.f32 %v1123, %v1125
    %v1127 = vadd.f32 %v1123, %v1126
    %vm1128 = vweird.f32 %v1123
    %v1129 = vsel %vm1128, %v1123, %v1127
    %v1130 = vmul.f32 %v1122, %v1129
    %v1131 = vadd.f32 %v1130, 1e-08
    %v1132 = vrsqrt.pop %v1131
    %v1133 = vmul.f32 %v1132, %v1131
    %v1134 = vmul.f32 %v1133, %v1132
    %v1135 = vmul.f32 0.5, %v1134
    %v1136 = vsub.f32 1.5, %v1135
    %v1137 = vmul.f32 %v1132, %v1136
    %vm1138 = vweird.f32 %v1131
    %vm1139 = vweird.f32 %v1132
    %vm1140 = vmor %vm1138, %vm1139
    %v1141 = vsel %vm1140, %v1132, %v1137
    %v1142 = vmul.f32 %v993, %v1141
    %v1143 = vmul.f32 %v994, %v1141
    %v1144 = vmul.f32 %v995, %v1141
    %v1145 = vmul.f32 %v996, %v1141
    %v1146 = vmul.f32 %v997, %v1141
    %v1147 = vmul.f32 %v998, %v1141
    %v1148 = vmul.f32 %v999, %v1141
    %v1149 = vmul.f32 %v1000, %v1141
    %v1150 = vmul.f32 %v1001, %v1141
    %v1151 = vmul.f32 %v1002, %v1141
    %v1152 = vmul.f32 %v1003, %v1141
    %v1153 = vmul.f32 %v1004, %v1141
    %v1154 = vmul.f32 %v1005, %v1141
    %v1155 = vmul.f32 %v1006, %v1141
    %v1156 = vmul.f32 %v1007, %v1141
    %v1157 = vmul.f32 %v1008, %v1141
    %v1158 = vmul.f32 %v1009, %v1141
    %v1159 = vmul.f32 %v1010, %v1141
    %v1160 = vmul.f32 %v1011, %v1141
    %v1161 = vmul.f32 %v1012, %v1141
    %v1162 = vmul.f32 %v1013, %v1141
    %v1163 = vmul.f32 %v1014, %v1141
    %v1164 = vmul.f32 %v1015, %v1141
    %v1165 = vmul.f32 %v1016, %v1141
    %v1166 = vmul.f32 %v1017, %v1141
    %v1167 = vmul.f32 %v1018, %v1141
    %v1168 = vmul.f32 %v1019, %v1141
    %v1169 = vmul.f32 %v1020, %v1141
    %v1170 = vmul.f32 %v1021, %v1141
    %v1171 = vmul.f32 %v1022, %v1141
    %v1172 = vmul.f32 %v1023, %v1141
    %v1173 = vmul.f32 %v1024, %v1141
    %v1174 = vpack.c.bf16 %v1143, %v1142
    %v1175 = vpack.c.bf16 %v1145, %v1144
    %v1176 = vpack.c.bf16 %v1147, %v1146
    %v1177 = vpack.c.bf16 %v1149, %v1148
    %v1178 = vpack.c.bf16 %v1151, %v1150
    %v1179 = vpack.c.bf16 %v1153, %v1152
    %v1180 = vpack.c.bf16 %v1155, %v1154
    %v1181 = vpack.c.bf16 %v1157, %v1156
    %v1182 = vpack.c.bf16 %v1159, %v1158
    %v1183 = vpack.c.bf16 %v1161, %v1160
    %v1184 = vpack.c.bf16 %v1163, %v1162
    %v1185 = vpack.c.bf16 %v1165, %v1164
    %v1186 = vpack.c.bf16 %v1167, %v1166
    %v1187 = vpack.c.bf16 %v1169, %v1168
    %v1188 = vpack.c.bf16 %v1171, %v1170
    %v1189 = vpack.c.bf16 %v1173, %v1172
    %v1206 = vrot.slane %v1174, 3
    %v1207 = vrot.slane %v1175, 6
    %v1208 = vrot.slane %v1175, 1
    %v1209 = vrot.slane %v1176, 4
    %v1210 = vrot.slane %v1176, 7
    %v1211 = vrot.slane %v1177, 2
    %v1212 = vrot.slane %v1177, 5
    %v1213 = vrot.slane %v1178, 3
    %v1214 = vrot.slane %v1179, 6
    %v1215 = vrot.slane %v1179, 1
    %v1216 = vrot.slane %v1180, 4
    %v1217 = vrot.slane %v1180, 7
    %v1218 = vrot.slane %v1181, 2
    %v1219 = vrot.slane %v1181, 5
    %v1220 = vrot.slane %v1182, 3
    %v1221 = vrot.slane %v1183, 6
    %v1222 = vrot.slane %v1183, 1
    %v1223 = vrot.slane %v1184, 4
    %v1224 = vrot.slane %v1184, 7
    %v1225 = vrot.slane %v1185, 2
    %v1226 = vrot.slane %v1185, 5
    %v1227 = vrot.slane %v1186, 3
    %v1228 = vrot.slane %v1187, 6
    %v1229 = vrot.slane %v1187, 1
    %v1230 = vrot.slane %v1188, 4
    %v1231 = vrot.slane %v1188, 7
    %v1232 = vrot.slane %v1189, 2
    %v1233 = vrot.slane %v1189, 5
    %vm1234 = vcmask 1040384
    %v1237 = vsel %vm1234, %v1174, %v1206
    %vm1238 = vcmask 1042434
    %v1241 = vsel %vm1238, %v1207, %v1208
    %v1242 = vsel %vm1057, %v1237, %v1241
    %vm1243 = vcmask 1044484
    %v1246 = vsel %vm1243, %v1209, %v1210
    %vm1247 = vcmask 1046534
    %v1250 = vsel %vm1247, %v1211, %v1212
    %vm1251 = vcmask 1045508
    %v1252 = vsel %vm1251, %v1246, %v1250
    %vm1253 = vcmask 1043456
    %v1254 = vsel %vm1253, %v1242, %v1252
    %v1257 = vsel %vm1234, %v1178, %v1213
    %v1260 = vsel %vm1238, %v1214, %v1215
    %v1261 = vsel %vm1057, %v1257, %v1260
    %v1264 = vsel %vm1243, %v1216, %v1217
    %v1267 = vsel %vm1247, %v1218, %v1219
    %v1268 = vsel %vm1251, %v1264, %v1267
    %v1269 = vsel %vm1253, %v1261, %v1268
    %v1272 = vsel %vm1234, %v1182, %v1220
    %v1275 = vsel %vm1238, %v1221, %v1222
    %v1276 = vsel %vm1057, %v1272, %v1275
    %v1279 = vsel %vm1243, %v1223, %v1224
    %v1282 = vsel %vm1247, %v1225, %v1226
    %v1283 = vsel %vm1251, %v1279, %v1282
    %v1284 = vsel %vm1253, %v1276, %v1283
    %v1287 = vsel %vm1234, %v1186, %v1227
    %v1290 = vsel %vm1238, %v1228, %v1229
    %v1291 = vsel %vm1057, %v1287, %v1290
    %v1294 = vsel %vm1243, %v1230, %v1231
    %v1297 = vsel %vm1247, %v1232, %v1233
    %v1298 = vsel %vm1251, %v1294, %v1297
    %v1299 = vsel %vm1253, %v1291, %v1298
    %1304 = vst [vmem:[%s3] sm:$0xff] %v1254
    %1305 = vst [vmem:[%s3 + $0x8] sm:$0xff] %v1269
    %1306 = vst [vmem:[%s3 + $0x10] sm:$0xff] %v1284
    %1307 = vst [vmem:[%s3 + $0x18] sm:$0xff] %v1299
    // Predicated region
    $region26: #{generator_forward.3} parent=1 // pred_check
      _
    $region27: #{generator_forward.3} parent=1 // pred_check_branch
      %1309 = sbr.rel (0) target = $region29
    $region28: #{generator_forward.3} parent=1 // pred_region
      _
    $region29: #{generator_forward.3} parent=1 // pred_fallthru
      _
    // Predicated region
    $region30: #{generator_forward.3} parent=1 // pred_check
      _
    $region31: #{generator_forward.3} parent=1 // pred_check_branch
      %1311 = sbr.rel (0) target = $region33
    $region32: #{generator_forward.3} parent=1 // pred_region
      _
    $region33: #{generator_forward.3} parent=1 // pred_fallthru
      _
    %1312 = vsyncpa [#allocation3], 1
    %1313 = vsyncpa [#allocation5], 1

// kernel: generator_forward.4
$region0: #{generator_forward.4}
  #allocation0 [shape = 'u32[]', space=smem, size = 0x4, offset = 0x4, fixed_abs, tag = 'smem constant byte address 0x4 - core index']
  #allocation1 [shape = 'u32[72,128]{1,0:T(1,128)}', space=vmem, size = 0x9000, scoped, tag = 'internal scratch']
  %s0 = inlined_call_operand.vmem [shape: bf16[2,42,256], index: 0, kind: input, shape index: {}]
  %s1 = inlined_call_operand.hbm [shape: bf16[9,256,512], index: 1, kind: input, shape index: {}]
  %s2 = inlined_call_operand.hbm [shape: f32[1,512], index: 2, kind: input, shape index: {}]
  %s3 = inlined_call_operand.vmem [shape: bf16[2,24,512], index: 3, kind: output, shape index: {}]
  %s4 = sld [smem:[#allocation0]]
  $region53: #{generator_forward.4} parent=0
    _
  %s6 = ssub.s32 1, %s4
  %s7 = scalar_select 0, %s6, %s4
  $region1: #{generator_forward.4} parent=0
    #allocation2 [shape = 'u8[2359296]{0}', space=vmem, size = 0x240000, scoped, tag = 'input window, operand 1, single buffered']
    #allocation3 [shape = 's32[2]{0}', space=sflag, size = 0x8, scoped, tag = 'scoped memory for generator_forward.4']
    #allocation4 [shape = 'u8[2048]{0}', space=vmem, size = 0x800, scoped, tag = 'input window, operand 2, single buffered']
    #allocation5 [shape = 's32[1]{0}', space=sflag, size = 0x4, scoped, tag = 'scoped memory for generator_forward.4']
    %8 = vsyncpa [#allocation3], 0
    %9 = vsyncpa [#allocation5], 0
    loop: start=0, step=1, limit=4
    $region2: #{generator_forward.4} parent=1 // loop_pre_header
      _
    $region3: #{generator_forward.4} parent=1 // loop_header
      %s11 = sphi 0, %s15
      %p12 = scmp.ge.s32.totalorder %s11, 4
      %s21 = sphi 0, %s23
      %s24 = sphi 0, %s21
      %s25 = sphi 0, %s24
      %s41 = sphi 0, %s25
      %s45 = sphi 0, %s45
      %s47 = sphi 0, %s45
      %s48 = sphi 0, %s47
      %s62 = sphi 0, %s48
      %s66 = sphi 0, %s66
      %s68 = sphi 0, %s66
      %s69 = sphi 0, %s68
      %s83 = sphi 0, %s69
      %s89 = sphi 0, %s91
      %s92 = sphi 0, %s89
      %s93 = sphi 0, %s92
      %s109 = sphi 0, %s93
    $region4: #{generator_forward.4} parent=1 // loop_header_branch
      %14 = sbr.rel (%p12) target = $region8
    $region5: #{generator_forward.4} parent=1 // loop_body
      %s16 = ssub.s32 %s11, 1
      %s17 = ssub.s32 %s11, 2
      %s18 = sadd.s32 %s11, 1
      %s19 = ssub.s32 %s11, %s18
      %p20 = scmp.eq.s32.totalorder %s19, 0
      %s22 = sadd.s32 %s21, 1
      %s23 = scalar_select %p20, %s21, %s22
      %p26 = pneg %p20
      %p27 = scmp.eq.s32.totalorder %s11, 1
      %p28 = por %p26, %p27
      %p29 = scmp.ne.s32.totalorder %s21, %s24
      %p30 = scmp.eq.s32.totalorder %s11, 0
      %p31 = por %p29, %p30
      %p32 = scmp.ne.s32.totalorder %s21, %s24
      %p33 = scmp.eq.s32.totalorder %s16, 1
      %p34 = por %p32, %p33
      %p35 = scmp.ne.s32.totalorder %s24, %s25
      %p36 = scmp.eq.s32.totalorder %s16, 0
      %p37 = por %p35, %p36
      %p38 = scmp.ne.s32.totalorder %s24, %s25
      %p39 = scmp.eq.s32.totalorder %s17, 1
      %p40 = por %p38, %p39
      %p42 = scmp.ne.s32.totalorder %s25, %s41
      %p43 = scmp.eq.s32.totalorder %s17, 0
      %p44 = por %p42, %p43
      %s46 = sadd.s32 %s45, 1
      %p49 = scmp.eq.s32.totalorder %s11, 1
      %p50 = scmp.ne.s32.totalorder %s45, %s47
      %p51 = scmp.eq.s32.totalorder %s11, 0
      %p52 = por %p50, %p51
      %p53 = scmp.ne.s32.totalorder %s45, %s47
      %p54 = scmp.eq.s32.totalorder %s16, 1
      %p55 = por %p53, %p54
      %p56 = scmp.ne.s32.totalorder %s47, %s48
      %p57 = scmp.eq.s32.totalorder %s16, 0
      %p58 = por %p56, %p57
      %p59 = scmp.ne.s32.totalorder %s47, %s48
      %p60 = scmp.eq.s32.totalorder %s17, 1
      %p61 = por %p59, %p60
      %p63 = scmp.ne.s32.totalorder %s48, %s62
      %p64 = scmp.eq.s32.totalorder %s17, 0
      %p65 = por %p63, %p64
      %s67 = sadd.s32 %s66, 1
      %p70 = scmp.eq.s32.totalorder %s11, 1
      %p71 = scmp.ne.s32.totalorder %s66, %s68
      %p72 = scmp.eq.s32.totalorder %s11, 0
      %p73 = por %p71, %p72
      %p74 = scmp.ne.s32.totalorder %s66, %s68
      %p75 = scmp.eq.s32.totalorder %s16, 1
      %p76 = por %p74, %p75
      %p77 = scmp.ne.s32.totalorder %s68, %s69
      %p78 = scmp.eq.s32.totalorder %s16, 0
      %p79 = por %p77, %p78
      %p80 = scmp.ne.s32.totalorder %s68, %s69
      %p81 = scmp.eq.s32.totalorder %s17, 1
      %p82 = por %p80, %p81
      %p84 = scmp.ne.s32.totalorder %s69, %s83
      %p85 = scmp.eq.s32.totalorder %s17, 0
      %p86 = por %p84, %p85
      %s87 = ssub.s32 %s11, %s18
      %p88 = scmp.eq.s32.totalorder %s87, 0
      %s90 = sadd.s32 %s89, 1
      %s91 = scalar_select %p88, %s89, %s90
      %p94 = pneg %p88
      %p95 = scmp.eq.s32.totalorder %s11, 1
      %p96 = por %p94, %p95
      %p97 = scmp.ne.s32.totalorder %s89, %s92
      %p98 = scmp.eq.s32.totalorder %s11, 0
      %p99 = por %p97, %p98
      %p100 = scmp.ne.s32.totalorder %s89, %s92
      %p101 = scmp.eq.s32.totalorder %s16, 1
      %p102 = por %p100, %p101
      %p103 = scmp.ne.s32.totalorder %s92, %s93
      %p104 = scmp.eq.s32.totalorder %s16, 0
      %p105 = por %p103, %p104
      %p106 = scmp.ne.s32.totalorder %s92, %s93
      %p107 = scmp.eq.s32.totalorder %s17, 1
      %p108 = por %p106, %p107
      %p110 = scmp.ne.s32.totalorder %s93, %s109
      %p111 = scmp.eq.s32.totalorder %s17, 0
      %p112 = por %p110, %p111
      %p113 = scmp.le.s32.totalorder 1, %s11
      %p114 = scmp.lt.s32.totalorder %s11, 3
      %p115 = pnand %p113, %p114
      %p116 = pneg %p115
      // Predicated region
      $region9: #{generator_forward.4} parent=5 // pred_check
        _
      $region10: #{generator_forward.4} parent=5 // pred_check_branch
        %118 = sbr.rel (%p115) target = $region12
      $region11: #{generator_forward.4} parent=5 // pred_region
        %s119 = ssub.s32 %s11, 1
        // Predicated region
        $region13: #{generator_forward.4} parent=11 // pred_check
          %p120 = pneg %p58
        $region14: #{generator_forward.4} parent=11 // pred_check_branch
          %122 = sbr.rel (%p120) target = $region16
        $region15: #{generator_forward.4} parent=11 // pred_region
          %124 = vsyncadd [#allocation3], 0
          %s125 = sshll.u32 %s1, 4
          %s126 = int_to_ptr.hbm [resolvable:$true] %s125
          %s127 = sshll.u32 [#allocation2], 4
          %s128 = int_to_ptr.vmem [resolvable:$true] %s127
          %133 = dma.hbm_to_vmem [thread:$0]  %s126, 73728, %s128, [#allocation3], 256, 256, 16
        $region16: #{generator_forward.4} parent=11 // pred_fallthru
          _
        // Predicated region
        $region17: #{generator_forward.4} parent=11 // pred_check
          %p134 = pneg %p79
        $region18: #{generator_forward.4} parent=11 // pred_check_branch
          %136 = sbr.rel (%p134) target = $region20
        $region19: #{generator_forward.4} parent=11 // pred_region
          %138 = vsyncadd [#allocation5], 0
          %s140 = sshll.u32 %s2, 4
          %s141 = int_to_ptr.hbm [resolvable:$true] %s140
          %s142 = sshll.u32 [#allocation4], 4
          %s143 = int_to_ptr.vmem [resolvable:$true] %s142
          %145 = dma.hbm_to_vmem [thread:$0]  %s141, 64, %s143, [#allocation5]
        $region20: #{generator_forward.4} parent=11 // pred_fallthru
          _
      $region12: #{generator_forward.4} parent=5 // pred_fallthru
        _
      %p146 = scmp.lt.s32.totalorder %s11, 2
      // Predicated region
      $region21: #{generator_forward.4} parent=5 // pred_check
        %p147 = pneg %p146
      $region22: #{generator_forward.4} parent=5 // pred_check_branch
        %149 = sbr.rel (%p147) target = $region24
      $region23: #{generator_forward.4} parent=5 // pred_region
        // Predicated region
        $region25: #{generator_forward.4} parent=23 // pred_check
          %p150 = pneg %p31
        $region26: #{generator_forward.4} parent=23 // pred_check_branch
          %152 = sbr.rel (%p150) target = $region28
        $region27: #{generator_forward.4} parent=23 // pred_region
          %p153 = scmp.lt.s32.totalorder %s11, 1
          %s154 = scalar_select %p153, %s11, 1
          %s155 = smul.addr %s154, 12
          %s156 = smul.addr %s155, 4
          %s157 = scalar_lea.vmem %s0, %s156
        $region28: #{generator_forward.4} parent=23 // pred_fallthru
          _
      $region24: #{generator_forward.4} parent=5 // pred_fallthru
        _
      %p158 = scmp.le.s32.totalorder 1, %s11
      %p159 = scmp.lt.s32.totalorder %s11, 3
      %p160 = pnand %p158, %p159
      %p161 = pneg %p160
      // Predicated region
      $region29: #{generator_forward.4} parent=5 // pred_check
        _
      $region30: #{generator_forward.4} parent=5 // pred_check_branch
        %163 = sbr.rel (%p160) target = $region32
      $region31: #{generator_forward.4} parent=5 // pred_region
        %s164 = ssub.s32 %s11, 1
        // Predicated region
        $region33: #{generator_forward.4} parent=31 // pred_check
          %p165 = pneg %p58
        $region34: #{generator_forward.4} parent=31 // pred_check_branch
          %167 = sbr.rel (%p165) target = $region36
        $region35: #{generator_forward.4} parent=31 // pred_region
          %169 = dma.done [#allocation3], 73728
        $region36: #{generator_forward.4} parent=31 // pred_fallthru
          _
        // Predicated region
        $region37: #{generator_forward.4} parent=31 // pred_check
          %p170 = pneg %p79
        $region38: #{generator_forward.4} parent=31 // pred_check_branch
          %172 = sbr.rel (%p170) target = $region40
        $region39: #{generator_forward.4} parent=31 // pred_region
          %174 = dma.done [#allocation5], 64
        $region40: #{generator_forward.4} parent=31 // pred_fallthru
          _
        %p175 = scmp.lt.s32.totalorder %s16, 1
        %s176 = scalar_select %p175, %s16, 1
        %s177 = smul.addr %s176, 12
        %s178 = smul.addr %s177, 4
        %s179 = scalar_lea.vmem %s0, %s178
        %p180 = pneg %p37
        %p181 = pneg %p34
        %p182 = pneg %p58
        %p183 = pneg %p55
        %p184 = pneg %p79
        %p185 = pneg %p76
        %p186 = pneg %p105
        %p187 = pneg %p102
        %p188 = scmp.lt.s32.totalorder %s16, 1
        %s189 = scalar_select %p188, %s16, 1
        %s190 = smul.addr %s189, 12
        %s191 = smul.addr %s190, 4
        %s192 = scalar_lea.vmem %s3, %s191
        %p193 = scmp.lt.s32.totalorder %s16, 1
        %s194 = scalar_select %p193, %s16, 1
        %s195 = smul.addr %s194, 12
        %s196 = smul.addr %s195, 4
        %s197 = scalar_lea.vmem %s0, %s196
        %p198 = scmp.lt.s32.totalorder %s16, 1
        %s199 = scalar_select %p198, %s16, 1
        %s200 = smul.addr %s199, 12
        %s201 = smul.addr %s200, 4
        %s202 = scalar_lea.vmem %s3, %s201
        %v203 = vld [vmem:[%s197] sm:$0xff]
        %v204 = vld [vmem:[%s197 + $0x8] sm:$0xff]
        %v205 = vld [vmem:[%s197 + $0x10] sm:$0xff]
        %v206 = vld [vmem:[#allocation2] sm:$0xff]
        %v207 = vld [vmem:[#allocation2 + $0x8] sm:$0xff]
        %v208 = vld [vmem:[#allocation2 + $0x10] sm:$0xff]
        %v209 = vld [vmem:[#allocation2 + $0x18] sm:$0xff]
        %v210 = vld [vmem:[#allocation2 + $0x20] sm:$0xff]
        %v211 = vld [vmem:[#allocation2 + $0x28] sm:$0xff]
        %v212 = vld [vmem:[#allocation2 + $0x30] sm:$0xff]
        %v213 = vld [vmem:[#allocation2 + $0x38] sm:$0xff]
        %v214 = vld [vmem:[#allocation2 + $0x40] sm:$0xff]
        %v215 = vld [vmem:[#allocation2 + $0x48] sm:$0xff]
        %v216 = vld [vmem:[#allocation2 + $0x50] sm:$0xff]
        %v217 = vld [vmem:[#allocation2 + $0x58] sm:$0xff]
        %v218 = vld [vmem:[#allocation2 + $0x60] sm:$0xff]
        %v219 = vld [vmem:[#allocation2 + $0x68] sm:$0xff]
        %v220 = vld [vmem:[#allocation2 + $0x70] sm:$0xff]
        %v221 = vld [vmem:[#allocation2 + $0x78] sm:$0xff]
        %v222 = vld [vmem:[#allocation2 + $0x80] sm:$0xff]
        %v223 = vld [vmem:[#allocation2 + $0x88] sm:$0xff]
        %v224 = vld [vmem:[#allocation2 + $0x90] sm:$0xff]
        %v225 = vld [vmem:[#allocation2 + $0x98] sm:$0xff]
        %v226 = vld [vmem:[#allocation2 + $0xa0] sm:$0xff]
        %v227 = vld [vmem:[#allocation2 + $0xa8] sm:$0xff]
        %v228 = vld [vmem:[#allocation2 + $0xb0] sm:$0xff]
        %v229 = vld [vmem:[#allocation2 + $0xb8] sm:$0xff]
        %v230 = vld [vmem:[#allocation2 + $0xc0] sm:$0xff]
        %v231 = vld [vmem:[#allocation2 + $0xc8] sm:$0xff]
        %v232 = vld [vmem:[#allocation2 + $0xd0] sm:$0xff]
        %v233 = vld [vmem:[#allocation2 + $0xd8] sm:$0xff]
        %v234 = vld [vmem:[#allocation2 + $0xe0] sm:$0xff]
        %v235 = vld [vmem:[#allocation2 + $0xe8] sm:$0xff]
        %v236 = vld [vmem:[#allocation2 + $0xf0] sm:$0xff]
        %v237 = vld [vmem:[#allocation2 + $0xf8] sm:$0xff]
        %v238 = vld [vmem:[#allocation2 + $0x100] sm:$0xff]
        %v239 = vld [vmem:[#allocation2 + $0x108] sm:$0xff]
        %v240 = vld [vmem:[#allocation2 + $0x110] sm:$0xff]
        %v241 = vld [vmem:[#allocation2 + $0x118] sm:$0xff]
        %v242 = vld [vmem:[#allocation2 + $0x120] sm:$0xff]
        %v243 = vld [vmem:[#allocation2 + $0x128] sm:$0xff]
        %v244 = vld [vmem:[#allocation2 + $0x130] sm:$0xff]
        %v245 = vld [vmem:[#allocation2 + $0x138] sm:$0xff]
        %v246 = vld [vmem:[#allocation2 + $0x140] sm:$0xff]
        %v247 = vld [vmem:[#allocation2 + $0x148] sm:$0xff]
        %v248 = vld [vmem:[#allocation2 + $0x150] sm:$0xff]
        %v249 = vld [vmem:[#allocation2 + $0x158] sm:$0xff]
        %v250 = vld [vmem:[#allocation2 + $0x160] sm:$0xff]
        %v251 = vld [vmem:[#allocation2 + $0x168] sm:$0xff]
        %v252 = vld [vmem:[#allocation2 + $0x170] sm:$0xff]
        %v253 = vld [vmem:[#allocation2 + $0x178] sm:$0xff]
        %v254 = vld [vmem:[#allocation2 + $0x180] sm:$0xff]
        %v255 = vld [vmem:[#allocation2 + $0x188] sm:$0xff]
        %v256 = vld [vmem:[#allocation2 + $0x190] sm:$0xff]
        %v257 = vld [vmem:[#allocation2 + $0x198] sm:$0xff]
        %v258 = vld [vmem:[#allocation2 + $0x1a0] sm:$0xff]
        %v259 = vld [vmem:[#allocation2 + $0x1a8] sm:$0xff]
        %v260 = vld [vmem:[#allocation2 + $0x1b0] sm:$0xff]
        %v261 = vld [vmem:[#allocation2 + $0x1b8] sm:$0xff]
        %v262 = vld [vmem:[#allocation2 + $0x1c0] sm:$0xff]
        %v263 = vld [vmem:[#allocation2 + $0x1c8] sm:$0xff]
        %v264 = vld [vmem:[#allocation2 + $0x1d0] sm:$0xff]
        %v265 = vld [vmem:[#allocation2 + $0x1d8] sm:$0xff]
        %v266 = vld [vmem:[#allocation2 + $0x1e0] sm:$0xff]
        %v267 = vld [vmem:[#allocation2 + $0x1e8] sm:$0xff]
        %v268 = vld [vmem:[#allocation2 + $0x1f0] sm:$0xff]
        %v269 = vld [vmem:[#allocation2 + $0x1f8] sm:$0xff]
        %v270 = vld [vmem:[%s197 + $0x18] sm:$0x11]
        %s271 = scalar_lea.vmem [#allocation2], 512
        %v272 = vld [vmem:[%s271] sm:$0xff]
        %v273 = vld [vmem:[%s271 + $0x8] sm:$0xff]
        %v274 = vld [vmem:[%s271 + $0x10] sm:$0xff]
        %v275 = vld [vmem:[%s271 + $0x18] sm:$0xff]
        %v276 = vld [vmem:[%s271 + $0x20] sm:$0xff]
        %v277 = vld [vmem:[%s271 + $0x28] sm:$0xff]
        %v278 = vld [vmem:[%s271 + $0x30] sm:$0xff]
        %v279 = vld [vmem:[%s271 + $0x38] sm:$0xff]
        %v280 = vld [vmem:[%s271 + $0x40] sm:$0xff]
        %v281 = vld [vmem:[%s271 + $0x48] sm:$0xff]
        %v282 = vld [vmem:[%s271 + $0x50] sm:$0xff]
        %v283 = vld [vmem:[%s271 + $0x58] sm:$0xff]
        %v284 = vld [vmem:[%s271 + $0x60] sm:$0xff]
        %v285 = vld [vmem:[%s271 + $0x68] sm:$0xff]
        %v286 = vld [vmem:[%s271 + $0x70] sm:$0xff]
        %v287 = vld [vmem:[%s271 + $0x78] sm:$0xff]
        %v288 = vld [vmem:[%s271 + $0x80] sm:$0xff]
        %v289 = vld [vmem:[%s271 + $0x88] sm:$0xff]
        %v290 = vld [vmem:[%s271 + $0x90] sm:$0xff]
        %v291 = vld [vmem:[%s271 + $0x98] sm:$0xff]
        %v292 = vld [vmem:[%s271 + $0xa0] sm:$0xff]
        %v293 = vld [vmem:[%s271 + $0xa8] sm:$0xff]
        %v294 = vld [vmem:[%s271 + $0xb0] sm:$0xff]
        %v295 = vld [vmem:[%s271 + $0xb8] sm:$0xff]
        %v296 = vld [vmem:[%s271 + $0xc0] sm:$0xff]
        %v297 = vld [vmem:[%s271 + $0xc8] sm:$0xff]
        %v298 = vld [vmem:[%s271 + $0xd0] sm:$0xff]
        %v299 = vld [vmem:[%s271 + $0xd8] sm:$0xff]
        %v300 = vld [vmem:[%s271 + $0xe0] sm:$0xff]
        %v301 = vld [vmem:[%s271 + $0xe8] sm:$0xff]
        %v302 = vld [vmem:[%s271 + $0xf0] sm:$0xff]
        %v303 = vld [vmem:[%s271 + $0xf8] sm:$0xff]
        %v304 = vld [vmem:[%s271 + $0x100] sm:$0xff]
        %v305 = vld [vmem:[%s271 + $0x108] sm:$0xff]
        %v306 = vld [vmem:[%s271 + $0x110] sm:$0xff]
        %v307 = vld [vmem:[%s271 + $0x118] sm:$0xff]
        %v308 = vld [vmem:[%s271 + $0x120] sm:$0xff]
        %v309 = vld [vmem:[%s271 + $0x128] sm:$0xff]
        %v310 = vld [vmem:[%s271 + $0x130] sm:$0xff]
        %v311 = vld [vmem:[%s271 + $0x138] sm:$0xff]
        %v312 = vld [vmem:[%s271 + $0x140] sm:$0xff]
        %v313 = vld [vmem:[%s271 + $0x148] sm:$0xff]
        %v314 = vld [vmem:[%s271 + $0x150] sm:$0xff]
        %v315 = vld [vmem:[%s271 + $0x158] sm:$0xff]
        %v316 = vld [vmem:[%s271 + $0x160] sm:$0xff]
        %v317 = vld [vmem:[%s271 + $0x168] sm:$0xff]
        %v318 = vld [vmem:[%s271 + $0x170] sm:$0xff]
        %v319 = vld [vmem:[%s271 + $0x178] sm:$0xff]
        %v320 = vld [vmem:[%s271 + $0x180] sm:$0xff]
        %v321 = vld [vmem:[%s271 + $0x188] sm:$0xff]
        %v322 = vld [vmem:[%s271 + $0x190] sm:$0xff]
        %v323 = vld [vmem:[%s271 + $0x198] sm:$0xff]
        %v324 = vld [vmem:[%s271 + $0x1a0] sm:$0xff]
        %v325 = vld [vmem:[%s271 + $0x1a8] sm:$0xff]
        %v326 = vld [vmem:[%s271 + $0x1b0] sm:$0xff]
        %v327 = vld [vmem:[%s271 + $0x1b8] sm:$0xff]
        %v328 = vld [vmem:[%s271 + $0x1c0] sm:$0xff]
        %v329 = vld [vmem:[%s271 + $0x1c8] sm:$0xff]
        %v330 = vld [vmem:[%s271 + $0x1d0] sm:$0xff]
        %v331 = vld [vmem:[%s271 + $0x1d8] sm:$0xff]
        %v332 = vld [vmem:[%s271 + $0x1e0] sm:$0xff]
        %v333 = vld [vmem:[%s271 + $0x1e8] sm:$0xff]
        %v334 = vld [vmem:[%s271 + $0x1f0] sm:$0xff]
        %v335 = vld [vmem:[%s271 + $0x1f8] sm:$0xff]
        %v340 = vunpack.c.l.b16 %v203
        %v341 = vunpack.c.h.b16 %v203
        %v342 = vunpack.c.l.b16 %v204
        %v343 = vunpack.c.h.b16 %v204
        %v344 = vunpack.c.l.b16 %v205
        %v345 = vunpack.c.h.b16 %v205
        %v346 = vunpack.c.l.b16 %v270
        %v347 = vunpack.c.h.b16 %v270
        %v348 = vpack.c.b16 %v342, %v340
        %v349 = vpack.c.b16 %v343, %v341
        %v350 = vpack.c.b16 %v346, %v344
        %v351 = vpack.c.b16 %v347, %v345
        %vm352 = vsmask.f32 7424
        %v354 = vshrl.u32 %v348, 16
        %v356 = vshll.u32 %v348, 16
        %v358 = vrot.slane %v356, 1
        %v359 = vor.u32 %v354, %v358
        %v361 = vshll.u32 %v350, 16
        %v363 = vrot.slane %v361, 1
        %v364 = vsel %vm352, %v359, %v363
        %v366 = vshrl.u32 %v349, 16
        %v368 = vshll.u32 %v349, 16
        %v370 = vrot.slane %v368, 1
        %v371 = vor.u32 %v366, %v370
        %v373 = vshll.u32 %v351, 16
        %v375 = vrot.slane %v373, 1
        %v376 = vsel %vm352, %v371, %v375
        %v377 = vshrl.u32 %v350, 16
        %v379 = vor.u32 %v377, %v363
        %v380 = vshrl.u32 %v351, 16
        %v382 = vor.u32 %v380, %v375
        %v451 = vunpack.c.l.b16 %v272
        %v452 = vunpack.c.h.b16 %v272
        %v453 = vunpack.c.l.b16 %v273
        %v454 = vunpack.c.h.b16 %v273
        %v455 = vunpack.c.l.b16 %v274
        %v456 = vunpack.c.h.b16 %v274
        %v457 = vunpack.c.l.b16 %v275
        %v458 = vunpack.c.h.b16 %v275
        %v459 = vunpack.c.l.b16 %v276
        %v460 = vunpack.c.h.b16 %v276
        %v461 = vunpack.c.l.b16 %v277
        %v462 = vunpack.c.h.b16 %v277
        %v463 = vunpack.c.l.b16 %v278
        %v464 = vunpack.c.h.b16 %v278
        %v465 = vunpack.c.l.b16 %v279
        %v466 = vunpack.c.h.b16 %v279
        %v467 = vunpack.c.l.b16 %v280
        %v468 = vunpack.c.h.b16 %v280
        %v469 = vunpack.c.l.b16 %v281
        %v470 = vunpack.c.h.b16 %v281
        %v471 = vunpack.c.l.b16 %v282
        %v472 = vunpack.c.h.b16 %v282
        %v473 = vunpack.c.l.b16 %v283
        %v474 = vunpack.c.h.b16 %v283
        %v475 = vunpack.c.l.b16 %v284
        %v476 = vunpack.c.h.b16 %v284
        %v477 = vunpack.c.l.b16 %v285
        %v478 = vunpack.c.h.b16 %v285
        %v479 = vunpack.c.l.b16 %v286
        %v480 = vunpack.c.h.b16 %v286
        %v481 = vunpack.c.l.b16 %v287
        %v482 = vunpack.c.h.b16 %v287
        %v483 = vunpack.c.l.b16 %v288
        %v484 = vunpack.c.h.b16 %v288
        %v485 = vunpack.c.l.b16 %v289
        %v486 = vunpack.c.h.b16 %v289
        %v487 = vunpack.c.l.b16 %v290
        %v488 = vunpack.c.h.b16 %v290
        %v489 = vunpack.c.l.b16 %v291
        %v490 = vunpack.c.h.b16 %v291
        %v491 = vunpack.c.l.b16 %v292
        %v492 = vunpack.c.h.b16 %v292
        %v493 = vunpack.c.l.b16 %v293
        %v494 = vunpack.c.h.b16 %v293
        %v495 = vunpack.c.l.b16 %v294
        %v496 = vunpack.c.h.b16 %v294
        %v497 = vunpack.c.l.b16 %v295
        %v498 = vunpack.c.h.b16 %v295
        %v499 = vunpack.c.l.b16 %v296
        %v500 = vunpack.c.h.b16 %v296
        %v501 = vunpack.c.l.b16 %v297
        %v502 = vunpack.c.h.b16 %v297
        %v503 = vunpack.c.l.b16 %v298
        %v504 = vunpack.c.h.b16 %v298
        %v505 = vunpack.c.l.b16 %v299
        %v506 = vunpack.c.h.b16 %v299
        %v507 = vunpack.c.l.b16 %v300
        %v508 = vunpack.c.h.b16 %v300
        %v509 = vunpack.c.l.b16 %v301
        %v510 = vunpack.c.h.b16 %v301
        %v511 = vunpack.c.l.b16 %v302
        %v512 = vunpack.c.h.b16 %v302
        %v513 = vunpack.c.l.b16 %v303
        %v514 = vunpack.c.h.b16 %v303
        %v515 = vunpack.c.l.b16 %v304
        %v516 = vunpack.c.h.b16 %v304
        %v517 = vunpack.c.l.b16 %v305
        %v518 = vunpack.c.h.b16 %v305
        %v519 = vunpack.c.l.b16 %v306
        %v520 = vunpack.c.h.b16 %v306
        %v521 = vunpack.c.l.b16 %v307
        %v522 = vunpack.c.h.b16 %v307
        %v523 = vunpack.c.l.b16 %v308
        %v524 = vunpack.c.h.b16 %v308
        %v525 = vunpack.c.l.b16 %v309
        %v526 = vunpack.c.h.b16 %v309
        %v527 = vunpack.c.l.b16 %v310
        %v528 = vunpack.c.h.b16 %v310
        %v529 = vunpack.c.l.b16 %v311
        %v530 = vunpack.c.h.b16 %v311
        %v531 = vunpack.c.l.b16 %v312
        %v532 = vunpack.c.h.b16 %v312
        %v533 = vunpack.c.l.b16 %v313
        %v534 = vunpack.c.h.b16 %v313
        %v535 = vunpack.c.l.b16 %v314
        %v536 = vunpack.c.h.b16 %v314
        %v537 = vunpack.c.l.b16 %v315
        %v538 = vunpack.c.h.b16 %v315
        %v539 = vunpack.c.l.b16 %v316
        %v540 = vunpack.c.h.b16 %v316
        %v541 = vunpack.c.l.b16 %v317
        %v542 = vunpack.c.h.b16 %v317
        %v543 = vunpack.c.l.b16 %v318
        %v544 = vunpack.c.h.b16 %v318
        %v545 = vunpack.c.l.b16 %v319
        %v546 = vunpack.c.h.b16 %v319
        %v547 = vunpack.c.l.b16 %v320
        %v548 = vunpack.c.h.b16 %v320
        %v549 = vunpack.c.l.b16 %v321
        %v550 = vunpack.c.h.b16 %v321
        %v551 = vunpack.c.l.b16 %v322
        %v552 = vunpack.c.h.b16 %v322
        %v553 = vunpack.c.l.b16 %v323
        %v554 = vunpack.c.h.b16 %v323
        %v555 = vunpack.c.l.b16 %v324
        %v556 = vunpack.c.h.b16 %v324
        %v557 = vunpack.c.l.b16 %v325
        %v558 = vunpack.c.h.b16 %v325
        %v559 = vunpack.c.l.b16 %v326
        %v560 = vunpack.c.h.b16 %v326
        %v561 = vunpack.c.l.b16 %v327
        %v562 = vunpack.c.h.b16 %v327
        %v563 = vunpack.c.l.b16 %v328
        %v564 = vunpack.c.h.b16 %v328
        %v565 = vunpack.c.l.b16 %v329
        %v566 = vunpack.c.h.b16 %v329
        %v567 = vunpack.c.l.b16 %v330
        %v568 = vunpack.c.h.b16 %v330
        %v569 = vunpack.c.l.b16 %v331
        %v570 = vunpack.c.h.b16 %v331
        %v571 = vunpack.c.l.b16 %v332
        %v572 = vunpack.c.h.b16 %v332
        %v573 = vunpack.c.l.b16 %v333
        %v574 = vunpack.c.h.b16 %v333
        %v575 = vunpack.c.l.b16 %v334
        %v576 = vunpack.c.h.b16 %v334
        %v577 = vunpack.c.l.b16 %v335
        %v578 = vunpack.c.h.b16 %v335
        %v579 = vpack.c.b16 %v455, %v451
        %v580 = vpack.c.b16 %v456, %v452
        %v581 = vpack.c.b16 %v457, %v453
        %v582 = vpack.c.b16 %v458, %v454
        %v583 = vpack.c.b16 %v463, %v459
        %v584 = vpack.c.b16 %v464, %v460
        %v585 = vpack.c.b16 %v465, %v461
        %v586 = vpack.c.b16 %v466, %v462
        %v587 = vpack.c.b16 %v471, %v467
        %v588 = vpack.c.b16 %v472, %v468
        %v589 = vpack.c.b16 %v473, %v469
        %v590 = vpack.c.b16 %v474, %v470
        %v591 = vpack.c.b16 %v479, %v475
        %v592 = vpack.c.b16 %v480, %v476
        %v593 = vpack.c.b16 %v481, %v477
        %v594 = vpack.c.b16 %v482, %v478
        %v595 = vpack.c.b16 %v487, %v483
        %v596 = vpack.c.b16 %v488, %v484
        %v597 = vpack.c.b16 %v489, %v485
        %v598 = vpack.c.b16 %v490, %v486
        %v599 = vpack.c.b16 %v495, %v491
        %v600 = vpack.c.b16 %v496, %v492
        %v601 = vpack.c.b16 %v497, %v493
        %v602 = vpack.c.b16 %v498, %v494
        %v603 = vpack.c.b16 %v503, %v499
        %v604 = vpack.c.b16 %v504, %v500
        %v605 = vpack.c.b16 %v505, %v501
        %v606 = vpack.c.b16 %v506, %v502
        %v607 = vpack.c.b16 %v511, %v507
        %v608 = vpack.c.b16 %v512, %v508
        %v609 = vpack.c.b16 %v513, %v509
        %v610 = vpack.c.b16 %v514, %v510
        %v611 = vpack.c.b16 %v519, %v515
        %v612 = vpack.c.b16 %v520, %v516
        %v613 = vpack.c.b16 %v521, %v517
        %v614 = vpack.c.b16 %v522, %v518
        %v615 = vpack.c.b16 %v527, %v523
        %v616 = vpack.c.b16 %v528, %v524
        %v617 = vpack.c.b16 %v529, %v525
        %v618 = vpack.c.b16 %v530, %v526
        %v619 = vpack.c.b16 %v535, %v531
        %v620 = vpack.c.b16 %v536, %v532
        %v621 = vpack.c.b16 %v537, %v533
        %v622 = vpack.c.b16 %v538, %v534
        %v623 = vpack.c.b16 %v543, %v539
        %v624 = vpack.c.b16 %v544, %v540
        %v625 = vpack.c.b16 %v545, %v541
        %v626 = vpack.c.b16 %v546, %v542
        %v627 = vpack.c.b16 %v551, %v547
        %v628 = vpack.c.b16 %v552, %v548
        %v629 = vpack.c.b16 %v553, %v549
        %v630 = vpack.c.b16 %v554, %v550
        %v631 = vpack.c.b16 %v559, %v555
        %v632 = vpack.c.b16 %v560, %v556
        %v633 = vpack.c.b16 %v561, %v557
        %v634 = vpack.c.b16 %v562, %v558
        %v635 = vpack.c.b16 %v567, %v563
        %v636 = vpack.c.b16 %v568, %v564
        %v637 = vpack.c.b16 %v569, %v565
        %v638 = vpack.c.b16 %v570, %v566
        %v639 = vpack.c.b16 %v575, %v571
        %v640 = vpack.c.b16 %v576, %v572
        %v641 = vpack.c.b16 %v577, %v573
        %v642 = vpack.c.b16 %v578, %v574
        %707 = vmatpush.bf16.msra.mxu0 %v607
        %708 = vmatpush.bf16.msra.mxu0 %v603
        %709 = vmatpush.bf16.msra.mxu0 %v599
        %710 = vmatpush.bf16.msra.mxu0 %v595
        %711 = vmatpush.bf16.msra.mxu0 %v591
        %712 = vmatpush.bf16.msra.mxu0 %v587
        %713 = vmatpush.bf16.msra.mxu0 %v583
        %714 = vmatpush.bf16.msra.mxu0 %v579
        %715 = vmatmul.bf16.gmra.mxu0 %v364
        %v716 = vpop.f32.mrf.mxu0
        %v717 = vadd.f32 0.0, %v716
        %v718 = vpop.f32.mrf.mxu0
        %v719 = vadd.f32 0.0, %v718
        %720 = vmatmul.bf16.gmra.mxu0 %v379
        %v721 = vpop.f32.mrf.mxu0
        %v722 = vadd.f32 0.0, %v721
        %v723 = vpop.f32.mrf.mxu0
        %724 = vdwg.mxu0
        %725 = vmatpush.bf16.msra.mxu0 %v639
        %726 = vmatpush.bf16.msra.mxu0 %v635
        %727 = vmatpush.bf16.msra.mxu0 %v631
        %728 = vmatpush.bf16.msra.mxu0 %v627
        %729 = vmatpush.bf16.msra.mxu0 %v623
        %730 = vmatpush.bf16.msra.mxu0 %v619
        %731 = vmatpush.bf16.msra.mxu0 %v615
        %732 = vmatpush.bf16.msra.mxu0 %v611
        %733 = vmatmul.bf16.gmra.mxu0 %v376
        %v734 = vpop.f32.mrf.mxu0
        %v735 = vadd.f32 %v717, %v734
        %v736 = vpop.f32.mrf.mxu0
        %v737 = vadd.f32 %v719, %v736
        %738 = vmatmul.bf16.gmra.mxu0 %v382
        %v739 = vpop.f32.mrf.mxu0
        %v740 = vadd.f32 %v722, %v739
        %v741 = vpop.f32.mrf.mxu0
        %742 = vdwg.mxu0
        %743 = vmatpush.bf16.msra.mxu0 %v608
        %744 = vmatpush.bf16.msra.mxu0 %v604
        %745 = vmatpush.bf16.msra.mxu0 %v600
        %746 = vmatpush.bf16.msra.mxu0 %v596
        %747 = vmatpush.bf16.msra.mxu0 %v592
        %748 = vmatpush.bf16.msra.mxu0 %v588
        %749 = vmatpush.bf16.msra.mxu0 %v584
        %750 = vmatpush.bf16.msra.mxu0 %v580
        %751 = vmatmul.bf16.gmra.mxu0 %v364
        %v752 = vpop.f32.mrf.mxu0
        %v753 = vadd.f32 0.0, %v752
        %v754 = vpop.f32.mrf.mxu0
        %v755 = vadd.f32 0.0, %v754
        %756 = vmatmul.bf16.gmra.mxu0 %v379
        %v757 = vpop.f32.mrf.mxu0
        %v758 = vadd.f32 0.0, %v757
        %v759 = vpop.f32.mrf.mxu0
        %760 = vdwg.mxu0
        %761 = vmatpush.bf16.msra.mxu0 %v640
        %762 = vmatpush.bf16.msra.mxu0 %v636
        %763 = vmatpush.bf16.msra.mxu0 %v632
        %764 = vmatpush.bf16.msra.mxu0 %v628
        %765 = vmatpush.bf16.msra.mxu0 %v624
        %766 = vmatpush.bf16.msra.mxu0 %v620
        %767 = vmatpush.bf16.msra.mxu0 %v616
        %768 = vmatpush.bf16.msra.mxu0 %v612
        %769 = vmatmul.bf16.gmra.mxu0 %v376
        %v770 = vpop.f32.mrf.mxu0
        %v771 = vadd.f32 %v753, %v770
        %v772 = vpop.f32.mrf.mxu0
        %v773 = vadd.f32 %v755, %v772
        %774 = vmatmul.bf16.gmra.mxu0 %v382
        %v775 = vpop.f32.mrf.mxu0
        %v776 = vadd.f32 %v758, %v775
        %v777 = vpop.f32.mrf.mxu0
        %778 = vdwg.mxu0
        %779 = vmatpush.bf16.msra.mxu0 %v609
        %780 = vmatpush.bf16.msra.mxu0 %v605
        %781 = vmatpush.bf16.msra.mxu0 %v601
        %782 = vmatpush.bf16.msra.mxu0 %v597
        %783 = vmatpush.bf16.msra.mxu0 %v593
        %784 = vmatpush.bf16.msra.mxu0 %v589
        %785 = vmatpush.bf16.msra.mxu0 %v585
        %786 = vmatpush.bf16.msra.mxu0 %v581
        %787 = vmatmul.bf16.gmra.mxu0 %v364
        %v788 = vpop.f32.mrf.mxu0
        %v789 = vadd.f32 0.0, %v788
        %v790 = vpop.f32.mrf.mxu0
        %v791 = vadd.f32 0.0, %v790
        %792 = vmatmul.bf16.gmra.mxu0 %v379
        %v793 = vpop.f32.mrf.mxu0
        %v794 = vadd.f32 0.0, %v793
        %v795 = vpop.f32.mrf.mxu0
        %796 = vdwg.mxu0
        %797 = vmatpush.bf16.msra.mxu0 %v641
        %798 = vmatpush.bf16.msra.mxu0 %v637
        %799 = vmatpush.bf16.msra.mxu0 %v633
        %800 = vmatpush.bf16.msra.mxu0 %v629
        %801 = vmatpush.bf16.msra.mxu0 %v625
        %802 = vmatpush.bf16.msra.mxu0 %v621
        %803 = vmatpush.bf16.msra.mxu0 %v617
        %804 = vmatpush.bf16.msra.mxu0 %v613
        %805 = vmatmul.bf16.gmra.mxu0 %v376
        %v806 = vpop.f32.mrf.mxu0
        %v807 = vadd.f32 %v789, %v806
        %v808 = vpop.f32.mrf.mxu0
        %v809 = vadd.f32 %v791, %v808
        %810 = vmatmul.bf16.gmra.mxu0 %v382
        %v811 = vpop.f32.mrf.mxu0
        %v812 = vadd.f32 %v794, %v811
        %v813 = vpop.f32.mrf.mxu0
        %814 = vdwg.mxu0
        %815 = vmatpush.bf16.msra.mxu0 %v610
        %816 = vmatpush.bf16.msra.mxu0 %v606
        %817 = vmatpush.bf16.msra.mxu0 %v602
        %818 = vmatpush.bf16.msra.mxu0 %v598
        %819 = vmatpush.bf16.msra.mxu0 %v594
        %820 = vmatpush.bf16.msra.mxu0 %v590
        %821 = vmatpush.bf16.msra.mxu0 %v586
        %822 = vmatpush.bf16.msra.mxu0 %v582
        %823 = vmatmul.bf16.gmra.mxu0 %v364
        %v824 = vpop.f32.mrf.mxu0
        %v825 = vadd.f32 0.0, %v824
        %v826 = vpop.f32.mrf.mxu0
        %v827 = vadd.f32 0.0, %v826
        %828 = vmatmul.bf16.gmra.mxu0 %v379
        %v829 = vpop.f32.mrf.mxu0
        %v830 = vadd.f32 0.0, %v829
        %v831 = vpop.f32.mrf.mxu0
        %832 = vdwg.mxu0
        %833 = vmatpush.bf16.msra.mxu0 %v642
        %834 = vmatpush.bf16.msra.mxu0 %v638
        %835 = vmatpush.bf16.msra.mxu0 %v634
        %836 = vmatpush.bf16.msra.mxu0 %v630
        %837 = vmatpush.bf16.msra.mxu0 %v626
        %838 = vmatpush.bf16.msra.mxu0 %v622
        %839 = vmatpush.bf16.msra.mxu0 %v618
        %840 = vmatpush.bf16.msra.mxu0 %v614
        %841 = vmatmul.bf16.gmra.mxu0 %v376
        %v842 = vpop.f32.mrf.mxu0
        %v843 = vadd.f32 %v825, %v842
        %v844 = vpop.f32.mrf.mxu0
        %v845 = vadd.f32 %v827, %v844
        %846 = vmatmul.bf16.gmra.mxu0 %v382
        %v847 = vpop.f32.mrf.mxu0
        %v848 = vadd.f32 %v830, %v847
        %v849 = vpop.f32.mrf.mxu0
        %850 = vdwg.mxu0
        %v851 = vpack.c.b16 %v344, %v344
        %v852 = vpack.c.b16 %v345, %v345
        %v921 = vunpack.c.l.b16 %v206
        %v922 = vunpack.c.h.b16 %v206
        %v923 = vunpack.c.l.b16 %v207
        %v924 = vunpack.c.h.b16 %v207
        %v925 = vunpack.c.l.b16 %v208
        %v926 = vunpack.c.h.b16 %v208
        %v927 = vunpack.c.l.b16 %v209
        %v928 = vunpack.c.h.b16 %v209
        %v929 = vunpack.c.l.b16 %v210
        %v930 = vunpack.c.h.b16 %v210
        %v931 = vunpack.c.l.b16 %v211
        %v932 = vunpack.c.h.b16 %v211
        %v933 = vunpack.c.l.b16 %v212
        %v934 = vunpack.c.h.b16 %v212
        %v935 = vunpack.c.l.b16 %v213
        %v936 = vunpack.c.h.b16 %v213
        %v937 = vunpack.c.l.b16 %v214
        %v938 = vunpack.c.h.b16 %v214
        %v939 = vunpack.c.l.b16 %v215
        %v940 = vunpack.c.h.b16 %v215
        %v941 = vunpack.c.l.b16 %v216
        %v942 = vunpack.c.h.b16 %v216
        %v943 = vunpack.c.l.b16 %v217
        %v944 = vunpack.c.h.b16 %v217
        %v945 = vunpack.c.l.b16 %v218
        %v946 = vunpack.c.h.b16 %v218
        %v947 = vunpack.c.l.b16 %v219
        %v948 = vunpack.c.h.b16 %v219
        %v949 = vunpack.c.l.b16 %v220
        %v950 = vunpack.c.h.b16 %v220
        %v951 = vunpack.c.l.b16 %v221
        %v952 = vunpack.c.h.b16 %v221
        %v953 = vunpack.c.l.b16 %v222
        %v954 = vunpack.c.h.b16 %v222
        %v955 = vunpack.c.l.b16 %v223
        %v956 = vunpack.c.h.b16 %v223
        %v957 = vunpack.c.l.b16 %v224
        %v958 = vunpack.c.h.b16 %v224
        %v959 = vunpack.c.l.b16 %v225
        %v960 = vunpack.c.h.b16 %v225
        %v961 = vunpack.c.l.b16 %v226
        %v962 = vunpack.c.h.b16 %v226
        %v963 = vunpack.c.l.b16 %v227
        %v964 = vunpack.c.h.b16 %v227
        %v965 = vunpack.c.l.b16 %v228
        %v966 = vunpack.c.h.b16 %v228
        %v967 = vunpack.c.l.b16 %v229
        %v968 = vunpack.c.h.b16 %v229
        %v969 = vunpack.c.l.b16 %v230
        %v970 = vunpack.c.h.b16 %v230
        %v971 = vunpack.c.l.b16 %v231
        %v972 = vunpack.c.h.b16 %v231
        %v973 = vunpack.c.l.b16 %v232
        %v974 = vunpack.c.h.b16 %v232
        %v975 = vunpack.c.l.b16 %v233
        %v976 = vunpack.c.h.b16 %v233
        %v977 = vunpack.c.l.b16 %v234
        %v978 = vunpack.c.h.b16 %v234
        %v979 = vunpack.c.l.b16 %v235
        %v980 = vunpack.c.h.b16 %v235
        %v981 = vunpack.c.l.b16 %v236
        %v982 = vunpack.c.h.b16 %v236
        %v983 = vunpack.c.l.b16 %v237
        %v984 = vunpack.c.h.b16 %v237
        %v985 = vunpack.c.l.b16 %v238
        %v986 = vunpack.c.h.b16 %v238
        %v987 = vunpack.c.l.b16 %v239
        %v988 = vunpack.c.h.b16 %v239
        %v989 = vunpack.c.l.b16 %v240
        %v990 = vunpack.c.h.b16 %v240
        %v991 = vunpack.c.l.b16 %v241
        %v992 = vunpack.c.h.b16 %v241
        %v993 = vunpack.c.l.b16 %v242
        %v994 = vunpack.c.h.b16 %v242
        %v995 = vunpack.c.l.b16 %v243
        %v996 = vunpack.c.h.b16 %v243
        %v997 = vunpack.c.l.b16 %v244
        %v998 = vunpack.c.h.b16 %v244
        %v999 = vunpack.c.l.b16 %v245
        %v1000 = vunpack.c.h.b16 %v245
        %v1001 = vunpack.c.l.b16 %v246
        %v1002 = vunpack.c.h.b16 %v246
        %v1003 = vunpack.c.l.b16 %v247
        %v1004 = vunpack.c.h.b16 %v247
        %v1005 = vunpack.c.l.b16 %v248
        %v1006 = vunpack.c.h.b16 %v248
        %v1007 = vunpack.c.l.b16 %v249
        %v1008 = vunpack.c.h.b16 %v249
        %v1009 = vunpack.c.l.b16 %v250
        %v1010 = vunpack.c.h.b16 %v250
        %v1011 = vunpack.c.l.b16 %v251
        %v1012 = vunpack.c.h.b16 %v251
        %v1013 = vunpack.c.l.b16 %v252
        %v1014 = vunpack.c.h.b16 %v252
        %v1015 = vunpack.c.l.b16 %v253
        %v1016 = vunpack.c.h.b16 %v253
        %v1017 = vunpack.c.l.b16 %v254
        %v1018 = vunpack.c.h.b16 %v254
        %v1019 = vunpack.c.l.b16 %v255
        %v1020 = vunpack.c.h.b16 %v255
        %v1021 = vunpack.c.l.b16 %v256
        %v1022 = vunpack.c.h.b16 %v256
        %v1023 = vunpack.c.l.b16 %v257
        %v1024 = vunpack.c.h.b16 %v257
        %v1025 = vunpack.c.l.b16 %v258
        %v1026 = vunpack.c.h.b16 %v258
        %v1027 = vunpack.c.l.b16 %v259
        %v1028 = vunpack.c.h.b16 %v259
        %v1029 = vunpack.c.l.b16 %v260
        %v1030 = vunpack.c.h.b16 %v260
        %v1031 = vunpack.c.l.b16 %v261
        %v1032 = vunpack.c.h.b16 %v261
        %v1033 = vunpack.c.l.b16 %v262
        %v1034 = vunpack.c.h.b16 %v262
        %v1035 = vunpack.c.l.b16 %v263
        %v1036 = vunpack.c.h.b16 %v263
        %v1037 = vunpack.c.l.b16 %v264
        %v1038 = vunpack.c.h.b16 %v264
        %v1039 = vunpack.c.l.b16 %v265
        %v1040 = vunpack.c.h.b16 %v265
        %v1041 = vunpack.c.l.b16 %v266
        %v1042 = vunpack.c.h.b16 %v266
        %v1043 = vunpack.c.l.b16 %v267
        %v1044 = vunpack.c.h.b16 %v267
        %v1045 = vunpack.c.l.b16 %v268
        %v1046 = vunpack.c.h.b16 %v268
        %v1047 = vunpack.c.l.b16 %v269
        %v1048 = vunpack.c.h.b16 %v269
        %v1049 = vpack.c.b16 %v925, %v921
        %v1050 = vpack.c.b16 %v926, %v922
        %v1051 = vpack.c.b16 %v927, %v923
        %v1052 = vpack.c.b16 %v928, %v924
        %v1053 = vpack.c.b16 %v933, %v929
        %v1054 = vpack.c.b16 %v934, %v930
        %v1055 = vpack.c.b16 %v935, %v931
        %v1056 = vpack.c.b16 %v936, %v932
        %v1057 = vpack.c.b16 %v941, %v937
        %v1058 = vpack.c.b16 %v942, %v938
        %v1059 = vpack.c.b16 %v943, %v939
        %v1060 = vpack.c.b16 %v944, %v940
        %v1061 = vpack.c.b16 %v949, %v945
        %v1062 = vpack.c.b16 %v950, %v946
        %v1063 = vpack.c.b16 %v951, %v947
        %v1064 = vpack.c.b16 %v952, %v948
        %v1065 = vpack.c.b16 %v957, %v953
        %v1066 = vpack.c.b16 %v958, %v954
        %v1067 = vpack.c.b16 %v959, %v955
        %v1068 = vpack.c.b16 %v960, %v956
        %v1069 = vpack.c.b16 %v965, %v961
        %v1070 = vpack.c.b16 %v966, %v962
        %v1071 = vpack.c.b16 %v967, %v963
        %v1072 = vpack.c.b16 %v968, %v964
        %v1073 = vpack.c.b16 %v973, %v969
        %v1074 = vpack.c.b16 %v974, %v970
        %v1075 = vpack.c.b16 %v975, %v971
        %v1076 = vpack.c.b16 %v976, %v972
        %v1077 = vpack.c.b16 %v981, %v977
        %v1078 = vpack.c.b16 %v982, %v978
        %v1079 = vpack.c.b16 %v983, %v979
        %v1080 = vpack.c.b16 %v984, %v980
        %v1081 = vpack.c.b16 %v989, %v985
        %v1082 = vpack.c.b16 %v990, %v986
        %v1083 = vpack.c.b16 %v991, %v987
        %v1084 = vpack.c.b16 %v992, %v988
        %v1085 = vpack.c.b16 %v997, %v993
        %v1086 = vpack.c.b16 %v998, %v994
        %v1087 = vpack.c.b16 %v999, %v995
        %v1088 = vpack.c.b16 %v1000, %v996
        %v1089 = vpack.c.b16 %v1005, %v1001
        %v1090 = vpack.c.b16 %v1006, %v1002
        %v1091 = vpack.c.b16 %v1007, %v1003
        %v1092 = vpack.c.b16 %v1008, %v1004
        %v1093 = vpack.c.b16 %v1013, %v1009
        %v1094 = vpack.c.b16 %v1014, %v1010
        %v1095 = vpack.c.b16 %v1015, %v1011
        %v1096 = vpack.c.b16 %v1016, %v1012
        %v1097 = vpack.c.b16 %v1021, %v1017
        %v1098 = vpack.c.b16 %v1022, %v1018
        %v1099 = vpack.c.b16 %v1023, %v1019
        %v1100 = vpack.c.b16 %v1024, %v1020
        %v1101 = vpack.c.b16 %v1029, %v1025
        %v1102 = vpack.c.b16 %v1030, %v1026
        %v1103 = vpack.c.b16 %v1031, %v1027
        %v1104 = vpack.c.b16 %v1032, %v1028
        %v1105 = vpack.c.b16 %v1037, %v1033
        %v1106 = vpack.c.b16 %v1038, %v1034
        %v1107 = vpack.c.b16 %v1039, %v1035
        %v1108 = vpack.c.b16 %v1040, %v1036
        %v1109 = vpack.c.b16 %v1045, %v1041
        %v1110 = vpack.c.b16 %v1046, %v1042
        %v1111 = vpack.c.b16 %v1047, %v1043
        %v1112 = vpack.c.b16 %v1048, %v1044
        %1177 = vmatpush.bf16.msra.mxu0 %v1077
        %1178 = vmatpush.bf16.msra.mxu0 %v1073
        %1179 = vmatpush.bf16.msra.mxu0 %v1069
        %1180 = vmatpush.bf16.msra.mxu0 %v1065
        %1181 = vmatpush.bf16.msra.mxu0 %v1061
        %1182 = vmatpush.bf16.msra.mxu0 %v1057
        %1183 = vmatpush.bf16.msra.mxu0 %v1053
        %1184 = vmatpush.bf16.msra.mxu0 %v1049
        %1185 = vmatmul.bf16.gmra.mxu0 %v348
        %v1186 = vpop.f32.mrf.mxu0
        %v1187 = vadd.f32 %v735, %v1186
        %v1188 = vpop.f32.mrf.mxu0
        %v1189 = vadd.f32 %v737, %v1188
        %1190 = vmatmul.bf16.gmra.mxu0 %v851
        %v1191 = vpop.f32.mrf.mxu0
        %v1192 = vadd.f32 %v740, %v1191
        %v1193 = vpop.f32.mrf.mxu0
        %1194 = vdwg.mxu0
        %1195 = vmatpush.bf16.msra.mxu0 %v1109
        %1196 = vmatpush.bf16.msra.mxu0 %v1105
        %1197 = vmatpush.bf16.msra.mxu0 %v1101
        %1198 = vmatpush.bf16.msra.mxu0 %v1097
        %1199 = vmatpush.bf16.msra.mxu0 %v1093
        %1200 = vmatpush.bf16.msra.mxu0 %v1089
        %1201 = vmatpush.bf16.msra.mxu0 %v1085
        %1202 = vmatpush.bf16.msra.mxu0 %v1081
        %1203 = vmatmul.bf16.gmra.mxu0 %v349
        %v1204 = vpop.f32.mrf.mxu0
        %v1205 = vadd.f32 %v1187, %v1204
        %v1206 = vpop.f32.mrf.mxu0
        %v1207 = vadd.f32 %v1189, %v1206
        %1208 = vmatmul.bf16.gmra.mxu0 %v852
        %v1209 = vpop.f32.mrf.mxu0
        %v1210 = vadd.f32 %v1192, %v1209
        %v1211 = vpop.f32.mrf.mxu0
        %1212 = vdwg.mxu0
        %1213 = vmatpush.bf16.msra.mxu0 %v1078
        %1214 = vmatpush.bf16.msra.mxu0 %v1074
        %1215 = vmatpush.bf16.msra.mxu0 %v1070
        %1216 = vmatpush.bf16.msra.mxu0 %v1066
        %1217 = vmatpush.bf16.msra.mxu0 %v1062
        %1218 = vmatpush.bf16.msra.mxu0 %v1058
        %1219 = vmatpush.bf16.msra.mxu0 %v1054
        %1220 = vmatpush.bf16.msra.mxu0 %v1050
        %1221 = vmatmul.bf16.gmra.mxu0 %v348
        %v1222 = vpop.f32.mrf.mxu0
        %v1223 = vadd.f32 %v771, %v1222
        %v1224 = vpop.f32.mrf.mxu0
        %v1225 = vadd.f32 %v773, %v1224
        %1226 = vmatmul.bf16.gmra.mxu0 %v851
        %v1227 = vpop.f32.mrf.mxu0
        %v1228 = vadd.f32 %v776, %v1227
        %v1229 = vpop.f32.mrf.mxu0
        %1230 = vdwg.mxu0
        %1231 = vmatpush.bf16.msra.mxu0 %v1110
        %1232 = vmatpush.bf16.msra.mxu0 %v1106
        %1233 = vmatpush.bf16.msra.mxu0 %v1102
        %1234 = vmatpush.bf16.msra.mxu0 %v1098
        %1235 = vmatpush.bf16.msra.mxu0 %v1094
        %1236 = vmatpush.bf16.msra.mxu0 %v1090
        %1237 = vmatpush.bf16.msra.mxu0 %v1086
        %1238 = vmatpush.bf16.msra.mxu0 %v1082
        %1239 = vmatmul.bf16.gmra.mxu0 %v349
        %v1240 = vpop.f32.mrf.mxu0
        %v1241 = vadd.f32 %v1223, %v1240
        %v1242 = vpop.f32.mrf.mxu0
        %v1243 = vadd.f32 %v1225, %v1242
        %1244 = vmatmul.bf16.gmra.mxu0 %v852
        %v1245 = vpop.f32.mrf.mxu0
        %v1246 = vadd.f32 %v1228, %v1245
        %v1247 = vpop.f32.mrf.mxu0
        %1248 = vdwg.mxu0
        %1249 = vmatpush.bf16.msra.mxu0 %v1079
        %1250 = vmatpush.bf16.msra.mxu0 %v1075
        %1251 = vmatpush.bf16.msra.mxu0 %v1071
        %1252 = vmatpush.bf16.msra.mxu0 %v1067
        %1253 = vmatpush.bf16.msra.mxu0 %v1063
        %1254 = vmatpush.bf16.msra.mxu0 %v1059
        %1255 = vmatpush.bf16.msra.mxu0 %v1055
        %1256 = vmatpush.bf16.msra.mxu0 %v1051
        %1257 = vmatmul.bf16.gmra.mxu0 %v348
        %v1258 = vpop.f32.mrf.mxu0
        %v1259 = vadd.f32 %v807, %v1258
        %v1260 = vpop.f32.mrf.mxu0
        %v1261 = vadd.f32 %v809, %v1260
        %1262 = vmatmul.bf16.gmra.mxu0 %v851
        %v1263 = vpop.f32.mrf.mxu0
        %v1264 = vadd.f32 %v812, %v1263
        %v1265 = vpop.f32.mrf.mxu0
        %1266 = vdwg.mxu0
        %1267 = vmatpush.bf16.msra.mxu0 %v1111
        %1268 = vmatpush.bf16.msra.mxu0 %v1107
        %1269 = vmatpush.bf16.msra.mxu0 %v1103
        %1270 = vmatpush.bf16.msra.mxu0 %v1099
        %1271 = vmatpush.bf16.msra.mxu0 %v1095
        %1272 = vmatpush.bf16.msra.mxu0 %v1091
        %1273 = vmatpush.bf16.msra.mxu0 %v1087
        %1274 = vmatpush.bf16.msra.mxu0 %v1083
        %1275 = vmatmul.bf16.gmra.mxu0 %v349
        %v1276 = vpop.f32.mrf.mxu0
        %v1277 = vadd.f32 %v1259, %v1276
        %v1278 = vpop.f32.mrf.mxu0
        %v1279 = vadd.f32 %v1261, %v1278
        %1280 = vmatmul.bf16.gmra.mxu0 %v852
        %v1281 = vpop.f32.mrf.mxu0
        %v1282 = vadd.f32 %v1264, %v1281
        %v1283 = vpop.f32.mrf.mxu0
        %1284 = vdwg.mxu0
        %1285 = vmatpush.bf16.msra.mxu0 %v1080
        %1286 = vmatpush.bf16.msra.mxu0 %v1076
        %1287 = vmatpush.bf16.msra.mxu0 %v1072
        %1288 = vmatpush.bf16.msra.mxu0 %v1068
        %1289 = vmatpush.bf16.msra.mxu0 %v1064
        %1290 = vmatpush.bf16.msra.mxu0 %v1060
        %1291 = vmatpush.bf16.msra.mxu0 %v1056
        %1292 = vmatpush.bf16.msra.mxu0 %v1052
        %1293 = vmatmul.bf16.gmra.mxu0 %v348
        %v1294 = vpop.f32.mrf.mxu0
        %v1295 = vadd.f32 %v843, %v1294
        %v1296 = vpop.f32.mrf.mxu0
        %v1297 = vadd.f32 %v845, %v1296
        %1298 = vmatmul.bf16.gmra.mxu0 %v851
        %v1299 = vpop.f32.mrf.mxu0
        %v1300 = vadd.f32 %v848, %v1299
        %v1301 = vpop.f32.mrf.mxu0
        %1302 = vdwg.mxu0
        %1303 = vmatpush.bf16.msra.mxu0 %v1112
        %1304 = vmatpush.bf16.msra.mxu0 %v1108
        %1305 = vmatpush.bf16.msra.mxu0 %v1104
        %1306 = vmatpush.bf16.msra.mxu0 %v1100
        %1307 = vmatpush.bf16.msra.mxu0 %v1096
        %1308 = vmatpush.bf16.msra.mxu0 %v1092
        %1309 = vmatpush.bf16.msra.mxu0 %v1088
        %1310 = vmatpush.bf16.msra.mxu0 %v1084
        %1311 = vmatmul.bf16.gmra.mxu0 %v349
        %v1312 = vpop.f32.mrf.mxu0
        %v1313 = vadd.f32 %v1295, %v1312
        %v1314 = vpop.f32.mrf.mxu0
        %v1315 = vadd.f32 %v1297, %v1314
        %1316 = vmatmul.bf16.gmra.mxu0 %v852
        %v1317 = vpop.f32.mrf.mxu0
        %v1318 = vadd.f32 %v1300, %v1317
        %v1319 = vpop.f32.mrf.mxu0
        %1320 = vdwg.mxu0
        %v1321 = vld [vmem:[%s197] sm:$0xee]
        %s1322 = scalar_lea.vmem [#allocation2], 1024
        %v1323 = vld [vmem:[%s1322] sm:$0xff]
        %v1324 = vld [vmem:[%s1322 + $0x8] sm:$0xff]
        %v1325 = vld [vmem:[%s1322 + $0x10] sm:$0xff]
        %v1326 = vld [vmem:[%s1322 + $0x18] sm:$0xff]
        %v1327 = vld [vmem:[%s1322 + $0x20] sm:$0xff]
        %v1328 = vld [vmem:[%s1322 + $0x28] sm:$0xff]
        %v1329 = vld [vmem:[%s1322 + $0x30] sm:$0xff]
        %v1330 = vld [vmem:[%s1322 + $0x38] sm:$0xff]
        %v1331 = vld [vmem:[%s1322 + $0x40] sm:$0xff]
        %v1332 = vld [vmem:[%s1322 + $0x48] sm:$0xff]
        %v1333 = vld [vmem:[%s1322 + $0x50] sm:$0xff]
        %v1334 = vld [vmem:[%s1322 + $0x58] sm:$0xff]
        %v1335 = vld [vmem:[%s1322 + $0x60] sm:$0xff]
        %v1336 = vld [vmem:[%s1322 + $0x68] sm:$0xff]
        %v1337 = vld [vmem:[%s1322 + $0x70] sm:$0xff]
        %v1338 = vld [vmem:[%s1322 + $0x78] sm:$0xff]
        %v1339 = vld [vmem:[%s1322 + $0x80] sm:$0xff]
        %v1340 = vld [vmem:[%s1322 + $0x88] sm:$0xff]
        %v1341 = vld [vmem:[%s1322 + $0x90] sm:$0xff]
        %v1342 = vld [vmem:[%s1322 + $0x98] sm:$0xff]
        %v1343 = vld [vmem:[%s1322 + $0xa0] sm:$0xff]
        %v1344 = vld [vmem:[%s1322 + $0xa8] sm:$0xff]
        %v1345 = vld [vmem:[%s1322 + $0xb0] sm:$0xff]
        %v1346 = vld [vmem:[%s1322 + $0xb8] sm:$0xff]
        %v1347 = vld [vmem:[%s1322 + $0xc0] sm:$0xff]
        %v1348 = vld [vmem:[%s1322 + $0xc8] sm:$0xff]
        %v1349 = vld [vmem:[%s1322 + $0xd0] sm:$0xff]
        %v1350 = vld [vmem:[%s1322 + $0xd8] sm:$0xff]
        %v1351 = vld [vmem:[%s1322 + $0xe0] sm:$0xff]
        %v1352 = vld [vmem:[%s1322 + $0xe8] sm:$0xff]
        %v1353 = vld [vmem:[%s1322 + $0xf0] sm:$0xff]
        %v1354 = vld [vmem:[%s1322 + $0xf8] sm:$0xff]
        %v1355 = vld [vmem:[%s1322 + $0x100] sm:$0xff]
        %v1356 = vld [vmem:[%s1322 + $0x108] sm:$0xff]
        %v1357 = vld [vmem:[%s1322 + $0x110] sm:$0xff]
        %v1358 = vld [vmem:[%s1322 + $0x118] sm:$0xff]
        %v1359 = vld [vmem:[%s1322 + $0x120] sm:$0xff]
        %v1360 = vld [vmem:[%s1322 + $0x128] sm:$0xff]
        %v1361 = vld [vmem:[%s1322 + $0x130] sm:$0xff]
        %v1362 = vld [vmem:[%s1322 + $0x138] sm:$0xff]
        %v1363 = vld [vmem:[%s1322 + $0x140] sm:$0xff]
        %v1364 = vld [vmem:[%s1322 + $0x148] sm:$0xff]
        %v1365 = vld [vmem:[%s1322 + $0x150] sm:$0xff]
        %v1366 = vld [vmem:[%s1322 + $0x158] sm:$0xff]
        %v1367 = vld [vmem:[%s1322 + $0x160] sm:$0xff]
        %v1368 = vld [vmem:[%s1322 + $0x168] sm:$0xff]
        %v1369 = vld [vmem:[%s1322 + $0x170] sm:$0xff]
        %v1370 = vld [vmem:[%s1322 + $0x178] sm:$0xff]
        %v1371 = vld [vmem:[%s1322 + $0x180] sm:$0xff]
        %v1372 = vld [vmem:[%s1322 + $0x188] sm:$0xff]
        %v1373 = vld [vmem:[%s1322 + $0x190] sm:$0xff]
        %v1374 = vld [vmem:[%s1322 + $0x198] sm:$0xff]
        %v1375 = vld [vmem:[%s1322 + $0x1a0] sm:$0xff]
        %v1376 = vld [vmem:[%s1322 + $0x1a8] sm:$0xff]
        %v1377 = vld [vmem:[%s1322 + $0x1b0] sm:$0xff]
        %v1378 = vld [vmem:[%s1322 + $0x1b8] sm:$0xff]
        %v1379 = vld [vmem:[%s1322 + $0x1c0] sm:$0xff]
        %v1380 = vld [vmem:[%s1322 + $0x1c8] sm:$0xff]
        %v1381 = vld [vmem:[%s1322 + $0x1d0] sm:$0xff]
        %v1382 = vld [vmem:[%s1322 + $0x1d8] sm:$0xff]
        %v1383 = vld [vmem:[%s1322 + $0x1e0] sm:$0xff]
        %v1384 = vld [vmem:[%s1322 + $0x1e8] sm:$0xff]
        %v1385 = vld [vmem:[%s1322 + $0x1f0] sm:$0xff]
        %v1386 = vld [vmem:[%s1322 + $0x1f8] sm:$0xff]
        %v1388 = vunpack.c.l.b16 %v1321
        %v1389 = vunpack.c.h.b16 %v1321
        %v1390 = vpack.c.b16 %v342, %v1388
        %v1391 = vpack.c.b16 %v343, %v1389
        %vm1392 = vcmask 1046528
        %v1393 = vrot.slane %v1390, 1
        %v1394 = vrot.slane %v350, 1
        %v1395 = vsel %vm1392, %v1393, %v1394
        %v1396 = vrot.slane %v1391, 1
        %v1397 = vrot.slane %v351, 1
        %v1398 = vsel %vm1392, %v1396, %v1397
        %v1467 = vunpack.c.l.b16 %v1323
        %v1468 = vunpack.c.h.b16 %v1323
        %v1469 = vunpack.c.l.b16 %v1324
        %v1470 = vunpack.c.h.b16 %v1324
        %v1471 = vunpack.c.l.b16 %v1325
        %v1472 = vunpack.c.h.b16 %v1325
        %v1473 = vunpack.c.l.b16 %v1326
        %v1474 = vunpack.c.h.b16 %v1326
        %v1475 = vunpack.c.l.b16 %v1327
        %v1476 = vunpack.c.h.b16 %v1327
        %v1477 = vunpack.c.l.b16 %v1328
        %v1478 = vunpack.c.h.b16 %v1328
        %v1479 = vunpack.c.l.b16 %v1329
        %v1480 = vunpack.c.h.b16 %v1329
        %v1481 = vunpack.c.l.b16 %v1330
        %v1482 = vunpack.c.h.b16 %v1330
        %v1483 = vunpack.c.l.b16 %v1331
        %v1484 = vunpack.c.h.b16 %v1331
        %v1485 = vunpack.c.l.b16 %v1332
        %v1486 = vunpack.c.h.b16 %v1332
        %v1487 = vunpack.c.l.b16 %v1333
        %v1488 = vunpack.c.h.b16 %v1333
        %v1489 = vunpack.c.l.b16 %v1334
        %v1490 = vunpack.c.h.b16 %v1334
        %v1491 = vunpack.c.l.b16 %v1335
        %v1492 = vunpack.c.h.b16 %v1335
        %v1493 = vunpack.c.l.b16 %v1336
        %v1494 = vunpack.c.h.b16 %v1336
        %v1495 = vunpack.c.l.b16 %v1337
        %v1496 = vunpack.c.h.b16 %v1337
        %v1497 = vunpack.c.l.b16 %v1338
        %v1498 = vunpack.c.h.b16 %v1338
        %v1499 = vunpack.c.l.b16 %v1339
        %v1500 = vunpack.c.h.b16 %v1339
        %v1501 = vunpack.c.l.b16 %v1340
        %v1502 = vunpack.c.h.b16 %v1340
        %v1503 = vunpack.c.l.b16 %v1341
        %v1504 = vunpack.c.h.b16 %v1341
        %v1505 = vunpack.c.l.b16 %v1342
        %v1506 = vunpack.c.h.b16 %v1342
        %v1507 = vunpack.c.l.b16 %v1343
        %v1508 = vunpack.c.h.b16 %v1343
        %v1509 = vunpack.c.l.b16 %v1344
        %v1510 = vunpack.c.h.b16 %v1344
        %v1511 = vunpack.c.l.b16 %v1345
        %v1512 = vunpack.c.h.b16 %v1345
        %v1513 = vunpack.c.l.b16 %v1346
        %v1514 = vunpack.c.h.b16 %v1346
        %v1515 = vunpack.c.l.b16 %v1347
        %v1516 = vunpack.c.h.b16 %v1347
        %v1517 = vunpack.c.l.b16 %v1348
        %v1518 = vunpack.c.h.b16 %v1348
        %v1519 = vunpack.c.l.b16 %v1349
        %v1520 = vunpack.c.h.b16 %v1349
        %v1521 = vunpack.c.l.b16 %v1350
        %v1522 = vunpack.c.h.b16 %v1350
        %v1523 = vunpack.c.l.b16 %v1351
        %v1524 = vunpack.c.h.b16 %v1351
        %v1525 = vunpack.c.l.b16 %v1352
        %v1526 = vunpack.c.h.b16 %v1352
        %v1527 = vunpack.c.l.b16 %v1353
        %v1528 = vunpack.c.h.b16 %v1353
        %v1529 = vunpack.c.l.b16 %v1354
        %v1530 = vunpack.c.h.b16 %v1354
        %v1531 = vunpack.c.l.b16 %v1355
        %v1532 = vunpack.c.h.b16 %v1355
        %v1533 = vunpack.c.l.b16 %v1356
        %v1534 = vunpack.c.h.b16 %v1356
        %v1535 = vunpack.c.l.b16 %v1357
        %v1536 = vunpack.c.h.b16 %v1357
        %v1537 = vunpack.c.l.b16 %v1358
        %v1538 = vunpack.c.h.b16 %v1358
        %v1539 = vunpack.c.l.b16 %v1359
        %v1540 = vunpack.c.h.b16 %v1359
        %v1541 = vunpack.c.l.b16 %v1360
        %v1542 = vunpack.c.h.b16 %v1360
        %v1543 = vunpack.c.l.b16 %v1361
        %v1544 = vunpack.c.h.b16 %v1361
        %v1545 = vunpack.c.l.b16 %v1362
        %v1546 = vunpack.c.h.b16 %v1362
        %v1547 = vunpack.c.l.b16 %v1363
        %v1548 = vunpack.c.h.b16 %v1363
        %v1549 = vunpack.c.l.b16 %v1364
        %v1550 = vunpack.c.h.b16 %v1364
        %v1551 = vunpack.c.l.b16 %v1365
        %v1552 = vunpack.c.h.b16 %v1365
        %v1553 = vunpack.c.l.b16 %v1366
        %v1554 = vunpack.c.h.b16 %v1366
        %v1555 = vunpack.c.l.b16 %v1367
        %v1556 = vunpack.c.h.b16 %v1367
        %v1557 = vunpack.c.l.b16 %v1368
        %v1558 = vunpack.c.h.b16 %v1368
        %v1559 = vunpack.c.l.b16 %v1369
        %v1560 = vunpack.c.h.b16 %v1369
        %v1561 = vunpack.c.l.b16 %v1370
        %v1562 = vunpack.c.h.b16 %v1370
        %v1563 = vunpack.c.l.b16 %v1371
        %v1564 = vunpack.c.h.b16 %v1371
        %v1565 = vunpack.c.l.b16 %v1372
        %v1566 = vunpack.c.h.b16 %v1372
        %v1567 = vunpack.c.l.b16 %v1373
        %v1568 = vunpack.c.h.b16 %v1373
        %v1569 = vunpack.c.l.b16 %v1374
        %v1570 = vunpack.c.h.b16 %v1374
        %v1571 = vunpack.c.l.b16 %v1375
        %v1572 = vunpack.c.h.b16 %v1375
        %v1573 = vunpack.c.l.b16 %v1376
        %v1574 = vunpack.c.h.b16 %v1376
        %v1575 = vunpack.c.l.b16 %v1377
        %v1576 = vunpack.c.h.b16 %v1377
        %v1577 = vunpack.c.l.b16 %v1378
        %v1578 = vunpack.c.h.b16 %v1378
        %v1579 = vunpack.c.l.b16 %v1379
        %v1580 = vunpack.c.h.b16 %v1379
        %v1581 = vunpack.c.l.b16 %v1380
        %v1582 = vunpack.c.h.b16 %v1380
        %v1583 = vunpack.c.l.b16 %v1381
        %v1584 = vunpack.c.h.b16 %v1381
        %v1585 = vunpack.c.l.b16 %v1382
        %v1586 = vunpack.c.h.b16 %v1382
        %v1587 = vunpack.c.l.b16 %v1383
        %v1588 = vunpack.c.h.b16 %v1383
        %v1589 = vunpack.c.l.b16 %v1384
        %v1590 = vunpack.c.h.b16 %v1384
        %v1591 = vunpack.c.l.b16 %v1385
        %v1592 = vunpack.c.h.b16 %v1385
        %v1593 = vunpack.c.l.b16 %v1386
        %v1594 = vunpack.c.h.b16 %v1386
        %v1595 = vpack.c.b16 %v1471, %v1467
        %v1596 = vpack.c.b16 %v1472, %v1468
        %v1597 = vpack.c.b16 %v1473, %v1469
        %v1598 = vpack.c.b16 %v1474, %v1470
        %v1599 = vpack.c.b16 %v1479, %v1475
        %v1600 = vpack.c.b16 %v1480, %v1476
        %v1601 = vpack.c.b16 %v1481, %v1477
        %v1602 = vpack.c.b16 %v1482, %v1478
        %v1603 = vpack.c.b16 %v1487, %v1483
        %v1604 = vpack.c.b16 %v1488, %v1484
        %v1605 = vpack.c.b16 %v1489, %v1485
        %v1606 = vpack.c.b16 %v1490, %v1486
        %v1607 = vpack.c.b16 %v1495, %v1491
        %v1608 = vpack.c.b16 %v1496, %v1492
        %v1609 = vpack.c.b16 %v1497, %v1493
        %v1610 = vpack.c.b16 %v1498, %v1494
        %v1611 = vpack.c.b16 %v1503, %v1499
        %v1612 = vpack.c.b16 %v1504, %v1500
        %v1613 = vpack.c.b16 %v1505, %v1501
        %v1614 = vpack.c.b16 %v1506, %v1502
        %v1615 = vpack.c.b16 %v1511, %v1507
        %v1616 = vpack.c.b16 %v1512, %v1508
        %v1617 = vpack.c.b16 %v1513, %v1509
        %v1618 = vpack.c.b16 %v1514, %v1510
        %v1619 = vpack.c.b16 %v1519, %v1515
        %v1620 = vpack.c.b16 %v1520, %v1516
        %v1621 = vpack.c.b16 %v1521, %v1517
        %v1622 = vpack.c.b16 %v1522, %v1518
        %v1623 = vpack.c.b16 %v1527, %v1523
        %v1624 = vpack.c.b16 %v1528, %v1524
        %v1625 = vpack.c.b16 %v1529, %v1525
        %v1626 = vpack.c.b16 %v1530, %v1526
        %v1627 = vpack.c.b16 %v1535, %v1531
        %v1628 = vpack.c.b16 %v1536, %v1532
        %v1629 = vpack.c.b16 %v1537, %v1533
        %v1630 = vpack.c.b16 %v1538, %v1534
        %v1631 = vpack.c.b16 %v1543, %v1539
        %v1632 = vpack.c.b16 %v1544, %v1540
        %v1633 = vpack.c.b16 %v1545, %v1541
        %v1634 = vpack.c.b16 %v1546, %v1542
        %v1635 = vpack.c.b16 %v1551, %v1547
        %v1636 = vpack.c.b16 %v1552, %v1548
        %v1637 = vpack.c.b16 %v1553, %v1549
        %v1638 = vpack.c.b16 %v1554, %v1550
        %v1639 = vpack.c.b16 %v1559, %v1555
        %v1640 = vpack.c.b16 %v1560, %v1556
        %v1641 = vpack.c.b16 %v1561, %v1557
        %v1642 = vpack.c.b16 %v1562, %v1558
        %v1643 = vpack.c.b16 %v1567, %v1563
        %v1644 = vpack.c.b16 %v1568, %v1564
        %v1645 = vpack.c.b16 %v1569, %v1565
        %v1646 = vpack.c.b16 %v1570, %v1566
        %v1647 = vpack.c.b16 %v1575, %v1571
        %v1648 = vpack.c.b16 %v1576, %v1572
        %v1649 = vpack.c.b16 %v1577, %v1573
        %v1650 = vpack.c.b16 %v1578, %v1574
        %v1651 = vpack.c.b16 %v1583, %v1579
        %v1652 = vpack.c.b16 %v1584, %v1580
        %v1653 = vpack.c.b16 %v1585, %v1581
        %v1654 = vpack.c.b16 %v1586, %v1582
        %v1655 = vpack.c.b16 %v1591, %v1587
        %v1656 = vpack.c.b16 %v1592, %v1588
        %v1657 = vpack.c.b16 %v1593, %v1589
        %v1658 = vpack.c.b16 %v1594, %v1590
        %1723 = vmatpush.bf16.msra.mxu0 %v1623
        %1724 = vmatpush.bf16.msra.mxu0 %v1619
        %1725 = vmatpush.bf16.msra.mxu0 %v1615
        %1726 = vmatpush.bf16.msra.mxu0 %v1611
        %1727 = vmatpush.bf16.msra.mxu0 %v1607
        %1728 = vmatpush.bf16.msra.mxu0 %v1603
        %1729 = vmatpush.bf16.msra.mxu0 %v1599
        %1730 = vmatpush.bf16.msra.mxu0 %v1595
        %1731 = vmatmul.bf16.gmra.mxu0 %v1395
        %v1732 = vpop.f32.mrf.mxu0
        %v1733 = vadd.f32 0.0, %v1732
        %v1734 = vpop.f32.mrf.mxu0
        %v1735 = vadd.f32 0.0, %v1734
        %1736 = vmatmul.bf16.gmra.mxu0 %v1394
        %v1737 = vpop.f32.mrf.mxu0
        %v1738 = vadd.f32 0.0, %v1737
        %v1739 = vpop.f32.mrf.mxu0
        %1740 = vdwg.mxu0
        %1741 = vmatpush.bf16.msra.mxu0 %v1655
        %1742 = vmatpush.bf16.msra.mxu0 %v1651
        %1743 = vmatpush.bf16.msra.mxu0 %v1647
        %1744 = vmatpush.bf16.msra.mxu0 %v1643
        %1745 = vmatpush.bf16.msra.mxu0 %v1639
        %1746 = vmatpush.bf16.msra.mxu0 %v1635
        %1747 = vmatpush.bf16.msra.mxu0 %v1631
        %1748 = vmatpush.bf16.msra.mxu0 %v1627
        %1749 = vmatmul.bf16.gmra.mxu0 %v1398
        %v1750 = vpop.f32.mrf.mxu0
        %v1751 = vadd.f32 %v1733, %v1750
        %v1752 = vpop.f32.mrf.mxu0
        %v1753 = vadd.f32 %v1735, %v1752
        %1754 = vmatmul.bf16.gmra.mxu0 %v1397
        %v1755 = vpop.f32.mrf.mxu0
        %v1756 = vadd.f32 %v1738, %v1755
        %v1757 = vpop.f32.mrf.mxu0
        %1758 = vdwg.mxu0
        %1759 = vmatpush.bf16.msra.mxu0 %v1624
        %1760 = vmatpush.bf16.msra.mxu0 %v1620
        %1761 = vmatpush.bf16.msra.mxu0 %v1616
        %1762 = vmatpush.bf16.msra.mxu0 %v1612
        %1763 = vmatpush.bf16.msra.mxu0 %v1608
        %1764 = vmatpush.bf16.msra.mxu0 %v1604
        %1765 = vmatpush.bf16.msra.mxu0 %v1600
        %1766 = vmatpush.bf16.msra.mxu0 %v1596
        %1767 = vmatmul.bf16.gmra.mxu0 %v1395
        %v1768 = vpop.f32.mrf.mxu0
        %v1769 = vadd.f32 0.0, %v1768
        %v1770 = vpop.f32.mrf.mxu0
        %v1771 = vadd.f32 0.0, %v1770
        %1772 = vmatmul.bf16.gmra.mxu0 %v1394
        %v1773 = vpop.f32.mrf.mxu0
        %v1774 = vadd.f32 0.0, %v1773
        %v1775 = vpop.f32.mrf.mxu0
        %1776 = vdwg.mxu0
        %1777 = vmatpush.bf16.msra.mxu0 %v1656
        %1778 = vmatpush.bf16.msra.mxu0 %v1652
        %1779 = vmatpush.bf16.msra.mxu0 %v1648
        %1780 = vmatpush.bf16.msra.mxu0 %v1644
        %1781 = vmatpush.bf16.msra.mxu0 %v1640
        %1782 = vmatpush.bf16.msra.mxu0 %v1636
        %1783 = vmatpush.bf16.msra.mxu0 %v1632
        %1784 = vmatpush.bf16.msra.mxu0 %v1628
        %1785 = vmatmul.bf16.gmra.mxu0 %v1398
        %v1786 = vpop.f32.mrf.mxu0
        %v1787 = vadd.f32 %v1769, %v1786
        %v1788 = vpop.f32.mrf.mxu0
        %v1789 = vadd.f32 %v1771, %v1788
        %1790 = vmatmul.bf16.gmra.mxu0 %v1397
        %v1791 = vpop.f32.mrf.mxu0
        %v1792 = vadd.f32 %v1774, %v1791
        %v1793 = vpop.f32.mrf.mxu0
        %1794 = vdwg.mxu0
        %1795 = vmatpush.bf16.msra.mxu0 %v1625
        %1796 = vmatpush.bf16.msra.mxu0 %v1621
        %1797 = vmatpush.bf16.msra.mxu0 %v1617
        %1798 = vmatpush.bf16.msra.mxu0 %v1613
        %1799 = vmatpush.bf16.msra.mxu0 %v1609
        %1800 = vmatpush.bf16.msra.mxu0 %v1605
        %1801 = vmatpush.bf16.msra.mxu0 %v1601
        %1802 = vmatpush.bf16.msra.mxu0 %v1597
        %1803 = vmatmul.bf16.gmra.mxu0 %v1395
        %v1804 = vpop.f32.mrf.mxu0
        %v1805 = vadd.f32 0.0, %v1804
        %v1806 = vpop.f32.mrf.mxu0
        %v1807 = vadd.f32 0.0, %v1806
        %1808 = vmatmul.bf16.gmra.mxu0 %v1394
        %v1809 = vpop.f32.mrf.mxu0
        %v1810 = vadd.f32 0.0, %v1809
        %v1811 = vpop.f32.mrf.mxu0
        %1812 = vdwg.mxu0
        %1813 = vmatpush.bf16.msra.mxu0 %v1657
        %1814 = vmatpush.bf16.msra.mxu0 %v1653
        %1815 = vmatpush.bf16.msra.mxu0 %v1649
        %1816 = vmatpush.bf16.msra.mxu0 %v1645
        %1817 = vmatpush.bf16.msra.mxu0 %v1641
        %1818 = vmatpush.bf16.msra.mxu0 %v1637
        %1819 = vmatpush.bf16.msra.mxu0 %v1633
        %1820 = vmatpush.bf16.msra.mxu0 %v1629
        %1821 = vmatmul.bf16.gmra.mxu0 %v1398
        %v1822 = vpop.f32.mrf.mxu0
        %v1823 = vadd.f32 %v1805, %v1822
        %v1824 = vpop.f32.mrf.mxu0
        %v1825 = vadd.f32 %v1807, %v1824
        %1826 = vmatmul.bf16.gmra.mxu0 %v1397
        %v1827 = vpop.f32.mrf.mxu0
        %v1828 = vadd.f32 %v1810, %v1827
        %v1829 = vpop.f32.mrf.mxu0
        %1830 = vdwg.mxu0
        %1831 = vmatpush.bf16.msra.mxu0 %v1626
        %1832 = vmatpush.bf16.msra.mxu0 %v1622
        %1833 = vmatpush.bf16.msra.mxu0 %v1618
        %1834 = vmatpush.bf16.msra.mxu0 %v1614
        %1835 = vmatpush.bf16.msra.mxu0 %v1610
        %1836 = vmatpush.bf16.msra.mxu0 %v1606
        %1837 = vmatpush.bf16.msra.mxu0 %v1602
        %1838 = vmatpush.bf16.msra.mxu0 %v1598
        %1839 = vmatmul.bf16.gmra.mxu0 %v1395
        %v1840 = vpop.f32.mrf.mxu0
        %v1841 = vadd.f32 0.0, %v1840
        %v1842 = vpop.f32.mrf.mxu0
        %v1843 = vadd.f32 0.0, %v1842
        %1844 = vmatmul.bf16.gmra.mxu0 %v1394
        %v1845 = vpop.f32.mrf.mxu0
        %v1846 = vadd.f32 0.0, %v1845
        %v1847 = vpop.f32.mrf.mxu0
        %1848 = vdwg.mxu0
        %1849 = vmatpush.bf16.msra.mxu0 %v1658
        %1850 = vmatpush.bf16.msra.mxu0 %v1654
        %1851 = vmatpush.bf16.msra.mxu0 %v1650
        %1852 = vmatpush.bf16.msra.mxu0 %v1646
        %1853 = vmatpush.bf16.msra.mxu0 %v1642
        %1854 = vmatpush.bf16.msra.mxu0 %v1638
        %1855 = vmatpush.bf16.msra.mxu0 %v1634
        %1856 = vmatpush.bf16.msra.mxu0 %v1630
        %1857 = vmatmul.bf16.gmra.mxu0 %v1398
        %v1858 = vpop.f32.mrf.mxu0
        %v1859 = vadd.f32 %v1841, %v1858
        %v1860 = vpop.f32.mrf.mxu0
        %v1861 = vadd.f32 %v1843, %v1860
        %1862 = vmatmul.bf16.gmra.mxu0 %v1397
        %v1863 = vpop.f32.mrf.mxu0
        %v1864 = vadd.f32 %v1846, %v1863
        %v1865 = vpop.f32.mrf.mxu0
        %1866 = vdwg.mxu0
        %v1867 = vadd.f32 %v1205, %v1751
        %v1868 = vadd.f32 %v1241, %v1787
        %v1869 = vadd.f32 %v1277, %v1823
        %v1870 = vadd.f32 %v1313, %v1859
        %v1871 = vadd.f32 %v1207, %v1753
        %v1872 = vadd.f32 %v1243, %v1789
        %v1873 = vadd.f32 %v1279, %v1825
        %v1874 = vadd.f32 %v1315, %v1861
        %v1875 = vadd.f32 %v1210, %v1756
        %v1876 = vadd.f32 %v1246, %v1792
        %v1877 = vadd.f32 %v1282, %v1828
        %v1878 = vadd.f32 %v1318, %v1864
        %v1879 = vld [vmem:[%s197] sm:$0x88]
        %v1880 = vld [vmem:[%s197 + $0x18] sm:$0x77]
        %s1881 = scalar_lea.vmem [#allocation2], 1536
        %v1882 = vld [vmem:[%s1881] sm:$0xff]
        %v1883 = vld [vmem:[%s1881 + $0x8] sm:$0xff]
        %v1884 = vld [vmem:[%s1881 + $0x10] sm:$0xff]
        %v1885 = vld [vmem:[%s1881 + $0x18] sm:$0xff]
        %v1886 = vld [vmem:[%s1881 + $0x20] sm:$0xff]
        %v1887 = vld [vmem:[%s1881 + $0x28] sm:$0xff]
        %v1888 = vld [vmem:[%s1881 + $0x30] sm:$0xff]
        %v1889 = vld [vmem:[%s1881 + $0x38] sm:$0xff]
        %v1890 = vld [vmem:[%s1881 + $0x40] sm:$0xff]
        %v1891 = vld [vmem:[%s1881 + $0x48] sm:$0xff]
        %v1892 = vld [vmem:[%s1881 + $0x50] sm:$0xff]
        %v1893 = vld [vmem:[%s1881 + $0x58] sm:$0xff]
        %v1894 = vld [vmem:[%s1881 + $0x60] sm:$0xff]
        %v1895 = vld [vmem:[%s1881 + $0x68] sm:$0xff]
        %v1896 = vld [vmem:[%s1881 + $0x70] sm:$0xff]
        %v1897 = vld [vmem:[%s1881 + $0x78] sm:$0xff]
        %v1898 = vld [vmem:[%s1881 + $0x80] sm:$0xff]
        %v1899 = vld [vmem:[%s1881 + $0x88] sm:$0xff]
        %v1900 = vld [vmem:[%s1881 + $0x90] sm:$0xff]
        %v1901 = vld [vmem:[%s1881 + $0x98] sm:$0xff]
        %v1902 = vld [vmem:[%s1881 + $0xa0] sm:$0xff]
        %v1903 = vld [vmem:[%s1881 + $0xa8] sm:$0xff]
        %v1904 = vld [vmem:[%s1881 + $0xb0] sm:$0xff]
        %v1905 = vld [vmem:[%s1881 + $0xb8] sm:$0xff]
        %v1906 = vld [vmem:[%s1881 + $0xc0] sm:$0xff]
        %v1907 = vld [vmem:[%s1881 + $0xc8] sm:$0xff]
        %v1908 = vld [vmem:[%s1881 + $0xd0] sm:$0xff]
        %v1909 = vld [vmem:[%s1881 + $0xd8] sm:$0xff]
        %v1910 = vld [vmem:[%s1881 + $0xe0] sm:$0xff]
        %v1911 = vld [vmem:[%s1881 + $0xe8] sm:$0xff]
        %v1912 = vld [vmem:[%s1881 + $0xf0] sm:$0xff]
        %v1913 = vld [vmem:[%s1881 + $0xf8] sm:$0xff]
        %v1914 = vld [vmem:[%s1881 + $0x100] sm:$0xff]
        %v1915 = vld [vmem:[%s1881 + $0x108] sm:$0xff]
        %v1916 = vld [vmem:[%s1881 + $0x110] sm:$0xff]
        %v1917 = vld [vmem:[%s1881 + $0x118] sm:$0xff]
        %v1918 = vld [vmem:[%s1881 + $0x120] sm:$0xff]
        %v1919 = vld [vmem:[%s1881 + $0x128] sm:$0xff]
        %v1920 = vld [vmem:[%s1881 + $0x130] sm:$0xff]
        %v1921 = vld [vmem:[%s1881 + $0x138] sm:$0xff]
        %v1922 = vld [vmem:[%s1881 + $0x140] sm:$0xff]
        %v1923 = vld [vmem:[%s1881 + $0x148] sm:$0xff]
        %v1924 = vld [vmem:[%s1881 + $0x150] sm:$0xff]
        %v1925 = vld [vmem:[%s1881 + $0x158] sm:$0xff]
        %v1926 = vld [vmem:[%s1881 + $0x160] sm:$0xff]
        %v1927 = vld [vmem:[%s1881 + $0x168] sm:$0xff]
        %v1928 = vld [vmem:[%s1881 + $0x170] sm:$0xff]
        %v1929 = vld [vmem:[%s1881 + $0x178] sm:$0xff]
        %v1930 = vld [vmem:[%s1881 + $0x180] sm:$0xff]
        %v1931 = vld [vmem:[%s1881 + $0x188] sm:$0xff]
        %v1932 = vld [vmem:[%s1881 + $0x190] sm:$0xff]
        %v1933 = vld [vmem:[%s1881 + $0x198] sm:$0xff]
        %v1934 = vld [vmem:[%s1881 + $0x1a0] sm:$0xff]
        %v1935 = vld [vmem:[%s1881 + $0x1a8] sm:$0xff]
        %v1936 = vld [vmem:[%s1881 + $0x1b0] sm:$0xff]
        %v1937 = vld [vmem:[%s1881 + $0x1b8] sm:$0xff]
        %v1938 = vld [vmem:[%s1881 + $0x1c0] sm:$0xff]
        %v1939 = vld [vmem:[%s1881 + $0x1c8] sm:$0xff]
        %v1940 = vld [vmem:[%s1881 + $0x1d0] sm:$0xff]
        %v1941 = vld [vmem:[%s1881 + $0x1d8] sm:$0xff]
        %v1942 = vld [vmem:[%s1881 + $0x1e0] sm:$0xff]
        %v1943 = vld [vmem:[%s1881 + $0x1e8] sm:$0xff]
        %v1944 = vld [vmem:[%s1881 + $0x1f0] sm:$0xff]
        %v1945 = vld [vmem:[%s1881 + $0x1f8] sm:$0xff]
        %v1948 = vunpack.c.l.b16 %v1879
        %v1949 = vunpack.c.h.b16 %v1879
        %v1950 = vunpack.c.l.b16 %v1880
        %v1951 = vunpack.c.h.b16 %v1880
        %v1952 = vpack.c.b16 %v342, %v1948
        %v1953 = vpack.c.b16 %v343, %v1949
        %v1954 = vpack.c.b16 %v1950, %v344
        %v1955 = vpack.c.b16 %v1951, %v345
        %vm1956 = vcmask 1044480
        %v1957 = vrot.slane %v1952, 3
        %v1958 = vrot.slane %v1954, 3
        %v1959 = vsel %vm1956, %v1957, %v1958
        %v1960 = vrot.slane %v1953, 3
        %v1961 = vrot.slane %v1955, 3
        %v1962 = vsel %vm1956, %v1960, %v1961
        %v2031 = vunpack.c.l.b16 %v1882
        %v2032 = vunpack.c.h.b16 %v1882
        %v2033 = vunpack.c.l.b16 %v1883
        %v2034 = vunpack.c.h.b16 %v1883
        %v2035 = vunpack.c.l.b16 %v1884
        %v2036 = vunpack.c.h.b16 %v1884
        %v2037 = vunpack.c.l.b16 %v1885
        %v2038 = vunpack.c.h.b16 %v1885
        %v2039 = vunpack.c.l.b16 %v1886
        %v2040 = vunpack.c.h.b16 %v1886
        %v2041 = vunpack.c.l.b16 %v1887
        %v2042 = vunpack.c.h.b16 %v1887
        %v2043 = vunpack.c.l.b16 %v1888
        %v2044 = vunpack.c.h.b16 %v1888
        %v2045 = vunpack.c.l.b16 %v1889
        %v2046 = vunpack.c.h.b16 %v1889
        %v2047 = vunpack.c.l.b16 %v1890
        %v2048 = vunpack.c.h.b16 %v1890
        %v2049 = vunpack.c.l.b16 %v1891
        %v2050 = vunpack.c.h.b16 %v1891
        %v2051 = vunpack.c.l.b16 %v1892
        %v2052 = vunpack.c.h.b16 %v1892
        %v2053 = vunpack.c.l.b16 %v1893
        %v2054 = vunpack.c.h.b16 %v1893
        %v2055 = vunpack.c.l.b16 %v1894
        %v2056 = vunpack.c.h.b16 %v1894
        %v2057 = vunpack.c.l.b16 %v1895
        %v2058 = vunpack.c.h.b16 %v1895
        %v2059 = vunpack.c.l.b16 %v1896
        %v2060 = vunpack.c.h.b16 %v1896
        %v2061 = vunpack.c.l.b16 %v1897
        %v2062 = vunpack.c.h.b16 %v1897
        %v2063 = vunpack.c.l.b16 %v1898
        %v2064 = vunpack.c.h.b16 %v1898
        %v2065 = vunpack.c.l.b16 %v1899
        %v2066 = vunpack.c.h.b16 %v1899
        %v2067 = vunpack.c.l.b16 %v1900
        %v2068 = vunpack.c.h.b16 %v1900
        %v2069 = vunpack.c.l.b16 %v1901
        %v2070 = vunpack.c.h.b16 %v1901
        %v2071 = vunpack.c.l.b16 %v1902
        %v2072 = vunpack.c.h.b16 %v1902
        %v2073 = vunpack.c.l.b16 %v1903
        %v2074 = vunpack.c.h.b16 %v1903
        %v2075 = vunpack.c.l.b16 %v1904
        %v2076 = vunpack.c.h.b16 %v1904
        %v2077 = vunpack.c.l.b16 %v1905
        %v2078 = vunpack.c.h.b16 %v1905
        %v2079 = vunpack.c.l.b16 %v1906
        %v2080 = vunpack.c.h.b16 %v1906
        %v2081 = vunpack.c.l.b16 %v1907
        %v2082 = vunpack.c.h.b16 %v1907
        %v2083 = vunpack.c.l.b16 %v1908
        %v2084 = vunpack.c.h.b16 %v1908
        %v2085 = vunpack.c.l.b16 %v1909
        %v2086 = vunpack.c.h.b16 %v1909
        %v2087 = vunpack.c.l.b16 %v1910
        %v2088 = vunpack.c.h.b16 %v1910
        %v2089 = vunpack.c.l.b16 %v1911
        %v2090 = vunpack.c.h.b16 %v1911
        %v2091 = vunpack.c.l.b16 %v1912
        %v2092 = vunpack.c.h.b16 %v1912
        %v2093 = vunpack.c.l.b16 %v1913
        %v2094 = vunpack.c.h.b16 %v1913
        %v2095 = vunpack.c.l.b16 %v1914
        %v2096 = vunpack.c.h.b16 %v1914
        %v2097 = vunpack.c.l.b16 %v1915
        %v2098 = vunpack.c.h.b16 %v1915
        %v2099 = vunpack.c.l.b16 %v1916
        %v2100 = vunpack.c.h.b16 %v1916
        %v2101 = vunpack.c.l.b16 %v1917
        %v2102 = vunpack.c.h.b16 %v1917
        %v2103 = vunpack.c.l.b16 %v1918
        %v2104 = vunpack.c.h.b16 %v1918
        %v2105 = vunpack.c.l.b16 %v1919
        %v2106 = vunpack.c.h.b16 %v1919
        %v2107 = vunpack.c.l.b16 %v1920
        %v2108 = vunpack.c.h.b16 %v1920
        %v2109 = vunpack.c.l.b16 %v1921
        %v2110 = vunpack.c.h.b16 %v1921
        %v2111 = vunpack.c.l.b16 %v1922
        %v2112 = vunpack.c.h.b16 %v1922
        %v2113 = vunpack.c.l.b16 %v1923
        %v2114 = vunpack.c.h.b16 %v1923
        %v2115 = vunpack.c.l.b16 %v1924
        %v2116 = vunpack.c.h.b16 %v1924
        %v2117 = vunpack.c.l.b16 %v1925
        %v2118 = vunpack.c.h.b16 %v1925
        %v2119 = vunpack.c.l.b16 %v1926
        %v2120 = vunpack.c.h.b16 %v1926
        %v2121 = vunpack.c.l.b16 %v1927
        %v2122 = vunpack.c.h.b16 %v1927
        %v2123 = vunpack.c.l.b16 %v1928
        %v2124 = vunpack.c.h.b16 %v1928
        %v2125 = vunpack.c.l.b16 %v1929
        %v2126 = vunpack.c.h.b16 %v1929
        %v2127 = vunpack.c.l.b16 %v1930
        %v2128 = vunpack.c.h.b16 %v1930
        %v2129 = vunpack.c.l.b16 %v1931
        %v2130 = vunpack.c.h.b16 %v1931
        %v2131 = vunpack.c.l.b16 %v1932
        %v2132 = vunpack.c.h.b16 %v1932
        %v2133 = vunpack.c.l.b16 %v1933
        %v2134 = vunpack.c.h.b16 %v1933
        %v2135 = vunpack.c.l.b16 %v1934
        %v2136 = vunpack.c.h.b16 %v1934
        %v2137 = vunpack.c.l.b16 %v1935
        %v2138 = vunpack.c.h.b16 %v1935
        %v2139 = vunpack.c.l.b16 %v1936
        %v2140 = vunpack.c.h.b16 %v1936
        %v2141 = vunpack.c.l.b16 %v1937
        %v2142 = vunpack.c.h.b16 %v1937
        %v2143 = vunpack.c.l.b16 %v1938
        %v2144 = vunpack.c.h.b16 %v1938
        %v2145 = vunpack.c.l.b16 %v1939
        %v2146 = vunpack.c.h.b16 %v1939
        %v2147 = vunpack.c.l.b16 %v1940
        %v2148 = vunpack.c.h.b16 %v1940
        %v2149 = vunpack.c.l.b16 %v1941
        %v2150 = vunpack.c.h.b16 %v1941
        %v2151 = vunpack.c.l.b16 %v1942
        %v2152 = vunpack.c.h.b16 %v1942
        %v2153 = vunpack.c.l.b16 %v1943
        %v2154 = vunpack.c.h.b16 %v1943
        %v2155 = vunpack.c.l.b16 %v1944
        %v2156 = vunpack.c.h.b16 %v1944
        %v2157 = vunpack.c.l.b16 %v1945
        %v2158 = vunpack.c.h.b16 %v1945
        %v2159 = vpack.c.b16 %v2035, %v2031
        %v2160 = vpack.c.b16 %v2036, %v2032
        %v2161 = vpack.c.b16 %v2037, %v2033
        %v2162 = vpack.c.b16 %v2038, %v2034
        %v2163 = vpack.c.b16 %v2043, %v2039
        %v2164 = vpack.c.b16 %v2044, %v2040
        %v2165 = vpack.c.b16 %v2045, %v2041
        %v2166 = vpack.c.b16 %v2046, %v2042
        %v2167 = vpack.c.b16 %v2051, %v2047
        %v2168 = vpack.c.b16 %v2052, %v2048
        %v2169 = vpack.c.b16 %v2053, %v2049
        %v2170 = vpack.c.b16 %v2054, %v2050
        %v2171 = vpack.c.b16 %v2059, %v2055
        %v2172 = vpack.c.b16 %v2060, %v2056
        %v2173 = vpack.c.b16 %v2061, %v2057
        %v2174 = vpack.c.b16 %v2062, %v2058
        %v2175 = vpack.c.b16 %v2067, %v2063
        %v2176 = vpack.c.b16 %v2068, %v2064
        %v2177 = vpack.c.b16 %v2069, %v2065
        %v2178 = vpack.c.b16 %v2070, %v2066
        %v2179 = vpack.c.b16 %v2075, %v2071
        %v2180 = vpack.c.b16 %v2076, %v2072
        %v2181 = vpack.c.b16 %v2077, %v2073
        %v2182 = vpack.c.b16 %v2078, %v2074
        %v2183 = vpack.c.b16 %v2083, %v2079
        %v2184 = vpack.c.b16 %v2084, %v2080
        %v2185 = vpack.c.b16 %v2085, %v2081
        %v2186 = vpack.c.b16 %v2086, %v2082
        %v2187 = vpack.c.b16 %v2091, %v2087
        %v2188 = vpack.c.b16 %v2092, %v2088
        %v2189 = vpack.c.b16 %v2093, %v2089
        %v2190 = vpack.c.b16 %v2094, %v2090
        %v2191 = vpack.c.b16 %v2099, %v2095
        %v2192 = vpack.c.b16 %v2100, %v2096
        %v2193 = vpack.c.b16 %v2101, %v2097
        %v2194 = vpack.c.b16 %v2102, %v2098
        %v2195 = vpack.c.b16 %v2107, %v2103
        %v2196 = vpack.c.b16 %v2108, %v2104
        %v2197 = vpack.c.b16 %v2109, %v2105
        %v2198 = vpack.c.b16 %v2110, %v2106
        %v2199 = vpack.c.b16 %v2115, %v2111
        %v2200 = vpack.c.b16 %v2116, %v2112
        %v2201 = vpack.c.b16 %v2117, %v2113
        %v2202 = vpack.c.b16 %v2118, %v2114
        %v2203 = vpack.c.b16 %v2123, %v2119
        %v2204 = vpack.c.b16 %v2124, %v2120
        %v2205 = vpack.c.b16 %v2125, %v2121
        %v2206 = vpack.c.b16 %v2126, %v2122
        %v2207 = vpack.c.b16 %v2131, %v2127
        %v2208 = vpack.c.b16 %v2132, %v2128
        %v2209 = vpack.c.b16 %v2133, %v2129
        %v2210 = vpack.c.b16 %v2134, %v2130
        %v2211 = vpack.c.b16 %v2139, %v2135
        %v2212 = vpack.c.b16 %v2140, %v2136
        %v2213 = vpack.c.b16 %v2141, %v2137
        %v2214 = vpack.c.b16 %v2142, %v2138
        %v2215 = vpack.c.b16 %v2147, %v2143
        %v2216 = vpack.c.b16 %v2148, %v2144
        %v2217 = vpack.c.b16 %v2149, %v2145
        %v2218 = vpack.c.b16 %v2150, %v2146
        %v2219 = vpack.c.b16 %v2155, %v2151
        %v2220 = vpack.c.b16 %v2156, %v2152
        %v2221 = vpack.c.b16 %v2157, %v2153
        %v2222 = vpack.c.b16 %v2158, %v2154
        %2287 = vmatpush.bf16.msra.mxu0 %v2187
        %2288 = vmatpush.bf16.msra.mxu0 %v2183
        %2289 = vmatpush.bf16.msra.mxu0 %v2179
        %2290 = vmatpush.bf16.msra.mxu0 %v2175
        %2291 = vmatpush.bf16.msra.mxu0 %v2171
        %2292 = vmatpush.bf16.msra.mxu0 %v2167
        %2293 = vmatpush.bf16.msra.mxu0 %v2163
        %2294 = vmatpush.bf16.msra.mxu0 %v2159
        %2295 = vmatmul.bf16.gmra.mxu0 %v1959
        %v2296 = vpop.f32.mrf.mxu0
        %v2297 = vadd.f32 0.0, %v2296
        %v2298 = vpop.f32.mrf.mxu0
        %v2299 = vadd.f32 0.0, %v2298
        %2300 = vmatmul.bf16.gmra.mxu0 %v1958
        %v2301 = vpop.f32.mrf.mxu0
        %v2302 = vadd.f32 0.0, %v2301
        %v2303 = vpop.f32.mrf.mxu0
        %2304 = vdwg.mxu0
        %2305 = vmatpush.bf16.msra.mxu0 %v2219
        %2306 = vmatpush.bf16.msra.mxu0 %v2215
        %2307 = vmatpush.bf16.msra.mxu0 %v2211
        %2308 = vmatpush.bf16.msra.mxu0 %v2207
        %2309 = vmatpush.bf16.msra.mxu0 %v2203
        %2310 = vmatpush.bf16.msra.mxu0 %v2199
        %2311 = vmatpush.bf16.msra.mxu0 %v2195
        %2312 = vmatpush.bf16.msra.mxu0 %v2191
        %2313 = vmatmul.bf16.gmra.mxu0 %v1962
        %v2314 = vpop.f32.mrf.mxu0
        %v2315 = vadd.f32 %v2297, %v2314
        %v2316 = vpop.f32.mrf.mxu0
        %v2317 = vadd.f32 %v2299, %v2316
        %2318 = vmatmul.bf16.gmra.mxu0 %v1961
        %v2319 = vpop.f32.mrf.mxu0
        %v2320 = vadd.f32 %v2302, %v2319
        %v2321 = vpop.f32.mrf.mxu0
        %2322 = vdwg.mxu0
        %2323 = vmatpush.bf16.msra.mxu0 %v2188
        %2324 = vmatpush.bf16.msra.mxu0 %v2184
        %2325 = vmatpush.bf16.msra.mxu0 %v2180
        %2326 = vmatpush.bf16.msra.mxu0 %v2176
        %2327 = vmatpush.bf16.msra.mxu0 %v2172
        %2328 = vmatpush.bf16.msra.mxu0 %v2168
        %2329 = vmatpush.bf16.msra.mxu0 %v2164
        %2330 = vmatpush.bf16.msra.mxu0 %v2160
        %2331 = vmatmul.bf16.gmra.mxu0 %v1959
        %v2332 = vpop.f32.mrf.mxu0
        %v2333 = vadd.f32 0.0, %v2332
        %v2334 = vpop.f32.mrf.mxu0
        %v2335 = vadd.f32 0.0, %v2334
        %2336 = vmatmul.bf16.gmra.mxu0 %v1958
        %v2337 = vpop.f32.mrf.mxu0
        %v2338 = vadd.f32 0.0, %v2337
        %v2339 = vpop.f32.mrf.mxu0
        %2340 = vdwg.mxu0
        %2341 = vmatpush.bf16.msra.mxu0 %v2220
        %2342 = vmatpush.bf16.msra.mxu0 %v2216
        %2343 = vmatpush.bf16.msra.mxu0 %v2212
        %2344 = vmatpush.bf16.msra.mxu0 %v2208
        %2345 = vmatpush.bf16.msra.mxu0 %v2204
        %2346 = vmatpush.bf16.msra.mxu0 %v2200
        %2347 = vmatpush.bf16.msra.mxu0 %v2196
        %2348 = vmatpush.bf16.msra.mxu0 %v2192
        %2349 = vmatmul.bf16.gmra.mxu0 %v1962
        %v2350 = vpop.f32.mrf.mxu0
        %v2351 = vadd.f32 %v2333, %v2350
        %v2352 = vpop.f32.mrf.mxu0
        %v2353 = vadd.f32 %v2335, %v2352
        %2354 = vmatmul.bf16.gmra.mxu0 %v1961
        %v2355 = vpop.f32.mrf.mxu0
        %v2356 = vadd.f32 %v2338, %v2355
        %v2357 = vpop.f32.mrf.mxu0
        %2358 = vdwg.mxu0
        %2359 = vmatpush.bf16.msra.mxu0 %v2189
        %2360 = vmatpush.bf16.msra.mxu0 %v2185
        %2361 = vmatpush.bf16.msra.mxu0 %v2181
        %2362 = vmatpush.bf16.msra.mxu0 %v2177
        %2363 = vmatpush.bf16.msra.mxu0 %v2173
        %2364 = vmatpush.bf16.msra.mxu0 %v2169
        %2365 = vmatpush.bf16.msra.mxu0 %v2165
        %2366 = vmatpush.bf16.msra.mxu0 %v2161
        %2367 = vmatmul.bf16.gmra.mxu0 %v1959
        %v2368 = vpop.f32.mrf.mxu0
        %v2369 = vadd.f32 0.0, %v2368
        %v2370 = vpop.f32.mrf.mxu0
        %v2371 = vadd.f32 0.0, %v2370
        %2372 = vmatmul.bf16.gmra.mxu0 %v1958
        %v2373 = vpop.f32.mrf.mxu0
        %v2374 = vadd.f32 0.0, %v2373
        %v2375 = vpop.f32.mrf.mxu0
        %2376 = vdwg.mxu0
        %2377 = vmatpush.bf16.msra.mxu0 %v2221
        %2378 = vmatpush.bf16.msra.mxu0 %v2217
        %2379 = vmatpush.bf16.msra.mxu0 %v2213
        %2380 = vmatpush.bf16.msra.mxu0 %v2209
        %2381 = vmatpush.bf16.msra.mxu0 %v2205
        %2382 = vmatpush.bf16.msra.mxu0 %v2201
        %2383 = vmatpush.bf16.msra.mxu0 %v2197
        %2384 = vmatpush.bf16.msra.mxu0 %v2193
        %2385 = vmatmul.bf16.gmra.mxu0 %v1962
        %v2386 = vpop.f32.mrf.mxu0
        %v2387 = vadd.f32 %v2369, %v2386
        %v2388 = vpop.f32.mrf.mxu0
        %v2389 = vadd.f32 %v2371, %v2388
        %2390 = vmatmul.bf16.gmra.mxu0 %v1961
        %v2391 = vpop.f32.mrf.mxu0
        %v2392 = vadd.f32 %v2374, %v2391
        %v2393 = vpop.f32.mrf.mxu0
        %2394 = vdwg.mxu0
        %2395 = vmatpush.bf16.msra.mxu0 %v2190
        %2396 = vmatpush.bf16.msra.mxu0 %v2186
        %2397 = vmatpush.bf16.msra.mxu0 %v2182
        %2398 = vmatpush.bf16.msra.mxu0 %v2178
        %2399 = vmatpush.bf16.msra.mxu0 %v2174
        %2400 = vmatpush.bf16.msra.mxu0 %v2170
        %2401 = vmatpush.bf16.msra.mxu0 %v2166
        %2402 = vmatpush.bf16.msra.mxu0 %v2162
        %2403 = vmatmul.bf16.gmra.mxu0 %v1959
        %v2404 = vpop.f32.mrf.mxu0
        %v2405 = vadd.f32 0.0, %v2404
        %v2406 = vpop.f32.mrf.mxu0
        %v2407 = vadd.f32 0.0, %v2406
        %2408 = vmatmul.bf16.gmra.mxu0 %v1958
        %v2409 = vpop.f32.mrf.mxu0
        %v2410 = vadd.f32 0.0, %v2409
        %v2411 = vpop.f32.mrf.mxu0
        %2412 = vdwg.mxu0
        %2413 = vmatpush.bf16.msra.mxu0 %v2222
        %2414 = vmatpush.bf16.msra.mxu0 %v2218
        %2415 = vmatpush.bf16.msra.mxu0 %v2214
        %2416 = vmatpush.bf16.msra.mxu0 %v2210
        %2417 = vmatpush.bf16.msra.mxu0 %v2206
        %2418 = vmatpush.bf16.msra.mxu0 %v2202
        %2419 = vmatpush.bf16.msra.mxu0 %v2198
        %2420 = vmatpush.bf16.msra.mxu0 %v2194
        %2421 = vmatmul.bf16.gmra.mxu0 %v1962
        %v2422 = vpop.f32.mrf.mxu0
        %v2423 = vadd.f32 %v2405, %v2422
        %v2424 = vpop.f32.mrf.mxu0
        %v2425 = vadd.f32 %v2407, %v2424
        %2426 = vmatmul.bf16.gmra.mxu0 %v1961
        %v2427 = vpop.f32.mrf.mxu0
        %v2428 = vadd.f32 %v2410, %v2427
        %v2429 = vpop.f32.mrf.mxu0
        %2430 = vdwg.mxu0
        %v2431 = vadd.f32 %v1867, %v2315
        %v2432 = vadd.f32 %v1868, %v2351
        %v2433 = vadd.f32 %v1869, %v2387
        %v2434 = vadd.f32 %v1870, %v2423
        %v2435 = vadd.f32 %v1871, %v2317
        %v2436 = vadd.f32 %v1872, %v2353
        %v2437 = vadd.f32 %v1873, %v2389
        %v2438 = vadd.f32 %v1874, %v2425
        %v2439 = vadd.f32 %v1875, %v2320
        %v2440 = vadd.f32 %v1876, %v2356
        %v2441 = vadd.f32 %v1877, %v2392
        %v2442 = vadd.f32 %v1878, %v2428
        %v2443 = vld [vmem:[%s197 + $0x18] sm:$0xff]
        %s2444 = scalar_lea.vmem [#allocation2], 2048
        %v2445 = vld [vmem:[%s2444] sm:$0xff]
        %v2446 = vld [vmem:[%s2444 + $0x8] sm:$0xff]
        %v2447 = vld [vmem:[%s2444 + $0x10] sm:$0xff]
        %v2448 = vld [vmem:[%s2444 + $0x18] sm:$0xff]
        %v2449 = vld [vmem:[%s2444 + $0x20] sm:$0xff]
        %v2450 = vld [vmem:[%s2444 + $0x28] sm:$0xff]
        %v2451 = vld [vmem:[%s2444 + $0x30] sm:$0xff]
        %v2452 = vld [vmem:[%s2444 + $0x38] sm:$0xff]
        %v2453 = vld [vmem:[%s2444 + $0x40] sm:$0xff]
        %v2454 = vld [vmem:[%s2444 + $0x48] sm:$0xff]
        %v2455 = vld [vmem:[%s2444 + $0x50] sm:$0xff]
        %v2456 = vld [vmem:[%s2444 + $0x58] sm:$0xff]
        %v2457 = vld [vmem:[%s2444 + $0x60] sm:$0xff]
        %v2458 = vld [vmem:[%s2444 + $0x68] sm:$0xff]
        %v2459 = vld [vmem:[%s2444 + $0x70] sm:$0xff]
        %v2460 = vld [vmem:[%s2444 + $0x78] sm:$0xff]
        %v2461 = vld [vmem:[%s2444 + $0x80] sm:$0xff]
        %v2462 = vld [vmem:[%s2444 + $0x88] sm:$0xff]
        %v2463 = vld [vmem:[%s2444 + $0x90] sm:$0xff]
        %v2464 = vld [vmem:[%s2444 + $0x98] sm:$0xff]
        %v2465 = vld [vmem:[%s2444 + $0xa0] sm:$0xff]
        %v2466 = vld [vmem:[%s2444 + $0xa8] sm:$0xff]
        %v2467 = vld [vmem:[%s2444 + $0xb0] sm:$0xff]
        %v2468 = vld [vmem:[%s2444 + $0xb8] sm:$0xff]
        %v2469 = vld [vmem:[%s2444 + $0xc0] sm:$0xff]
        %v2470 = vld [vmem:[%s2444 + $0xc8] sm:$0xff]
        %v2471 = vld [vmem:[%s2444 + $0xd0] sm:$0xff]
        %v2472 = vld [vmem:[%s2444 + $0xd8] sm:$0xff]
        %v2473 = vld [vmem:[%s2444 + $0xe0] sm:$0xff]
        %v2474 = vld [vmem:[%s2444 + $0xe8] sm:$0xff]
        %v2475 = vld [vmem:[%s2444 + $0xf0] sm:$0xff]
        %v2476 = vld [vmem:[%s2444 + $0xf8] sm:$0xff]
        %v2477 = vld [vmem:[%s2444 + $0x100] sm:$0xff]
        %v2478 = vld [vmem:[%s2444 + $0x108] sm:$0xff]
        %v2479 = vld [vmem:[%s2444 + $0x110] sm:$0xff]
        %v2480 = vld [vmem:[%s2444 + $0x118] sm:$0xff]
        %v2481 = vld [vmem:[%s2444 + $0x120] sm:$0xff]
        %v2482 = vld [vmem:[%s2444 + $0x128] sm:$0xff]
        %v2483 = vld [vmem:[%s2444 + $0x130] sm:$0xff]
        %v2484 = vld [vmem:[%s2444 + $0x138] sm:$0xff]
        %v2485 = vld [vmem:[%s2444 + $0x140] sm:$0xff]
        %v2486 = vld [vmem:[%s2444 + $0x148] sm:$0xff]
        %v2487 = vld [vmem:[%s2444 + $0x150] sm:$0xff]
        %v2488 = vld [vmem:[%s2444 + $0x158] sm:$0xff]
        %v2489 = vld [vmem:[%s2444 + $0x160] sm:$0xff]
        %v2490 = vld [vmem:[%s2444 + $0x168] sm:$0xff]
        %v2491 = vld [vmem:[%s2444 + $0x170] sm:$0xff]
        %v2492 = vld [vmem:[%s2444 + $0x178] sm:$0xff]
        %v2493 = vld [vmem:[%s2444 + $0x180] sm:$0xff]
        %v2494 = vld [vmem:[%s2444 + $0x188] sm:$0xff]
        %v2495 = vld [vmem:[%s2444 + $0x190] sm:$0xff]
        %v2496 = vld [vmem:[%s2444 + $0x198] sm:$0xff]
        %v2497 = vld [vmem:[%s2444 + $0x1a0] sm:$0xff]
        %v2498 = vld [vmem:[%s2444 + $0x1a8] sm:$0xff]
        %v2499 = vld [vmem:[%s2444 + $0x1b0] sm:$0xff]
        %v2500 = vld [vmem:[%s2444 + $0x1b8] sm:$0xff]
        %v2501 = vld [vmem:[%s2444 + $0x1c0] sm:$0xff]
        %v2502 = vld [vmem:[%s2444 + $0x1c8] sm:$0xff]
        %v2503 = vld [vmem:[%s2444 + $0x1d0] sm:$0xff]
        %v2504 = vld [vmem:[%s2444 + $0x1d8] sm:$0xff]
        %v2505 = vld [vmem:[%s2444 + $0x1e0] sm:$0xff]
        %v2506 = vld [vmem:[%s2444 + $0x1e8] sm:$0xff]
        %v2507 = vld [vmem:[%s2444 + $0x1f0] sm:$0xff]
        %v2508 = vld [vmem:[%s2444 + $0x1f8] sm:$0xff]
        %v2510 = vunpack.c.l.b16 %v2443
        %v2511 = vunpack.c.h.b16 %v2443
        %v2512 = vpack.c.b16 %v2510, %v344
        %v2513 = vpack.c.b16 %v2511, %v345
        %vm2514 = vsmask.f32 4352
        %v2516 = vshrl.u32 %v1952, 16
        %v2518 = vrot.slane %v2516, 3
        %v2519 = vshll.u32 %v1952, 16
        %v2521 = vrot.slane %v2519, 4
        %v2522 = vor.u32 %v2518, %v2521
        %v2524 = vshrl.u32 %v2512, 16
        %v2526 = vrot.slane %v2524, 3
        %v2527 = vshll.u32 %v2512, 16
        %v2529 = vrot.slane %v2527, 4
        %v2530 = vor.u32 %v2526, %v2529
        %v2531 = vsel %vm2514, %v2522, %v2530
        %v2533 = vshrl.u32 %v1953, 16
        %v2535 = vrot.slane %v2533, 3
        %v2536 = vshll.u32 %v1953, 16
        %v2538 = vrot.slane %v2536, 4
        %v2539 = vor.u32 %v2535, %v2538
        %v2541 = vshrl.u32 %v2513, 16
        %v2543 = vrot.slane %v2541, 3
        %v2544 = vshll.u32 %v2513, 16
        %v2546 = vrot.slane %v2544, 4
        %v2547 = vor.u32 %v2543, %v2546
        %v2548 = vsel %vm2514, %v2539, %v2547
        %v2617 = vunpack.c.l.b16 %v2445
        %v2618 = vunpack.c.h.b16 %v2445
        %v2619 = vunpack.c.l.b16 %v2446
        %v2620 = vunpack.c.h.b16 %v2446
        %v2621 = vunpack.c.l.b16 %v2447
        %v2622 = vunpack.c.h.b16 %v2447
        %v2623 = vunpack.c.l.b16 %v2448
        %v2624 = vunpack.c.h.b16 %v2448
        %v2625 = vunpack.c.l.b16 %v2449
        %v2626 = vunpack.c.h.b16 %v2449
        %v2627 = vunpack.c.l.b16 %v2450
        %v2628 = vunpack.c.h.b16 %v2450
        %v2629 = vunpack.c.l.b16 %v2451
        %v2630 = vunpack.c.h.b16 %v2451
        %v2631 = vunpack.c.l.b16 %v2452
        %v2632 = vunpack.c.h.b16 %v2452
        %v2633 = vunpack.c.l.b16 %v2453
        %v2634 = vunpack.c.h.b16 %v2453
        %v2635 = vunpack.c.l.b16 %v2454
        %v2636 = vunpack.c.h.b16 %v2454
        %v2637 = vunpack.c.l.b16 %v2455
        %v2638 = vunpack.c.h.b16 %v2455
        %v2639 = vunpack.c.l.b16 %v2456
        %v2640 = vunpack.c.h.b16 %v2456
        %v2641 = vunpack.c.l.b16 %v2457
        %v2642 = vunpack.c.h.b16 %v2457
        %v2643 = vunpack.c.l.b16 %v2458
        %v2644 = vunpack.c.h.b16 %v2458
        %v2645 = vunpack.c.l.b16 %v2459
        %v2646 = vunpack.c.h.b16 %v2459
        %v2647 = vunpack.c.l.b16 %v2460
        %v2648 = vunpack.c.h.b16 %v2460
        %v2649 = vunpack.c.l.b16 %v2461
        %v2650 = vunpack.c.h.b16 %v2461
        %v2651 = vunpack.c.l.b16 %v2462
        %v2652 = vunpack.c.h.b16 %v2462
        %v2653 = vunpack.c.l.b16 %v2463
        %v2654 = vunpack.c.h.b16 %v2463
        %v2655 = vunpack.c.l.b16 %v2464
        %v2656 = vunpack.c.h.b16 %v2464
        %v2657 = vunpack.c.l.b16 %v2465
        %v2658 = vunpack.c.h.b16 %v2465
        %v2659 = vunpack.c.l.b16 %v2466
        %v2660 = vunpack.c.h.b16 %v2466
        %v2661 = vunpack.c.l.b16 %v2467
        %v2662 = vunpack.c.h.b16 %v2467
        %v2663 = vunpack.c.l.b16 %v2468
        %v2664 = vunpack.c.h.b16 %v2468
        %v2665 = vunpack.c.l.b16 %v2469
        %v2666 = vunpack.c.h.b16 %v2469
        %v2667 = vunpack.c.l.b16 %v2470
        %v2668 = vunpack.c.h.b16 %v2470
        %v2669 = vunpack.c.l.b16 %v2471
        %v2670 = vunpack.c.h.b16 %v2471
        %v2671 = vunpack.c.l.b16 %v2472
        %v2672 = vunpack.c.h.b16 %v2472
        %v2673 = vunpack.c.l.b16 %v2473
        %v2674 = vunpack.c.h.b16 %v2473
        %v2675 = vunpack.c.l.b16 %v2474
        %v2676 = vunpack.c.h.b16 %v2474
        %v2677 = vunpack.c.l.b16 %v2475
        %v2678 = vunpack.c.h.b16 %v2475
        %v2679 = vunpack.c.l.b16 %v2476
        %v2680 = vunpack.c.h.b16 %v2476
        %v2681 = vunpack.c.l.b16 %v2477
        %v2682 = vunpack.c.h.b16 %v2477
        %v2683 = vunpack.c.l.b16 %v2478
        %v2684 = vunpack.c.h.b16 %v2478
        %v2685 = vunpack.c.l.b16 %v2479
        %v2686 = vunpack.c.h.b16 %v2479
        %v2687 = vunpack.c.l.b16 %v2480
        %v2688 = vunpack.c.h.b16 %v2480
        %v2689 = vunpack.c.l.b16 %v2481
        %v2690 = vunpack.c.h.b16 %v2481
        %v2691 = vunpack.c.l.b16 %v2482
        %v2692 = vunpack.c.h.b16 %v2482
        %v2693 = vunpack.c.l.b16 %v2483
        %v2694 = vunpack.c.h.b16 %v2483
        %v2695 = vunpack.c.l.b16 %v2484
        %v2696 = vunpack.c.h.b16 %v2484
        %v2697 = vunpack.c.l.b16 %v2485
        %v2698 = vunpack.c.h.b16 %v2485
        %v2699 = vunpack.c.l.b16 %v2486
        %v2700 = vunpack.c.h.b16 %v2486
        %v2701 = vunpack.c.l.b16 %v2487
        %v2702 = vunpack.c.h.b16 %v2487
        %v2703 = vunpack.c.l.b16 %v2488
        %v2704 = vunpack.c.h.b16 %v2488
        %v2705 = vunpack.c.l.b16 %v2489
        %v2706 = vunpack.c.h.b16 %v2489
        %v2707 = vunpack.c.l.b16 %v2490
        %v2708 = vunpack.c.h.b16 %v2490
        %v2709 = vunpack.c.l.b16 %v2491
        %v2710 = vunpack.c.h.b16 %v2491
        %v2711 = vunpack.c.l.b16 %v2492
        %v2712 = vunpack.c.h.b16 %v2492
        %v2713 = vunpack.c.l.b16 %v2493
        %v2714 = vunpack.c.h.b16 %v2493
        %v2715 = vunpack.c.l.b16 %v2494
        %v2716 = vunpack.c.h.b16 %v2494
        %v2717 = vunpack.c.l.b16 %v2495
        %v2718 = vunpack.c.h.b16 %v2495
        %v2719 = vunpack.c.l.b16 %v2496
        %v2720 = vunpack.c.h.b16 %v2496
        %v2721 = vunpack.c.l.b16 %v2497
        %v2722 = vunpack.c.h.b16 %v2497
        %v2723 = vunpack.c.l.b16 %v2498
        %v2724 = vunpack.c.h.b16 %v2498
        %v2725 = vunpack.c.l.b16 %v2499
        %v2726 = vunpack.c.h.b16 %v2499
        %v2727 = vunpack.c.l.b16 %v2500
        %v2728 = vunpack.c.h.b16 %v2500
        %v2729 = vunpack.c.l.b16 %v2501
        %v2730 = vunpack.c.h.b16 %v2501
        %v2731 = vunpack.c.l.b16 %v2502
        %v2732 = vunpack.c.h.b16 %v2502
        %v2733 = vunpack.c.l.b16 %v2503
        %v2734 = vunpack.c.h.b16 %v2503
        %v2735 = vunpack.c.l.b16 %v2504
        %v2736 = vunpack.c.h.b16 %v2504
        %v2737 = vunpack.c.l.b16 %v2505
        %v2738 = vunpack.c.h.b16 %v2505
        %v2739 = vunpack.c.l.b16 %v2506
        %v2740 = vunpack.c.h.b16 %v2506
        %v2741 = vunpack.c.l.b16 %v2507
        %v2742 = vunpack.c.h.b16 %v2507
        %v2743 = vunpack.c.l.b16 %v2508
        %v2744 = vunpack.c.h.b16 %v2508
        %v2745 = vpack.c.b16 %v2621, %v2617
        %v2746 = vpack.c.b16 %v2622, %v2618
        %v2747 = vpack.c.b16 %v2623, %v2619
        %v2748 = vpack.c.b16 %v2624, %v2620
        %v2749 = vpack.c.b16 %v2629, %v2625
        %v2750 = vpack.c.b16 %v2630, %v2626
        %v2751 = vpack.c.b16 %v2631, %v2627
        %v2752 = vpack.c.b16 %v2632, %v2628
        %v2753 = vpack.c.b16 %v2637, %v2633
        %v2754 = vpack.c.b16 %v2638, %v2634
        %v2755 = vpack.c.b16 %v2639, %v2635
        %v2756 = vpack.c.b16 %v2640, %v2636
        %v2757 = vpack.c.b16 %v2645, %v2641
        %v2758 = vpack.c.b16 %v2646, %v2642
        %v2759 = vpack.c.b16 %v2647, %v2643
        %v2760 = vpack.c.b16 %v2648, %v2644
        %v2761 = vpack.c.b16 %v2653, %v2649
        %v2762 = vpack.c.b16 %v2654, %v2650
        %v2763 = vpack.c.b16 %v2655, %v2651
        %v2764 = vpack.c.b16 %v2656, %v2652
        %v2765 = vpack.c.b16 %v2661, %v2657
        %v2766 = vpack.c.b16 %v2662, %v2658
        %v2767 = vpack.c.b16 %v2663, %v2659
        %v2768 = vpack.c.b16 %v2664, %v2660
        %v2769 = vpack.c.b16 %v2669, %v2665
        %v2770 = vpack.c.b16 %v2670, %v2666
        %v2771 = vpack.c.b16 %v2671, %v2667
        %v2772 = vpack.c.b16 %v2672, %v2668
        %v2773 = vpack.c.b16 %v2677, %v2673
        %v2774 = vpack.c.b16 %v2678, %v2674
        %v2775 = vpack.c.b16 %v2679, %v2675
        %v2776 = vpack.c.b16 %v2680, %v2676
        %v2777 = vpack.c.b16 %v2685, %v2681
        %v2778 = vpack.c.b16 %v2686, %v2682
        %v2779 = vpack.c.b16 %v2687, %v2683
        %v2780 = vpack.c.b16 %v2688, %v2684
        %v2781 = vpack.c.b16 %v2693, %v2689
        %v2782 = vpack.c.b16 %v2694, %v2690
        %v2783 = vpack.c.b16 %v2695, %v2691
        %v2784 = vpack.c.b16 %v2696, %v2692
        %v2785 = vpack.c.b16 %v2701, %v2697
        %v2786 = vpack.c.b16 %v2702, %v2698
        %v2787 = vpack.c.b16 %v2703, %v2699
        %v2788 = vpack.c.b16 %v2704, %v2700
        %v2789 = vpack.c.b16 %v2709, %v2705
        %v2790 = vpack.c.b16 %v2710, %v2706
        %v2791 = vpack.c.b16 %v2711, %v2707
        %v2792 = vpack.c.b16 %v2712, %v2708
        %v2793 = vpack.c.b16 %v2717, %v2713
        %v2794 = vpack.c.b16 %v2718, %v2714
        %v2795 = vpack.c.b16 %v2719, %v2715
        %v2796 = vpack.c.b16 %v2720, %v2716
        %v2797 = vpack.c.b16 %v2725, %v2721
        %v2798 = vpack.c.b16 %v2726, %v2722
        %v2799 = vpack.c.b16 %v2727, %v2723
        %v2800 = vpack.c.b16 %v2728, %v2724
        %v2801 = vpack.c.b16 %v2733, %v2729
        %v2802 = vpack.c.b16 %v2734, %v2730
        %v2803 = vpack.c.b16 %v2735, %v2731
        %v2804 = vpack.c.b16 %v2736, %v2732
        %v2805 = vpack.c.b16 %v2741, %v2737
        %v2806 = vpack.c.b16 %v2742, %v2738
        %v2807 = vpack.c.b16 %v2743, %v2739
        %v2808 = vpack.c.b16 %v2744, %v2740
        %2873 = vmatpush.bf16.msra.mxu0 %v2773
        %2874 = vmatpush.bf16.msra.mxu0 %v2769
        %2875 = vmatpush.bf16.msra.mxu0 %v2765
        %2876 = vmatpush.bf16.msra.mxu0 %v2761
        %2877 = vmatpush.bf16.msra.mxu0 %v2757
        %2878 = vmatpush.bf16.msra.mxu0 %v2753
        %2879 = vmatpush.bf16.msra.mxu0 %v2749
        %2880 = vmatpush.bf16.msra.mxu0 %v2745
        %2881 = vmatmul.bf16.gmra.mxu0 %v2531
        %v2882 = vpop.f32.mrf.mxu0
        %v2883 = vadd.f32 0.0, %v2882
        %v2884 = vpop.f32.mrf.mxu0
        %v2885 = vadd.f32 0.0, %v2884
        %2886 = vmatmul.bf16.gmra.mxu0 %v2530
        %v2887 = vpop.f32.mrf.mxu0
        %v2888 = vadd.f32 0.0, %v2887
        %v2889 = vpop.f32.mrf.mxu0
        %2890 = vdwg.mxu0
        %2891 = vmatpush.bf16.msra.mxu0 %v2805
        %2892 = vmatpush.bf16.msra.mxu0 %v2801
        %2893 = vmatpush.bf16.msra.mxu0 %v2797
        %2894 = vmatpush.bf16.msra.mxu0 %v2793
        %2895 = vmatpush.bf16.msra.mxu0 %v2789
        %2896 = vmatpush.bf16.msra.mxu0 %v2785
        %2897 = vmatpush.bf16.msra.mxu0 %v2781
        %2898 = vmatpush.bf16.msra.mxu0 %v2777
        %2899 = vmatmul.bf16.gmra.mxu0 %v2548
        %v2900 = vpop.f32.mrf.mxu0
        %v2901 = vadd.f32 %v2883, %v2900
        %v2902 = vpop.f32.mrf.mxu0
        %v2903 = vadd.f32 %v2885, %v2902
        %2904 = vmatmul.bf16.gmra.mxu0 %v2547
        %v2905 = vpop.f32.mrf.mxu0
        %v2906 = vadd.f32 %v2888, %v2905
        %v2907 = vpop.f32.mrf.mxu0
        %2908 = vdwg.mxu0
        %2909 = vmatpush.bf16.msra.mxu0 %v2774
        %2910 = vmatpush.bf16.msra.mxu0 %v2770
        %2911 = vmatpush.bf16.msra.mxu0 %v2766
        %2912 = vmatpush.bf16.msra.mxu0 %v2762
        %2913 = vmatpush.bf16.msra.mxu0 %v2758
        %2914 = vmatpush.bf16.msra.mxu0 %v2754
        %2915 = vmatpush.bf16.msra.mxu0 %v2750
        %2916 = vmatpush.bf16.msra.mxu0 %v2746
        %2917 = vmatmul.bf16.gmra.mxu0 %v2531
        %v2918 = vpop.f32.mrf.mxu0
        %v2919 = vadd.f32 0.0, %v2918
        %v2920 = vpop.f32.mrf.mxu0
        %v2921 = vadd.f32 0.0, %v2920
        %2922 = vmatmul.bf16.gmra.mxu0 %v2530
        %v2923 = vpop.f32.mrf.mxu0
        %v2924 = vadd.f32 0.0, %v2923
        %v2925 = vpop.f32.mrf.mxu0
        %2926 = vdwg.mxu0
        %2927 = vmatpush.bf16.msra.mxu0 %v2806
        %2928 = vmatpush.bf16.msra.mxu0 %v2802
        %2929 = vmatpush.bf16.msra.mxu0 %v2798
        %2930 = vmatpush.bf16.msra.mxu0 %v2794
        %2931 = vmatpush.bf16.msra.mxu0 %v2790
        %2932 = vmatpush.bf16.msra.mxu0 %v2786
        %2933 = vmatpush.bf16.msra.mxu0 %v2782
        %2934 = vmatpush.bf16.msra.mxu0 %v2778
        %2935 = vmatmul.bf16.gmra.mxu0 %v2548
        %v2936 = vpop.f32.mrf.mxu0
        %v2937 = vadd.f32 %v2919, %v2936
        %v2938 = vpop.f32.mrf.mxu0
        %v2939 = vadd.f32 %v2921, %v2938
        %2940 = vmatmul.bf16.gmra.mxu0 %v2547
        %v2941 = vpop.f32.mrf.mxu0
        %v2942 = vadd.f32 %v2924, %v2941
        %v2943 = vpop.f32.mrf.mxu0
        %2944 = vdwg.mxu0
        %2945 = vmatpush.bf16.msra.mxu0 %v2775
        %2946 = vmatpush.bf16.msra.mxu0 %v2771
        %2947 = vmatpush.bf16.msra.mxu0 %v2767
        %2948 = vmatpush.bf16.msra.mxu0 %v2763
        %2949 = vmatpush.bf16.msra.mxu0 %v2759
        %2950 = vmatpush.bf16.msra.mxu0 %v2755
        %2951 = vmatpush.bf16.msra.mxu0 %v2751
        %2952 = vmatpush.bf16.msra.mxu0 %v2747
        %2953 = vmatmul.bf16.gmra.mxu0 %v2531
        %v2954 = vpop.f32.mrf.mxu0
        %v2955 = vadd.f32 0.0, %v2954
        %v2956 = vpop.f32.mrf.mxu0
        %v2957 = vadd.f32 0.0, %v2956
        %2958 = vmatmul.bf16.gmra.mxu0 %v2530
        %v2959 = vpop.f32.mrf.mxu0
        %v2960 = vadd.f32 0.0, %v2959
        %v2961 = vpop.f32.mrf.mxu0
        %2962 = vdwg.mxu0
        %2963 = vmatpush.bf16.msra.mxu0 %v2807
        %2964 = vmatpush.bf16.msra.mxu0 %v2803
        %2965 = vmatpush.bf16.msra.mxu0 %v2799
        %2966 = vmatpush.bf16.msra.mxu0 %v2795
        %2967 = vmatpush.bf16.msra.mxu0 %v2791
        %2968 = vmatpush.bf16.msra.mxu0 %v2787
        %2969 = vmatpush.bf16.msra.mxu0 %v2783
        %2970 = vmatpush.bf16.msra.mxu0 %v2779
        %2971 = vmatmul.bf16.gmra.mxu0 %v2548
        %v2972 = vpop.f32.mrf.mxu0
        %v2973 = vadd.f32 %v2955, %v2972
        %v2974 = vpop.f32.mrf.mxu0
        %v2975 = vadd.f32 %v2957, %v2974
        %2976 = vmatmul.bf16.gmra.mxu0 %v2547
        %v2977 = vpop.f32.mrf.mxu0
        %v2978 = vadd.f32 %v2960, %v2977
        %v2979 = vpop.f32.mrf.mxu0
        %2980 = vdwg.mxu0
        %2981 = vmatpush.bf16.msra.mxu0 %v2776
        %2982 = vmatpush.bf16.msra.mxu0 %v2772
        %2983 = vmatpush.bf16.msra.mxu0 %v2768
        %2984 = vmatpush.bf16.msra.mxu0 %v2764
        %2985 = vmatpush.bf16.msra.mxu0 %v2760
        %2986 = vmatpush.bf16.msra.mxu0 %v2756
        %2987 = vmatpush.bf16.msra.mxu0 %v2752
        %2988 = vmatpush.bf16.msra.mxu0 %v2748
        %2989 = vmatmul.bf16.gmra.mxu0 %v2531
        %v2990 = vpop.f32.mrf.mxu0
        %v2991 = vadd.f32 0.0, %v2990
        %v2992 = vpop.f32.mrf.mxu0
        %v2993 = vadd.f32 0.0, %v2992
        %2994 = vmatmul.bf16.gmra.mxu0 %v2530
        %v2995 = vpop.f32.mrf.mxu0
        %v2996 = vadd.f32 0.0, %v2995
        %v2997 = vpop.f32.mrf.mxu0
        %2998 = vdwg.mxu0
        %2999 = vmatpush.bf16.msra.mxu0 %v2808
        %3000 = vmatpush.bf16.msra.mxu0 %v2804
        %3001 = vmatpush.bf16.msra.mxu0 %v2800
        %3002 = vmatpush.bf16.msra.mxu0 %v2796
        %3003 = vmatpush.bf16.msra.mxu0 %v2792
        %3004 = vmatpush.bf16.msra.mxu0 %v2788
        %3005 = vmatpush.bf16.msra.mxu0 %v2784
        %3006 = vmatpush.bf16.msra.mxu0 %v2780
        %3007 = vmatmul.bf16.gmra.mxu0 %v2548
        %v3008 = vpop.f32.mrf.mxu0
        %v3009 = vadd.f32 %v2991, %v3008
        %v3010 = vpop.f32.mrf.mxu0
        %v3011 = vadd.f32 %v2993, %v3010
        %3012 = vmatmul.bf16.gmra.mxu0 %v2547
        %v3013 = vpop.f32.mrf.mxu0
        %v3014 = vadd.f32 %v2996, %v3013
        %v3015 = vpop.f32.mrf.mxu0
        %3016 = vdwg.mxu0
        %v3017 = vadd.f32 %v2431, %v2901
        %v3018 = vadd.f32 %v2432, %v2937
        %v3019 = vadd.f32 %v2433, %v2973
        %v3020 = vadd.f32 %v2434, %v3009
        %v3021 = vadd.f32 %v2435, %v2903
        %v3022 = vadd.f32 %v2436, %v2939
        %v3023 = vadd.f32 %v2437, %v2975
        %v3024 = vadd.f32 %v2438, %v3011
        %v3025 = vadd.f32 %v2439, %v2906
        %v3026 = vadd.f32 %v2440, %v2942
        %v3027 = vadd.f32 %v2441, %v2978
        %v3028 = vadd.f32 %v2442, %v3014
        %s3029 = scalar_lea.vmem [#allocation2], 2560
        %v3030 = vld [vmem:[%s3029] sm:$0xff]
        %v3031 = vld [vmem:[%s3029 + $0x8] sm:$0xff]
        %v3032 = vld [vmem:[%s3029 + $0x10] sm:$0xff]
        %v3033 = vld [vmem:[%s3029 + $0x18] sm:$0xff]
        %v3034 = vld [vmem:[%s3029 + $0x20] sm:$0xff]
        %v3035 = vld [vmem:[%s3029 + $0x28] sm:$0xff]
        %v3036 = vld [vmem:[%s3029 + $0x30] sm:$0xff]
        %v3037 = vld [vmem:[%s3029 + $0x38] sm:$0xff]
        %v3038 = vld [vmem:[%s3029 + $0x40] sm:$0xff]
        %v3039 = vld [vmem:[%s3029 + $0x48] sm:$0xff]
        %v3040 = vld [vmem:[%s3029 + $0x50] sm:$0xff]
        %v3041 = vld [vmem:[%s3029 + $0x58] sm:$0xff]
        %v3042 = vld [vmem:[%s3029 + $0x60] sm:$0xff]
        %v3043 = vld [vmem:[%s3029 + $0x68] sm:$0xff]
        %v3044 = vld [vmem:[%s3029 + $0x70] sm:$0xff]
        %v3045 = vld [vmem:[%s3029 + $0x78] sm:$0xff]
        %v3046 = vld [vmem:[%s3029 + $0x80] sm:$0xff]
        %v3047 = vld [vmem:[%s3029 + $0x88] sm:$0xff]
        %v3048 = vld [vmem:[%s3029 + $0x90] sm:$0xff]
        %v3049 = vld [vmem:[%s3029 + $0x98] sm:$0xff]
        %v3050 = vld [vmem:[%s3029 + $0xa0] sm:$0xff]
        %v3051 = vld [vmem:[%s3029 + $0xa8] sm:$0xff]
        %v3052 = vld [vmem:[%s3029 + $0xb0] sm:$0xff]
        %v3053 = vld [vmem:[%s3029 + $0xb8] sm:$0xff]
        %v3054 = vld [vmem:[%s3029 + $0xc0] sm:$0xff]
        %v3055 = vld [vmem:[%s3029 + $0xc8] sm:$0xff]
        %v3056 = vld [vmem:[%s3029 + $0xd0] sm:$0xff]
        %v3057 = vld [vmem:[%s3029 + $0xd8] sm:$0xff]
        %v3058 = vld [vmem:[%s3029 + $0xe0] sm:$0xff]
        %v3059 = vld [vmem:[%s3029 + $0xe8] sm:$0xff]
        %v3060 = vld [vmem:[%s3029 + $0xf0] sm:$0xff]
        %v3061 = vld [vmem:[%s3029 + $0xf8] sm:$0xff]
        %v3062 = vld [vmem:[%s3029 + $0x100] sm:$0xff]
        %v3063 = vld [vmem:[%s3029 + $0x108] sm:$0xff]
        %v3064 = vld [vmem:[%s3029 + $0x110] sm:$0xff]
        %v3065 = vld [vmem:[%s3029 + $0x118] sm:$0xff]
        %v3066 = vld [vmem:[%s3029 + $0x120] sm:$0xff]
        %v3067 = vld [vmem:[%s3029 + $0x128] sm:$0xff]
        %v3068 = vld [vmem:[%s3029 + $0x130] sm:$0xff]
        %v3069 = vld [vmem:[%s3029 + $0x138] sm:$0xff]
        %v3070 = vld [vmem:[%s3029 + $0x140] sm:$0xff]
        %v3071 = vld [vmem:[%s3029 + $0x148] sm:$0xff]
        %v3072 = vld [vmem:[%s3029 + $0x150] sm:$0xff]
        %v3073 = vld [vmem:[%s3029 + $0x158] sm:$0xff]
        %v3074 = vld [vmem:[%s3029 + $0x160] sm:$0xff]
        %v3075 = vld [vmem:[%s3029 + $0x168] sm:$0xff]
        %v3076 = vld [vmem:[%s3029 + $0x170] sm:$0xff]
        %v3077 = vld [vmem:[%s3029 + $0x178] sm:$0xff]
        %v3078 = vld [vmem:[%s3029 + $0x180] sm:$0xff]
        %v3079 = vld [vmem:[%s3029 + $0x188] sm:$0xff]
        %v3080 = vld [vmem:[%s3029 + $0x190] sm:$0xff]
        %v3081 = vld [vmem:[%s3029 + $0x198] sm:$0xff]
        %v3082 = vld [vmem:[%s3029 + $0x1a0] sm:$0xff]
        %v3083 = vld [vmem:[%s3029 + $0x1a8] sm:$0xff]
        %v3084 = vld [vmem:[%s3029 + $0x1b0] sm:$0xff]
        %v3085 = vld [vmem:[%s3029 + $0x1b8] sm:$0xff]
        %v3086 = vld [vmem:[%s3029 + $0x1c0] sm:$0xff]
        %v3087 = vld [vmem:[%s3029 + $0x1c8] sm:$0xff]
        %v3088 = vld [vmem:[%s3029 + $0x1d0] sm:$0xff]
        %v3089 = vld [vmem:[%s3029 + $0x1d8] sm:$0xff]
        %v3090 = vld [vmem:[%s3029 + $0x1e0] sm:$0xff]
        %v3091 = vld [vmem:[%s3029 + $0x1e8] sm:$0xff]
        %v3092 = vld [vmem:[%s3029 + $0x1f0] sm:$0xff]
        %v3093 = vld [vmem:[%s3029 + $0x1f8] sm:$0xff]
        %v3094 = vpack.c.b16 %v344, %v342
        %v3095 = vpack.c.b16 %v345, %v343
        %v3096 = vpack.c.b16 %v2510, %v2510
        %v3097 = vpack.c.b16 %v2511, %v2511
        %v3166 = vunpack.c.l.b16 %v3030
        %v3167 = vunpack.c.h.b16 %v3030
        %v3168 = vunpack.c.l.b16 %v3031
        %v3169 = vunpack.c.h.b16 %v3031
        %v3170 = vunpack.c.l.b16 %v3032
        %v3171 = vunpack.c.h.b16 %v3032
        %v3172 = vunpack.c.l.b16 %v3033
        %v3173 = vunpack.c.h.b16 %v3033
        %v3174 = vunpack.c.l.b16 %v3034
        %v3175 = vunpack.c.h.b16 %v3034
        %v3176 = vunpack.c.l.b16 %v3035
        %v3177 = vunpack.c.h.b16 %v3035
        %v3178 = vunpack.c.l.b16 %v3036
        %v3179 = vunpack.c.h.b16 %v3036
        %v3180 = vunpack.c.l.b16 %v3037
        %v3181 = vunpack.c.h.b16 %v3037
        %v3182 = vunpack.c.l.b16 %v3038
        %v3183 = vunpack.c.h.b16 %v3038
        %v3184 = vunpack.c.l.b16 %v3039
        %v3185 = vunpack.c.h.b16 %v3039
        %v3186 = vunpack.c.l.b16 %v3040
        %v3187 = vunpack.c.h.b16 %v3040
        %v3188 = vunpack.c.l.b16 %v3041
        %v3189 = vunpack.c.h.b16 %v3041
        %v3190 = vunpack.c.l.b16 %v3042
        %v3191 = vunpack.c.h.b16 %v3042
        %v3192 = vunpack.c.l.b16 %v3043
        %v3193 = vunpack.c.h.b16 %v3043
        %v3194 = vunpack.c.l.b16 %v3044
        %v3195 = vunpack.c.h.b16 %v3044
        %v3196 = vunpack.c.l.b16 %v3045
        %v3197 = vunpack.c.h.b16 %v3045
        %v3198 = vunpack.c.l.b16 %v3046
        %v3199 = vunpack.c.h.b16 %v3046
        %v3200 = vunpack.c.l.b16 %v3047
        %v3201 = vunpack.c.h.b16 %v3047
        %v3202 = vunpack.c.l.b16 %v3048
        %v3203 = vunpack.c.h.b16 %v3048
        %v3204 = vunpack.c.l.b16 %v3049
        %v3205 = vunpack.c.h.b16 %v3049
        %v3206 = vunpack.c.l.b16 %v3050
        %v3207 = vunpack.c.h.b16 %v3050
        %v3208 = vunpack.c.l.b16 %v3051
        %v3209 = vunpack.c.h.b16 %v3051
        %v3210 = vunpack.c.l.b16 %v3052
        %v3211 = vunpack.c.h.b16 %v3052
        %v3212 = vunpack.c.l.b16 %v3053
        %v3213 = vunpack.c.h.b16 %v3053
        %v3214 = vunpack.c.l.b16 %v3054
        %v3215 = vunpack.c.h.b16 %v3054
        %v3216 = vunpack.c.l.b16 %v3055
        %v3217 = vunpack.c.h.b16 %v3055
        %v3218 = vunpack.c.l.b16 %v3056
        %v3219 = vunpack.c.h.b16 %v3056
        %v3220 = vunpack.c.l.b16 %v3057
        %v3221 = vunpack.c.h.b16 %v3057
        %v3222 = vunpack.c.l.b16 %v3058
        %v3223 = vunpack.c.h.b16 %v3058
        %v3224 = vunpack.c.l.b16 %v3059
        %v3225 = vunpack.c.h.b16 %v3059
        %v3226 = vunpack.c.l.b16 %v3060
        %v3227 = vunpack.c.h.b16 %v3060
        %v3228 = vunpack.c.l.b16 %v3061
        %v3229 = vunpack.c.h.b16 %v3061
        %v3230 = vunpack.c.l.b16 %v3062
        %v3231 = vunpack.c.h.b16 %v3062
        %v3232 = vunpack.c.l.b16 %v3063
        %v3233 = vunpack.c.h.b16 %v3063
        %v3234 = vunpack.c.l.b16 %v3064
        %v3235 = vunpack.c.h.b16 %v3064
        %v3236 = vunpack.c.l.b16 %v3065
        %v3237 = vunpack.c.h.b16 %v3065
        %v3238 = vunpack.c.l.b16 %v3066
        %v3239 = vunpack.c.h.b16 %v3066
        %v3240 = vunpack.c.l.b16 %v3067
        %v3241 = vunpack.c.h.b16 %v3067
        %v3242 = vunpack.c.l.b16 %v3068
        %v3243 = vunpack.c.h.b16 %v3068
        %v3244 = vunpack.c.l.b16 %v3069
        %v3245 = vunpack.c.h.b16 %v3069
        %v3246 = vunpack.c.l.b16 %v3070
        %v3247 = vunpack.c.h.b16 %v3070
        %v3248 = vunpack.c.l.b16 %v3071
        %v3249 = vunpack.c.h.b16 %v3071
        %v3250 = vunpack.c.l.b16 %v3072
        %v3251 = vunpack.c.h.b16 %v3072
        %v3252 = vunpack.c.l.b16 %v3073
        %v3253 = vunpack.c.h.b16 %v3073
        %v3254 = vunpack.c.l.b16 %v3074
        %v3255 = vunpack.c.h.b16 %v3074
        %v3256 = vunpack.c.l.b16 %v3075
        %v3257 = vunpack.c.h.b16 %v3075
        %v3258 = vunpack.c.l.b16 %v3076
        %v3259 = vunpack.c.h.b16 %v3076
        %v3260 = vunpack.c.l.b16 %v3077
        %v3261 = vunpack.c.h.b16 %v3077
        %v3262 = vunpack.c.l.b16 %v3078
        %v3263 = vunpack.c.h.b16 %v3078
        %v3264 = vunpack.c.l.b16 %v3079
        %v3265 = vunpack.c.h.b16 %v3079
        %v3266 = vunpack.c.l.b16 %v3080
        %v3267 = vunpack.c.h.b16 %v3080
        %v3268 = vunpack.c.l.b16 %v3081
        %v3269 = vunpack.c.h.b16 %v3081
        %v3270 = vunpack.c.l.b16 %v3082
        %v3271 = vunpack.c.h.b16 %v3082
        %v3272 = vunpack.c.l.b16 %v3083
        %v3273 = vunpack.c.h.b16 %v3083
        %v3274 = vunpack.c.l.b16 %v3084
        %v3275 = vunpack.c.h.b16 %v3084
        %v3276 = vunpack.c.l.b16 %v3085
        %v3277 = vunpack.c.h.b16 %v3085
        %v3278 = vunpack.c.l.b16 %v3086
        %v3279 = vunpack.c.h.b16 %v3086
        %v3280 = vunpack.c.l.b16 %v3087
        %v3281 = vunpack.c.h.b16 %v3087
        %v3282 = vunpack.c.l.b16 %v3088
        %v3283 = vunpack.c.h.b16 %v3088
        %v3284 = vunpack.c.l.b16 %v3089
        %v3285 = vunpack.c.h.b16 %v3089
        %v3286 = vunpack.c.l.b16 %v3090
        %v3287 = vunpack.c.h.b16 %v3090
        %v3288 = vunpack.c.l.b16 %v3091
        %v3289 = vunpack.c.h.b16 %v3091
        %v3290 = vunpack.c.l.b16 %v3092
        %v3291 = vunpack.c.h.b16 %v3092
        %v3292 = vunpack.c.l.b16 %v3093
        %v3293 = vunpack.c.h.b16 %v3093
        %v3294 = vpack.c.b16 %v3170, %v3166
        %v3295 = vpack.c.b16 %v3171, %v3167
        %v3296 = vpack.c.b16 %v3172, %v3168
        %v3297 = vpack.c.b16 %v3173, %v3169
        %v3298 = vpack.c.b16 %v3178, %v3174
        %v3299 = vpack.c.b16 %v3179, %v3175
        %v3300 = vpack.c.b16 %v3180, %v3176
        %v3301 = vpack.c.b16 %v3181, %v3177
        %v3302 = vpack.c.b16 %v3186, %v3182
        %v3303 = vpack.c.b16 %v3187, %v3183
        %v3304 = vpack.c.b16 %v3188, %v3184
        %v3305 = vpack.c.b16 %v3189, %v3185
        %v3306 = vpack.c.b16 %v3194, %v3190
        %v3307 = vpack.c.b16 %v3195, %v3191
        %v3308 = vpack.c.b16 %v3196, %v3192
        %v3309 = vpack.c.b16 %v3197, %v3193
        %v3310 = vpack.c.b16 %v3202, %v3198
        %v3311 = vpack.c.b16 %v3203, %v3199
        %v3312 = vpack.c.b16 %v3204, %v3200
        %v3313 = vpack.c.b16 %v3205, %v3201
        %v3314 = vpack.c.b16 %v3210, %v3206
        %v3315 = vpack.c.b16 %v3211, %v3207
        %v3316 = vpack.c.b16 %v3212, %v3208
        %v3317 = vpack.c.b16 %v3213, %v3209
        %v3318 = vpack.c.b16 %v3218, %v3214
        %v3319 = vpack.c.b16 %v3219, %v3215
        %v3320 = vpack.c.b16 %v3220, %v3216
        %v3321 = vpack.c.b16 %v3221, %v3217
        %v3322 = vpack.c.b16 %v3226, %v3222
        %v3323 = vpack.c.b16 %v3227, %v3223
        %v3324 = vpack.c.b16 %v3228, %v3224
        %v3325 = vpack.c.b16 %v3229, %v3225
        %v3326 = vpack.c.b16 %v3234, %v3230
        %v3327 = vpack.c.b16 %v3235, %v3231
        %v3328 = vpack.c.b16 %v3236, %v3232
        %v3329 = vpack.c.b16 %v3237, %v3233
        %v3330 = vpack.c.b16 %v3242, %v3238
        %v3331 = vpack.c.b16 %v3243, %v3239
        %v3332 = vpack.c.b16 %v3244, %v3240
        %v3333 = vpack.c.b16 %v3245, %v3241
        %v3334 = vpack.c.b16 %v3250, %v3246
        %v3335 = vpack.c.b16 %v3251, %v3247
        %v3336 = vpack.c.b16 %v3252, %v3248
        %v3337 = vpack.c.b16 %v3253, %v3249
        %v3338 = vpack.c.b16 %v3258, %v3254
        %v3339 = vpack.c.b16 %v3259, %v3255
        %v3340 = vpack.c.b16 %v3260, %v3256
        %v3341 = vpack.c.b16 %v3261, %v3257
        %v3342 = vpack.c.b16 %v3266, %v3262
        %v3343 = vpack.c.b16 %v3267, %v3263
        %v3344 = vpack.c.b16 %v3268, %v3264
        %v3345 = vpack.c.b16 %v3269, %v3265
        %v3346 = vpack.c.b16 %v3274, %v3270
        %v3347 = vpack.c.b16 %v3275, %v3271
        %v3348 = vpack.c.b16 %v3276, %v3272
        %v3349 = vpack.c.b16 %v3277, %v3273
        %v3350 = vpack.c.b16 %v3282, %v3278
        %v3351 = vpack.c.b16 %v3283, %v3279
        %v3352 = vpack.c.b16 %v3284, %v3280
        %v3353 = vpack.c.b16 %v3285, %v3281
        %v3354 = vpack.c.b16 %v3290, %v3286
        %v3355 = vpack.c.b16 %v3291, %v3287
        %v3356 = vpack.c.b16 %v3292, %v3288
        %v3357 = vpack.c.b16 %v3293, %v3289
        %3422 = vmatpush.bf16.msra.mxu0 %v3322
        %3423 = vmatpush.bf16.msra.mxu0 %v3318
        %3424 = vmatpush.bf16.msra.mxu0 %v3314
        %3425 = vmatpush.bf16.msra.mxu0 %v3310
        %3426 = vmatpush.bf16.msra.mxu0 %v3306
        %3427 = vmatpush.bf16.msra.mxu0 %v3302
        %3428 = vmatpush.bf16.msra.mxu0 %v3298
        %3429 = vmatpush.bf16.msra.mxu0 %v3294
        %3430 = vmatmul.bf16.gmra.mxu0 %v3094
        %v3431 = vpop.f32.mrf.mxu0
        %v3432 = vadd.f32 0.0, %v3431
        %v3433 = vpop.f32.mrf.mxu0
        %v3434 = vadd.f32 0.0, %v3433
        %3435 = vmatmul.bf16.gmra.mxu0 %v3096
        %v3436 = vpop.f32.mrf.mxu0
        %v3437 = vadd.f32 0.0, %v3436
        %v3438 = vpop.f32.mrf.mxu0
        %3439 = vdwg.mxu0
        %3440 = vmatpush.bf16.msra.mxu0 %v3354
        %3441 = vmatpush.bf16.msra.mxu0 %v3350
        %3442 = vmatpush.bf16.msra.mxu0 %v3346
        %3443 = vmatpush.bf16.msra.mxu0 %v3342
        %3444 = vmatpush.bf16.msra.mxu0 %v3338
        %3445 = vmatpush.bf16.msra.mxu0 %v3334
        %3446 = vmatpush.bf16.msra.mxu0 %v3330
        %3447 = vmatpush.bf16.msra.mxu0 %v3326
        %3448 = vmatmul.bf16.gmra.mxu0 %v3095
        %v3449 = vpop.f32.mrf.mxu0
        %v3450 = vadd.f32 %v3432, %v3449
        %v3451 = vpop.f32.mrf.mxu0
        %v3452 = vadd.f32 %v3434, %v3451
        %3453 = vmatmul.bf16.gmra.mxu0 %v3097
        %v3454 = vpop.f32.mrf.mxu0
        %v3455 = vadd.f32 %v3437, %v3454
        %v3456 = vpop.f32.mrf.mxu0
        %3457 = vdwg.mxu0
        %3458 = vmatpush.bf16.msra.mxu0 %v3323
        %3459 = vmatpush.bf16.msra.mxu0 %v3319
        %3460 = vmatpush.bf16.msra.mxu0 %v3315
        %3461 = vmatpush.bf16.msra.mxu0 %v3311
        %3462 = vmatpush.bf16.msra.mxu0 %v3307
        %3463 = vmatpush.bf16.msra.mxu0 %v3303
        %3464 = vmatpush.bf16.msra.mxu0 %v3299
        %3465 = vmatpush.bf16.msra.mxu0 %v3295
        %3466 = vmatmul.bf16.gmra.mxu0 %v3094
        %v3467 = vpop.f32.mrf.mxu0
        %v3468 = vadd.f32 0.0, %v3467
        %v3469 = vpop.f32.mrf.mxu0
        %v3470 = vadd.f32 0.0, %v3469
        %3471 = vmatmul.bf16.gmra.mxu0 %v3096
        %v3472 = vpop.f32.mrf.mxu0
        %v3473 = vadd.f32 0.0, %v3472
        %v3474 = vpop.f32.mrf.mxu0
        %3475 = vdwg.mxu0
        %3476 = vmatpush.bf16.msra.mxu0 %v3355
        %3477 = vmatpush.bf16.msra.mxu0 %v3351
        %3478 = vmatpush.bf16.msra.mxu0 %v3347
        %3479 = vmatpush.bf16.msra.mxu0 %v3343
        %3480 = vmatpush.bf16.msra.mxu0 %v3339
        %3481 = vmatpush.bf16.msra.mxu0 %v3335
        %3482 = vmatpush.bf16.msra.mxu0 %v3331
        %3483 = vmatpush.bf16.msra.mxu0 %v3327
        %3484 = vmatmul.bf16.gmra.mxu0 %v3095
        %v3485 = vpop.f32.mrf.mxu0
        %v3486 = vadd.f32 %v3468, %v3485
        %v3487 = vpop.f32.mrf.mxu0
        %v3488 = vadd.f32 %v3470, %v3487
        %3489 = vmatmul.bf16.gmra.mxu0 %v3097
        %v3490 = vpop.f32.mrf.mxu0
        %v3491 = vadd.f32 %v3473, %v3490
        %v3492 = vpop.f32.mrf.mxu0
        %3493 = vdwg.mxu0
        %3494 = vmatpush.bf16.msra.mxu0 %v3324
        %3495 = vmatpush.bf16.msra.mxu0 %v3320
        %3496 = vmatpush.bf16.msra.mxu0 %v3316
        %3497 = vmatpush.bf16.msra.mxu0 %v3312
        %3498 = vmatpush.bf16.msra.mxu0 %v3308
        %3499 = vmatpush.bf16.msra.mxu0 %v3304
        %3500 = vmatpush.bf16.msra.mxu0 %v3300
        %3501 = vmatpush.bf16.msra.mxu0 %v3296
        %3502 = vmatmul.bf16.gmra.mxu0 %v3094
        %v3503 = vpop.f32.mrf.mxu0
        %v3504 = vadd.f32 0.0, %v3503
        %v3505 = vpop.f32.mrf.mxu0
        %v3506 = vadd.f32 0.0, %v3505
        %3507 = vmatmul.bf16.gmra.mxu0 %v3096
        %v3508 = vpop.f32.mrf.mxu0
        %v3509 = vadd.f32 0.0, %v3508
        %v3510 = vpop.f32.mrf.mxu0
        %3511 = vdwg.mxu0
        %3512 = vmatpush.bf16.msra.mxu0 %v3356
        %3513 = vmatpush.bf16.msra.mxu0 %v3352
        %3514 = vmatpush.bf16.msra.mxu0 %v3348
        %3515 = vmatpush.bf16.msra.mxu0 %v3344
        %3516 = vmatpush.bf16.msra.mxu0 %v3340
        %3517 = vmatpush.bf16.msra.mxu0 %v3336
        %3518 = vmatpush.bf16.msra.mxu0 %v3332
        %3519 = vmatpush.bf16.msra.mxu0 %v3328
        %3520 = vmatmul.bf16.gmra.mxu0 %v3095
        %v3521 = vpop.f32.mrf.mxu0
        %v3522 = vadd.f32 %v3504, %v3521
        %v3523 = vpop.f32.mrf.mxu0
        %v3524 = vadd.f32 %v3506, %v3523
        %3525 = vmatmul.bf16.gmra.mxu0 %v3097
        %v3526 = vpop.f32.mrf.mxu0
        %v3527 = vadd.f32 %v3509, %v3526
        %v3528 = vpop.f32.mrf.mxu0
        %3529 = vdwg.mxu0
        %3530 = vmatpush.bf16.msra.mxu0 %v3325
        %3531 = vmatpush.bf16.msra.mxu0 %v3321
        %3532 = vmatpush.bf16.msra.mxu0 %v3317
        %3533 = vmatpush.bf16.msra.mxu0 %v3313
        %3534 = vmatpush.bf16.msra.mxu0 %v3309
        %3535 = vmatpush.bf16.msra.mxu0 %v3305
        %3536 = vmatpush.bf16.msra.mxu0 %v3301
        %3537 = vmatpush.bf16.msra.mxu0 %v3297
        %3538 = vmatmul.bf16.gmra.mxu0 %v3094
        %v3539 = vpop.f32.mrf.mxu0
        %v3540 = vadd.f32 0.0, %v3539
        %v3541 = vpop.f32.mrf.mxu0
        %v3542 = vadd.f32 0.0, %v3541
        %3543 = vmatmul.bf16.gmra.mxu0 %v3096
        %v3544 = vpop.f32.mrf.mxu0
        %v3545 = vadd.f32 0.0, %v3544
        %v3546 = vpop.f32.mrf.mxu0
        %3547 = vdwg.mxu0
        %3548 = vmatpush.bf16.msra.mxu0 %v3357
        %3549 = vmatpush.bf16.msra.mxu0 %v3353
        %3550 = vmatpush.bf16.msra.mxu0 %v3349
        %3551 = vmatpush.bf16.msra.mxu0 %v3345
        %3552 = vmatpush.bf16.msra.mxu0 %v3341
        %3553 = vmatpush.bf16.msra.mxu0 %v3337
        %3554 = vmatpush.bf16.msra.mxu0 %v3333
        %3555 = vmatpush.bf16.msra.mxu0 %v3329
        %3556 = vmatmul.bf16.gmra.mxu0 %v3095
        %v3557 = vpop.f32.mrf.mxu0
        %v3558 = vadd.f32 %v3540, %v3557
        %v3559 = vpop.f32.mrf.mxu0
        %v3560 = vadd.f32 %v3542, %v3559
        %3561 = vmatmul.bf16.gmra.mxu0 %v3097
        %v3562 = vpop.f32.mrf.mxu0
        %v3563 = vadd.f32 %v3545, %v3562
        %v3564 = vpop.f32.mrf.mxu0
        %3565 = vdwg.mxu0
        %v3566 = vadd.f32 %v3017, %v3450
        %v3567 = vadd.f32 %v3018, %v3486
        %v3568 = vadd.f32 %v3019, %v3522
        %v3569 = vadd.f32 %v3020, %v3558
        %v3570 = vadd.f32 %v3021, %v3452
        %v3571 = vadd.f32 %v3022, %v3488
        %v3572 = vadd.f32 %v3023, %v3524
        %v3573 = vadd.f32 %v3024, %v3560
        %v3574 = vadd.f32 %v3025, %v3455
        %v3575 = vadd.f32 %v3026, %v3491
        %v3576 = vadd.f32 %v3027, %v3527
        %v3577 = vadd.f32 %v3028, %v3563
        %v3578 = vld [vmem:[%s197 + $0x8] sm:$0xcc]
        %v3579 = vld [vmem:[%s197 + $0x10] sm:$0xff]
        %v3580 = vld [vmem:[%s197 + $0x18] sm:$0xff]
        %v3581 = vld [vmem:[%s197 + $0x20] sm:$0x33]
        %s3582 = scalar_lea.vmem [#allocation2], 3072
        %v3583 = vld [vmem:[%s3582] sm:$0xff]
        %v3584 = vld [vmem:[%s3582 + $0x8] sm:$0xff]
        %v3585 = vld [vmem:[%s3582 + $0x10] sm:$0xff]
        %v3586 = vld [vmem:[%s3582 + $0x18] sm:$0xff]
        %v3587 = vld [vmem:[%s3582 + $0x20] sm:$0xff]
        %v3588 = vld [vmem:[%s3582 + $0x28] sm:$0xff]
        %v3589 = vld [vmem:[%s3582 + $0x30] sm:$0xff]
        %v3590 = vld [vmem:[%s3582 + $0x38] sm:$0xff]
        %v3591 = vld [vmem:[%s3582 + $0x40] sm:$0xff]
        %v3592 = vld [vmem:[%s3582 + $0x48] sm:$0xff]
        %v3593 = vld [vmem:[%s3582 + $0x50] sm:$0xff]
        %v3594 = vld [vmem:[%s3582 + $0x58] sm:$0xff]
        %v3595 = vld [vmem:[%s3582 + $0x60] sm:$0xff]
        %v3596 = vld [vmem:[%s3582 + $0x68] sm:$0xff]
        %v3597 = vld [vmem:[%s3582 + $0x70] sm:$0xff]
        %v3598 = vld [vmem:[%s3582 + $0x78] sm:$0xff]
        %v3599 = vld [vmem:[%s3582 + $0x80] sm:$0xff]
        %v3600 = vld [vmem:[%s3582 + $0x88] sm:$0xff]
        %v3601 = vld [vmem:[%s3582 + $0x90] sm:$0xff]
        %v3602 = vld [vmem:[%s3582 + $0x98] sm:$0xff]
        %v3603 = vld [vmem:[%s3582 + $0xa0] sm:$0xff]
        %v3604 = vld [vmem:[%s3582 + $0xa8] sm:$0xff]
        %v3605 = vld [vmem:[%s3582 + $0xb0] sm:$0xff]
        %v3606 = vld [vmem:[%s3582 + $0xb8] sm:$0xff]
        %v3607 = vld [vmem:[%s3582 + $0xc0] sm:$0xff]
        %v3608 = vld [vmem:[%s3582 + $0xc8] sm:$0xff]
        %v3609 = vld [vmem:[%s3582 + $0xd0] sm:$0xff]
        %v3610 = vld [vmem:[%s3582 + $0xd8] sm:$0xff]
        %v3611 = vld [vmem:[%s3582 + $0xe0] sm:$0xff]
        %v3612 = vld [vmem:[%s3582 + $0xe8] sm:$0xff]
        %v3613 = vld [vmem:[%s3582 + $0xf0] sm:$0xff]
        %v3614 = vld [vmem:[%s3582 + $0xf8] sm:$0xff]
        %v3615 = vld [vmem:[%s3582 + $0x100] sm:$0xff]
        %v3616 = vld [vmem:[%s3582 + $0x108] sm:$0xff]
        %v3617 = vld [vmem:[%s3582 + $0x110] sm:$0xff]
        %v3618 = vld [vmem:[%s3582 + $0x118] sm:$0xff]
        %v3619 = vld [vmem:[%s3582 + $0x120] sm:$0xff]
        %v3620 = vld [vmem:[%s3582 + $0x128] sm:$0xff]
        %v3621 = vld [vmem:[%s3582 + $0x130] sm:$0xff]
        %v3622 = vld [vmem:[%s3582 + $0x138] sm:$0xff]
        %v3623 = vld [vmem:[%s3582 + $0x140] sm:$0xff]
        %v3624 = vld [vmem:[%s3582 + $0x148] sm:$0xff]
        %v3625 = vld [vmem:[%s3582 + $0x150] sm:$0xff]
        %v3626 = vld [vmem:[%s3582 + $0x158] sm:$0xff]
        %v3627 = vld [vmem:[%s3582 + $0x160] sm:$0xff]
        %v3628 = vld [vmem:[%s3582 + $0x168] sm:$0xff]
        %v3629 = vld [vmem:[%s3582 + $0x170] sm:$0xff]
        %v3630 = vld [vmem:[%s3582 + $0x178] sm:$0xff]
        %v3631 = vld [vmem:[%s3582 + $0x180] sm:$0xff]
        %v3632 = vld [vmem:[%s3582 + $0x188] sm:$0xff]
        %v3633 = vld [vmem:[%s3582 + $0x190] sm:$0xff]
        %v3634 = vld [vmem:[%s3582 + $0x198] sm:$0xff]
        %v3635 = vld [vmem:[%s3582 + $0x1a0] sm:$0xff]
        %v3636 = vld [vmem:[%s3582 + $0x1a8] sm:$0xff]
        %v3637 = vld [vmem:[%s3582 + $0x1b0] sm:$0xff]
        %v3638 = vld [vmem:[%s3582 + $0x1b8] sm:$0xff]
        %v3639 = vld [vmem:[%s3582 + $0x1c0] sm:$0xff]
        %v3640 = vld [vmem:[%s3582 + $0x1c8] sm:$0xff]
        %v3641 = vld [vmem:[%s3582 + $0x1d0] sm:$0xff]
        %v3642 = vld [vmem:[%s3582 + $0x1d8] sm:$0xff]
        %v3643 = vld [vmem:[%s3582 + $0x1e0] sm:$0xff]
        %v3644 = vld [vmem:[%s3582 + $0x1e8] sm:$0xff]
        %v3645 = vld [vmem:[%s3582 + $0x1f0] sm:$0xff]
        %v3646 = vld [vmem:[%s3582 + $0x1f8] sm:$0xff]
        %v3651 = vunpack.c.l.b16 %v3578
        %v3652 = vunpack.c.h.b16 %v3578
        %v3653 = vunpack.c.l.b16 %v3579
        %v3654 = vunpack.c.h.b16 %v3579
        %v3655 = vunpack.c.l.b16 %v3580
        %v3656 = vunpack.c.h.b16 %v3580
        %v3657 = vunpack.c.l.b16 %v3581
        %v3658 = vunpack.c.h.b16 %v3581
        %v3659 = vpack.c.b16 %v3653, %v3651
        %v3660 = vpack.c.b16 %v3654, %v3652
        %v3661 = vpack.c.b16 %v3657, %v3655
        %v3662 = vpack.c.b16 %v3658, %v3656
        %vm3663 = vcmask 1045504
        %v3664 = vrot.slane %v3659, 2
        %v3665 = vrot.slane %v3661, 2
        %v3666 = vsel %vm3663, %v3664, %v3665
        %v3667 = vrot.slane %v3660, 2
        %v3668 = vrot.slane %v3662, 2
        %v3669 = vsel %vm3663, %v3667, %v3668
        %v3738 = vunpack.c.l.b16 %v3583
        %v3739 = vunpack.c.h.b16 %v3583
        %v3740 = vunpack.c.l.b16 %v3584
        %v3741 = vunpack.c.h.b16 %v3584
        %v3742 = vunpack.c.l.b16 %v3585
        %v3743 = vunpack.c.h.b16 %v3585
        %v3744 = vunpack.c.l.b16 %v3586
        %v3745 = vunpack.c.h.b16 %v3586
        %v3746 = vunpack.c.l.b16 %v3587
        %v3747 = vunpack.c.h.b16 %v3587
        %v3748 = vunpack.c.l.b16 %v3588
        %v3749 = vunpack.c.h.b16 %v3588
        %v3750 = vunpack.c.l.b16 %v3589
        %v3751 = vunpack.c.h.b16 %v3589
        %v3752 = vunpack.c.l.b16 %v3590
        %v3753 = vunpack.c.h.b16 %v3590
        %v3754 = vunpack.c.l.b16 %v3591
        %v3755 = vunpack.c.h.b16 %v3591
        %v3756 = vunpack.c.l.b16 %v3592
        %v3757 = vunpack.c.h.b16 %v3592
        %v3758 = vunpack.c.l.b16 %v3593
        %v3759 = vunpack.c.h.b16 %v3593
        %v3760 = vunpack.c.l.b16 %v3594
        %v3761 = vunpack.c.h.b16 %v3594
        %v3762 = vunpack.c.l.b16 %v3595
        %v3763 = vunpack.c.h.b16 %v3595
        %v3764 = vunpack.c.l.b16 %v3596
        %v3765 = vunpack.c.h.b16 %v3596
        %v3766 = vunpack.c.l.b16 %v3597
        %v3767 = vunpack.c.h.b16 %v3597
        %v3768 = vunpack.c.l.b16 %v3598
        %v3769 = vunpack.c.h.b16 %v3598
        %v3770 = vunpack.c.l.b16 %v3599
        %v3771 = vunpack.c.h.b16 %v3599
        %v3772 = vunpack.c.l.b16 %v3600
        %v3773 = vunpack.c.h.b16 %v3600
        %v3774 = vunpack.c.l.b16 %v3601
        %v3775 = vunpack.c.h.b16 %v3601
        %v3776 = vunpack.c.l.b16 %v3602
        %v3777 = vunpack.c.h.b16 %v3602
        %v3778 = vunpack.c.l.b16 %v3603
        %v3779 = vunpack.c.h.b16 %v3603
        %v3780 = vunpack.c.l.b16 %v3604
        %v3781 = vunpack.c.h.b16 %v3604
        %v3782 = vunpack.c.l.b16 %v3605
        %v3783 = vunpack.c.h.b16 %v3605
        %v3784 = vunpack.c.l.b16 %v3606
        %v3785 = vunpack.c.h.b16 %v3606
        %v3786 = vunpack.c.l.b16 %v3607
        %v3787 = vunpack.c.h.b16 %v3607
        %v3788 = vunpack.c.l.b16 %v3608
        %v3789 = vunpack.c.h.b16 %v3608
        %v3790 = vunpack.c.l.b16 %v3609
        %v3791 = vunpack.c.h.b16 %v3609
        %v3792 = vunpack.c.l.b16 %v3610
        %v3793 = vunpack.c.h.b16 %v3610
        %v3794 = vunpack.c.l.b16 %v3611
        %v3795 = vunpack.c.h.b16 %v3611
        %v3796 = vunpack.c.l.b16 %v3612
        %v3797 = vunpack.c.h.b16 %v3612
        %v3798 = vunpack.c.l.b16 %v3613
        %v3799 = vunpack.c.h.b16 %v3613
        %v3800 = vunpack.c.l.b16 %v3614
        %v3801 = vunpack.c.h.b16 %v3614
        %v3802 = vunpack.c.l.b16 %v3615
        %v3803 = vunpack.c.h.b16 %v3615
        %v3804 = vunpack.c.l.b16 %v3616
        %v3805 = vunpack.c.h.b16 %v3616
        %v3806 = vunpack.c.l.b16 %v3617
        %v3807 = vunpack.c.h.b16 %v3617
        %v3808 = vunpack.c.l.b16 %v3618
        %v3809 = vunpack.c.h.b16 %v3618
        %v3810 = vunpack.c.l.b16 %v3619
        %v3811 = vunpack.c.h.b16 %v3619
        %v3812 = vunpack.c.l.b16 %v3620
        %v3813 = vunpack.c.h.b16 %v3620
        %v3814 = vunpack.c.l.b16 %v3621
        %v3815 = vunpack.c.h.b16 %v3621
        %v3816 = vunpack.c.l.b16 %v3622
        %v3817 = vunpack.c.h.b16 %v3622
        %v3818 = vunpack.c.l.b16 %v3623
        %v3819 = vunpack.c.h.b16 %v3623
        %v3820 = vunpack.c.l.b16 %v3624
        %v3821 = vunpack.c.h.b16 %v3624
        %v3822 = vunpack.c.l.b16 %v3625
        %v3823 = vunpack.c.h.b16 %v3625
        %v3824 = vunpack.c.l.b16 %v3626
        %v3825 = vunpack.c.h.b16 %v3626
        %v3826 = vunpack.c.l.b16 %v3627
        %v3827 = vunpack.c.h.b16 %v3627
        %v3828 = vunpack.c.l.b16 %v3628
        %v3829 = vunpack.c.h.b16 %v3628
        %v3830 = vunpack.c.l.b16 %v3629
        %v3831 = vunpack.c.h.b16 %v3629
        %v3832 = vunpack.c.l.b16 %v3630
        %v3833 = vunpack.c.h.b16 %v3630
        %v3834 = vunpack.c.l.b16 %v3631
        %v3835 = vunpack.c.h.b16 %v3631
        %v3836 = vunpack.c.l.b16 %v3632
        %v3837 = vunpack.c.h.b16 %v3632
        %v3838 = vunpack.c.l.b16 %v3633
        %v3839 = vunpack.c.h.b16 %v3633
        %v3840 = vunpack.c.l.b16 %v3634
        %v3841 = vunpack.c.h.b16 %v3634
        %v3842 = vunpack.c.l.b16 %v3635
        %v3843 = vunpack.c.h.b16 %v3635
        %v3844 = vunpack.c.l.b16 %v3636
        %v3845 = vunpack.c.h.b16 %v3636
        %v3846 = vunpack.c.l.b16 %v3637
        %v3847 = vunpack.c.h.b16 %v3637
        %v3848 = vunpack.c.l.b16 %v3638
        %v3849 = vunpack.c.h.b16 %v3638
        %v3850 = vunpack.c.l.b16 %v3639
        %v3851 = vunpack.c.h.b16 %v3639
        %v3852 = vunpack.c.l.b16 %v3640
        %v3853 = vunpack.c.h.b16 %v3640
        %v3854 = vunpack.c.l.b16 %v3641
        %v3855 = vunpack.c.h.b16 %v3641
        %v3856 = vunpack.c.l.b16 %v3642
        %v3857 = vunpack.c.h.b16 %v3642
        %v3858 = vunpack.c.l.b16 %v3643
        %v3859 = vunpack.c.h.b16 %v3643
        %v3860 = vunpack.c.l.b16 %v3644
        %v3861 = vunpack.c.h.b16 %v3644
        %v3862 = vunpack.c.l.b16 %v3645
        %v3863 = vunpack.c.h.b16 %v3645
        %v3864 = vunpack.c.l.b16 %v3646
        %v3865 = vunpack.c.h.b16 %v3646
        %v3866 = vpack.c.b16 %v3742, %v3738
        %v3867 = vpack.c.b16 %v3743, %v3739
        %v3868 = vpack.c.b16 %v3744, %v3740
        %v3869 = vpack.c.b16 %v3745, %v3741
        %v3870 = vpack.c.b16 %v3750, %v3746
        %v3871 = vpack.c.b16 %v3751, %v3747
        %v3872 = vpack.c.b16 %v3752, %v3748
        %v3873 = vpack.c.b16 %v3753, %v3749
        %v3874 = vpack.c.b16 %v3758, %v3754
        %v3875 = vpack.c.b16 %v3759, %v3755
        %v3876 = vpack.c.b16 %v3760, %v3756
        %v3877 = vpack.c.b16 %v3761, %v3757
        %v3878 = vpack.c.b16 %v3766, %v3762
        %v3879 = vpack.c.b16 %v3767, %v3763
        %v3880 = vpack.c.b16 %v3768, %v3764
        %v3881 = vpack.c.b16 %v3769, %v3765
        %v3882 = vpack.c.b16 %v3774, %v3770
        %v3883 = vpack.c.b16 %v3775, %v3771
        %v3884 = vpack.c.b16 %v3776, %v3772
        %v3885 = vpack.c.b16 %v3777, %v3773
        %v3886 = vpack.c.b16 %v3782, %v3778
        %v3887 = vpack.c.b16 %v3783, %v3779
        %v3888 = vpack.c.b16 %v3784, %v3780
        %v3889 = vpack.c.b16 %v3785, %v3781
        %v3890 = vpack.c.b16 %v3790, %v3786
        %v3891 = vpack.c.b16 %v3791, %v3787
        %v3892 = vpack.c.b16 %v3792, %v3788
        %v3893 = vpack.c.b16 %v3793, %v3789
        %v3894 = vpack.c.b16 %v3798, %v3794
        %v3895 = vpack.c.b16 %v3799, %v3795
        %v3896 = vpack.c.b16 %v3800, %v3796
        %v3897 = vpack.c.b16 %v3801, %v3797
        %v3898 = vpack.c.b16 %v3806, %v3802
        %v3899 = vpack.c.b16 %v3807, %v3803
        %v3900 = vpack.c.b16 %v3808, %v3804
        %v3901 = vpack.c.b16 %v3809, %v3805
        %v3902 = vpack.c.b16 %v3814, %v3810
        %v3903 = vpack.c.b16 %v3815, %v3811
        %v3904 = vpack.c.b16 %v3816, %v3812
        %v3905 = vpack.c.b16 %v3817, %v3813
        %v3906 = vpack.c.b16 %v3822, %v3818
        %v3907 = vpack.c.b16 %v3823, %v3819
        %v3908 = vpack.c.b16 %v3824, %v3820
        %v3909 = vpack.c.b16 %v3825, %v3821
        %v3910 = vpack.c.b16 %v3830, %v3826
        %v3911 = vpack.c.b16 %v3831, %v3827
        %v3912 = vpack.c.b16 %v3832, %v3828
        %v3913 = vpack.c.b16 %v3833, %v3829
        %v3914 = vpack.c.b16 %v3838, %v3834
        %v3915 = vpack.c.b16 %v3839, %v3835
        %v3916 = vpack.c.b16 %v3840, %v3836
        %v3917 = vpack.c.b16 %v3841, %v3837
        %v3918 = vpack.c.b16 %v3846, %v3842
        %v3919 = vpack.c.b16 %v3847, %v3843
        %v3920 = vpack.c.b16 %v3848, %v3844
        %v3921 = vpack.c.b16 %v3849, %v3845
        %v3922 = vpack.c.b16 %v3854, %v3850
        %v3923 = vpack.c.b16 %v3855, %v3851
        %v3924 = vpack.c.b16 %v3856, %v3852
        %v3925 = vpack.c.b16 %v3857, %v3853
        %v3926 = vpack.c.b16 %v3862, %v3858
        %v3927 = vpack.c.b16 %v3863, %v3859
        %v3928 = vpack.c.b16 %v3864, %v3860
        %v3929 = vpack.c.b16 %v3865, %v3861
        %3994 = vmatpush.bf16.msra.mxu0 %v3894
        %3995 = vmatpush.bf16.msra.mxu0 %v3890
        %3996 = vmatpush.bf16.msra.mxu0 %v3886
        %3997 = vmatpush.bf16.msra.mxu0 %v3882
        %3998 = vmatpush.bf16.msra.mxu0 %v3878
        %3999 = vmatpush.bf16.msra.mxu0 %v3874
        %4000 = vmatpush.bf16.msra.mxu0 %v3870
        %4001 = vmatpush.bf16.msra.mxu0 %v3866
        %4002 = vmatmul.bf16.gmra.mxu0 %v3666
        %v4003 = vpop.f32.mrf.mxu0
        %v4004 = vadd.f32 0.0, %v4003
        %v4005 = vpop.f32.mrf.mxu0
        %v4006 = vadd.f32 0.0, %v4005
        %4007 = vmatmul.bf16.gmra.mxu0 %v3665
        %v4008 = vpop.f32.mrf.mxu0
        %v4009 = vadd.f32 0.0, %v4008
        %v4010 = vpop.f32.mrf.mxu0
        %4011 = vdwg.mxu0
        %4012 = vmatpush.bf16.msra.mxu0 %v3926
        %4013 = vmatpush.bf16.msra.mxu0 %v3922
        %4014 = vmatpush.bf16.msra.mxu0 %v3918
        %4015 = vmatpush.bf16.msra.mxu0 %v3914
        %4016 = vmatpush.bf16.msra.mxu0 %v3910
        %4017 = vmatpush.bf16.msra.mxu0 %v3906
        %4018 = vmatpush.bf16.msra.mxu0 %v3902
        %4019 = vmatpush.bf16.msra.mxu0 %v3898
        %4020 = vmatmul.bf16.gmra.mxu0 %v3669
        %v4021 = vpop.f32.mrf.mxu0
        %v4022 = vadd.f32 %v4004, %v4021
        %v4023 = vpop.f32.mrf.mxu0
        %v4024 = vadd.f32 %v4006, %v4023
        %4025 = vmatmul.bf16.gmra.mxu0 %v3668
        %v4026 = vpop.f32.mrf.mxu0
        %v4027 = vadd.f32 %v4009, %v4026
        %v4028 = vpop.f32.mrf.mxu0
        %4029 = vdwg.mxu0
        %4030 = vmatpush.bf16.msra.mxu0 %v3895
        %4031 = vmatpush.bf16.msra.mxu0 %v3891
        %4032 = vmatpush.bf16.msra.mxu0 %v3887
        %4033 = vmatpush.bf16.msra.mxu0 %v3883
        %4034 = vmatpush.bf16.msra.mxu0 %v3879
        %4035 = vmatpush.bf16.msra.mxu0 %v3875
        %4036 = vmatpush.bf16.msra.mxu0 %v3871
        %4037 = vmatpush.bf16.msra.mxu0 %v3867
        %4038 = vmatmul.bf16.gmra.mxu0 %v3666
        %v4039 = vpop.f32.mrf.mxu0
        %v4040 = vadd.f32 0.0, %v4039
        %v4041 = vpop.f32.mrf.mxu0
        %v4042 = vadd.f32 0.0, %v4041
        %4043 = vmatmul.bf16.gmra.mxu0 %v3665
        %v4044 = vpop.f32.mrf.mxu0
        %v4045 = vadd.f32 0.0, %v4044
        %v4046 = vpop.f32.mrf.mxu0
        %4047 = vdwg.mxu0
        %4048 = vmatpush.bf16.msra.mxu0 %v3927
        %4049 = vmatpush.bf16.msra.mxu0 %v3923
        %4050 = vmatpush.bf16.msra.mxu0 %v3919
        %4051 = vmatpush.bf16.msra.mxu0 %v3915
        %4052 = vmatpush.bf16.msra.mxu0 %v3911
        %4053 = vmatpush.bf16.msra.mxu0 %v3907
        %4054 = vmatpush.bf16.msra.mxu0 %v3903
        %4055 = vmatpush.bf16.msra.mxu0 %v3899
        %4056 = vmatmul.bf16.gmra.mxu0 %v3669
        %v4057 = vpop.f32.mrf.mxu0
        %v4058 = vadd.f32 %v4040, %v4057
        %v4059 = vpop.f32.mrf.mxu0
        %v4060 = vadd.f32 %v4042, %v4059
        %4061 = vmatmul.bf16.gmra.mxu0 %v3668
        %v4062 = vpop.f32.mrf.mxu0
        %v4063 = vadd.f32 %v4045, %v4062
        %v4064 = vpop.f32.mrf.mxu0
        %4065 = vdwg.mxu0
        %4066 = vmatpush.bf16.msra.mxu0 %v3896
        %4067 = vmatpush.bf16.msra.mxu0 %v3892
        %4068 = vmatpush.bf16.msra.mxu0 %v3888
        %4069 = vmatpush.bf16.msra.mxu0 %v3884
        %4070 = vmatpush.bf16.msra.mxu0 %v3880
        %4071 = vmatpush.bf16.msra.mxu0 %v3876
        %4072 = vmatpush.bf16.msra.mxu0 %v3872
        %4073 = vmatpush.bf16.msra.mxu0 %v3868
        %4074 = vmatmul.bf16.gmra.mxu0 %v3666
        %v4075 = vpop.f32.mrf.mxu0
        %v4076 = vadd.f32 0.0, %v4075
        %v4077 = vpop.f32.mrf.mxu0
        %v4078 = vadd.f32 0.0, %v4077
        %4079 = vmatmul.bf16.gmra.mxu0 %v3665
        %v4080 = vpop.f32.mrf.mxu0
        %v4081 = vadd.f32 0.0, %v4080
        %v4082 = vpop.f32.mrf.mxu0
        %4083 = vdwg.mxu0
        %4084 = vmatpush.bf16.msra.mxu0 %v3928
        %4085 = vmatpush.bf16.msra.mxu0 %v3924
        %4086 = vmatpush.bf16.msra.mxu0 %v3920
        %4087 = vmatpush.bf16.msra.mxu0 %v3916
        %4088 = vmatpush.bf16.msra.mxu0 %v3912
        %4089 = vmatpush.bf16.msra.mxu0 %v3908
        %4090 = vmatpush.bf16.msra.mxu0 %v3904
        %4091 = vmatpush.bf16.msra.mxu0 %v3900
        %4092 = vmatmul.bf16.gmra.mxu0 %v3669
        %v4093 = vpop.f32.mrf.mxu0
        %v4094 = vadd.f32 %v4076, %v4093
        %v4095 = vpop.f32.mrf.mxu0
        %v4096 = vadd.f32 %v4078, %v4095
        %4097 = vmatmul.bf16.gmra.mxu0 %v3668
        %v4098 = vpop.f32.mrf.mxu0
        %v4099 = vadd.f32 %v4081, %v4098
        %v4100 = vpop.f32.mrf.mxu0
        %4101 = vdwg.mxu0
        %4102 = vmatpush.bf16.msra.mxu0 %v3897
        %4103 = vmatpush.bf16.msra.mxu0 %v3893
        %4104 = vmatpush.bf16.msra.mxu0 %v3889
        %4105 = vmatpush.bf16.msra.mxu0 %v3885
        %4106 = vmatpush.bf16.msra.mxu0 %v3881
        %4107 = vmatpush.bf16.msra.mxu0 %v3877
        %4108 = vmatpush.bf16.msra.mxu0 %v3873
        %4109 = vmatpush.bf16.msra.mxu0 %v3869
        %4110 = vmatmul.bf16.gmra.mxu0 %v3666
        %v4111 = vpop.f32.mrf.mxu0
        %v4112 = vadd.f32 0.0, %v4111
        %v4113 = vpop.f32.mrf.mxu0
        %v4114 = vadd.f32 0.0, %v4113
        %4115 = vmatmul.bf16.gmra.mxu0 %v3665
        %v4116 = vpop.f32.mrf.mxu0
        %v4117 = vadd.f32 0.0, %v4116
        %v4118 = vpop.f32.mrf.mxu0
        %4119 = vdwg.mxu0
        %4120 = vmatpush.bf16.msra.mxu0 %v3929
        %4121 = vmatpush.bf16.msra.mxu0 %v3925
        %4122 = vmatpush.bf16.msra.mxu0 %v3921
        %4123 = vmatpush.bf16.msra.mxu0 %v3917
        %4124 = vmatpush.bf16.msra.mxu0 %v3913
        %4125 = vmatpush.bf16.msra.mxu0 %v3909
        %4126 = vmatpush.bf16.msra.mxu0 %v3905
        %4127 = vmatpush.bf16.msra.mxu0 %v3901
        %4128 = vmatmul.bf16.gmra.mxu0 %v3669
        %v4129 = vpop.f32.mrf.mxu0
        %v4130 = vadd.f32 %v4112, %v4129
        %v4131 = vpop.f32.mrf.mxu0
        %v4132 = vadd.f32 %v4114, %v4131
        %4133 = vmatmul.bf16.gmra.mxu0 %v3668
        %v4134 = vpop.f32.mrf.mxu0
        %v4135 = vadd.f32 %v4117, %v4134
        %v4136 = vpop.f32.mrf.mxu0
        %4137 = vdwg.mxu0
        %v4138 = vadd.f32 %v3566, %v4022
        %v4139 = vadd.f32 %v3567, %v4058
        %v4140 = vadd.f32 %v3568, %v4094
        %v4141 = vadd.f32 %v3569, %v4130
        %v4142 = vadd.f32 %v3570, %v4024
        %v4143 = vadd.f32 %v3571, %v4060
        %v4144 = vadd.f32 %v3572, %v4096
        %v4145 = vadd.f32 %v3573, %v4132
        %v4146 = vadd.f32 %v3574, %v4027
        %v4147 = vadd.f32 %v3575, %v4063
        %v4148 = vadd.f32 %v3576, %v4099
        %v4149 = vadd.f32 %v3577, %v4135
        %v4150 = vld [vmem:[%s197 + $0x20] sm:$0x77]
        %s4151 = scalar_lea.vmem [#allocation2], 3584
        %v4152 = vld [vmem:[%s4151] sm:$0xff]
        %v4153 = vld [vmem:[%s4151 + $0x8] sm:$0xff]
        %v4154 = vld [vmem:[%s4151 + $0x10] sm:$0xff]
        %v4155 = vld [vmem:[%s4151 + $0x18] sm:$0xff]
        %v4156 = vld [vmem:[%s4151 + $0x20] sm:$0xff]
        %v4157 = vld [vmem:[%s4151 + $0x28] sm:$0xff]
        %v4158 = vld [vmem:[%s4151 + $0x30] sm:$0xff]
        %v4159 = vld [vmem:[%s4151 + $0x38] sm:$0xff]
        %v4160 = vld [vmem:[%s4151 + $0x40] sm:$0xff]
        %v4161 = vld [vmem:[%s4151 + $0x48] sm:$0xff]
        %v4162 = vld [vmem:[%s4151 + $0x50] sm:$0xff]
        %v4163 = vld [vmem:[%s4151 + $0x58] sm:$0xff]
        %v4164 = vld [vmem:[%s4151 + $0x60] sm:$0xff]
        %v4165 = vld [vmem:[%s4151 + $0x68] sm:$0xff]
        %v4166 = vld [vmem:[%s4151 + $0x70] sm:$0xff]
        %v4167 = vld [vmem:[%s4151 + $0x78] sm:$0xff]
        %v4168 = vld [vmem:[%s4151 + $0x80] sm:$0xff]
        %v4169 = vld [vmem:[%s4151 + $0x88] sm:$0xff]
        %v4170 = vld [vmem:[%s4151 + $0x90] sm:$0xff]
        %v4171 = vld [vmem:[%s4151 + $0x98] sm:$0xff]
        %v4172 = vld [vmem:[%s4151 + $0xa0] sm:$0xff]
        %v4173 = vld [vmem:[%s4151 + $0xa8] sm:$0xff]
        %v4174 = vld [vmem:[%s4151 + $0xb0] sm:$0xff]
        %v4175 = vld [vmem:[%s4151 + $0xb8] sm:$0xff]
        %v4176 = vld [vmem:[%s4151 + $0xc0] sm:$0xff]
        %v4177 = vld [vmem:[%s4151 + $0xc8] sm:$0xff]
        %v4178 = vld [vmem:[%s4151 + $0xd0] sm:$0xff]
        %v4179 = vld [vmem:[%s4151 + $0xd8] sm:$0xff]
        %v4180 = vld [vmem:[%s4151 + $0xe0] sm:$0xff]
        %v4181 = vld [vmem:[%s4151 + $0xe8] sm:$0xff]
        %v4182 = vld [vmem:[%s4151 + $0xf0] sm:$0xff]
        %v4183 = vld [vmem:[%s4151 + $0xf8] sm:$0xff]
        %v4184 = vld [vmem:[%s4151 + $0x100] sm:$0xff]
        %v4185 = vld [vmem:[%s4151 + $0x108] sm:$0xff]
        %v4186 = vld [vmem:[%s4151 + $0x110] sm:$0xff]
        %v4187 = vld [vmem:[%s4151 + $0x118] sm:$0xff]
        %v4188 = vld [vmem:[%s4151 + $0x120] sm:$0xff]
        %v4189 = vld [vmem:[%s4151 + $0x128] sm:$0xff]
        %v4190 = vld [vmem:[%s4151 + $0x130] sm:$0xff]
        %v4191 = vld [vmem:[%s4151 + $0x138] sm:$0xff]
        %v4192 = vld [vmem:[%s4151 + $0x140] sm:$0xff]
        %v4193 = vld [vmem:[%s4151 + $0x148] sm:$0xff]
        %v4194 = vld [vmem:[%s4151 + $0x150] sm:$0xff]
        %v4195 = vld [vmem:[%s4151 + $0x158] sm:$0xff]
        %v4196 = vld [vmem:[%s4151 + $0x160] sm:$0xff]
        %v4197 = vld [vmem:[%s4151 + $0x168] sm:$0xff]
        %v4198 = vld [vmem:[%s4151 + $0x170] sm:$0xff]
        %v4199 = vld [vmem:[%s4151 + $0x178] sm:$0xff]
        %v4200 = vld [vmem:[%s4151 + $0x180] sm:$0xff]
        %v4201 = vld [vmem:[%s4151 + $0x188] sm:$0xff]
        %v4202 = vld [vmem:[%s4151 + $0x190] sm:$0xff]
        %v4203 = vld [vmem:[%s4151 + $0x198] sm:$0xff]
        %v4204 = vld [vmem:[%s4151 + $0x1a0] sm:$0xff]
        %v4205 = vld [vmem:[%s4151 + $0x1a8] sm:$0xff]
        %v4206 = vld [vmem:[%s4151 + $0x1b0] sm:$0xff]
        %v4207 = vld [vmem:[%s4151 + $0x1b8] sm:$0xff]
        %v4208 = vld [vmem:[%s4151 + $0x1c0] sm:$0xff]
        %v4209 = vld [vmem:[%s4151 + $0x1c8] sm:$0xff]
        %v4210 = vld [vmem:[%s4151 + $0x1d0] sm:$0xff]
        %v4211 = vld [vmem:[%s4151 + $0x1d8] sm:$0xff]
        %v4212 = vld [vmem:[%s4151 + $0x1e0] sm:$0xff]
        %v4213 = vld [vmem:[%s4151 + $0x1e8] sm:$0xff]
        %v4214 = vld [vmem:[%s4151 + $0x1f0] sm:$0xff]
        %v4215 = vld [vmem:[%s4151 + $0x1f8] sm:$0xff]
        %v4217 = vunpack.c.l.b16 %v4150
        %v4218 = vunpack.c.h.b16 %v4150
        %v4219 = vpack.c.b16 %v4217, %v3655
        %v4220 = vpack.c.b16 %v4218, %v3656
        %vm4221 = vsmask.f32 5376
        %v4223 = vshrl.u32 %v3659, 16
        %v4225 = vrot.slane %v4223, 2
        %v4226 = vshll.u32 %v3659, 16
        %v4228 = vrot.slane %v4226, 3
        %v4229 = vor.u32 %v4225, %v4228
        %v4231 = vshrl.u32 %v4219, 16
        %v4233 = vrot.slane %v4231, 2
        %v4234 = vshll.u32 %v4219, 16
        %v4236 = vrot.slane %v4234, 3
        %v4237 = vor.u32 %v4233, %v4236
        %v4238 = vsel %vm4221, %v4229, %v4237
        %v4240 = vshrl.u32 %v3660, 16
        %v4242 = vrot.slane %v4240, 2
        %v4243 = vshll.u32 %v3660, 16
        %v4245 = vrot.slane %v4243, 3
        %v4246 = vor.u32 %v4242, %v4245
        %v4248 = vshrl.u32 %v4220, 16
        %v4250 = vrot.slane %v4248, 2
        %v4251 = vshll.u32 %v4220, 16
        %v4253 = vrot.slane %v4251, 3
        %v4254 = vor.u32 %v4250, %v4253
        %v4255 = vsel %vm4221, %v4246, %v4254
        %v4324 = vunpack.c.l.b16 %v4152
        %v4325 = vunpack.c.h.b16 %v4152
        %v4326 = vunpack.c.l.b16 %v4153
        %v4327 = vunpack.c.h.b16 %v4153
        %v4328 = vunpack.c.l.b16 %v4154
        %v4329 = vunpack.c.h.b16 %v4154
        %v4330 = vunpack.c.l.b16 %v4155
        %v4331 = vunpack.c.h.b16 %v4155
        %v4332 = vunpack.c.l.b16 %v4156
        %v4333 = vunpack.c.h.b16 %v4156
        %v4334 = vunpack.c.l.b16 %v4157
        %v4335 = vunpack.c.h.b16 %v4157
        %v4336 = vunpack.c.l.b16 %v4158
        %v4337 = vunpack.c.h.b16 %v4158
        %v4338 = vunpack.c.l.b16 %v4159
        %v4339 = vunpack.c.h.b16 %v4159
        %v4340 = vunpack.c.l.b16 %v4160
        %v4341 = vunpack.c.h.b16 %v4160
        %v4342 = vunpack.c.l.b16 %v4161
        %v4343 = vunpack.c.h.b16 %v4161
        %v4344 = vunpack.c.l.b16 %v4162
        %v4345 = vunpack.c.h.b16 %v4162
        %v4346 = vunpack.c.l.b16 %v4163
        %v4347 = vunpack.c.h.b16 %v4163
        %v4348 = vunpack.c.l.b16 %v4164
        %v4349 = vunpack.c.h.b16 %v4164
        %v4350 = vunpack.c.l.b16 %v4165
        %v4351 = vunpack.c.h.b16 %v4165
        %v4352 = vunpack.c.l.b16 %v4166
        %v4353 = vunpack.c.h.b16 %v4166
        %v4354 = vunpack.c.l.b16 %v4167
        %v4355 = vunpack.c.h.b16 %v4167
        %v4356 = vunpack.c.l.b16 %v4168
        %v4357 = vunpack.c.h.b16 %v4168
        %v4358 = vunpack.c.l.b16 %v4169
        %v4359 = vunpack.c.h.b16 %v4169
        %v4360 = vunpack.c.l.b16 %v4170
        %v4361 = vunpack.c.h.b16 %v4170
        %v4362 = vunpack.c.l.b16 %v4171
        %v4363 = vunpack.c.h.b16 %v4171
        %v4364 = vunpack.c.l.b16 %v4172
        %v4365 = vunpack.c.h.b16 %v4172
        %v4366 = vunpack.c.l.b16 %v4173
        %v4367 = vunpack.c.h.b16 %v4173
        %v4368 = vunpack.c.l.b16 %v4174
        %v4369 = vunpack.c.h.b16 %v4174
        %v4370 = vunpack.c.l.b16 %v4175
        %v4371 = vunpack.c.h.b16 %v4175
        %v4372 = vunpack.c.l.b16 %v4176
        %v4373 = vunpack.c.h.b16 %v4176
        %v4374 = vunpack.c.l.b16 %v4177
        %v4375 = vunpack.c.h.b16 %v4177
        %v4376 = vunpack.c.l.b16 %v4178
        %v4377 = vunpack.c.h.b16 %v4178
        %v4378 = vunpack.c.l.b16 %v4179
        %v4379 = vunpack.c.h.b16 %v4179
        %v4380 = vunpack.c.l.b16 %v4180
        %v4381 = vunpack.c.h.b16 %v4180
        %v4382 = vunpack.c.l.b16 %v4181
        %v4383 = vunpack.c.h.b16 %v4181
        %v4384 = vunpack.c.l.b16 %v4182
        %v4385 = vunpack.c.h.b16 %v4182
        %v4386 = vunpack.c.l.b16 %v4183
        %v4387 = vunpack.c.h.b16 %v4183
        %v4388 = vunpack.c.l.b16 %v4184
        %v4389 = vunpack.c.h.b16 %v4184
        %v4390 = vunpack.c.l.b16 %v4185
        %v4391 = vunpack.c.h.b16 %v4185
        %v4392 = vunpack.c.l.b16 %v4186
        %v4393 = vunpack.c.h.b16 %v4186
        %v4394 = vunpack.c.l.b16 %v4187
        %v4395 = vunpack.c.h.b16 %v4187
        %v4396 = vunpack.c.l.b16 %v4188
        %v4397 = vunpack.c.h.b16 %v4188
        %v4398 = vunpack.c.l.b16 %v4189
        %v4399 = vunpack.c.h.b16 %v4189
        %v4400 = vunpack.c.l.b16 %v4190
        %v4401 = vunpack.c.h.b16 %v4190
        %v4402 = vunpack.c.l.b16 %v4191
        %v4403 = vunpack.c.h.b16 %v4191
        %v4404 = vunpack.c.l.b16 %v4192
        %v4405 = vunpack.c.h.b16 %v4192
        %v4406 = vunpack.c.l.b16 %v4193
        %v4407 = vunpack.c.h.b16 %v4193
        %v4408 = vunpack.c.l.b16 %v4194
        %v4409 = vunpack.c.h.b16 %v4194
        %v4410 = vunpack.c.l.b16 %v4195
        %v4411 = vunpack.c.h.b16 %v4195
        %v4412 = vunpack.c.l.b16 %v4196
        %v4413 = vunpack.c.h.b16 %v4196
        %v4414 = vunpack.c.l.b16 %v4197
        %v4415 = vunpack.c.h.b16 %v4197
        %v4416 = vunpack.c.l.b16 %v4198
        %v4417 = vunpack.c.h.b16 %v4198
        %v4418 = vunpack.c.l.b16 %v4199
        %v4419 = vunpack.c.h.b16 %v4199
        %v4420 = vunpack.c.l.b16 %v4200
        %v4421 = vunpack.c.h.b16 %v4200
        %v4422 = vunpack.c.l.b16 %v4201
        %v4423 = vunpack.c.h.b16 %v4201
        %v4424 = vunpack.c.l.b16 %v4202
        %v4425 = vunpack.c.h.b16 %v4202
        %v4426 = vunpack.c.l.b16 %v4203
        %v4427 = vunpack.c.h.b16 %v4203
        %v4428 = vunpack.c.l.b16 %v4204
        %v4429 = vunpack.c.h.b16 %v4204
        %v4430 = vunpack.c.l.b16 %v4205
        %v4431 = vunpack.c.h.b16 %v4205
        %v4432 = vunpack.c.l.b16 %v4206
        %v4433 = vunpack.c.h.b16 %v4206
        %v4434 = vunpack.c.l.b16 %v4207
        %v4435 = vunpack.c.h.b16 %v4207
        %v4436 = vunpack.c.l.b16 %v4208
        %v4437 = vunpack.c.h.b16 %v4208
        %v4438 = vunpack.c.l.b16 %v4209
        %v4439 = vunpack.c.h.b16 %v4209
        %v4440 = vunpack.c.l.b16 %v4210
        %v4441 = vunpack.c.h.b16 %v4210
        %v4442 = vunpack.c.l.b16 %v4211
        %v4443 = vunpack.c.h.b16 %v4211
        %v4444 = vunpack.c.l.b16 %v4212
        %v4445 = vunpack.c.h.b16 %v4212
        %v4446 = vunpack.c.l.b16 %v4213
        %v4447 = vunpack.c.h.b16 %v4213
        %v4448 = vunpack.c.l.b16 %v4214
        %v4449 = vunpack.c.h.b16 %v4214
        %v4450 = vunpack.c.l.b16 %v4215
        %v4451 = vunpack.c.h.b16 %v4215
        %v4452 = vpack.c.b16 %v4328, %v4324
        %v4453 = vpack.c.b16 %v4329, %v4325
        %v4454 = vpack.c.b16 %v4330, %v4326
        %v4455 = vpack.c.b16 %v4331, %v4327
        %v4456 = vpack.c.b16 %v4336, %v4332
        %v4457 = vpack.c.b16 %v4337, %v4333
        %v4458 = vpack.c.b16 %v4338, %v4334
        %v4459 = vpack.c.b16 %v4339, %v4335
        %v4460 = vpack.c.b16 %v4344, %v4340
        %v4461 = vpack.c.b16 %v4345, %v4341
        %v4462 = vpack.c.b16 %v4346, %v4342
        %v4463 = vpack.c.b16 %v4347, %v4343
        %v4464 = vpack.c.b16 %v4352, %v4348
        %v4465 = vpack.c.b16 %v4353, %v4349
        %v4466 = vpack.c.b16 %v4354, %v4350
        %v4467 = vpack.c.b16 %v4355, %v4351
        %v4468 = vpack.c.b16 %v4360, %v4356
        %v4469 = vpack.c.b16 %v4361, %v4357
        %v4470 = vpack.c.b16 %v4362, %v4358
        %v4471 = vpack.c.b16 %v4363, %v4359
        %v4472 = vpack.c.b16 %v4368, %v4364
        %v4473 = vpack.c.b16 %v4369, %v4365
        %v4474 = vpack.c.b16 %v4370, %v4366
        %v4475 = vpack.c.b16 %v4371, %v4367
        %v4476 = vpack.c.b16 %v4376, %v4372
        %v4477 = vpack.c.b16 %v4377, %v4373
        %v4478 = vpack.c.b16 %v4378, %v4374
        %v4479 = vpack.c.b16 %v4379, %v4375
        %v4480 = vpack.c.b16 %v4384, %v4380
        %v4481 = vpack.c.b16 %v4385, %v4381
        %v4482 = vpack.c.b16 %v4386, %v4382
        %v4483 = vpack.c.b16 %v4387, %v4383
        %v4484 = vpack.c.b16 %v4392, %v4388
        %v4485 = vpack.c.b16 %v4393, %v4389
        %v4486 = vpack.c.b16 %v4394, %v4390
        %v4487 = vpack.c.b16 %v4395, %v4391
        %v4488 = vpack.c.b16 %v4400, %v4396
        %v4489 = vpack.c.b16 %v4401, %v4397
        %v4490 = vpack.c.b16 %v4402, %v4398
        %v4491 = vpack.c.b16 %v4403, %v4399
        %v4492 = vpack.c.b16 %v4408, %v4404
        %v4493 = vpack.c.b16 %v4409, %v4405
        %v4494 = vpack.c.b16 %v4410, %v4406
        %v4495 = vpack.c.b16 %v4411, %v4407
        %v4496 = vpack.c.b16 %v4416, %v4412
        %v4497 = vpack.c.b16 %v4417, %v4413
        %v4498 = vpack.c.b16 %v4418, %v4414
        %v4499 = vpack.c.b16 %v4419, %v4415
        %v4500 = vpack.c.b16 %v4424, %v4420
        %v4501 = vpack.c.b16 %v4425, %v4421
        %v4502 = vpack.c.b16 %v4426, %v4422
        %v4503 = vpack.c.b16 %v4427, %v4423
        %v4504 = vpack.c.b16 %v4432, %v4428
        %v4505 = vpack.c.b16 %v4433, %v4429
        %v4506 = vpack.c.b16 %v4434, %v4430
        %v4507 = vpack.c.b16 %v4435, %v4431
        %v4508 = vpack.c.b16 %v4440, %v4436
        %v4509 = vpack.c.b16 %v4441, %v4437
        %v4510 = vpack.c.b16 %v4442, %v4438
        %v4511 = vpack.c.b16 %v4443, %v4439
        %v4512 = vpack.c.b16 %v4448, %v4444
        %v4513 = vpack.c.b16 %v4449, %v4445
        %v4514 = vpack.c.b16 %v4450, %v4446
        %v4515 = vpack.c.b16 %v4451, %v4447
        %4580 = vmatpush.bf16.msra.mxu0 %v4480
        %4581 = vmatpush.bf16.msra.mxu0 %v4476
        %4582 = vmatpush.bf16.msra.mxu0 %v4472
        %4583 = vmatpush.bf16.msra.mxu0 %v4468
        %4584 = vmatpush.bf16.msra.mxu0 %v4464
        %4585 = vmatpush.bf16.msra.mxu0 %v4460
        %4586 = vmatpush.bf16.msra.mxu0 %v4456
        %4587 = vmatpush.bf16.msra.mxu0 %v4452
        %4588 = vmatmul.bf16.gmra.mxu0 %v4238
        %v4589 = vpop.f32.mrf.mxu0
        %v4590 = vadd.f32 0.0, %v4589
        %v4591 = vpop.f32.mrf.mxu0
        %v4592 = vadd.f32 0.0, %v4591
        %4593 = vmatmul.bf16.gmra.mxu0 %v4237
        %v4594 = vpop.f32.mrf.mxu0
        %v4595 = vadd.f32 0.0, %v4594
        %v4596 = vpop.f32.mrf.mxu0
        %4597 = vdwg.mxu0
        %4598 = vmatpush.bf16.msra.mxu0 %v4512
        %4599 = vmatpush.bf16.msra.mxu0 %v4508
        %4600 = vmatpush.bf16.msra.mxu0 %v4504
        %4601 = vmatpush.bf16.msra.mxu0 %v4500
        %4602 = vmatpush.bf16.msra.mxu0 %v4496
        %4603 = vmatpush.bf16.msra.mxu0 %v4492
        %4604 = vmatpush.bf16.msra.mxu0 %v4488
        %4605 = vmatpush.bf16.msra.mxu0 %v4484
        %4606 = vmatmul.bf16.gmra.mxu0 %v4255
        %v4607 = vpop.f32.mrf.mxu0
        %v4608 = vadd.f32 %v4590, %v4607
        %v4609 = vpop.f32.mrf.mxu0
        %v4610 = vadd.f32 %v4592, %v4609
        %4611 = vmatmul.bf16.gmra.mxu0 %v4254
        %v4612 = vpop.f32.mrf.mxu0
        %v4613 = vadd.f32 %v4595, %v4612
        %v4614 = vpop.f32.mrf.mxu0
        %4615 = vdwg.mxu0
        %4616 = vmatpush.bf16.msra.mxu0 %v4481
        %4617 = vmatpush.bf16.msra.mxu0 %v4477
        %4618 = vmatpush.bf16.msra.mxu0 %v4473
        %4619 = vmatpush.bf16.msra.mxu0 %v4469
        %4620 = vmatpush.bf16.msra.mxu0 %v4465
        %4621 = vmatpush.bf16.msra.mxu0 %v4461
        %4622 = vmatpush.bf16.msra.mxu0 %v4457
        %4623 = vmatpush.bf16.msra.mxu0 %v4453
        %4624 = vmatmul.bf16.gmra.mxu0 %v4238
        %v4625 = vpop.f32.mrf.mxu0
        %v4626 = vadd.f32 0.0, %v4625
        %v4627 = vpop.f32.mrf.mxu0
        %v4628 = vadd.f32 0.0, %v4627
        %4629 = vmatmul.bf16.gmra.mxu0 %v4237
        %v4630 = vpop.f32.mrf.mxu0
        %v4631 = vadd.f32 0.0, %v4630
        %v4632 = vpop.f32.mrf.mxu0
        %4633 = vdwg.mxu0
        %4634 = vmatpush.bf16.msra.mxu0 %v4513
        %4635 = vmatpush.bf16.msra.mxu0 %v4509
        %4636 = vmatpush.bf16.msra.mxu0 %v4505
        %4637 = vmatpush.bf16.msra.mxu0 %v4501
        %4638 = vmatpush.bf16.msra.mxu0 %v4497
        %4639 = vmatpush.bf16.msra.mxu0 %v4493
        %4640 = vmatpush.bf16.msra.mxu0 %v4489
        %4641 = vmatpush.bf16.msra.mxu0 %v4485
        %4642 = vmatmul.bf16.gmra.mxu0 %v4255
        %v4643 = vpop.f32.mrf.mxu0
        %v4644 = vadd.f32 %v4626, %v4643
        %v4645 = vpop.f32.mrf.mxu0
        %v4646 = vadd.f32 %v4628, %v4645
        %4647 = vmatmul.bf16.gmra.mxu0 %v4254
        %v4648 = vpop.f32.mrf.mxu0
        %v4649 = vadd.f32 %v4631, %v4648
        %v4650 = vpop.f32.mrf.mxu0
        %4651 = vdwg.mxu0
        %4652 = vmatpush.bf16.msra.mxu0 %v4482
        %4653 = vmatpush.bf16.msra.mxu0 %v4478
        %4654 = vmatpush.bf16.msra.mxu0 %v4474
        %4655 = vmatpush.bf16.msra.mxu0 %v4470
        %4656 = vmatpush.bf16.msra.mxu0 %v4466
        %4657 = vmatpush.bf16.msra.mxu0 %v4462
        %4658 = vmatpush.bf16.msra.mxu0 %v4458
        %4659 = vmatpush.bf16.msra.mxu0 %v4454
        %4660 = vmatmul.bf16.gmra.mxu0 %v4238
        %v4661 = vpop.f32.mrf.mxu0
        %v4662 = vadd.f32 0.0, %v4661
        %v4663 = vpop.f32.mrf.mxu0
        %v4664 = vadd.f32 0.0, %v4663
        %4665 = vmatmul.bf16.gmra.mxu0 %v4237
        %v4666 = vpop.f32.mrf.mxu0
        %v4667 = vadd.f32 0.0, %v4666
        %v4668 = vpop.f32.mrf.mxu0
        %4669 = vdwg.mxu0
        %4670 = vmatpush.bf16.msra.mxu0 %v4514
        %4671 = vmatpush.bf16.msra.mxu0 %v4510
        %4672 = vmatpush.bf16.msra.mxu0 %v4506
        %4673 = vmatpush.bf16.msra.mxu0 %v4502
        %4674 = vmatpush.bf16.msra.mxu0 %v4498
        %4675 = vmatpush.bf16.msra.mxu0 %v4494
        %4676 = vmatpush.bf16.msra.mxu0 %v4490
        %4677 = vmatpush.bf16.msra.mxu0 %v4486
        %4678 = vmatmul.bf16.gmra.mxu0 %v4255
        %v4679 = vpop.f32.mrf.mxu0
        %v4680 = vadd.f32 %v4662, %v4679
        %v4681 = vpop.f32.mrf.mxu0
        %v4682 = vadd.f32 %v4664, %v4681
        %4683 = vmatmul.bf16.gmra.mxu0 %v4254
        %v4684 = vpop.f32.mrf.mxu0
        %v4685 = vadd.f32 %v4667, %v4684
        %v4686 = vpop.f32.mrf.mxu0
        %4687 = vdwg.mxu0
        %4688 = vmatpush.bf16.msra.mxu0 %v4483
        %4689 = vmatpush.bf16.msra.mxu0 %v4479
        %4690 = vmatpush.bf16.msra.mxu0 %v4475
        %4691 = vmatpush.bf16.msra.mxu0 %v4471
        %4692 = vmatpush.bf16.msra.mxu0 %v4467
        %4693 = vmatpush.bf16.msra.mxu0 %v4463
        %4694 = vmatpush.bf16.msra.mxu0 %v4459
        %4695 = vmatpush.bf16.msra.mxu0 %v4455
        %4696 = vmatmul.bf16.gmra.mxu0 %v4238
        %v4697 = vpop.f32.mrf.mxu0
        %v4698 = vadd.f32 0.0, %v4697
        %v4699 = vpop.f32.mrf.mxu0
        %v4700 = vadd.f32 0.0, %v4699
        %4701 = vmatmul.bf16.gmra.mxu0 %v4237
        %v4702 = vpop.f32.mrf.mxu0
        %v4703 = vadd.f32 0.0, %v4702
        %v4704 = vpop.f32.mrf.mxu0
        %4705 = vdwg.mxu0
        %4706 = vmatpush.bf16.msra.mxu0 %v4515
        %4707 = vmatpush.bf16.msra.mxu0 %v4511
        %4708 = vmatpush.bf16.msra.mxu0 %v4507
        %4709 = vmatpush.bf16.msra.mxu0 %v4503
        %4710 = vmatpush.bf16.msra.mxu0 %v4499
        %4711 = vmatpush.bf16.msra.mxu0 %v4495
        %4712 = vmatpush.bf16.msra.mxu0 %v4491
        %4713 = vmatpush.bf16.msra.mxu0 %v4487
        %4714 = vmatmul.bf16.gmra.mxu0 %v4255
        %v4715 = vpop.f32.mrf.mxu0
        %v4716 = vadd.f32 %v4698, %v4715
        %v4717 = vpop.f32.mrf.mxu0
        %v4718 = vadd.f32 %v4700, %v4717
        %4719 = vmatmul.bf16.gmra.mxu0 %v4254
        %v4720 = vpop.f32.mrf.mxu0
        %v4721 = vadd.f32 %v4703, %v4720
        %v4722 = vpop.f32.mrf.mxu0
        %4723 = vdwg.mxu0
        %v4724 = vadd.f32 %v4138, %v4608
        %v4725 = vadd.f32 %v4139, %v4644
        %v4726 = vadd.f32 %v4140, %v4680
        %v4727 = vadd.f32 %v4141, %v4716
        %v4728 = vadd.f32 %v4142, %v4610
        %v4729 = vadd.f32 %v4143, %v4646
        %v4730 = vadd.f32 %v4144, %v4682
        %v4731 = vadd.f32 %v4145, %v4718
        %v4732 = vadd.f32 %v4146, %v4613
        %v4733 = vadd.f32 %v4147, %v4649
        %v4734 = vadd.f32 %v4148, %v4685
        %v4735 = vadd.f32 %v4149, %v4721
        %v4736 = vld [vmem:[%s197 + $0x8] sm:$0x88]
        %s4737 = scalar_lea.vmem [#allocation2], 4096
        %v4738 = vld [vmem:[%s4737] sm:$0xff]
        %v4739 = vld [vmem:[%s4737 + $0x8] sm:$0xff]
        %v4740 = vld [vmem:[%s4737 + $0x10] sm:$0xff]
        %v4741 = vld [vmem:[%s4737 + $0x18] sm:$0xff]
        %v4742 = vld [vmem:[%s4737 + $0x20] sm:$0xff]
        %v4743 = vld [vmem:[%s4737 + $0x28] sm:$0xff]
        %v4744 = vld [vmem:[%s4737 + $0x30] sm:$0xff]
        %v4745 = vld [vmem:[%s4737 + $0x38] sm:$0xff]
        %v4746 = vld [vmem:[%s4737 + $0x40] sm:$0xff]
        %v4747 = vld [vmem:[%s4737 + $0x48] sm:$0xff]
        %v4748 = vld [vmem:[%s4737 + $0x50] sm:$0xff]
        %v4749 = vld [vmem:[%s4737 + $0x58] sm:$0xff]
        %v4750 = vld [vmem:[%s4737 + $0x60] sm:$0xff]
        %v4751 = vld [vmem:[%s4737 + $0x68] sm:$0xff]
        %v4752 = vld [vmem:[%s4737 + $0x70] sm:$0xff]
        %v4753 = vld [vmem:[%s4737 + $0x78] sm:$0xff]
        %v4754 = vld [vmem:[%s4737 + $0x80] sm:$0xff]
        %v4755 = vld [vmem:[%s4737 + $0x88] sm:$0xff]
        %v4756 = vld [vmem:[%s4737 + $0x90] sm:$0xff]
        %v4757 = vld [vmem:[%s4737 + $0x98] sm:$0xff]
        %v4758 = vld [vmem:[%s4737 + $0xa0] sm:$0xff]
        %v4759 = vld [vmem:[%s4737 + $0xa8] sm:$0xff]
        %v4760 = vld [vmem:[%s4737 + $0xb0] sm:$0xff]
        %v4761 = vld [vmem:[%s4737 + $0xb8] sm:$0xff]
        %v4762 = vld [vmem:[%s4737 + $0xc0] sm:$0xff]
        %v4763 = vld [vmem:[%s4737 + $0xc8] sm:$0xff]
        %v4764 = vld [vmem:[%s4737 + $0xd0] sm:$0xff]
        %v4765 = vld [vmem:[%s4737 + $0xd8] sm:$0xff]
        %v4766 = vld [vmem:[%s4737 + $0xe0] sm:$0xff]
        %v4767 = vld [vmem:[%s4737 + $0xe8] sm:$0xff]
        %v4768 = vld [vmem:[%s4737 + $0xf0] sm:$0xff]
        %v4769 = vld [vmem:[%s4737 + $0xf8] sm:$0xff]
        %v4770 = vld [vmem:[%s4737 + $0x100] sm:$0xff]
        %v4771 = vld [vmem:[%s4737 + $0x108] sm:$0xff]
        %v4772 = vld [vmem:[%s4737 + $0x110] sm:$0xff]
        %v4773 = vld [vmem:[%s4737 + $0x118] sm:$0xff]
        %v4774 = vld [vmem:[%s4737 + $0x120] sm:$0xff]
        %v4775 = vld [vmem:[%s4737 + $0x128] sm:$0xff]
        %v4776 = vld [vmem:[%s4737 + $0x130] sm:$0xff]
        %v4777 = vld [vmem:[%s4737 + $0x138] sm:$0xff]
        %v4778 = vld [vmem:[%s4737 + $0x140] sm:$0xff]
        %v4779 = vld [vmem:[%s4737 + $0x148] sm:$0xff]
        %v4780 = vld [vmem:[%s4737 + $0x150] sm:$0xff]
        %v4781 = vld [vmem:[%s4737 + $0x158] sm:$0xff]
        %v4782 = vld [vmem:[%s4737 + $0x160] sm:$0xff]
        %v4783 = vld [vmem:[%s4737 + $0x168] sm:$0xff]
        %v4784 = vld [vmem:[%s4737 + $0x170] sm:$0xff]
        %v4785 = vld [vmem:[%s4737 + $0x178] sm:$0xff]
        %v4786 = vld [vmem:[%s4737 + $0x180] sm:$0xff]
        %v4787 = vld [vmem:[%s4737 + $0x188] sm:$0xff]
        %v4788 = vld [vmem:[%s4737 + $0x190] sm:$0xff]
        %v4789 = vld [vmem:[%s4737 + $0x198] sm:$0xff]
        %v4790 = vld [vmem:[%s4737 + $0x1a0] sm:$0xff]
        %v4791 = vld [vmem:[%s4737 + $0x1a8] sm:$0xff]
        %v4792 = vld [vmem:[%s4737 + $0x1b0] sm:$0xff]
        %v4793 = vld [vmem:[%s4737 + $0x1b8] sm:$0xff]
        %v4794 = vld [vmem:[%s4737 + $0x1c0] sm:$0xff]
        %v4795 = vld [vmem:[%s4737 + $0x1c8] sm:$0xff]
        %v4796 = vld [vmem:[%s4737 + $0x1d0] sm:$0xff]
        %v4797 = vld [vmem:[%s4737 + $0x1d8] sm:$0xff]
        %v4798 = vld [vmem:[%s4737 + $0x1e0] sm:$0xff]
        %v4799 = vld [vmem:[%s4737 + $0x1e8] sm:$0xff]
        %v4800 = vld [vmem:[%s4737 + $0x1f0] sm:$0xff]
        %v4801 = vld [vmem:[%s4737 + $0x1f8] sm:$0xff]
        %v4803 = vunpack.c.l.b16 %v4736
        %v4804 = vunpack.c.h.b16 %v4736
        %v4805 = vpack.c.b16 %v3653, %v4803
        %v4806 = vpack.c.b16 %v3654, %v4804
        %v4807 = vrot.slane %v4805, 3
        %v4808 = vrot.slane %v4219, 3
        %v4809 = vsel %vm1956, %v4807, %v4808
        %v4810 = vrot.slane %v4806, 3
        %v4811 = vrot.slane %v4220, 3
        %v4812 = vsel %vm1956, %v4810, %v4811
        %v4881 = vunpack.c.l.b16 %v4738
        %v4882 = vunpack.c.h.b16 %v4738
        %v4883 = vunpack.c.l.b16 %v4739
        %v4884 = vunpack.c.h.b16 %v4739
        %v4885 = vunpack.c.l.b16 %v4740
        %v4886 = vunpack.c.h.b16 %v4740
        %v4887 = vunpack.c.l.b16 %v4741
        %v4888 = vunpack.c.h.b16 %v4741
        %v4889 = vunpack.c.l.b16 %v4742
        %v4890 = vunpack.c.h.b16 %v4742
        %v4891 = vunpack.c.l.b16 %v4743
        %v4892 = vunpack.c.h.b16 %v4743
        %v4893 = vunpack.c.l.b16 %v4744
        %v4894 = vunpack.c.h.b16 %v4744
        %v4895 = vunpack.c.l.b16 %v4745
        %v4896 = vunpack.c.h.b16 %v4745
        %v4897 = vunpack.c.l.b16 %v4746
        %v4898 = vunpack.c.h.b16 %v4746
        %v4899 = vunpack.c.l.b16 %v4747
        %v4900 = vunpack.c.h.b16 %v4747
        %v4901 = vunpack.c.l.b16 %v4748
        %v4902 = vunpack.c.h.b16 %v4748
        %v4903 = vunpack.c.l.b16 %v4749
        %v4904 = vunpack.c.h.b16 %v4749
        %v4905 = vunpack.c.l.b16 %v4750
        %v4906 = vunpack.c.h.b16 %v4750
        %v4907 = vunpack.c.l.b16 %v4751
        %v4908 = vunpack.c.h.b16 %v4751
        %v4909 = vunpack.c.l.b16 %v4752
        %v4910 = vunpack.c.h.b16 %v4752
        %v4911 = vunpack.c.l.b16 %v4753
        %v4912 = vunpack.c.h.b16 %v4753
        %v4913 = vunpack.c.l.b16 %v4754
        %v4914 = vunpack.c.h.b16 %v4754
        %v4915 = vunpack.c.l.b16 %v4755
        %v4916 = vunpack.c.h.b16 %v4755
        %v4917 = vunpack.c.l.b16 %v4756
        %v4918 = vunpack.c.h.b16 %v4756
        %v4919 = vunpack.c.l.b16 %v4757
        %v4920 = vunpack.c.h.b16 %v4757
        %v4921 = vunpack.c.l.b16 %v4758
        %v4922 = vunpack.c.h.b16 %v4758
        %v4923 = vunpack.c.l.b16 %v4759
        %v4924 = vunpack.c.h.b16 %v4759
        %v4925 = vunpack.c.l.b16 %v4760
        %v4926 = vunpack.c.h.b16 %v4760
        %v4927 = vunpack.c.l.b16 %v4761
        %v4928 = vunpack.c.h.b16 %v4761
        %v4929 = vunpack.c.l.b16 %v4762
        %v4930 = vunpack.c.h.b16 %v4762
        %v4931 = vunpack.c.l.b16 %v4763
        %v4932 = vunpack.c.h.b16 %v4763
        %v4933 = vunpack.c.l.b16 %v4764
        %v4934 = vunpack.c.h.b16 %v4764
        %v4935 = vunpack.c.l.b16 %v4765
        %v4936 = vunpack.c.h.b16 %v4765
        %v4937 = vunpack.c.l.b16 %v4766
        %v4938 = vunpack.c.h.b16 %v4766
        %v4939 = vunpack.c.l.b16 %v4767
        %v4940 = vunpack.c.h.b16 %v4767
        %v4941 = vunpack.c.l.b16 %v4768
        %v4942 = vunpack.c.h.b16 %v4768
        %v4943 = vunpack.c.l.b16 %v4769
        %v4944 = vunpack.c.h.b16 %v4769
        %v4945 = vunpack.c.l.b16 %v4770
        %v4946 = vunpack.c.h.b16 %v4770
        %v4947 = vunpack.c.l.b16 %v4771
        %v4948 = vunpack.c.h.b16 %v4771
        %v4949 = vunpack.c.l.b16 %v4772
        %v4950 = vunpack.c.h.b16 %v4772
        %v4951 = vunpack.c.l.b16 %v4773
        %v4952 = vunpack.c.h.b16 %v4773
        %v4953 = vunpack.c.l.b16 %v4774
        %v4954 = vunpack.c.h.b16 %v4774
        %v4955 = vunpack.c.l.b16 %v4775
        %v4956 = vunpack.c.h.b16 %v4775
        %v4957 = vunpack.c.l.b16 %v4776
        %v4958 = vunpack.c.h.b16 %v4776
        %v4959 = vunpack.c.l.b16 %v4777
        %v4960 = vunpack.c.h.b16 %v4777
        %v4961 = vunpack.c.l.b16 %v4778
        %v4962 = vunpack.c.h.b16 %v4778
        %v4963 = vunpack.c.l.b16 %v4779
        %v4964 = vunpack.c.h.b16 %v4779
        %v4965 = vunpack.c.l.b16 %v4780
        %v4966 = vunpack.c.h.b16 %v4780
        %v4967 = vunpack.c.l.b16 %v4781
        %v4968 = vunpack.c.h.b16 %v4781
        %v4969 = vunpack.c.l.b16 %v4782
        %v4970 = vunpack.c.h.b16 %v4782
        %v4971 = vunpack.c.l.b16 %v4783
        %v4972 = vunpack.c.h.b16 %v4783
        %v4973 = vunpack.c.l.b16 %v4784
        %v4974 = vunpack.c.h.b16 %v4784
        %v4975 = vunpack.c.l.b16 %v4785
        %v4976 = vunpack.c.h.b16 %v4785
        %v4977 = vunpack.c.l.b16 %v4786
        %v4978 = vunpack.c.h.b16 %v4786
        %v4979 = vunpack.c.l.b16 %v4787
        %v4980 = vunpack.c.h.b16 %v4787
        %v4981 = vunpack.c.l.b16 %v4788
        %v4982 = vunpack.c.h.b16 %v4788
        %v4983 = vunpack.c.l.b16 %v4789
        %v4984 = vunpack.c.h.b16 %v4789
        %v4985 = vunpack.c.l.b16 %v4790
        %v4986 = vunpack.c.h.b16 %v4790
        %v4987 = vunpack.c.l.b16 %v4791
        %v4988 = vunpack.c.h.b16 %v4791
        %v4989 = vunpack.c.l.b16 %v4792
        %v4990 = vunpack.c.h.b16 %v4792
        %v4991 = vunpack.c.l.b16 %v4793
        %v4992 = vunpack.c.h.b16 %v4793
        %v4993 = vunpack.c.l.b16 %v4794
        %v4994 = vunpack.c.h.b16 %v4794
        %v4995 = vunpack.c.l.b16 %v4795
        %v4996 = vunpack.c.h.b16 %v4795
        %v4997 = vunpack.c.l.b16 %v4796
        %v4998 = vunpack.c.h.b16 %v4796
        %v4999 = vunpack.c.l.b16 %v4797
        %v5000 = vunpack.c.h.b16 %v4797
        %v5001 = vunpack.c.l.b16 %v4798
        %v5002 = vunpack.c.h.b16 %v4798
        %v5003 = vunpack.c.l.b16 %v4799
        %v5004 = vunpack.c.h.b16 %v4799
        %v5005 = vunpack.c.l.b16 %v4800
        %v5006 = vunpack.c.h.b16 %v4800
        %v5007 = vunpack.c.l.b16 %v4801
        %v5008 = vunpack.c.h.b16 %v4801
        %v5009 = vpack.c.b16 %v4885, %v4881
        %v5010 = vpack.c.b16 %v4886, %v4882
        %v5011 = vpack.c.b16 %v4887, %v4883
        %v5012 = vpack.c.b16 %v4888, %v4884
        %v5013 = vpack.c.b16 %v4893, %v4889
        %v5014 = vpack.c.b16 %v4894, %v4890
        %v5015 = vpack.c.b16 %v4895, %v4891
        %v5016 = vpack.c.b16 %v4896, %v4892
        %v5017 = vpack.c.b16 %v4901, %v4897
        %v5018 = vpack.c.b16 %v4902, %v4898
        %v5019 = vpack.c.b16 %v4903, %v4899
        %v5020 = vpack.c.b16 %v4904, %v4900
        %v5021 = vpack.c.b16 %v4909, %v4905
        %v5022 = vpack.c.b16 %v4910, %v4906
        %v5023 = vpack.c.b16 %v4911, %v4907
        %v5024 = vpack.c.b16 %v4912, %v4908
        %v5025 = vpack.c.b16 %v4917, %v4913
        %v5026 = vpack.c.b16 %v4918, %v4914
        %v5027 = vpack.c.b16 %v4919, %v4915
        %v5028 = vpack.c.b16 %v4920, %v4916
        %v5029 = vpack.c.b16 %v4925, %v4921
        %v5030 = vpack.c.b16 %v4926, %v4922
        %v5031 = vpack.c.b16 %v4927, %v4923
        %v5032 = vpack.c.b16 %v4928, %v4924
        %v5033 = vpack.c.b16 %v4933, %v4929
        %v5034 = vpack.c.b16 %v4934, %v4930
        %v5035 = vpack.c.b16 %v4935, %v4931
        %v5036 = vpack.c.b16 %v4936, %v4932
        %v5037 = vpack.c.b16 %v4941, %v4937
        %v5038 = vpack.c.b16 %v4942, %v4938
        %v5039 = vpack.c.b16 %v4943, %v4939
        %v5040 = vpack.c.b16 %v4944, %v4940
        %v5041 = vpack.c.b16 %v4949, %v4945
        %v5042 = vpack.c.b16 %v4950, %v4946
        %v5043 = vpack.c.b16 %v4951, %v4947
        %v5044 = vpack.c.b16 %v4952, %v4948
        %v5045 = vpack.c.b16 %v4957, %v4953
        %v5046 = vpack.c.b16 %v4958, %v4954
        %v5047 = vpack.c.b16 %v4959, %v4955
        %v5048 = vpack.c.b16 %v4960, %v4956
        %v5049 = vpack.c.b16 %v4965, %v4961
        %v5050 = vpack.c.b16 %v4966, %v4962
        %v5051 = vpack.c.b16 %v4967, %v4963
        %v5052 = vpack.c.b16 %v4968, %v4964
        %v5053 = vpack.c.b16 %v4973, %v4969
        %v5054 = vpack.c.b16 %v4974, %v4970
        %v5055 = vpack.c.b16 %v4975, %v4971
        %v5056 = vpack.c.b16 %v4976, %v4972
        %v5057 = vpack.c.b16 %v4981, %v4977
        %v5058 = vpack.c.b16 %v4982, %v4978
        %v5059 = vpack.c.b16 %v4983, %v4979
        %v5060 = vpack.c.b16 %v4984, %v4980
        %v5061 = vpack.c.b16 %v4989, %v4985
        %v5062 = vpack.c.b16 %v4990, %v4986
        %v5063 = vpack.c.b16 %v4991, %v4987
        %v5064 = vpack.c.b16 %v4992, %v4988
        %v5065 = vpack.c.b16 %v4997, %v4993
        %v5066 = vpack.c.b16 %v4998, %v4994
        %v5067 = vpack.c.b16 %v4999, %v4995
        %v5068 = vpack.c.b16 %v5000, %v4996
        %v5069 = vpack.c.b16 %v5005, %v5001
        %v5070 = vpack.c.b16 %v5006, %v5002
        %v5071 = vpack.c.b16 %v5007, %v5003
        %v5072 = vpack.c.b16 %v5008, %v5004
        %5137 = vmatpush.bf16.msra.mxu0 %v5037
        %5138 = vmatpush.bf16.msra.mxu0 %v5033
        %5139 = vmatpush.bf16.msra.mxu0 %v5029
        %5140 = vmatpush.bf16.msra.mxu0 %v5025
        %5141 = vmatpush.bf16.msra.mxu0 %v5021
        %5142 = vmatpush.bf16.msra.mxu0 %v5017
        %5143 = vmatpush.bf16.msra.mxu0 %v5013
        %5144 = vmatpush.bf16.msra.mxu0 %v5009
        %5145 = vmatmul.bf16.gmra.mxu0 %v4809
        %v5146 = vpop.f32.mrf.mxu0
        %v5147 = vadd.f32 0.0, %v5146
        %v5148 = vpop.f32.mrf.mxu0
        %v5149 = vadd.f32 0.0, %v5148
        %5150 = vmatmul.bf16.gmra.mxu0 %v4808
        %v5151 = vpop.f32.mrf.mxu0
        %v5152 = vadd.f32 0.0, %v5151
        %v5153 = vpop.f32.mrf.mxu0
        %5154 = vdwg.mxu0
        %5155 = vmatpush.bf16.msra.mxu0 %v5069
        %5156 = vmatpush.bf16.msra.mxu0 %v5065
        %5157 = vmatpush.bf16.msra.mxu0 %v5061
        %5158 = vmatpush.bf16.msra.mxu0 %v5057
        %5159 = vmatpush.bf16.msra.mxu0 %v5053
        %5160 = vmatpush.bf16.msra.mxu0 %v5049
        %5161 = vmatpush.bf16.msra.mxu0 %v5045
        %5162 = vmatpush.bf16.msra.mxu0 %v5041
        %5163 = vmatmul.bf16.gmra.mxu0 %v4812
        %v5164 = vpop.f32.mrf.mxu0
        %v5165 = vadd.f32 %v5147, %v5164
        %v5166 = vpop.f32.mrf.mxu0
        %v5167 = vadd.f32 %v5149, %v5166
        %5168 = vmatmul.bf16.gmra.mxu0 %v4811
        %v5169 = vpop.f32.mrf.mxu0
        %v5170 = vadd.f32 %v5152, %v5169
        %v5171 = vpop.f32.mrf.mxu0
        %5172 = vdwg.mxu0
        %5173 = vmatpush.bf16.msra.mxu0 %v5038
        %5174 = vmatpush.bf16.msra.mxu0 %v5034
        %5175 = vmatpush.bf16.msra.mxu0 %v5030
        %5176 = vmatpush.bf16.msra.mxu0 %v5026
        %5177 = vmatpush.bf16.msra.mxu0 %v5022
        %5178 = vmatpush.bf16.msra.mxu0 %v5018
        %5179 = vmatpush.bf16.msra.mxu0 %v5014
        %5180 = vmatpush.bf16.msra.mxu0 %v5010
        %5181 = vmatmul.bf16.gmra.mxu0 %v4809
        %v5182 = vpop.f32.mrf.mxu0
        %v5183 = vadd.f32 0.0, %v5182
        %v5184 = vpop.f32.mrf.mxu0
        %v5185 = vadd.f32 0.0, %v5184
        %5186 = vmatmul.bf16.gmra.mxu0 %v4808
        %v5187 = vpop.f32.mrf.mxu0
        %v5188 = vadd.f32 0.0, %v5187
        %v5189 = vpop.f32.mrf.mxu0
        %5190 = vdwg.mxu0
        %5191 = vmatpush.bf16.msra.mxu0 %v5070
        %5192 = vmatpush.bf16.msra.mxu0 %v5066
        %5193 = vmatpush.bf16.msra.mxu0 %v5062
        %5194 = vmatpush.bf16.msra.mxu0 %v5058
        %5195 = vmatpush.bf16.msra.mxu0 %v5054
        %5196 = vmatpush.bf16.msra.mxu0 %v5050
        %5197 = vmatpush.bf16.msra.mxu0 %v5046
        %5198 = vmatpush.bf16.msra.mxu0 %v5042
        %5199 = vmatmul.bf16.gmra.mxu0 %v4812
        %v5200 = vpop.f32.mrf.mxu0
        %v5201 = vadd.f32 %v5183, %v5200
        %v5202 = vpop.f32.mrf.mxu0
        %v5203 = vadd.f32 %v5185, %v5202
        %5204 = vmatmul.bf16.gmra.mxu0 %v4811
        %v5205 = vpop.f32.mrf.mxu0
        %v5206 = vadd.f32 %v5188, %v5205
        %v5207 = vpop.f32.mrf.mxu0
        %5208 = vdwg.mxu0
        %5209 = vmatpush.bf16.msra.mxu0 %v5039
        %5210 = vmatpush.bf16.msra.mxu0 %v5035
        %5211 = vmatpush.bf16.msra.mxu0 %v5031
        %5212 = vmatpush.bf16.msra.mxu0 %v5027
        %5213 = vmatpush.bf16.msra.mxu0 %v5023
        %5214 = vmatpush.bf16.msra.mxu0 %v5019
        %5215 = vmatpush.bf16.msra.mxu0 %v5015
        %5216 = vmatpush.bf16.msra.mxu0 %v5011
        %5217 = vmatmul.bf16.gmra.mxu0 %v4809
        %v5218 = vpop.f32.mrf.mxu0
        %v5219 = vadd.f32 0.0, %v5218
        %v5220 = vpop.f32.mrf.mxu0
        %v5221 = vadd.f32 0.0, %v5220
        %5222 = vmatmul.bf16.gmra.mxu0 %v4808
        %v5223 = vpop.f32.mrf.mxu0
        %v5224 = vadd.f32 0.0, %v5223
        %v5225 = vpop.f32.mrf.mxu0
        %5226 = vdwg.mxu0
        %5227 = vmatpush.bf16.msra.mxu0 %v5071
        %5228 = vmatpush.bf16.msra.mxu0 %v5067
        %5229 = vmatpush.bf16.msra.mxu0 %v5063
        %5230 = vmatpush.bf16.msra.mxu0 %v5059
        %5231 = vmatpush.bf16.msra.mxu0 %v5055
        %5232 = vmatpush.bf16.msra.mxu0 %v5051
        %5233 = vmatpush.bf16.msra.mxu0 %v5047
        %5234 = vmatpush.bf16.msra.mxu0 %v5043
        %5235 = vmatmul.bf16.gmra.mxu0 %v4812
        %v5236 = vpop.f32.mrf.mxu0
        %v5237 = vadd.f32 %v5219, %v5236
        %v5238 = vpop.f32.mrf.mxu0
        %v5239 = vadd.f32 %v5221, %v5238
        %5240 = vmatmul.bf16.gmra.mxu0 %v4811
        %v5241 = vpop.f32.mrf.mxu0
        %v5242 = vadd.f32 %v5224, %v5241
        %v5243 = vpop.f32.mrf.mxu0
        %5244 = vdwg.mxu0
        %5245 = vmatpush.bf16.msra.mxu0 %v5040
        %5246 = vmatpush.bf16.msra.mxu0 %v5036
        %5247 = vmatpush.bf16.msra.mxu0 %v5032
        %5248 = vmatpush.bf16.msra.mxu0 %v5028
        %5249 = vmatpush.bf16.msra.mxu0 %v5024
        %5250 = vmatpush.bf16.msra.mxu0 %v5020
        %5251 = vmatpush.bf16.msra.mxu0 %v5016
        %5252 = vmatpush.bf16.msra.mxu0 %v5012
        %5253 = vmatmul.bf16.gmra.mxu0 %v4809
        %v5254 = vpop.f32.mrf.mxu0
        %v5255 = vadd.f32 0.0, %v5254
        %v5256 = vpop.f32.mrf.mxu0
        %v5257 = vadd.f32 0.0, %v5256
        %5258 = vmatmul.bf16.gmra.mxu0 %v4808
        %v5259 = vpop.f32.mrf.mxu0
        %v5260 = vadd.f32 0.0, %v5259
        %v5261 = vpop.f32.mrf.mxu0
        %5262 = vdwg.mxu0
        %5263 = vmatpush.bf16.msra.mxu0 %v5072
        %5264 = vmatpush.bf16.msra.mxu0 %v5068
        %5265 = vmatpush.bf16.msra.mxu0 %v5064
        %5266 = vmatpush.bf16.msra.mxu0 %v5060
        %5267 = vmatpush.bf16.msra.mxu0 %v5056
        %5268 = vmatpush.bf16.msra.mxu0 %v5052
        %5269 = vmatpush.bf16.msra.mxu0 %v5048
        %5270 = vmatpush.bf16.msra.mxu0 %v5044
        %5271 = vmatmul.bf16.gmra.mxu0 %v4812
        %v5272 = vpop.f32.mrf.mxu0
        %v5273 = vadd.f32 %v5255, %v5272
        %v5274 = vpop.f32.mrf.mxu0
        %v5275 = vadd.f32 %v5257, %v5274
        %5276 = vmatmul.bf16.gmra.mxu0 %v4811
        %v5277 = vpop.f32.mrf.mxu0
        %v5278 = vadd.f32 %v5260, %v5277
        %v5279 = vpop.f32.mrf.mxu0
        %5280 = vdwg.mxu0
        %v5281 = vadd.f32 %v4724, %v5165
        %v5282 = vadd.f32 %v4725, %v5201
        %v5283 = vadd.f32 %v4726, %v5237
        %v5284 = vadd.f32 %v4727, %v5273
        %v5285 = vadd.f32 %v4728, %v5167
        %v5286 = vadd.f32 %v4729, %v5203
        %v5287 = vadd.f32 %v4730, %v5239
        %v5288 = vadd.f32 %v4731, %v5275
        %v5289 = vadd.f32 %v4732, %v5170
        %v5290 = vadd.f32 %v4733, %v5206
        %v5291 = vadd.f32 %v4734, %v5242
        %v5292 = vadd.f32 %v4735, %v5278
        %v5293 = vld [vmem:[#allocation4] sm:$0xf]
        %v5295 = vperm.slane %v5293, 0
        %v5296 = vperm.slane %v5293, 1
        %v5297 = vperm.slane %v5293, 2
        %v5298 = vperm.slane %v5293, 3
        %v5303 = vadd.f32 %v5281, %v5295
        %v5304 = vadd.f32 %v5282, %v5296
        %v5305 = vadd.f32 %v5283, %v5297
        %v5306 = vadd.f32 %v5284, %v5298
        %v5307 = vadd.f32 %v5285, %v5295
        %v5308 = vadd.f32 %v5286, %v5296
        %v5309 = vadd.f32 %v5287, %v5297
        %v5310 = vadd.f32 %v5288, %v5298
        %v5311 = vadd.f32 %v5289, %v5295
        %v5312 = vadd.f32 %v5290, %v5296
        %v5313 = vadd.f32 %v5291, %v5297
        %v5314 = vadd.f32 %v5292, %v5298
        %v5315 = vmul.f32 %v5303, 0.2
        %v5316 = vmul.f32 %v5304, 0.2
        %v5317 = vmul.f32 %v5305, 0.2
        %v5318 = vmul.f32 %v5306, 0.2
        %v5319 = vmul.f32 %v5307, 0.2
        %v5320 = vmul.f32 %v5308, 0.2
        %v5321 = vmul.f32 %v5309, 0.2
        %v5322 = vmul.f32 %v5310, 0.2
        %v5323 = vmul.f32 %v5311, 0.2
        %v5324 = vmul.f32 %v5312, 0.2
        %v5325 = vmul.f32 %v5313, 0.2
        %v5326 = vmul.f32 %v5314, 0.2
        %v5327 = vmax.f32 %v5303, %v5315
        %v5328 = vmax.f32 %v5304, %v5316
        %v5329 = vmax.f32 %v5305, %v5317
        %v5330 = vmax.f32 %v5306, %v5318
        %v5331 = vmax.f32 %v5307, %v5319
        %v5332 = vmax.f32 %v5308, %v5320
        %v5333 = vmax.f32 %v5309, %v5321
        %v5334 = vmax.f32 %v5310, %v5322
        %v5335 = vmax.f32 %v5311, %v5323
        %v5336 = vmax.f32 %v5312, %v5324
        %v5337 = vmax.f32 %v5313, %v5325
        %v5338 = vmax.f32 %v5314, %v5326
        %v5339 = vmul.f32 %v5327, %v5327
        %v5340 = vmul.f32 %v5328, %v5328
        %v5341 = vmul.f32 %v5329, %v5329
        %v5342 = vmul.f32 %v5330, %v5330
        %v5343 = vmul.f32 %v5331, %v5331
        %v5344 = vmul.f32 %v5332, %v5332
        %v5345 = vmul.f32 %v5333, %v5333
        %v5346 = vmul.f32 %v5334, %v5334
        %v5347 = vmul.f32 %v5335, %v5335
        %v5348 = vmul.f32 %v5336, %v5336
        %v5349 = vmul.f32 %v5337, %v5337
        %v5350 = vmul.f32 %v5338, %v5338
        %v5351 = vadd.f32 %v5339, %v5340
        %v5352 = vadd.f32 %v5351, %v5341
        %v5353 = vadd.f32 %v5352, %v5342
        %5354 = vadd.xlane.f32.xlu0 %v5353
        %v5355 = vpop.xlane.xlu0 %5354
        %v5356 = vadd.f32 %v5343, %v5344
        %v5357 = vadd.f32 %v5356, %v5345
        %v5358 = vadd.f32 %v5357, %v5346
        %5359 = vadd.xlane.f32.xlu0 %v5358
        %v5360 = vpop.xlane.xlu0 %5359
        %v5361 = vadd.f32 %v5347, %v5348
        %v5362 = vadd.f32 %v5361, %v5349
        %v5363 = vadd.f32 %v5362, %v5350
        %5364 = vadd.xlane.f32.xlu0 %v5363
        %v5365 = vpop.xlane.xlu0 %5364
        %v5366 = vrcp.pop 512.0
        %v5367 = vmul.f32 512.0, %v5366
        %v5368 = vsub.f32 1.0, %v5367
        %v5369 = vmul.f32 %v5366, %v5368
        %v5370 = vadd.f32 %v5366, %v5369
        %vm5371 = vweird.f32 %v5366
        %v5372 = vsel %vm5371, %v5366, %v5370
        %v5373 = vmul.f32 %v5355, %v5372
        %v5374 = vmul.f32 %v5360, %v5372
        %v5375 = vmul.f32 %v5365, %v5372
        %v5376 = vadd.f32 %v5373, 1e-08
        %v5377 = vadd.f32 %v5374, 1e-08
        %v5378 = vadd.f32 %v5375, 1e-08
        %v5379 = vrsqrt.pop %v5376
        %v5380 = vmul.f32 %v5379, %v5376
        %v5381 = vmul.f32 %v5380, %v5379
        %v5382 = vmul.f32 0.5, %v5381
        %v5383 = vsub.f32 1.5, %v5382
        %v5384 = vmul.f32 %v5379, %v5383
        %vm5385 = vweird.f32 %v5376
        %vm5386 = vweird.f32 %v5379
        %vm5387 = vmor %vm5385, %vm5386
        %v5388 = vsel %vm5387, %v5379, %v5384
        %v5389 = vrsqrt.pop %v5377
        %v5390 = vmul.f32 %v5389, %v5377
        %v5391 = vmul.f32 %v5390, %v5389
        %v5392 = vmul.f32 0.5, %v5391
        %v5393 = vsub.f32 1.5, %v5392
        %v5394 = vmul.f32 %v5389, %v5393
        %vm5395 = vweird.f32 %v5377
        %vm5396 = vweird.f32 %v5389
        %vm5397 = vmor %vm5395, %vm5396
        %v5398 = vsel %vm5397, %v5389, %v5394
        %v5399 = vrsqrt.pop %v5378
        %v5400 = vmul.f32 %v5399, %v5378
        %v5401 = vmul.f32 %v5400, %v5399
        %v5402 = vmul.f32 0.5, %v5401
        %v5403 = vsub.f32 1.5, %v5402
        %v5404 = vmul.f32 %v5399, %v5403
        %vm5405 = vweird.f32 %v5378
        %vm5406 = vweird.f32 %v5399
        %vm5407 = vmor %vm5405, %vm5406
        %v5408 = vsel %vm5407, %v5399, %v5404
        %v5409 = vmul.f32 %v5327, %v5388
        %v5410 = vmul.f32 %v5328, %v5388
        %v5411 = vmul.f32 %v5329, %v5388
        %v5412 = vmul.f32 %v5330, %v5388
        %v5413 = vmul.f32 %v5331, %v5398
        %v5414 = vmul.f32 %v5332, %v5398
        %v5415 = vmul.f32 %v5333, %v5398
        %v5416 = vmul.f32 %v5334, %v5398
        %v5417 = vmul.f32 %v5335, %v5408
        %v5418 = vmul.f32 %v5336, %v5408
        %v5419 = vmul.f32 %v5337, %v5408
        %v5420 = vmul.f32 %v5338, %v5408
        %v5421 = vpack.c.bf16 %v5410, %v5409
        %v5422 = vpack.c.bf16 %v5412, %v5411
        %v5423 = vpack.c.bf16 %v5414, %v5413
        %v5424 = vpack.c.bf16 %v5416, %v5415
        %v5425 = vpack.c.bf16 %v5418, %v5417
        %v5426 = vpack.c.bf16 %v5420, %v5419
        %5427 = vst [vmem:[%s202] sm:$0xff] %v5421
        %5428 = vst [vmem:[%s202 + $0x8] sm:$0xff] %v5422
        %5429 = vst [vmem:[%s202 + $0x10] sm:$0xff] %v5423
        %5430 = vst [vmem:[%s202 + $0x18] sm:$0xff] %v5424
        %5431 = vst [vmem:[%s202 + $0x20] sm:$0xff] %v5425
        %5432 = vst [vmem:[%s202 + $0x28] sm:$0xff] %v5426
        %p5433 = scmp.lt.s32.totalorder %s16, 1
        %s5434 = scalar_select %p5433, %s16, 1
        %s5435 = smul.addr %s5434, 12
        %s5436 = smul.addr %s5435, 4
        %s5437 = scalar_lea.vmem %s3, %s5436
        // Predicated region
        $region41: #{generator_forward.4} parent=31 // pred_check
          %p5438 = pneg %p102
        $region42: #{generator_forward.4} parent=31 // pred_check_branch
          %5440 = sbr.rel (%p5438) target = $region44
        $region43: #{generator_forward.4} parent=31 // pred_region
          _
        $region44: #{generator_forward.4} parent=31 // pred_fallthru
          _
      $region32: #{generator_forward.4} parent=5 // pred_fallthru
        _
      %p5441 = scmp.le.s32.totalorder 2, %s11
      // Predicated region
      $region45: #{generator_forward.4} parent=5 // pred_check
        %p5442 = pneg %p5441
      $region46: #{generator_forward.4} parent=5 // pred_check_branch
        %5444 = sbr.rel (%p5442) target = $region48
      $region47: #{generator_forward.4} parent=5 // pred_region
        %s5445 = ssub.s32 %s11, 2
        // Predicated region
        $region49: #{generator_forward.4} parent=47 // pred_check
          %p5446 = pneg %p108
        $region50: #{generator_forward.4} parent=47 // pred_check_branch
          %5448 = sbr.rel (%p5446) target = $region52
        $region51: #{generator_forward.4} parent=47 // pred_region
          %p5449 = scmp.lt.s32.totalorder %s17, 1
          %s5450 = scalar_select %p5449, %s17, 1
          %s5451 = smul.addr %s5450, 12
          %s5452 = smul.addr %s5451, 4
          %s5453 = scalar_lea.vmem %s3, %s5452
        $region52: #{generator_forward.4} parent=47 // pred_fallthru
          _
      $region48: #{generator_forward.4} parent=5 // pred_fallthru
        _
    $region6: #{generator_forward.4} parent=1 // loop_footer
      %s15 = sadd.s32 1, %s11
    $region7: #{generator_forward.4} parent=1 // loop_footer_branch
      %10 = sbr.rel target = $region3
    $region8: #{generator_forward.4} parent=1 // loop_exit
      _
    %5454 = vsyncpa [#allocation3], 1
    %s5455 = scalar_lea.sflag [#allocation3], 1
    %5456 = vsyncpa %s5455, 1
    %5457 = vsyncpa [#allocation5], 1

// kernel: generator_forward.5
$region0: #{generator_forward.5}
  #allocation0 [shape = 'u32[]', space=smem, size = 0x4, offset = 0x4, fixed_abs, tag = 'smem constant byte address 0x4 - core index']
  #allocation1 [shape = 'u32[72,128]{1,0:T(1,128)}', space=vmem, size = 0x9000, scoped, tag = 'internal scratch']
  %s0 = inlined_call_operand.vmem [shape: bf16[2,42,512], index: 0, kind: input, shape index: {}]
  %s1 = inlined_call_operand.hbm [shape: bf16[9,512,128], index: 1, kind: input, shape index: {}]
  %s2 = inlined_call_operand.hbm [shape: f32[1,128], index: 2, kind: input, shape index: {}]
  %s3 = inlined_call_operand.vmem [shape: f32[2,24,128], index: 3, kind: output, shape index: {}]
  %s4 = sld [smem:[#allocation0]]
  $region53: #{generator_forward.5} parent=0
    _
  %s6 = ssub.s32 1, %s4
  %s7 = scalar_select 0, %s6, %s4
  $region1: #{generator_forward.5} parent=0
    #allocation2 [shape = 'u8[1179648]{0}', space=vmem, size = 0x120000, scoped, tag = 'input window, operand 1, single buffered']
    #allocation3 [shape = 's32[2]{0}', space=sflag, size = 0x8, scoped, tag = 'scoped memory for generator_forward.5']
    #allocation4 [shape = 'u8[512]{0}', space=vmem, size = 0x400, scoped, tag = 'input window, operand 2, single buffered']
    #allocation5 [shape = 's32[1]{0}', space=sflag, size = 0x4, scoped, tag = 'scoped memory for generator_forward.5']
    %8 = vsyncpa [#allocation3], 0
    %9 = vsyncpa [#allocation5], 0
    loop: start=0, step=1, limit=4
    $region2: #{generator_forward.5} parent=1 // loop_pre_header
      _
    $region3: #{generator_forward.5} parent=1 // loop_header
      %s11 = sphi 0, %s15
      %p12 = scmp.ge.s32.totalorder %s11, 4
      %s21 = sphi 0, %s23
      %s24 = sphi 0, %s21
      %s25 = sphi 0, %s24
      %s41 = sphi 0, %s25
      %s45 = sphi 0, %s45
      %s47 = sphi 0, %s45
      %s48 = sphi 0, %s47
      %s62 = sphi 0, %s48
      %s66 = sphi 0, %s66
      %s68 = sphi 0, %s66
      %s69 = sphi 0, %s68
      %s83 = sphi 0, %s69
      %s89 = sphi 0, %s91
      %s92 = sphi 0, %s89
      %s93 = sphi 0, %s92
      %s109 = sphi 0, %s93
    $region4: #{generator_forward.5} parent=1 // loop_header_branch
      %14 = sbr.rel (%p12) target = $region8
    $region5: #{generator_forward.5} parent=1 // loop_body
      %s16 = ssub.s32 %s11, 1
      %s17 = ssub.s32 %s11, 2
      %s18 = sadd.s32 %s11, 1
      %s19 = ssub.s32 %s11, %s18
      %p20 = scmp.eq.s32.totalorder %s19, 0
      %s22 = sadd.s32 %s21, 1
      %s23 = scalar_select %p20, %s21, %s22
      %p26 = pneg %p20
      %p27 = scmp.eq.s32.totalorder %s11, 1
      %p28 = por %p26, %p27
      %p29 = scmp.ne.s32.totalorder %s21, %s24
      %p30 = scmp.eq.s32.totalorder %s11, 0
      %p31 = por %p29, %p30
      %p32 = scmp.ne.s32.totalorder %s21, %s24
      %p33 = scmp.eq.s32.totalorder %s16, 1
      %p34 = por %p32, %p33
      %p35 = scmp.ne.s32.totalorder %s24, %s25
      %p36 = scmp.eq.s32.totalorder %s16, 0
      %p37 = por %p35, %p36
      %p38 = scmp.ne.s32.totalorder %s24, %s25
      %p39 = scmp.eq.s32.totalorder %s17, 1
      %p40 = por %p38, %p39
      %p42 = scmp.ne.s32.totalorder %s25, %s41
      %p43 = scmp.eq.s32.totalorder %s17, 0
      %p44 = por %p42, %p43
      %s46 = sadd.s32 %s45, 1
      %p49 = scmp.eq.s32.totalorder %s11, 1
      %p50 = scmp.ne.s32.totalorder %s45, %s47
      %p51 = scmp.eq.s32.totalorder %s11, 0
      %p52 = por %p50, %p51
      %p53 = scmp.ne.s32.totalorder %s45, %s47
      %p54 = scmp.eq.s32.totalorder %s16, 1
      %p55 = por %p53, %p54
      %p56 = scmp.ne.s32.totalorder %s47, %s48
      %p57 = scmp.eq.s32.totalorder %s16, 0
      %p58 = por %p56, %p57
      %p59 = scmp.ne.s32.totalorder %s47, %s48
      %p60 = scmp.eq.s32.totalorder %s17, 1
      %p61 = por %p59, %p60
      %p63 = scmp.ne.s32.totalorder %s48, %s62
      %p64 = scmp.eq.s32.totalorder %s17, 0
      %p65 = por %p63, %p64
      %s67 = sadd.s32 %s66, 1
      %p70 = scmp.eq.s32.totalorder %s11, 1
      %p71 = scmp.ne.s32.totalorder %s66, %s68
      %p72 = scmp.eq.s32.totalorder %s11, 0
      %p73 = por %p71, %p72
      %p74 = scmp.ne.s32.totalorder %s66, %s68
      %p75 = scmp.eq.s32.totalorder %s16, 1
      %p76 = por %p74, %p75
      %p77 = scmp.ne.s32.totalorder %s68, %s69
      %p78 = scmp.eq.s32.totalorder %s16, 0
      %p79 = por %p77, %p78
      %p80 = scmp.ne.s32.totalorder %s68, %s69
      %p81 = scmp.eq.s32.totalorder %s17, 1
      %p82 = por %p80, %p81
      %p84 = scmp.ne.s32.totalorder %s69, %s83
      %p85 = scmp.eq.s32.totalorder %s17, 0
      %p86 = por %p84, %p85
      %s87 = ssub.s32 %s11, %s18
      %p88 = scmp.eq.s32.totalorder %s87, 0
      %s90 = sadd.s32 %s89, 1
      %s91 = scalar_select %p88, %s89, %s90
      %p94 = pneg %p88
      %p95 = scmp.eq.s32.totalorder %s11, 1
      %p96 = por %p94, %p95
      %p97 = scmp.ne.s32.totalorder %s89, %s92
      %p98 = scmp.eq.s32.totalorder %s11, 0
      %p99 = por %p97, %p98
      %p100 = scmp.ne.s32.totalorder %s89, %s92
      %p101 = scmp.eq.s32.totalorder %s16, 1
      %p102 = por %p100, %p101
      %p103 = scmp.ne.s32.totalorder %s92, %s93
      %p104 = scmp.eq.s32.totalorder %s16, 0
      %p105 = por %p103, %p104
      %p106 = scmp.ne.s32.totalorder %s92, %s93
      %p107 = scmp.eq.s32.totalorder %s17, 1
      %p108 = por %p106, %p107
      %p110 = scmp.ne.s32.totalorder %s93, %s109
      %p111 = scmp.eq.s32.totalorder %s17, 0
      %p112 = por %p110, %p111
      %p113 = scmp.le.s32.totalorder 1, %s11
      %p114 = scmp.lt.s32.totalorder %s11, 3
      %p115 = pnand %p113, %p114
      %p116 = pneg %p115
      // Predicated region
      $region9: #{generator_forward.5} parent=5 // pred_check
        _
      $region10: #{generator_forward.5} parent=5 // pred_check_branch
        %118 = sbr.rel (%p115) target = $region12
      $region11: #{generator_forward.5} parent=5 // pred_region
        %s119 = ssub.s32 %s11, 1
        // Predicated region
        $region13: #{generator_forward.5} parent=11 // pred_check
          %p120 = pneg %p58
        $region14: #{generator_forward.5} parent=11 // pred_check_branch
          %122 = sbr.rel (%p120) target = $region16
        $region15: #{generator_forward.5} parent=11 // pred_region
          %124 = vsyncadd [#allocation3], 0
          %s125 = sshll.u32 %s1, 4
          %s126 = int_to_ptr.hbm [resolvable:$true] %s125
          %s127 = sshll.u32 [#allocation2], 4
          %s128 = int_to_ptr.vmem [resolvable:$true] %s127
          %133 = dma.hbm_to_vmem [thread:$0]  %s126, 36864, %s128, [#allocation3], 64, 64, 4
        $region16: #{generator_forward.5} parent=11 // pred_fallthru
          _
        // Predicated region
        $region17: #{generator_forward.5} parent=11 // pred_check
          %p134 = pneg %p79
        $region18: #{generator_forward.5} parent=11 // pred_check_branch
          %136 = sbr.rel (%p134) target = $region20
        $region19: #{generator_forward.5} parent=11 // pred_region
          %138 = vsyncadd [#allocation5], 0
          %s140 = sshll.u32 %s2, 4
          %s141 = int_to_ptr.hbm [resolvable:$true] %s140
          %s142 = sshll.u32 [#allocation4], 4
          %s143 = int_to_ptr.vmem [resolvable:$true] %s142
          %145 = dma.hbm_to_vmem [thread:$0]  %s141, 16, %s143, [#allocation5]
        $region20: #{generator_forward.5} parent=11 // pred_fallthru
          _
      $region12: #{generator_forward.5} parent=5 // pred_fallthru
        _
      %p146 = scmp.lt.s32.totalorder %s11, 2
      // Predicated region
      $region21: #{generator_forward.5} parent=5 // pred_check
        %p147 = pneg %p146
      $region22: #{generator_forward.5} parent=5 // pred_check_branch
        %149 = sbr.rel (%p147) target = $region24
      $region23: #{generator_forward.5} parent=5 // pred_region
        // Predicated region
        $region25: #{generator_forward.5} parent=23 // pred_check
          %p150 = pneg %p31
        $region26: #{generator_forward.5} parent=23 // pred_check_branch
          %152 = sbr.rel (%p150) target = $region28
        $region27: #{generator_forward.5} parent=23 // pred_region
          %p153 = scmp.lt.s32.totalorder %s11, 1
          %s154 = scalar_select %p153, %s11, 1
          %s155 = smul.addr %s154, 24
          %s156 = smul.addr %s155, 4
          %s157 = scalar_lea.vmem %s0, %s156
        $region28: #{generator_forward.5} parent=23 // pred_fallthru
          _
      $region24: #{generator_forward.5} parent=5 // pred_fallthru
        _
      %p158 = scmp.le.s32.totalorder 1, %s11
      %p159 = scmp.lt.s32.totalorder %s11, 3
      %p160 = pnand %p158, %p159
      %p161 = pneg %p160
      // Predicated region
      $region29: #{generator_forward.5} parent=5 // pred_check
        _
      $region30: #{generator_forward.5} parent=5 // pred_check_branch
        %163 = sbr.rel (%p160) target = $region32
      $region31: #{generator_forward.5} parent=5 // pred_region
        %s164 = ssub.s32 %s11, 1
        // Predicated region
        $region33: #{generator_forward.5} parent=31 // pred_check
          %p165 = pneg %p58
        $region34: #{generator_forward.5} parent=31 // pred_check_branch
          %167 = sbr.rel (%p165) target = $region36
        $region35: #{generator_forward.5} parent=31 // pred_region
          %169 = dma.done [#allocation3], 36864
        $region36: #{generator_forward.5} parent=31 // pred_fallthru
          _
        // Predicated region
        $region37: #{generator_forward.5} parent=31 // pred_check
          %p170 = pneg %p79
        $region38: #{generator_forward.5} parent=31 // pred_check_branch
          %172 = sbr.rel (%p170) target = $region40
        $region39: #{generator_forward.5} parent=31 // pred_region
          %174 = dma.done [#allocation5], 16
        $region40: #{generator_forward.5} parent=31 // pred_fallthru
          _
        %p175 = scmp.lt.s32.totalorder %s16, 1
        %s176 = scalar_select %p175, %s16, 1
        %s177 = smul.addr %s176, 24
        %s178 = smul.addr %s177, 4
        %s179 = scalar_lea.vmem %s0, %s178
        %p180 = pneg %p37
        %p181 = pneg %p34
        %p182 = pneg %p58
        %p183 = pneg %p55
        %p184 = pneg %p79
        %p185 = pneg %p76
        %p186 = pneg %p105
        %p187 = pneg %p102
        %p188 = scmp.lt.s32.totalorder %s16, 1
        %s189 = scalar_select %p188, %s16, 1
        %s190 = smul.addr %s189, 3
        %s191 = smul.addr %s190, 8
        %s192 = scalar_lea.vmem %s3, %s191
        %p193 = scmp.lt.s32.totalorder %s16, 1
        %s194 = scalar_select %p193, %s16, 1
        %s195 = smul.addr %s194, 24
        %s196 = smul.addr %s195, 4
        %s197 = scalar_lea.vmem %s0, %s196
        %p198 = scmp.lt.s32.totalorder %s16, 1
        %s199 = scalar_select %p198, %s16, 1
        %s200 = smul.addr %s199, 3
        %s201 = smul.addr %s200, 8
        %s202 = scalar_lea.vmem %s3, %s201
        %v203 = vld [vmem:[%s197] sm:$0xff]
        %v204 = vld [vmem:[%s197 + $0x8] sm:$0xff]
        %v205 = vld [vmem:[%s197 + $0x10] sm:$0xff]
        %v206 = vld [vmem:[%s197 + $0x18] sm:$0xff]
        %v207 = vld [vmem:[%s197 + $0x20] sm:$0xff]
        %v208 = vld [vmem:[%s197 + $0x28] sm:$0xff]
        %v209 = vld [vmem:[#allocation2] sm:$0xf]
        %v210 = vld [vmem:[#allocation2 + $0x4] sm:$0xf]
        %v211 = vld [vmem:[#allocation2 + $0x8] sm:$0xf]
        %v212 = vld [vmem:[#allocation2 + $0xc] sm:$0xf]
        %v213 = vld [vmem:[#allocation2 + $0x10] sm:$0xf]
        %v214 = vld [vmem:[#allocation2 + $0x14] sm:$0xf]
        %v215 = vld [vmem:[#allocation2 + $0x18] sm:$0xf]
        %v216 = vld [vmem:[#allocation2 + $0x1c] sm:$0xf]
        %v217 = vld [vmem:[#allocation2 + $0x20] sm:$0xf]
        %v218 = vld [vmem:[#allocation2 + $0x24] sm:$0xf]
        %v219 = vld [vmem:[#allocation2 + $0x28] sm:$0xf]
        %v220 = vld [vmem:[#allocation2 + $0x2c] sm:$0xf]
        %v221 = vld [vmem:[#allocation2 + $0x30] sm:$0xf]
        %v222 = vld [vmem:[#allocation2 + $0x34] sm:$0xf]
        %v223 = vld [vmem:[#allocation2 + $0x38] sm:$0xf]
        %v224 = vld [vmem:[#allocation2 + $0x3c] sm:$0xf]
        %v225 = vld [vmem:[#allocation2 + $0x40] sm:$0xf]
        %v226 = vld [vmem:[#allocation2 + $0x44] sm:$0xf]
        %v227 = vld [vmem:[#allocation2 + $0x48] sm:$0xf]
        %v228 = vld [vmem:[#allocation2 + $0x4c] sm:$0xf]
        %v229 = vld [vmem:[#allocation2 + $0x50] sm:$0xf]
        %v230 = vld [vmem:[#allocation2 + $0x54] sm:$0xf]
        %v231 = vld [vmem:[#allocation2 + $0x58] sm:$0xf]
        %v232 = vld [vmem:[#allocation2 + $0x5c] sm:$0xf]
        %v233 = vld [vmem:[#allocation2 + $0x60] sm:$0xf]
        %v234 = vld [vmem:[#allocation2 + $0x64] sm:$0xf]
        %v235 = vld [vmem:[#allocation2 + $0x68] sm:$0xf]
        %v236 = vld [vmem:[#allocation2 + $0x6c] sm:$0xf]
        %v237 = vld [vmem:[#allocation2 + $0x70] sm:$0xf]
        %v238 = vld [vmem:[#allocation2 + $0x74] sm:$0xf]
        %v239 = vld [vmem:[#allocation2 + $0x78] sm:$0xf]
        %v240 = vld [vmem:[#allocation2 + $0x7c] sm:$0xf]
        %v241 = vld [vmem:[#allocation2 + $0x80] sm:$0xf]
        %v242 = vld [vmem:[#allocation2 + $0x84] sm:$0xf]
        %v243 = vld [vmem:[#allocation2 + $0x88] sm:$0xf]
        %v244 = vld [vmem:[#allocation2 + $0x8c] sm:$0xf]
        %v245 = vld [vmem:[#allocation2 + $0x90] sm:$0xf]
        %v246 = vld [vmem:[#allocation2 + $0x94] sm:$0xf]
        %v247 = vld [vmem:[#allocation2 + $0x98] sm:$0xf]
        %v248 = vld [vmem:[#allocation2 + $0x9c] sm:$0xf]
        %v249 = vld [vmem:[#allocation2 + $0xa0] sm:$0xf]
        %v250 = vld [vmem:[#allocation2 + $0xa4] sm:$0xf]
        %v251 = vld [vmem:[#allocation2 + $0xa8] sm:$0xf]
        %v252 = vld [vmem:[#allocation2 + $0xac] sm:$0xf]
        %v253 = vld [vmem:[#allocation2 + $0xb0] sm:$0xf]
        %v254 = vld [vmem:[#allocation2 + $0xb4] sm:$0xf]
        %v255 = vld [vmem:[#allocation2 + $0xb8] sm:$0xf]
        %v256 = vld [vmem:[#allocation2 + $0xbc] sm:$0xf]
        %v257 = vld [vmem:[#allocation2 + $0xc0] sm:$0xf]
        %v258 = vld [vmem:[#allocation2 + $0xc4] sm:$0xf]
        %v259 = vld [vmem:[#allocation2 + $0xc8] sm:$0xf]
        %v260 = vld [vmem:[#allocation2 + $0xcc] sm:$0xf]
        %v261 = vld [vmem:[#allocation2 + $0xd0] sm:$0xf]
        %v262 = vld [vmem:[#allocation2 + $0xd4] sm:$0xf]
        %v263 = vld [vmem:[#allocation2 + $0xd8] sm:$0xf]
        %v264 = vld [vmem:[#allocation2 + $0xdc] sm:$0xf]
        %v265 = vld [vmem:[#allocation2 + $0xe0] sm:$0xf]
        %v266 = vld [vmem:[#allocation2 + $0xe4] sm:$0xf]
        %v267 = vld [vmem:[#allocation2 + $0xe8] sm:$0xf]
        %v268 = vld [vmem:[#allocation2 + $0xec] sm:$0xf]
        %v269 = vld [vmem:[#allocation2 + $0xf0] sm:$0xf]
        %v270 = vld [vmem:[#allocation2 + $0xf4] sm:$0xf]
        %v271 = vld [vmem:[#allocation2 + $0xf8] sm:$0xf]
        %v272 = vld [vmem:[#allocation2 + $0xfc] sm:$0xf]
        %v273 = vld [vmem:[%s197 + $0x30] sm:$0x11]
        %v274 = vld [vmem:[%s197 + $0x38] sm:$0x11]
        %s275 = scalar_lea.vmem [#allocation2], 256
        %v276 = vld [vmem:[%s275] sm:$0xf]
        %v277 = vld [vmem:[%s275 + $0x4] sm:$0xf]
        %v278 = vld [vmem:[%s275 + $0x8] sm:$0xf]
        %v279 = vld [vmem:[%s275 + $0xc] sm:$0xf]
        %v280 = vld [vmem:[%s275 + $0x10] sm:$0xf]
        %v281 = vld [vmem:[%s275 + $0x14] sm:$0xf]
        %v282 = vld [vmem:[%s275 + $0x18] sm:$0xf]
        %v283 = vld [vmem:[%s275 + $0x1c] sm:$0xf]
        %v284 = vld [vmem:[%s275 + $0x20] sm:$0xf]
        %v285 = vld [vmem:[%s275 + $0x24] sm:$0xf]
        %v286 = vld [vmem:[%s275 + $0x28] sm:$0xf]
        %v287 = vld [vmem:[%s275 + $0x2c] sm:$0xf]
        %v288 = vld [vmem:[%s275 + $0x30] sm:$0xf]
        %v289 = vld [vmem:[%s275 + $0x34] sm:$0xf]
        %v290 = vld [vmem:[%s275 + $0x38] sm:$0xf]
        %v291 = vld [vmem:[%s275 + $0x3c] sm:$0xf]
        %v292 = vld [vmem:[%s275 + $0x40] sm:$0xf]
        %v293 = vld [vmem:[%s275 + $0x44] sm:$0xf]
        %v294 = vld [vmem:[%s275 + $0x48] sm:$0xf]
        %v295 = vld [vmem:[%s275 + $0x4c] sm:$0xf]
        %v296 = vld [vmem:[%s275 + $0x50] sm:$0xf]
        %v297 = vld [vmem:[%s275 + $0x54] sm:$0xf]
        %v298 = vld [vmem:[%s275 + $0x58] sm:$0xf]
        %v299 = vld [vmem:[%s275 + $0x5c] sm:$0xf]
        %v300 = vld [vmem:[%s275 + $0x60] sm:$0xf]
        %v301 = vld [vmem:[%s275 + $0x64] sm:$0xf]
        %v302 = vld [vmem:[%s275 + $0x68] sm:$0xf]
        %v303 = vld [vmem:[%s275 + $0x6c] sm:$0xf]
        %v304 = vld [vmem:[%s275 + $0x70] sm:$0xf]
        %v305 = vld [vmem:[%s275 + $0x74] sm:$0xf]
        %v306 = vld [vmem:[%s275 + $0x78] sm:$0xf]
        %v307 = vld [vmem:[%s275 + $0x7c] sm:$0xf]
        %v308 = vld [vmem:[%s275 + $0x80] sm:$0xf]
        %v309 = vld [vmem:[%s275 + $0x84] sm:$0xf]
        %v310 = vld [vmem:[%s275 + $0x88] sm:$0xf]
        %v311 = vld [vmem:[%s275 + $0x8c] sm:$0xf]
        %v312 = vld [vmem:[%s275 + $0x90] sm:$0xf]
        %v313 = vld [vmem:[%s275 + $0x94] sm:$0xf]
        %v314 = vld [vmem:[%s275 + $0x98] sm:$0xf]
        %v315 = vld [vmem:[%s275 + $0x9c] sm:$0xf]
        %v316 = vld [vmem:[%s275 + $0xa0] sm:$0xf]
        %v317 = vld [vmem:[%s275 + $0xa4] sm:$0xf]
        %v318 = vld [vmem:[%s275 + $0xa8] sm:$0xf]
        %v319 = vld [vmem:[%s275 + $0xac] sm:$0xf]
        %v320 = vld [vmem:[%s275 + $0xb0] sm:$0xf]
        %v321 = vld [vmem:[%s275 + $0xb4] sm:$0xf]
        %v322 = vld [vmem:[%s275 + $0xb8] sm:$0xf]
        %v323 = vld [vmem:[%s275 + $0xbc] sm:$0xf]
        %v324 = vld [vmem:[%s275 + $0xc0] sm:$0xf]
        %v325 = vld [vmem:[%s275 + $0xc4] sm:$0xf]
        %v326 = vld [vmem:[%s275 + $0xc8] sm:$0xf]
        %v327 = vld [vmem:[%s275 + $0xcc] sm:$0xf]
        %v328 = vld [vmem:[%s275 + $0xd0] sm:$0xf]
        %v329 = vld [vmem:[%s275 + $0xd4] sm:$0xf]
        %v330 = vld [vmem:[%s275 + $0xd8] sm:$0xf]
        %v331 = vld [vmem:[%s275 + $0xdc] sm:$0xf]
        %v332 = vld [vmem:[%s275 + $0xe0] sm:$0xf]
        %v333 = vld [vmem:[%s275 + $0xe4] sm:$0xf]
        %v334 = vld [vmem:[%s275 + $0xe8] sm:$0xf]
        %v335 = vld [vmem:[%s275 + $0xec] sm:$0xf]
        %v336 = vld [vmem:[%s275 + $0xf0] sm:$0xf]
        %v337 = vld [vmem:[%s275 + $0xf4] sm:$0xf]
        %v338 = vld [vmem:[%s275 + $0xf8] sm:$0xf]
        %v339 = vld [vmem:[%s275 + $0xfc] sm:$0xf]
        %v348 = vunpack.c.l.b16 %v203
        %v349 = vunpack.c.h.b16 %v203
        %v350 = vunpack.c.l.b16 %v204
        %v351 = vunpack.c.h.b16 %v204
        %v352 = vunpack.c.l.b16 %v205
        %v353 = vunpack.c.h.b16 %v205
        %v354 = vunpack.c.l.b16 %v206
        %v355 = vunpack.c.h.b16 %v206
        %v356 = vunpack.c.l.b16 %v207
        %v357 = vunpack.c.h.b16 %v207
        %v358 = vunpack.c.l.b16 %v208
        %v359 = vunpack.c.h.b16 %v208
        %v360 = vunpack.c.l.b16 %v273
        %v361 = vunpack.c.h.b16 %v273
        %v362 = vunpack.c.l.b16 %v274
        %v363 = vunpack.c.h.b16 %v274
        %v364 = vpack.c.b16 %v352, %v348
        %v365 = vpack.c.b16 %v353, %v349
        %v366 = vpack.c.b16 %v354, %v350
        %v367 = vpack.c.b16 %v355, %v351
        %v368 = vpack.c.b16 %v360, %v356
        %v369 = vpack.c.b16 %v361, %v357
        %v370 = vpack.c.b16 %v362, %v358
        %v371 = vpack.c.b16 %v363, %v359
        %vm372 = vsmask.f32 7424
        %v374 = vshrl.u32 %v364, 16
        %v376 = vshll.u32 %v364, 16
        %v378 = vrot.slane %v376, 1
        %v379 = vor.u32 %v374, %v378
        %v381 = vshll.u32 %v368, 16
        %v383 = vrot.slane %v381, 1
        %v384 = vsel %vm372, %v379, %v383
        %v386 = vshrl.u32 %v365, 16
        %v388 = vshll.u32 %v365, 16
        %v390 = vrot.slane %v388, 1
        %v391 = vor.u32 %v386, %v390
        %v393 = vshll.u32 %v369, 16
        %v395 = vrot.slane %v393, 1
        %v396 = vsel %vm372, %v391, %v395
        %v398 = vshrl.u32 %v366, 16
        %v400 = vshll.u32 %v366, 16
        %v402 = vrot.slane %v400, 1
        %v403 = vor.u32 %v398, %v402
        %v405 = vshll.u32 %v370, 16
        %v407 = vrot.slane %v405, 1
        %v408 = vsel %vm372, %v403, %v407
        %v410 = vshrl.u32 %v367, 16
        %v412 = vshll.u32 %v367, 16
        %v414 = vrot.slane %v412, 1
        %v415 = vor.u32 %v410, %v414
        %v417 = vshll.u32 %v371, 16
        %v419 = vrot.slane %v417, 1
        %v420 = vsel %vm372, %v415, %v419
        %v421 = vshrl.u32 %v368, 16
        %v423 = vor.u32 %v421, %v383
        %v424 = vshrl.u32 %v369, 16
        %v426 = vor.u32 %v424, %v395
        %v427 = vshrl.u32 %v370, 16
        %v429 = vor.u32 %v427, %v407
        %v430 = vshrl.u32 %v371, 16
        %v432 = vor.u32 %v430, %v419
        %v505 = vunpack.c.l.b16 %v276
        %v506 = vunpack.c.l.b16 %v277
        %v507 = vunpack.c.l.b16 %v278
        %v508 = vunpack.c.l.b16 %v279
        %v509 = vunpack.c.l.b16 %v280
        %v510 = vunpack.c.l.b16 %v281
        %v511 = vunpack.c.l.b16 %v282
        %v512 = vunpack.c.l.b16 %v283
        %v513 = vunpack.c.l.b16 %v284
        %v514 = vunpack.c.l.b16 %v285
        %v515 = vunpack.c.l.b16 %v286
        %v516 = vunpack.c.l.b16 %v287
        %v517 = vunpack.c.l.b16 %v288
        %v518 = vunpack.c.l.b16 %v289
        %v519 = vunpack.c.l.b16 %v290
        %v520 = vunpack.c.l.b16 %v291
        %v521 = vunpack.c.l.b16 %v292
        %v522 = vunpack.c.l.b16 %v293
        %v523 = vunpack.c.l.b16 %v294
        %v524 = vunpack.c.l.b16 %v295
        %v525 = vunpack.c.l.b16 %v296
        %v526 = vunpack.c.l.b16 %v297
        %v527 = vunpack.c.l.b16 %v298
        %v528 = vunpack.c.l.b16 %v299
        %v529 = vunpack.c.l.b16 %v300
        %v530 = vunpack.c.l.b16 %v301
        %v531 = vunpack.c.l.b16 %v302
        %v532 = vunpack.c.l.b16 %v303
        %v533 = vunpack.c.l.b16 %v304
        %v534 = vunpack.c.l.b16 %v305
        %v535 = vunpack.c.l.b16 %v306
        %v536 = vunpack.c.l.b16 %v307
        %v537 = vunpack.c.l.b16 %v308
        %v538 = vunpack.c.l.b16 %v309
        %v539 = vunpack.c.l.b16 %v310
        %v540 = vunpack.c.l.b16 %v311
        %v541 = vunpack.c.l.b16 %v312
        %v542 = vunpack.c.l.b16 %v313
        %v543 = vunpack.c.l.b16 %v314
        %v544 = vunpack.c.l.b16 %v315
        %v545 = vunpack.c.l.b16 %v316
        %v546 = vunpack.c.l.b16 %v317
        %v547 = vunpack.c.l.b16 %v318
        %v548 = vunpack.c.l.b16 %v319
        %v549 = vunpack.c.l.b16 %v320
        %v550 = vunpack.c.l.b16 %v321
        %v551 = vunpack.c.l.b16 %v322
        %v552 = vunpack.c.l.b16 %v323
        %v553 = vunpack.c.l.b16 %v324
        %v554 = vunpack.c.l.b16 %v325
        %v555 = vunpack.c.l.b16 %v326
        %v556 = vunpack.c.l.b16 %v327
        %v557 = vunpack.c.l.b16 %v328
        %v558 = vunpack.c.l.b16 %v329
        %v559 = vunpack.c.l.b16 %v330
        %v560 = vunpack.c.l.b16 %v331
        %v561 = vunpack.c.l.b16 %v332
        %v562 = vunpack.c.l.b16 %v333
        %v563 = vunpack.c.l.b16 %v334
        %v564 = vunpack.c.l.b16 %v335
        %v565 = vunpack.c.l.b16 %v336
        %v566 = vunpack.c.l.b16 %v337
        %v567 = vunpack.c.l.b16 %v338
        %v568 = vunpack.c.l.b16 %v339
        %v569 = vpack.c.b16 %v506, %v505
        %v570 = vpack.c.b16 %v508, %v507
        %v571 = vpack.c.b16 %v510, %v509
        %v572 = vpack.c.b16 %v512, %v511
        %v573 = vpack.c.b16 %v514, %v513
        %v574 = vpack.c.b16 %v516, %v515
        %v575 = vpack.c.b16 %v518, %v517
        %v576 = vpack.c.b16 %v520, %v519
        %v577 = vpack.c.b16 %v522, %v521
        %v578 = vpack.c.b16 %v524, %v523
        %v579 = vpack.c.b16 %v526, %v525
        %v580 = vpack.c.b16 %v528, %v527
        %v581 = vpack.c.b16 %v530, %v529
        %v582 = vpack.c.b16 %v532, %v531
        %v583 = vpack.c.b16 %v534, %v533
        %v584 = vpack.c.b16 %v536, %v535
        %v585 = vpack.c.b16 %v538, %v537
        %v586 = vpack.c.b16 %v540, %v539
        %v587 = vpack.c.b16 %v542, %v541
        %v588 = vpack.c.b16 %v544, %v543
        %v589 = vpack.c.b16 %v546, %v545
        %v590 = vpack.c.b16 %v548, %v547
        %v591 = vpack.c.b16 %v550, %v549
        %v592 = vpack.c.b16 %v552, %v551
        %v593 = vpack.c.b16 %v554, %v553
        %v594 = vpack.c.b16 %v556, %v555
        %v595 = vpack.c.b16 %v558, %v557
        %v596 = vpack.c.b16 %v560, %v559
        %v597 = vpack.c.b16 %v562, %v561
        %v598 = vpack.c.b16 %v564, %v563
        %v599 = vpack.c.b16 %v566, %v565
        %v600 = vpack.c.b16 %v568, %v567
        %633 = vmatpush.bf16.msra.mxu0 %v576
        %634 = vmatpush.bf16.msra.mxu0 %v575
        %635 = vmatpush.bf16.msra.mxu0 %v574
        %636 = vmatpush.bf16.msra.mxu0 %v573
        %637 = vmatpush.bf16.msra.mxu0 %v572
        %638 = vmatpush.bf16.msra.mxu0 %v571
        %639 = vmatpush.bf16.msra.mxu0 %v570
        %640 = vmatpush.bf16.msra.mxu0 %v569
        %641 = vmatmul.bf16.gmra.mxu0 %v384
        %v642 = vpop.f32.mrf.mxu0
        %v643 = vadd.f32 0.0, %v642
        %v644 = vpop.f32.mrf.mxu0
        %v645 = vadd.f32 0.0, %v644
        %646 = vmatmul.bf16.gmra.mxu0 %v423
        %v647 = vpop.f32.mrf.mxu0
        %v648 = vadd.f32 0.0, %v647
        %v649 = vpop.f32.mrf.mxu0
        %650 = vdwg.mxu0
        %651 = vmatpush.bf16.msra.mxu0 %v584
        %652 = vmatpush.bf16.msra.mxu0 %v583
        %653 = vmatpush.bf16.msra.mxu0 %v582
        %654 = vmatpush.bf16.msra.mxu0 %v581
        %655 = vmatpush.bf16.msra.mxu0 %v580
        %656 = vmatpush.bf16.msra.mxu0 %v579
        %657 = vmatpush.bf16.msra.mxu0 %v578
        %658 = vmatpush.bf16.msra.mxu0 %v577
        %659 = vmatmul.bf16.gmra.mxu0 %v396
        %v660 = vpop.f32.mrf.mxu0
        %v661 = vadd.f32 %v643, %v660
        %v662 = vpop.f32.mrf.mxu0
        %v663 = vadd.f32 %v645, %v662
        %664 = vmatmul.bf16.gmra.mxu0 %v426
        %v665 = vpop.f32.mrf.mxu0
        %v666 = vadd.f32 %v648, %v665
        %v667 = vpop.f32.mrf.mxu0
        %668 = vdwg.mxu0
        %669 = vmatpush.bf16.msra.mxu0 %v592
        %670 = vmatpush.bf16.msra.mxu0 %v591
        %671 = vmatpush.bf16.msra.mxu0 %v590
        %672 = vmatpush.bf16.msra.mxu0 %v589
        %673 = vmatpush.bf16.msra.mxu0 %v588
        %674 = vmatpush.bf16.msra.mxu0 %v587
        %675 = vmatpush.bf16.msra.mxu0 %v586
        %676 = vmatpush.bf16.msra.mxu0 %v585
        %677 = vmatmul.bf16.gmra.mxu0 %v408
        %v678 = vpop.f32.mrf.mxu0
        %v679 = vadd.f32 %v661, %v678
        %v680 = vpop.f32.mrf.mxu0
        %v681 = vadd.f32 %v663, %v680
        %682 = vmatmul.bf16.gmra.mxu0 %v429
        %v683 = vpop.f32.mrf.mxu0
        %v684 = vadd.f32 %v666, %v683
        %v685 = vpop.f32.mrf.mxu0
        %686 = vdwg.mxu0
        %687 = vmatpush.bf16.msra.mxu0 %v600
        %688 = vmatpush.bf16.msra.mxu0 %v599
        %689 = vmatpush.bf16.msra.mxu0 %v598
        %690 = vmatpush.bf16.msra.mxu0 %v597
        %691 = vmatpush.bf16.msra.mxu0 %v596
        %692 = vmatpush.bf16.msra.mxu0 %v595
        %693 = vmatpush.bf16.msra.mxu0 %v594
        %694 = vmatpush.bf16.msra.mxu0 %v593
        %695 = vmatmul.bf16.gmra.mxu0 %v420
        %v696 = vpop.f32.mrf.mxu0
        %v697 = vadd.f32 %v679, %v696
        %v698 = vpop.f32.mrf.mxu0
        %v699 = vadd.f32 %v681, %v698
        %700 = vmatmul.bf16.gmra.mxu0 %v432
        %v701 = vpop.f32.mrf.mxu0
        %v702 = vadd.f32 %v684, %v701
        %v703 = vpop.f32.mrf.mxu0
        %704 = vdwg.mxu0
        %v705 = vpack.c.b16 %v356, %v356
        %v706 = vpack.c.b16 %v357, %v357
        %v707 = vpack.c.b16 %v358, %v358
        %v708 = vpack.c.b16 %v359, %v359
        %v781 = vunpack.c.l.b16 %v209
        %v782 = vunpack.c.l.b16 %v210
        %v783 = vunpack.c.l.b16 %v211
        %v784 = vunpack.c.l.b16 %v212
        %v785 = vunpack.c.l.b16 %v213
        %v786 = vunpack.c.l.b16 %v214
        %v787 = vunpack.c.l.b16 %v215
        %v788 = vunpack.c.l.b16 %v216
        %v789 = vunpack.c.l.b16 %v217
        %v790 = vunpack.c.l.b16 %v218
        %v791 = vunpack.c.l.b16 %v219
        %v792 = vunpack.c.l.b16 %v220
        %v793 = vunpack.c.l.b16 %v221
        %v794 = vunpack.c.l.b16 %v222
        %v795 = vunpack.c.l.b16 %v223
        %v796 = vunpack.c.l.b16 %v224
        %v797 = vunpack.c.l.b16 %v225
        %v798 = vunpack.c.l.b16 %v226
        %v799 = vunpack.c.l.b16 %v227
        %v800 = vunpack.c.l.b16 %v228
        %v801 = vunpack.c.l.b16 %v229
        %v802 = vunpack.c.l.b16 %v230
        %v803 = vunpack.c.l.b16 %v231
        %v804 = vunpack.c.l.b16 %v232
        %v805 = vunpack.c.l.b16 %v233
        %v806 = vunpack.c.l.b16 %v234
        %v807 = vunpack.c.l.b16 %v235
        %v808 = vunpack.c.l.b16 %v236
        %v809 = vunpack.c.l.b16 %v237
        %v810 = vunpack.c.l.b16 %v238
        %v811 = vunpack.c.l.b16 %v239
        %v812 = vunpack.c.l.b16 %v240
        %v813 = vunpack.c.l.b16 %v241
        %v814 = vunpack.c.l.b16 %v242
        %v815 = vunpack.c.l.b16 %v243
        %v816 = vunpack.c.l.b16 %v244
        %v817 = vunpack.c.l.b16 %v245
        %v818 = vunpack.c.l.b16 %v246
        %v819 = vunpack.c.l.b16 %v247
        %v820 = vunpack.c.l.b16 %v248
        %v821 = vunpack.c.l.b16 %v249
        %v822 = vunpack.c.l.b16 %v250
        %v823 = vunpack.c.l.b16 %v251
        %v824 = vunpack.c.l.b16 %v252
        %v825 = vunpack.c.l.b16 %v253
        %v826 = vunpack.c.l.b16 %v254
        %v827 = vunpack.c.l.b16 %v255
        %v828 = vunpack.c.l.b16 %v256
        %v829 = vunpack.c.l.b16 %v257
        %v830 = vunpack.c.l.b16 %v258
        %v831 = vunpack.c.l.b16 %v259
        %v832 = vunpack.c.l.b16 %v260
        %v833 = vunpack.c.l.b16 %v261
        %v834 = vunpack.c.l.b16 %v262
        %v835 = vunpack.c.l.b16 %v263
        %v836 = vunpack.c.l.b16 %v264
        %v837 = vunpack.c.l.b16 %v265
        %v838 = vunpack.c.l.b16 %v266
        %v839 = vunpack.c.l.b16 %v267
        %v840 = vunpack.c.l.b16 %v268
        %v841 = vunpack.c.l.b16 %v269
        %v842 = vunpack.c.l.b16 %v270
        %v843 = vunpack.c.l.b16 %v271
        %v844 = vunpack.c.l.b16 %v272
        %v845 = vpack.c.b16 %v782, %v781
        %v846 = vpack.c.b16 %v784, %v783
        %v847 = vpack.c.b16 %v786, %v785
        %v848 = vpack.c.b16 %v788, %v787
        %v849 = vpack.c.b16 %v790, %v789
        %v850 = vpack.c.b16 %v792, %v791
        %v851 = vpack.c.b16 %v794, %v793
        %v852 = vpack.c.b16 %v796, %v795
        %v853 = vpack.c.b16 %v798, %v797
        %v854 = vpack.c.b16 %v800, %v799
        %v855 = vpack.c.b16 %v802, %v801
        %v856 = vpack.c.b16 %v804, %v803
        %v857 = vpack.c.b16 %v806, %v805
        %v858 = vpack.c.b16 %v808, %v807
        %v859 = vpack.c.b16 %v810, %v809
        %v860 = vpack.c.b16 %v812, %v811
        %v861 = vpack.c.b16 %v814, %v813
        %v862 = vpack.c.b16 %v816, %v815
        %v863 = vpack.c.b16 %v818, %v817
        %v864 = vpack.c.b16 %v820, %v819
        %v865 = vpack.c.b16 %v822, %v821
        %v866 = vpack.c.b16 %v824, %v823
        %v867 = vpack.c.b16 %v826, %v825
        %v868 = vpack.c.b16 %v828, %v827
        %v869 = vpack.c.b16 %v830, %v829
        %v870 = vpack.c.b16 %v832, %v831
        %v871 = vpack.c.b16 %v834, %v833
        %v872 = vpack.c.b16 %v836, %v835
        %v873 = vpack.c.b16 %v838, %v837
        %v874 = vpack.c.b16 %v840, %v839
        %v875 = vpack.c.b16 %v842, %v841
        %v876 = vpack.c.b16 %v844, %v843
        %909 = vmatpush.bf16.msra.mxu0 %v852
        %910 = vmatpush.bf16.msra.mxu0 %v851
        %911 = vmatpush.bf16.msra.mxu0 %v850
        %912 = vmatpush.bf16.msra.mxu0 %v849
        %913 = vmatpush.bf16.msra.mxu0 %v848
        %914 = vmatpush.bf16.msra.mxu0 %v847
        %915 = vmatpush.bf16.msra.mxu0 %v846
        %916 = vmatpush.bf16.msra.mxu0 %v845
        %917 = vmatmul.bf16.gmra.mxu0 %v364
        %v918 = vpop.f32.mrf.mxu0
        %v919 = vadd.f32 %v697, %v918
        %v920 = vpop.f32.mrf.mxu0
        %v921 = vadd.f32 %v699, %v920
        %922 = vmatmul.bf16.gmra.mxu0 %v705
        %v923 = vpop.f32.mrf.mxu0
        %v924 = vadd.f32 %v702, %v923
        %v925 = vpop.f32.mrf.mxu0
        %926 = vdwg.mxu0
        %927 = vmatpush.bf16.msra.mxu0 %v860
        %928 = vmatpush.bf16.msra.mxu0 %v859
        %929 = vmatpush.bf16.msra.mxu0 %v858
        %930 = vmatpush.bf16.msra.mxu0 %v857
        %931 = vmatpush.bf16.msra.mxu0 %v856
        %932 = vmatpush.bf16.msra.mxu0 %v855
        %933 = vmatpush.bf16.msra.mxu0 %v854
        %934 = vmatpush.bf16.msra.mxu0 %v853
        %935 = vmatmul.bf16.gmra.mxu0 %v365
        %v936 = vpop.f32.mrf.mxu0
        %v937 = vadd.f32 %v919, %v936
        %v938 = vpop.f32.mrf.mxu0
        %v939 = vadd.f32 %v921, %v938
        %940 = vmatmul.bf16.gmra.mxu0 %v706
        %v941 = vpop.f32.mrf.mxu0
        %v942 = vadd.f32 %v924, %v941
        %v943 = vpop.f32.mrf.mxu0
        %944 = vdwg.mxu0
        %945 = vmatpush.bf16.msra.mxu0 %v868
        %946 = vmatpush.bf16.msra.mxu0 %v867
        %947 = vmatpush.bf16.msra.mxu0 %v866
        %948 = vmatpush.bf16.msra.mxu0 %v865
        %949 = vmatpush.bf16.msra.mxu0 %v864
        %950 = vmatpush.bf16.msra.mxu0 %v863
        %951 = vmatpush.bf16.msra.mxu0 %v862
        %952 = vmatpush.bf16.msra.mxu0 %v861
        %953 = vmatmul.bf16.gmra.mxu0 %v366
        %v954 = vpop.f32.mrf.mxu0
        %v955 = vadd.f32 %v937, %v954
        %v956 = vpop.f32.mrf.mxu0
        %v957 = vadd.f32 %v939, %v956
        %958 = vmatmul.bf16.gmra.mxu0 %v707
        %v959 = vpop.f32.mrf.mxu0
        %v960 = vadd.f32 %v942, %v959
        %v961 = vpop.f32.mrf.mxu0
        %962 = vdwg.mxu0
        %963 = vmatpush.bf16.msra.mxu0 %v876
        %964 = vmatpush.bf16.msra.mxu0 %v875
        %965 = vmatpush.bf16.msra.mxu0 %v874
        %966 = vmatpush.bf16.msra.mxu0 %v873
        %967 = vmatpush.bf16.msra.mxu0 %v872
        %968 = vmatpush.bf16.msra.mxu0 %v871
        %969 = vmatpush.bf16.msra.mxu0 %v870
        %970 = vmatpush.bf16.msra.mxu0 %v869
        %971 = vmatmul.bf16.gmra.mxu0 %v367
        %v972 = vpop.f32.mrf.mxu0
        %v973 = vadd.f32 %v955, %v972
        %v974 = vpop.f32.mrf.mxu0
        %v975 = vadd.f32 %v957, %v974
        %976 = vmatmul.bf16.gmra.mxu0 %v708
        %v977 = vpop.f32.mrf.mxu0
        %v978 = vadd.f32 %v960, %v977
        %v979 = vpop.f32.mrf.mxu0
        %980 = vdwg.mxu0
        %v981 = vld [vmem:[%s197] sm:$0xee]
        %v982 = vld [vmem:[%s197 + $0x8] sm:$0xee]
        %s983 = scalar_lea.vmem [#allocation2], 512
        %v984 = vld [vmem:[%s983] sm:$0xf]
        %v985 = vld [vmem:[%s983 + $0x4] sm:$0xf]
        %v986 = vld [vmem:[%s983 + $0x8] sm:$0xf]
        %v987 = vld [vmem:[%s983 + $0xc] sm:$0xf]
        %v988 = vld [vmem:[%s983 + $0x10] sm:$0xf]
        %v989 = vld [vmem:[%s983 + $0x14] sm:$0xf]
        %v990 = vld [vmem:[%s983 + $0x18] sm:$0xf]
        %v991 = vld [vmem:[%s983 + $0x1c] sm:$0xf]
        %v992 = vld [vmem:[%s983 + $0x20] sm:$0xf]
        %v993 = vld [vmem:[%s983 + $0x24] sm:$0xf]
        %v994 = vld [vmem:[%s983 + $0x28] sm:$0xf]
        %v995 = vld [vmem:[%s983 + $0x2c] sm:$0xf]
        %v996 = vld [vmem:[%s983 + $0x30] sm:$0xf]
        %v997 = vld [vmem:[%s983 + $0x34] sm:$0xf]
        %v998 = vld [vmem:[%s983 + $0x38] sm:$0xf]
        %v999 = vld [vmem:[%s983 + $0x3c] sm:$0xf]
        %v1000 = vld [vmem:[%s983 + $0x40] sm:$0xf]
        %v1001 = vld [vmem:[%s983 + $0x44] sm:$0xf]
        %v1002 = vld [vmem:[%s983 + $0x48] sm:$0xf]
        %v1003 = vld [vmem:[%s983 + $0x4c] sm:$0xf]
        %v1004 = vld [vmem:[%s983 + $0x50] sm:$0xf]
        %v1005 = vld [vmem:[%s983 + $0x54] sm:$0xf]
        %v1006 = vld [vmem:[%s983 + $0x58] sm:$0xf]
        %v1007 = vld [vmem:[%s983 + $0x5c] sm:$0xf]
        %v1008 = vld [vmem:[%s983 + $0x60] sm:$0xf]
        %v1009 = vld [vmem:[%s983 + $0x64] sm:$0xf]
        %v1010 = vld [vmem:[%s983 + $0x68] sm:$0xf]
        %v1011 = vld [vmem:[%s983 + $0x6c] sm:$0xf]
        %v1012 = vld [vmem:[%s983 + $0x70] sm:$0xf]
        %v1013 = vld [vmem:[%s983 + $0x74] sm:$0xf]
        %v1014 = vld [vmem:[%s983 + $0x78] sm:$0xf]
        %v1015 = vld [vmem:[%s983 + $0x7c] sm:$0xf]
        %v1016 = vld [vmem:[%s983 + $0x80] sm:$0xf]
        %v1017 = vld [vmem:[%s983 + $0x84] sm:$0xf]
        %v1018 = vld [vmem:[%s983 + $0x88] sm:$0xf]
        %v1019 = vld [vmem:[%s983 + $0x8c] sm:$0xf]
        %v1020 = vld [vmem:[%s983 + $0x90] sm:$0xf]
        %v1021 = vld [vmem:[%s983 + $0x94] sm:$0xf]
        %v1022 = vld [vmem:[%s983 + $0x98] sm:$0xf]
        %v1023 = vld [vmem:[%s983 + $0x9c] sm:$0xf]
        %v1024 = vld [vmem:[%s983 + $0xa0] sm:$0xf]
        %v1025 = vld [vmem:[%s983 + $0xa4] sm:$0xf]
        %v1026 = vld [vmem:[%s983 + $0xa8] sm:$0xf]
        %v1027 = vld [vmem:[%s983 + $0xac] sm:$0xf]
        %v1028 = vld [vmem:[%s983 + $0xb0] sm:$0xf]
        %v1029 = vld [vmem:[%s983 + $0xb4] sm:$0xf]
        %v1030 = vld [vmem:[%s983 + $0xb8] sm:$0xf]
        %v1031 = vld [vmem:[%s983 + $0xbc] sm:$0xf]
        %v1032 = vld [vmem:[%s983 + $0xc0] sm:$0xf]
        %v1033 = vld [vmem:[%s983 + $0xc4] sm:$0xf]
        %v1034 = vld [vmem:[%s983 + $0xc8] sm:$0xf]
        %v1035 = vld [vmem:[%s983 + $0xcc] sm:$0xf]
        %v1036 = vld [vmem:[%s983 + $0xd0] sm:$0xf]
        %v1037 = vld [vmem:[%s983 + $0xd4] sm:$0xf]
        %v1038 = vld [vmem:[%s983 + $0xd8] sm:$0xf]
        %v1039 = vld [vmem:[%s983 + $0xdc] sm:$0xf]
        %v1040 = vld [vmem:[%s983 + $0xe0] sm:$0xf]
        %v1041 = vld [vmem:[%s983 + $0xe4] sm:$0xf]
        %v1042 = vld [vmem:[%s983 + $0xe8] sm:$0xf]
        %v1043 = vld [vmem:[%s983 + $0xec] sm:$0xf]
        %v1044 = vld [vmem:[%s983 + $0xf0] sm:$0xf]
        %v1045 = vld [vmem:[%s983 + $0xf4] sm:$0xf]
        %v1046 = vld [vmem:[%s983 + $0xf8] sm:$0xf]
        %v1047 = vld [vmem:[%s983 + $0xfc] sm:$0xf]
        %v1050 = vunpack.c.l.b16 %v981
        %v1051 = vunpack.c.h.b16 %v981
        %v1052 = vunpack.c.l.b16 %v982
        %v1053 = vunpack.c.h.b16 %v982
        %v1054 = vpack.c.b16 %v352, %v1050
        %v1055 = vpack.c.b16 %v353, %v1051
        %v1056 = vpack.c.b16 %v354, %v1052
        %v1057 = vpack.c.b16 %v355, %v1053
        %vm1058 = vcmask 1046528
        %v1059 = vrot.slane %v1054, 1
        %v1060 = vrot.slane %v368, 1
        %v1061 = vsel %vm1058, %v1059, %v1060
        %v1062 = vrot.slane %v1055, 1
        %v1063 = vrot.slane %v369, 1
        %v1064 = vsel %vm1058, %v1062, %v1063
        %v1065 = vrot.slane %v1056, 1
        %v1066 = vrot.slane %v370, 1
        %v1067 = vsel %vm1058, %v1065, %v1066
        %v1068 = vrot.slane %v1057, 1
        %v1069 = vrot.slane %v371, 1
        %v1070 = vsel %vm1058, %v1068, %v1069
        %v1143 = vunpack.c.l.b16 %v984
        %v1144 = vunpack.c.l.b16 %v985
        %v1145 = vunpack.c.l.b16 %v986
        %v1146 = vunpack.c.l.b16 %v987
        %v1147 = vunpack.c.l.b16 %v988
        %v1148 = vunpack.c.l.b16 %v989
        %v1149 = vunpack.c.l.b16 %v990
        %v1150 = vunpack.c.l.b16 %v991
        %v1151 = vunpack.c.l.b16 %v992
        %v1152 = vunpack.c.l.b16 %v993
        %v1153 = vunpack.c.l.b16 %v994
        %v1154 = vunpack.c.l.b16 %v995
        %v1155 = vunpack.c.l.b16 %v996
        %v1156 = vunpack.c.l.b16 %v997
        %v1157 = vunpack.c.l.b16 %v998
        %v1158 = vunpack.c.l.b16 %v999
        %v1159 = vunpack.c.l.b16 %v1000
        %v1160 = vunpack.c.l.b16 %v1001
        %v1161 = vunpack.c.l.b16 %v1002
        %v1162 = vunpack.c.l.b16 %v1003
        %v1163 = vunpack.c.l.b16 %v1004
        %v1164 = vunpack.c.l.b16 %v1005
        %v1165 = vunpack.c.l.b16 %v1006
        %v1166 = vunpack.c.l.b16 %v1007
        %v1167 = vunpack.c.l.b16 %v1008
        %v1168 = vunpack.c.l.b16 %v1009
        %v1169 = vunpack.c.l.b16 %v1010
        %v1170 = vunpack.c.l.b16 %v1011
        %v1171 = vunpack.c.l.b16 %v1012
        %v1172 = vunpack.c.l.b16 %v1013
        %v1173 = vunpack.c.l.b16 %v1014
        %v1174 = vunpack.c.l.b16 %v1015
        %v1175 = vunpack.c.l.b16 %v1016
        %v1176 = vunpack.c.l.b16 %v1017
        %v1177 = vunpack.c.l.b16 %v1018
        %v1178 = vunpack.c.l.b16 %v1019
        %v1179 = vunpack.c.l.b16 %v1020
        %v1180 = vunpack.c.l.b16 %v1021
        %v1181 = vunpack.c.l.b16 %v1022
        %v1182 = vunpack.c.l.b16 %v1023
        %v1183 = vunpack.c.l.b16 %v1024
        %v1184 = vunpack.c.l.b16 %v1025
        %v1185 = vunpack.c.l.b16 %v1026
        %v1186 = vunpack.c.l.b16 %v1027
        %v1187 = vunpack.c.l.b16 %v1028
        %v1188 = vunpack.c.l.b16 %v1029
        %v1189 = vunpack.c.l.b16 %v1030
        %v1190 = vunpack.c.l.b16 %v1031
        %v1191 = vunpack.c.l.b16 %v1032
        %v1192 = vunpack.c.l.b16 %v1033
        %v1193 = vunpack.c.l.b16 %v1034
        %v1194 = vunpack.c.l.b16 %v1035
        %v1195 = vunpack.c.l.b16 %v1036
        %v1196 = vunpack.c.l.b16 %v1037
        %v1197 = vunpack.c.l.b16 %v1038
        %v1198 = vunpack.c.l.b16 %v1039
        %v1199 = vunpack.c.l.b16 %v1040
        %v1200 = vunpack.c.l.b16 %v1041
        %v1201 = vunpack.c.l.b16 %v1042
        %v1202 = vunpack.c.l.b16 %v1043
        %v1203 = vunpack.c.l.b16 %v1044
        %v1204 = vunpack.c.l.b16 %v1045
        %v1205 = vunpack.c.l.b16 %v1046
        %v1206 = vunpack.c.l.b16 %v1047
        %v1207 = vpack.c.b16 %v1144, %v1143
        %v1208 = vpack.c.b16 %v1146, %v1145
        %v1209 = vpack.c.b16 %v1148, %v1147
        %v1210 = vpack.c.b16 %v1150, %v1149
        %v1211 = vpack.c.b16 %v1152, %v1151
        %v1212 = vpack.c.b16 %v1154, %v1153
        %v1213 = vpack.c.b16 %v1156, %v1155
        %v1214 = vpack.c.b16 %v1158, %v1157
        %v1215 = vpack.c.b16 %v1160, %v1159
        %v1216 = vpack.c.b16 %v1162, %v1161
        %v1217 = vpack.c.b16 %v1164, %v1163
        %v1218 = vpack.c.b16 %v1166, %v1165
        %v1219 = vpack.c.b16 %v1168, %v1167
        %v1220 = vpack.c.b16 %v1170, %v1169
        %v1221 = vpack.c.b16 %v1172, %v1171
        %v1222 = vpack.c.b16 %v1174, %v1173
        %v1223 = vpack.c.b16 %v1176, %v1175
        %v1224 = vpack.c.b16 %v1178, %v1177
        %v1225 = vpack.c.b16 %v1180, %v1179
        %v1226 = vpack.c.b16 %v1182, %v1181
        %v1227 = vpack.c.b16 %v1184, %v1183
        %v1228 = vpack.c.b16 %v1186, %v1185
        %v1229 = vpack.c.b16 %v1188, %v1187
        %v1230 = vpack.c.b16 %v1190, %v1189
        %v1231 = vpack.c.b16 %v1192, %v1191
        %v1232 = vpack.c.b16 %v1194, %v1193
        %v1233 = vpack.c.b16 %v1196, %v1195
        %v1234 = vpack.c.b16 %v1198, %v1197
        %v1235 = vpack.c.b16 %v1200, %v1199
        %v1236 = vpack.c.b16 %v1202, %v1201
        %v1237 = vpack.c.b16 %v1204, %v1203
        %v1238 = vpack.c.b16 %v1206, %v1205
        %1271 = vmatpush.bf16.msra.mxu0 %v1214
        %1272 = vmatpush.bf16.msra.mxu0 %v1213
        %1273 = vmatpush.bf16.msra.mxu0 %v1212
        %1274 = vmatpush.bf16.msra.mxu0 %v1211
        %1275 = vmatpush.bf16.msra.mxu0 %v1210
        %1276 = vmatpush.bf16.msra.mxu0 %v1209
        %1277 = vmatpush.bf16.msra.mxu0 %v1208
        %1278 = vmatpush.bf16.msra.mxu0 %v1207
        %1279 = vmatmul.bf16.gmra.mxu0 %v1061
        %v1280 = vpop.f32.mrf.mxu0
        %v1281 = vadd.f32 0.0, %v1280
        %v1282 = vpop.f32.mrf.mxu0
        %v1283 = vadd.f32 0.0, %v1282
        %1284 = vmatmul.bf16.gmra.mxu0 %v1060
        %v1285 = vpop.f32.mrf.mxu0
        %v1286 = vadd.f32 0.0, %v1285
        %v1287 = vpop.f32.mrf.mxu0
        %1288 = vdwg.mxu0
        %1289 = vmatpush.bf16.msra.mxu0 %v1222
        %1290 = vmatpush.bf16.msra.mxu0 %v1221
        %1291 = vmatpush.bf16.msra.mxu0 %v1220
        %1292 = vmatpush.bf16.msra.mxu0 %v1219
        %1293 = vmatpush.bf16.msra.mxu0 %v1218
        %1294 = vmatpush.bf16.msra.mxu0 %v1217
        %1295 = vmatpush.bf16.msra.mxu0 %v1216
        %1296 = vmatpush.bf16.msra.mxu0 %v1215
        %1297 = vmatmul.bf16.gmra.mxu0 %v1064
        %v1298 = vpop.f32.mrf.mxu0
        %v1299 = vadd.f32 %v1281, %v1298
        %v1300 = vpop.f32.mrf.mxu0
        %v1301 = vadd.f32 %v1283, %v1300
        %1302 = vmatmul.bf16.gmra.mxu0 %v1063
        %v1303 = vpop.f32.mrf.mxu0
        %v1304 = vadd.f32 %v1286, %v1303
        %v1305 = vpop.f32.mrf.mxu0
        %1306 = vdwg.mxu0
        %1307 = vmatpush.bf16.msra.mxu0 %v1230
        %1308 = vmatpush.bf16.msra.mxu0 %v1229
        %1309 = vmatpush.bf16.msra.mxu0 %v1228
        %1310 = vmatpush.bf16.msra.mxu0 %v1227
        %1311 = vmatpush.bf16.msra.mxu0 %v1226
        %1312 = vmatpush.bf16.msra.mxu0 %v1225
        %1313 = vmatpush.bf16.msra.mxu0 %v1224
        %1314 = vmatpush.bf16.msra.mxu0 %v1223
        %1315 = vmatmul.bf16.gmra.mxu0 %v1067
        %v1316 = vpop.f32.mrf.mxu0
        %v1317 = vadd.f32 %v1299, %v1316
        %v1318 = vpop.f32.mrf.mxu0
        %v1319 = vadd.f32 %v1301, %v1318
        %1320 = vmatmul.bf16.gmra.mxu0 %v1066
        %v1321 = vpop.f32.mrf.mxu0
        %v1322 = vadd.f32 %v1304, %v1321
        %v1323 = vpop.f32.mrf.mxu0
        %1324 = vdwg.mxu0
        %1325 = vmatpush.bf16.msra.mxu0 %v1238
        %1326 = vmatpush.bf16.msra.mxu0 %v1237
        %1327 = vmatpush.bf16.msra.mxu0 %v1236
        %1328 = vmatpush.bf16.msra.mxu0 %v1235
        %1329 = vmatpush.bf16.msra.mxu0 %v1234
        %1330 = vmatpush.bf16.msra.mxu0 %v1233
        %1331 = vmatpush.bf16.msra.mxu0 %v1232
        %1332 = vmatpush.bf16.msra.mxu0 %v1231
        %1333 = vmatmul.bf16.gmra.mxu0 %v1070
        %v1334 = vpop.f32.mrf.mxu0
        %v1335 = vadd.f32 %v1317, %v1334
        %v1336 = vpop.f32.mrf.mxu0
        %v1337 = vadd.f32 %v1319, %v1336
        %1338 = vmatmul.bf16.gmra.mxu0 %v1069
        %v1339 = vpop.f32.mrf.mxu0
        %v1340 = vadd.f32 %v1322, %v1339
        %v1341 = vpop.f32.mrf.mxu0
        %1342 = vdwg.mxu0
        %v1343 = vadd.f32 %v973, %v1335
        %v1344 = vadd.f32 %v975, %v1337
        %v1345 = vadd.f32 %v978, %v1340
        %v1346 = vld [vmem:[%s197] sm:$0x88]
        %v1347 = vld [vmem:[%s197 + $0x8] sm:$0x88]
        %v1348 = vld [vmem:[%s197 + $0x30] sm:$0x77]
        %v1349 = vld [vmem:[%s197 + $0x38] sm:$0x77]
        %s1350 = scalar_lea.vmem [#allocation2], 768
        %v1351 = vld [vmem:[%s1350] sm:$0xf]
        %v1352 = vld [vmem:[%s1350 + $0x4] sm:$0xf]
        %v1353 = vld [vmem:[%s1350 + $0x8] sm:$0xf]
        %v1354 = vld [vmem:[%s1350 + $0xc] sm:$0xf]
        %v1355 = vld [vmem:[%s1350 + $0x10] sm:$0xf]
        %v1356 = vld [vmem:[%s1350 + $0x14] sm:$0xf]
        %v1357 = vld [vmem:[%s1350 + $0x18] sm:$0xf]
        %v1358 = vld [vmem:[%s1350 + $0x1c] sm:$0xf]
        %v1359 = vld [vmem:[%s1350 + $0x20] sm:$0xf]
        %v1360 = vld [vmem:[%s1350 + $0x24] sm:$0xf]
        %v1361 = vld [vmem:[%s1350 + $0x28] sm:$0xf]
        %v1362 = vld [vmem:[%s1350 + $0x2c] sm:$0xf]
        %v1363 = vld [vmem:[%s1350 + $0x30] sm:$0xf]
        %v1364 = vld [vmem:[%s1350 + $0x34] sm:$0xf]
        %v1365 = vld [vmem:[%s1350 + $0x38] sm:$0xf]
        %v1366 = vld [vmem:[%s1350 + $0x3c] sm:$0xf]
        %v1367 = vld [vmem:[%s1350 + $0x40] sm:$0xf]
        %v1368 = vld [vmem:[%s1350 + $0x44] sm:$0xf]
        %v1369 = vld [vmem:[%s1350 + $0x48] sm:$0xf]
        %v1370 = vld [vmem:[%s1350 + $0x4c] sm:$0xf]
        %v1371 = vld [vmem:[%s1350 + $0x50] sm:$0xf]
        %v1372 = vld [vmem:[%s1350 + $0x54] sm:$0xf]
        %v1373 = vld [vmem:[%s1350 + $0x58] sm:$0xf]
        %v1374 = vld [vmem:[%s1350 + $0x5c] sm:$0xf]
        %v1375 = vld [vmem:[%s1350 + $0x60] sm:$0xf]
        %v1376 = vld [vmem:[%s1350 + $0x64] sm:$0xf]
        %v1377 = vld [vmem:[%s1350 + $0x68] sm:$0xf]
        %v1378 = vld [vmem:[%s1350 + $0x6c] sm:$0xf]
        %v1379 = vld [vmem:[%s1350 + $0x70] sm:$0xf]
        %v1380 = vld [vmem:[%s1350 + $0x74] sm:$0xf]
        %v1381 = vld [vmem:[%s1350 + $0x78] sm:$0xf]
        %v1382 = vld [vmem:[%s1350 + $0x7c] sm:$0xf]
        %v1383 = vld [vmem:[%s1350 + $0x80] sm:$0xf]
        %v1384 = vld [vmem:[%s1350 + $0x84] sm:$0xf]
        %v1385 = vld [vmem:[%s1350 + $0x88] sm:$0xf]
        %v1386 = vld [vmem:[%s1350 + $0x8c] sm:$0xf]
        %v1387 = vld [vmem:[%s1350 + $0x90] sm:$0xf]
        %v1388 = vld [vmem:[%s1350 + $0x94] sm:$0xf]
        %v1389 = vld [vmem:[%s1350 + $0x98] sm:$0xf]
        %v1390 = vld [vmem:[%s1350 + $0x9c] sm:$0xf]
        %v1391 = vld [vmem:[%s1350 + $0xa0] sm:$0xf]
        %v1392 = vld [vmem:[%s1350 + $0xa4] sm:$0xf]
        %v1393 = vld [vmem:[%s1350 + $0xa8] sm:$0xf]
        %v1394 = vld [vmem:[%s1350 + $0xac] sm:$0xf]
        %v1395 = vld [vmem:[%s1350 + $0xb0] sm:$0xf]
        %v1396 = vld [vmem:[%s1350 + $0xb4] sm:$0xf]
        %v1397 = vld [vmem:[%s1350 + $0xb8] sm:$0xf]
        %v1398 = vld [vmem:[%s1350 + $0xbc] sm:$0xf]
        %v1399 = vld [vmem:[%s1350 + $0xc0] sm:$0xf]
        %v1400 = vld [vmem:[%s1350 + $0xc4] sm:$0xf]
        %v1401 = vld [vmem:[%s1350 + $0xc8] sm:$0xf]
        %v1402 = vld [vmem:[%s1350 + $0xcc] sm:$0xf]
        %v1403 = vld [vmem:[%s1350 + $0xd0] sm:$0xf]
        %v1404 = vld [vmem:[%s1350 + $0xd4] sm:$0xf]
        %v1405 = vld [vmem:[%s1350 + $0xd8] sm:$0xf]
        %v1406 = vld [vmem:[%s1350 + $0xdc] sm:$0xf]
        %v1407 = vld [vmem:[%s1350 + $0xe0] sm:$0xf]
        %v1408 = vld [vmem:[%s1350 + $0xe4] sm:$0xf]
        %v1409 = vld [vmem:[%s1350 + $0xe8] sm:$0xf]
        %v1410 = vld [vmem:[%s1350 + $0xec] sm:$0xf]
        %v1411 = vld [vmem:[%s1350 + $0xf0] sm:$0xf]
        %v1412 = vld [vmem:[%s1350 + $0xf4] sm:$0xf]
        %v1413 = vld [vmem:[%s1350 + $0xf8] sm:$0xf]
        %v1414 = vld [vmem:[%s1350 + $0xfc] sm:$0xf]
        %v1419 = vunpack.c.l.b16 %v1346
        %v1420 = vunpack.c.h.b16 %v1346
        %v1421 = vunpack.c.l.b16 %v1347
        %v1422 = vunpack.c.h.b16 %v1347
        %v1423 = vunpack.c.l.b16 %v1348
        %v1424 = vunpack.c.h.b16 %v1348
        %v1425 = vunpack.c.l.b16 %v1349
        %v1426 = vunpack.c.h.b16 %v1349
        %v1427 = vpack.c.b16 %v352, %v1419
        %v1428 = vpack.c.b16 %v353, %v1420
        %v1429 = vpack.c.b16 %v354, %v1421
        %v1430 = vpack.c.b16 %v355, %v1422
        %v1431 = vpack.c.b16 %v1423, %v356
        %v1432 = vpack.c.b16 %v1424, %v357
        %v1433 = vpack.c.b16 %v1425, %v358
        %v1434 = vpack.c.b16 %v1426, %v359
        %vm1435 = vcmask 1044480
        %v1436 = vrot.slane %v1427, 3
        %v1437 = vrot.slane %v1431, 3
        %v1438 = vsel %vm1435, %v1436, %v1437
        %v1439 = vrot.slane %v1428, 3
        %v1440 = vrot.slane %v1432, 3
        %v1441 = vsel %vm1435, %v1439, %v1440
        %v1442 = vrot.slane %v1429, 3
        %v1443 = vrot.slane %v1433, 3
        %v1444 = vsel %vm1435, %v1442, %v1443
        %v1445 = vrot.slane %v1430, 3
        %v1446 = vrot.slane %v1434, 3
        %v1447 = vsel %vm1435, %v1445, %v1446
        %v1520 = vunpack.c.l.b16 %v1351
        %v1521 = vunpack.c.l.b16 %v1352
        %v1522 = vunpack.c.l.b16 %v1353
        %v1523 = vunpack.c.l.b16 %v1354
        %v1524 = vunpack.c.l.b16 %v1355
        %v1525 = vunpack.c.l.b16 %v1356
        %v1526 = vunpack.c.l.b16 %v1357
        %v1527 = vunpack.c.l.b16 %v1358
        %v1528 = vunpack.c.l.b16 %v1359
        %v1529 = vunpack.c.l.b16 %v1360
        %v1530 = vunpack.c.l.b16 %v1361
        %v1531 = vunpack.c.l.b16 %v1362
        %v1532 = vunpack.c.l.b16 %v1363
        %v1533 = vunpack.c.l.b16 %v1364
        %v1534 = vunpack.c.l.b16 %v1365
        %v1535 = vunpack.c.l.b16 %v1366
        %v1536 = vunpack.c.l.b16 %v1367
        %v1537 = vunpack.c.l.b16 %v1368
        %v1538 = vunpack.c.l.b16 %v1369
        %v1539 = vunpack.c.l.b16 %v1370
        %v1540 = vunpack.c.l.b16 %v1371
        %v1541 = vunpack.c.l.b16 %v1372
        %v1542 = vunpack.c.l.b16 %v1373
        %v1543 = vunpack.c.l.b16 %v1374
        %v1544 = vunpack.c.l.b16 %v1375
        %v1545 = vunpack.c.l.b16 %v1376
        %v1546 = vunpack.c.l.b16 %v1377
        %v1547 = vunpack.c.l.b16 %v1378
        %v1548 = vunpack.c.l.b16 %v1379
        %v1549 = vunpack.c.l.b16 %v1380
        %v1550 = vunpack.c.l.b16 %v1381
        %v1551 = vunpack.c.l.b16 %v1382
        %v1552 = vunpack.c.l.b16 %v1383
        %v1553 = vunpack.c.l.b16 %v1384
        %v1554 = vunpack.c.l.b16 %v1385
        %v1555 = vunpack.c.l.b16 %v1386
        %v1556 = vunpack.c.l.b16 %v1387
        %v1557 = vunpack.c.l.b16 %v1388
        %v1558 = vunpack.c.l.b16 %v1389
        %v1559 = vunpack.c.l.b16 %v1390
        %v1560 = vunpack.c.l.b16 %v1391
        %v1561 = vunpack.c.l.b16 %v1392
        %v1562 = vunpack.c.l.b16 %v1393
        %v1563 = vunpack.c.l.b16 %v1394
        %v1564 = vunpack.c.l.b16 %v1395
        %v1565 = vunpack.c.l.b16 %v1396
        %v1566 = vunpack.c.l.b16 %v1397
        %v1567 = vunpack.c.l.b16 %v1398
        %v1568 = vunpack.c.l.b16 %v1399
        %v1569 = vunpack.c.l.b16 %v1400
        %v1570 = vunpack.c.l.b16 %v1401
        %v1571 = vunpack.c.l.b16 %v1402
        %v1572 = vunpack.c.l.b16 %v1403
        %v1573 = vunpack.c.l.b16 %v1404
        %v1574 = vunpack.c.l.b16 %v1405
        %v1575 = vunpack.c.l.b16 %v1406
        %v1576 = vunpack.c.l.b16 %v1407
        %v1577 = vunpack.c.l.b16 %v1408
        %v1578 = vunpack.c.l.b16 %v1409
        %v1579 = vunpack.c.l.b16 %v1410
        %v1580 = vunpack.c.l.b16 %v1411
        %v1581 = vunpack.c.l.b16 %v1412
        %v1582 = vunpack.c.l.b16 %v1413
        %v1583 = vunpack.c.l.b16 %v1414
        %v1584 = vpack.c.b16 %v1521, %v1520
        %v1585 = vpack.c.b16 %v1523, %v1522
        %v1586 = vpack.c.b16 %v1525, %v1524
        %v1587 = vpack.c.b16 %v1527, %v1526
        %v1588 = vpack.c.b16 %v1529, %v1528
        %v1589 = vpack.c.b16 %v1531, %v1530
        %v1590 = vpack.c.b16 %v1533, %v1532
        %v1591 = vpack.c.b16 %v1535, %v1534
        %v1592 = vpack.c.b16 %v1537, %v1536
        %v1593 = vpack.c.b16 %v1539, %v1538
        %v1594 = vpack.c.b16 %v1541, %v1540
        %v1595 = vpack.c.b16 %v1543, %v1542
        %v1596 = vpack.c.b16 %v1545, %v1544
        %v1597 = vpack.c.b16 %v1547, %v1546
        %v1598 = vpack.c.b16 %v1549, %v1548
        %v1599 = vpack.c.b16 %v1551, %v1550
        %v1600 = vpack.c.b16 %v1553, %v1552
        %v1601 = vpack.c.b16 %v1555, %v1554
        %v1602 = vpack.c.b16 %v1557, %v1556
        %v1603 = vpack.c.b16 %v1559, %v1558
        %v1604 = vpack.c.b16 %v1561, %v1560
        %v1605 = vpack.c.b16 %v1563, %v1562
        %v1606 = vpack.c.b16 %v1565, %v1564
        %v1607 = vpack.c.b16 %v1567, %v1566
        %v1608 = vpack.c.b16 %v1569, %v1568
        %v1609 = vpack.c.b16 %v1571, %v1570
        %v1610 = vpack.c.b16 %v1573, %v1572
        %v1611 = vpack.c.b16 %v1575, %v1574
        %v1612 = vpack.c.b16 %v1577, %v1576
        %v1613 = vpack.c.b16 %v1579, %v1578
        %v1614 = vpack.c.b16 %v1581, %v1580
        %v1615 = vpack.c.b16 %v1583, %v1582
        %1648 = vmatpush.bf16.msra.mxu0 %v1591
        %1649 = vmatpush.bf16.msra.mxu0 %v1590
        %1650 = vmatpush.bf16.msra.mxu0 %v1589
        %1651 = vmatpush.bf16.msra.mxu0 %v1588
        %1652 = vmatpush.bf16.msra.mxu0 %v1587
        %1653 = vmatpush.bf16.msra.mxu0 %v1586
        %1654 = vmatpush.bf16.msra.mxu0 %v1585
        %1655 = vmatpush.bf16.msra.mxu0 %v1584
        %1656 = vmatmul.bf16.gmra.mxu0 %v1438
        %v1657 = vpop.f32.mrf.mxu0
        %v1658 = vadd.f32 0.0, %v1657
        %v1659 = vpop.f32.mrf.mxu0
        %v1660 = vadd.f32 0.0, %v1659
        %1661 = vmatmul.bf16.gmra.mxu0 %v1437
        %v1662 = vpop.f32.mrf.mxu0
        %v1663 = vadd.f32 0.0, %v1662
        %v1664 = vpop.f32.mrf.mxu0
        %1665 = vdwg.mxu0
        %1666 = vmatpush.bf16.msra.mxu0 %v1599
        %1667 = vmatpush.bf16.msra.mxu0 %v1598
        %1668 = vmatpush.bf16.msra.mxu0 %v1597
        %1669 = vmatpush.bf16.msra.mxu0 %v1596
        %1670 = vmatpush.bf16.msra.mxu0 %v1595
        %1671 = vmatpush.bf16.msra.mxu0 %v1594
        %1672 = vmatpush.bf16.msra.mxu0 %v1593
        %1673 = vmatpush.bf16.msra.mxu0 %v1592
        %1674 = vmatmul.bf16.gmra.mxu0 %v1441
        %v1675 = vpop.f32.mrf.mxu0
        %v1676 = vadd.f32 %v1658, %v1675
        %v1677 = vpop.f32.mrf.mxu0
        %v1678 = vadd.f32 %v1660, %v1677
        %1679 = vmatmul.bf16.gmra.mxu0 %v1440
        %v1680 = vpop.f32.mrf.mxu0
        %v1681 = vadd.f32 %v1663, %v1680
        %v1682 = vpop.f32.mrf.mxu0
        %1683 = vdwg.mxu0
        %1684 = vmatpush.bf16.msra.mxu0 %v1607
        %1685 = vmatpush.bf16.msra.mxu0 %v1606
        %1686 = vmatpush.bf16.msra.mxu0 %v1605
        %1687 = vmatpush.bf16.msra.mxu0 %v1604
        %1688 = vmatpush.bf16.msra.mxu0 %v1603
        %1689 = vmatpush.bf16.msra.mxu0 %v1602
        %1690 = vmatpush.bf16.msra.mxu0 %v1601
        %1691 = vmatpush.bf16.msra.mxu0 %v1600
        %1692 = vmatmul.bf16.gmra.mxu0 %v1444
        %v1693 = vpop.f32.mrf.mxu0
        %v1694 = vadd.f32 %v1676, %v1693
        %v1695 = vpop.f32.mrf.mxu0
        %v1696 = vadd.f32 %v1678, %v1695
        %1697 = vmatmul.bf16.gmra.mxu0 %v1443
        %v1698 = vpop.f32.mrf.mxu0
        %v1699 = vadd.f32 %v1681, %v1698
        %v1700 = vpop.f32.mrf.mxu0
        %1701 = vdwg.mxu0
        %1702 = vmatpush.bf16.msra.mxu0 %v1615
        %1703 = vmatpush.bf16.msra.mxu0 %v1614
        %1704 = vmatpush.bf16.msra.mxu0 %v1613
        %1705 = vmatpush.bf16.msra.mxu0 %v1612
        %1706 = vmatpush.bf16.msra.mxu0 %v1611
        %1707 = vmatpush.bf16.msra.mxu0 %v1610
        %1708 = vmatpush.bf16.msra.mxu0 %v1609
        %1709 = vmatpush.bf16.msra.mxu0 %v1608
        %1710 = vmatmul.bf16.gmra.mxu0 %v1447
        %v1711 = vpop.f32.mrf.mxu0
        %v1712 = vadd.f32 %v1694, %v1711
        %v1713 = vpop.f32.mrf.mxu0
        %v1714 = vadd.f32 %v1696, %v1713
        %1715 = vmatmul.bf16.gmra.mxu0 %v1446
        %v1716 = vpop.f32.mrf.mxu0
        %v1717 = vadd.f32 %v1699, %v1716
        %v1718 = vpop.f32.mrf.mxu0
        %1719 = vdwg.mxu0
        %v1720 = vadd.f32 %v1343, %v1712
        %v1721 = vadd.f32 %v1344, %v1714
        %v1722 = vadd.f32 %v1345, %v1717
        %v1723 = vld [vmem:[%s197 + $0x30] sm:$0xff]
        %v1724 = vld [vmem:[%s197 + $0x38] sm:$0xff]
        %s1725 = scalar_lea.vmem [#allocation2], 1024
        %v1726 = vld [vmem:[%s1725] sm:$0xf]
        %v1727 = vld [vmem:[%s1725 + $0x4] sm:$0xf]
        %v1728 = vld [vmem:[%s1725 + $0x8] sm:$0xf]
        %v1729 = vld [vmem:[%s1725 + $0xc] sm:$0xf]
        %v1730 = vld [vmem:[%s1725 + $0x10] sm:$0xf]
        %v1731 = vld [vmem:[%s1725 + $0x14] sm:$0xf]
        %v1732 = vld [vmem:[%s1725 + $0x18] sm:$0xf]
        %v1733 = vld [vmem:[%s1725 + $0x1c] sm:$0xf]
        %v1734 = vld [vmem:[%s1725 + $0x20] sm:$0xf]
        %v1735 = vld [vmem:[%s1725 + $0x24] sm:$0xf]
        %v1736 = vld [vmem:[%s1725 + $0x28] sm:$0xf]
        %v1737 = vld [vmem:[%s1725 + $0x2c] sm:$0xf]
        %v1738 = vld [vmem:[%s1725 + $0x30] sm:$0xf]
        %v1739 = vld [vmem:[%s1725 + $0x34] sm:$0xf]
        %v1740 = vld [vmem:[%s1725 + $0x38] sm:$0xf]
        %v1741 = vld [vmem:[%s1725 + $0x3c] sm:$0xf]
        %v1742 = vld [vmem:[%s1725 + $0x40] sm:$0xf]
        %v1743 = vld [vmem:[%s1725 + $0x44] sm:$0xf]
        %v1744 = vld [vmem:[%s1725 + $0x48] sm:$0xf]
        %v1745 = vld [vmem:[%s1725 + $0x4c] sm:$0xf]
        %v1746 = vld [vmem:[%s1725 + $0x50] sm:$0xf]
        %v1747 = vld [vmem:[%s1725 + $0x54] sm:$0xf]
        %v1748 = vld [vmem:[%s1725 + $0x58] sm:$0xf]
        %v1749 = vld [vmem:[%s1725 + $0x5c] sm:$0xf]
        %v1750 = vld [vmem:[%s1725 + $0x60] sm:$0xf]
        %v1751 = vld [vmem:[%s1725 + $0x64] sm:$0xf]
        %v1752 = vld [vmem:[%s1725 + $0x68] sm:$0xf]
        %v1753 = vld [vmem:[%s1725 + $0x6c] sm:$0xf]
        %v1754 = vld [vmem:[%s1725 + $0x70] sm:$0xf]
        %v1755 = vld [vmem:[%s1725 + $0x74] sm:$0xf]
        %v1756 = vld [vmem:[%s1725 + $0x78] sm:$0xf]
        %v1757 = vld [vmem:[%s1725 + $0x7c] sm:$0xf]
        %v1758 = vld [vmem:[%s1725 + $0x80] sm:$0xf]
        %v1759 = vld [vmem:[%s1725 + $0x84] sm:$0xf]
        %v1760 = vld [vmem:[%s1725 + $0x88] sm:$0xf]
        %v1761 = vld [vmem:[%s1725 + $0x8c] sm:$0xf]
        %v1762 = vld [vmem:[%s1725 + $0x90] sm:$0xf]
        %v1763 = vld [vmem:[%s1725 + $0x94] sm:$0xf]
        %v1764 = vld [vmem:[%s1725 + $0x98] sm:$0xf]
        %v1765 = vld [vmem:[%s1725 + $0x9c] sm:$0xf]
        %v1766 = vld [vmem:[%s1725 + $0xa0] sm:$0xf]
        %v1767 = vld [vmem:[%s1725 + $0xa4] sm:$0xf]
        %v1768 = vld [vmem:[%s1725 + $0xa8] sm:$0xf]
        %v1769 = vld [vmem:[%s1725 + $0xac] sm:$0xf]
        %v1770 = vld [vmem:[%s1725 + $0xb0] sm:$0xf]
        %v1771 = vld [vmem:[%s1725 + $0xb4] sm:$0xf]
        %v1772 = vld [vmem:[%s1725 + $0xb8] sm:$0xf]
        %v1773 = vld [vmem:[%s1725 + $0xbc] sm:$0xf]
        %v1774 = vld [vmem:[%s1725 + $0xc0] sm:$0xf]
        %v1775 = vld [vmem:[%s1725 + $0xc4] sm:$0xf]
        %v1776 = vld [vmem:[%s1725 + $0xc8] sm:$0xf]
        %v1777 = vld [vmem:[%s1725 + $0xcc] sm:$0xf]
        %v1778 = vld [vmem:[%s1725 + $0xd0] sm:$0xf]
        %v1779 = vld [vmem:[%s1725 + $0xd4] sm:$0xf]
        %v1780 = vld [vmem:[%s1725 + $0xd8] sm:$0xf]
        %v1781 = vld [vmem:[%s1725 + $0xdc] sm:$0xf]
        %v1782 = vld [vmem:[%s1725 + $0xe0] sm:$0xf]
        %v1783 = vld [vmem:[%s1725 + $0xe4] sm:$0xf]
        %v1784 = vld [vmem:[%s1725 + $0xe8] sm:$0xf]
        %v1785 = vld [vmem:[%s1725 + $0xec] sm:$0xf]
        %v1786 = vld [vmem:[%s1725 + $0xf0] sm:$0xf]
        %v1787 = vld [vmem:[%s1725 + $0xf4] sm:$0xf]
        %v1788 = vld [vmem:[%s1725 + $0xf8] sm:$0xf]
        %v1789 = vld [vmem:[%s1725 + $0xfc] sm:$0xf]
        %v1792 = vunpack.c.l.b16 %v1723
        %v1793 = vunpack.c.h.b16 %v1723
        %v1794 = vunpack.c.l.b16 %v1724
        %v1795 = vunpack.c.h.b16 %v1724
        %v1796 = vpack.c.b16 %v1792, %v356
        %v1797 = vpack.c.b16 %v1793, %v357
        %v1798 = vpack.c.b16 %v1794, %v358
        %v1799 = vpack.c.b16 %v1795, %v359
        %vm1800 = vsmask.f32 4352
        %v1802 = vshrl.u32 %v1427, 16
        %v1804 = vrot.slane %v1802, 3
        %v1805 = vshll.u32 %v1427, 16
        %v1807 = vrot.slane %v1805, 4
        %v1808 = vor.u32 %v1804, %v1807
        %v1810 = vshrl.u32 %v1796, 16
        %v1812 = vrot.slane %v1810, 3
        %v1813 = vshll.u32 %v1796, 16
        %v1815 = vrot.slane %v1813, 4
        %v1816 = vor.u32 %v1812, %v1815
        %v1817 = vsel %vm1800, %v1808, %v1816
        %v1819 = vshrl.u32 %v1428, 16
        %v1821 = vrot.slane %v1819, 3
        %v1822 = vshll.u32 %v1428, 16
        %v1824 = vrot.slane %v1822, 4
        %v1825 = vor.u32 %v1821, %v1824
        %v1827 = vshrl.u32 %v1797, 16
        %v1829 = vrot.slane %v1827, 3
        %v1830 = vshll.u32 %v1797, 16
        %v1832 = vrot.slane %v1830, 4
        %v1833 = vor.u32 %v1829, %v1832
        %v1834 = vsel %vm1800, %v1825, %v1833
        %v1836 = vshrl.u32 %v1429, 16
        %v1838 = vrot.slane %v1836, 3
        %v1839 = vshll.u32 %v1429, 16
        %v1841 = vrot.slane %v1839, 4
        %v1842 = vor.u32 %v1838, %v1841
        %v1844 = vshrl.u32 %v1798, 16
        %v1846 = vrot.slane %v1844, 3
        %v1847 = vshll.u32 %v1798, 16
        %v1849 = vrot.slane %v1847, 4
        %v1850 = vor.u32 %v1846, %v1849
        %v1851 = vsel %vm1800, %v1842, %v1850
        %v1853 = vshrl.u32 %v1430, 16
        %v1855 = vrot.slane %v1853, 3
        %v1856 = vshll.u32 %v1430, 16
        %v1858 = vrot.slane %v1856, 4
        %v1859 = vor.u32 %v1855, %v1858
        %v1861 = vshrl.u32 %v1799, 16
        %v1863 = vrot.slane %v1861, 3
        %v1864 = vshll.u32 %v1799, 16
        %v1866 = vrot.slane %v1864, 4
        %v1867 = vor.u32 %v1863, %v1866
        %v1868 = vsel %vm1800, %v1859, %v1867
        %v1941 = vunpack.c.l.b16 %v1726
        %v1942 = vunpack.c.l.b16 %v1727
        %v1943 = vunpack.c.l.b16 %v1728
        %v1944 = vunpack.c.l.b16 %v1729
        %v1945 = vunpack.c.l.b16 %v1730
        %v1946 = vunpack.c.l.b16 %v1731
        %v1947 = vunpack.c.l.b16 %v1732
        %v1948 = vunpack.c.l.b16 %v1733
        %v1949 = vunpack.c.l.b16 %v1734
        %v1950 = vunpack.c.l.b16 %v1735
        %v1951 = vunpack.c.l.b16 %v1736
        %v1952 = vunpack.c.l.b16 %v1737
        %v1953 = vunpack.c.l.b16 %v1738
        %v1954 = vunpack.c.l.b16 %v1739
        %v1955 = vunpack.c.l.b16 %v1740
        %v1956 = vunpack.c.l.b16 %v1741
        %v1957 = vunpack.c.l.b16 %v1742
        %v1958 = vunpack.c.l.b16 %v1743
        %v1959 = vunpack.c.l.b16 %v1744
        %v1960 = vunpack.c.l.b16 %v1745
        %v1961 = vunpack.c.l.b16 %v1746
        %v1962 = vunpack.c.l.b16 %v1747
        %v1963 = vunpack.c.l.b16 %v1748
        %v1964 = vunpack.c.l.b16 %v1749
        %v1965 = vunpack.c.l.b16 %v1750
        %v1966 = vunpack.c.l.b16 %v1751
        %v1967 = vunpack.c.l.b16 %v1752
        %v1968 = vunpack.c.l.b16 %v1753
        %v1969 = vunpack.c.l.b16 %v1754
        %v1970 = vunpack.c.l.b16 %v1755
        %v1971 = vunpack.c.l.b16 %v1756
        %v1972 = vunpack.c.l.b16 %v1757
        %v1973 = vunpack.c.l.b16 %v1758
        %v1974 = vunpack.c.l.b16 %v1759
        %v1975 = vunpack.c.l.b16 %v1760
        %v1976 = vunpack.c.l.b16 %v1761
        %v1977 = vunpack.c.l.b16 %v1762
        %v1978 = vunpack.c.l.b16 %v1763
        %v1979 = vunpack.c.l.b16 %v1764
        %v1980 = vunpack.c.l.b16 %v1765
        %v1981 = vunpack.c.l.b16 %v1766
        %v1982 = vunpack.c.l.b16 %v1767
        %v1983 = vunpack.c.l.b16 %v1768
        %v1984 = vunpack.c.l.b16 %v1769
        %v1985 = vunpack.c.l.b16 %v1770
        %v1986 = vunpack.c.l.b16 %v1771
        %v1987 = vunpack.c.l.b16 %v1772
        %v1988 = vunpack.c.l.b16 %v1773
        %v1989 = vunpack.c.l.b16 %v1774
        %v1990 = vunpack.c.l.b16 %v1775
        %v1991 = vunpack.c.l.b16 %v1776
        %v1992 = vunpack.c.l.b16 %v1777
        %v1993 = vunpack.c.l.b16 %v1778
        %v1994 = vunpack.c.l.b16 %v1779
        %v1995 = vunpack.c.l.b16 %v1780
        %v1996 = vunpack.c.l.b16 %v1781
        %v1997 = vunpack.c.l.b16 %v1782
        %v1998 = vunpack.c.l.b16 %v1783
        %v1999 = vunpack.c.l.b16 %v1784
        %v2000 = vunpack.c.l.b16 %v1785
        %v2001 = vunpack.c.l.b16 %v1786
        %v2002 = vunpack.c.l.b16 %v1787
        %v2003 = vunpack.c.l.b16 %v1788
        %v2004 = vunpack.c.l.b16 %v1789
        %v2005 = vpack.c.b16 %v1942, %v1941
        %v2006 = vpack.c.b16 %v1944, %v1943
        %v2007 = vpack.c.b16 %v1946, %v1945
        %v2008 = vpack.c.b16 %v1948, %v1947
        %v2009 = vpack.c.b16 %v1950, %v1949
        %v2010 = vpack.c.b16 %v1952, %v1951
        %v2011 = vpack.c.b16 %v1954, %v1953
        %v2012 = vpack.c.b16 %v1956, %v1955
        %v2013 = vpack.c.b16 %v1958, %v1957
        %v2014 = vpack.c.b16 %v1960, %v1959
        %v2015 = vpack.c.b16 %v1962, %v1961
        %v2016 = vpack.c.b16 %v1964, %v1963
        %v2017 = vpack.c.b16 %v1966, %v1965
        %v2018 = vpack.c.b16 %v1968, %v1967
        %v2019 = vpack.c.b16 %v1970, %v1969
        %v2020 = vpack.c.b16 %v1972, %v1971
        %v2021 = vpack.c.b16 %v1974, %v1973
        %v2022 = vpack.c.b16 %v1976, %v1975
        %v2023 = vpack.c.b16 %v1978, %v1977
        %v2024 = vpack.c.b16 %v1980, %v1979
        %v2025 = vpack.c.b16 %v1982, %v1981
        %v2026 = vpack.c.b16 %v1984, %v1983
        %v2027 = vpack.c.b16 %v1986, %v1985
        %v2028 = vpack.c.b16 %v1988, %v1987
        %v2029 = vpack.c.b16 %v1990, %v1989
        %v2030 = vpack.c.b16 %v1992, %v1991
        %v2031 = vpack.c.b16 %v1994, %v1993
        %v2032 = vpack.c.b16 %v1996, %v1995
        %v2033 = vpack.c.b16 %v1998, %v1997
        %v2034 = vpack.c.b16 %v2000, %v1999
        %v2035 = vpack.c.b16 %v2002, %v2001
        %v2036 = vpack.c.b16 %v2004, %v2003
        %2069 = vmatpush.bf16.msra.mxu0 %v2012
        %2070 = vmatpush.bf16.msra.mxu0 %v2011
        %2071 = vmatpush.bf16.msra.mxu0 %v2010
        %2072 = vmatpush.bf16.msra.mxu0 %v2009
        %2073 = vmatpush.bf16.msra.mxu0 %v2008
        %2074 = vmatpush.bf16.msra.mxu0 %v2007
        %2075 = vmatpush.bf16.msra.mxu0 %v2006
        %2076 = vmatpush.bf16.msra.mxu0 %v2005
        %2077 = vmatmul.bf16.gmra.mxu0 %v1817
        %v2078 = vpop.f32.mrf.mxu0
        %v2079 = vadd.f32 0.0, %v2078
        %v2080 = vpop.f32.mrf.mxu0
        %v2081 = vadd.f32 0.0, %v2080
        %2082 = vmatmul.bf16.gmra.mxu0 %v1816
        %v2083 = vpop.f32.mrf.mxu0
        %v2084 = vadd.f32 0.0, %v2083
        %v2085 = vpop.f32.mrf.mxu0
        %2086 = vdwg.mxu0
        %2087 = vmatpush.bf16.msra.mxu0 %v2020
        %2088 = vmatpush.bf16.msra.mxu0 %v2019
        %2089 = vmatpush.bf16.msra.mxu0 %v2018
        %2090 = vmatpush.bf16.msra.mxu0 %v2017
        %2091 = vmatpush.bf16.msra.mxu0 %v2016
        %2092 = vmatpush.bf16.msra.mxu0 %v2015
        %2093 = vmatpush.bf16.msra.mxu0 %v2014
        %2094 = vmatpush.bf16.msra.mxu0 %v2013
        %2095 = vmatmul.bf16.gmra.mxu0 %v1834
        %v2096 = vpop.f32.mrf.mxu0
        %v2097 = vadd.f32 %v2079, %v2096
        %v2098 = vpop.f32.mrf.mxu0
        %v2099 = vadd.f32 %v2081, %v2098
        %2100 = vmatmul.bf16.gmra.mxu0 %v1833
        %v2101 = vpop.f32.mrf.mxu0
        %v2102 = vadd.f32 %v2084, %v2101
        %v2103 = vpop.f32.mrf.mxu0
        %2104 = vdwg.mxu0
        %2105 = vmatpush.bf16.msra.mxu0 %v2028
        %2106 = vmatpush.bf16.msra.mxu0 %v2027
        %2107 = vmatpush.bf16.msra.mxu0 %v2026
        %2108 = vmatpush.bf16.msra.mxu0 %v2025
        %2109 = vmatpush.bf16.msra.mxu0 %v2024
        %2110 = vmatpush.bf16.msra.mxu0 %v2023
        %2111 = vmatpush.bf16.msra.mxu0 %v2022
        %2112 = vmatpush.bf16.msra.mxu0 %v2021
        %2113 = vmatmul.bf16.gmra.mxu0 %v1851
        %v2114 = vpop.f32.mrf.mxu0
        %v2115 = vadd.f32 %v2097, %v2114
        %v2116 = vpop.f32.mrf.mxu0
        %v2117 = vadd.f32 %v2099, %v2116
        %2118 = vmatmul.bf16.gmra.mxu0 %v1850
        %v2119 = vpop.f32.mrf.mxu0
        %v2120 = vadd.f32 %v2102, %v2119
        %v2121 = vpop.f32.mrf.mxu0
        %2122 = vdwg.mxu0
        %2123 = vmatpush.bf16.msra.mxu0 %v2036
        %2124 = vmatpush.bf16.msra.mxu0 %v2035
        %2125 = vmatpush.bf16.msra.mxu0 %v2034
        %2126 = vmatpush.bf16.msra.mxu0 %v2033
        %2127 = vmatpush.bf16.msra.mxu0 %v2032
        %2128 = vmatpush.bf16.msra.mxu0 %v2031
        %2129 = vmatpush.bf16.msra.mxu0 %v2030
        %2130 = vmatpush.bf16.msra.mxu0 %v2029
        %2131 = vmatmul.bf16.gmra.mxu0 %v1868
        %v2132 = vpop.f32.mrf.mxu0
        %v2133 = vadd.f32 %v2115, %v2132
        %v2134 = vpop.f32.mrf.mxu0
        %v2135 = vadd.f32 %v2117, %v2134
        %2136 = vmatmul.bf16.gmra.mxu0 %v1867
        %v2137 = vpop.f32.mrf.mxu0
        %v2138 = vadd.f32 %v2120, %v2137
        %v2139 = vpop.f32.mrf.mxu0
        %2140 = vdwg.mxu0
        %v2141 = vadd.f32 %v1720, %v2133
        %v2142 = vadd.f32 %v1721, %v2135
        %v2143 = vadd.f32 %v1722, %v2138
        %s2144 = scalar_lea.vmem [#allocation2], 1280
        %v2145 = vld [vmem:[%s2144] sm:$0xf]
        %v2146 = vld [vmem:[%s2144 + $0x4] sm:$0xf]
        %v2147 = vld [vmem:[%s2144 + $0x8] sm:$0xf]
        %v2148 = vld [vmem:[%s2144 + $0xc] sm:$0xf]
        %v2149 = vld [vmem:[%s2144 + $0x10] sm:$0xf]
        %v2150 = vld [vmem:[%s2144 + $0x14] sm:$0xf]
        %v2151 = vld [vmem:[%s2144 + $0x18] sm:$0xf]
        %v2152 = vld [vmem:[%s2144 + $0x1c] sm:$0xf]
        %v2153 = vld [vmem:[%s2144 + $0x20] sm:$0xf]
        %v2154 = vld [vmem:[%s2144 + $0x24] sm:$0xf]
        %v2155 = vld [vmem:[%s2144 + $0x28] sm:$0xf]
        %v2156 = vld [vmem:[%s2144 + $0x2c] sm:$0xf]
        %v2157 = vld [vmem:[%s2144 + $0x30] sm:$0xf]
        %v2158 = vld [vmem:[%s2144 + $0x34] sm:$0xf]
        %v2159 = vld [vmem:[%s2144 + $0x38] sm:$0xf]
        %v2160 = vld [vmem:[%s2144 + $0x3c] sm:$0xf]
        %v2161 = vld [vmem:[%s2144 + $0x40] sm:$0xf]
        %v2162 = vld [vmem:[%s2144 + $0x44] sm:$0xf]
        %v2163 = vld [vmem:[%s2144 + $0x48] sm:$0xf]
        %v2164 = vld [vmem:[%s2144 + $0x4c] sm:$0xf]
        %v2165 = vld [vmem:[%s2144 + $0x50] sm:$0xf]
        %v2166 = vld [vmem:[%s2144 + $0x54] sm:$0xf]
        %v2167 = vld [vmem:[%s2144 + $0x58] sm:$0xf]
        %v2168 = vld [vmem:[%s2144 + $0x5c] sm:$0xf]
        %v2169 = vld [vmem:[%s2144 + $0x60] sm:$0xf]
        %v2170 = vld [vmem:[%s2144 + $0x64] sm:$0xf]
        %v2171 = vld [vmem:[%s2144 + $0x68] sm:$0xf]
        %v2172 = vld [vmem:[%s2144 + $0x6c] sm:$0xf]
        %v2173 = vld [vmem:[%s2144 + $0x70] sm:$0xf]
        %v2174 = vld [vmem:[%s2144 + $0x74] sm:$0xf]
        %v2175 = vld [vmem:[%s2144 + $0x78] sm:$0xf]
        %v2176 = vld [vmem:[%s2144 + $0x7c] sm:$0xf]
        %v2177 = vld [vmem:[%s2144 + $0x80] sm:$0xf]
        %v2178 = vld [vmem:[%s2144 + $0x84] sm:$0xf]
        %v2179 = vld [vmem:[%s2144 + $0x88] sm:$0xf]
        %v2180 = vld [vmem:[%s2144 + $0x8c] sm:$0xf]
        %v2181 = vld [vmem:[%s2144 + $0x90] sm:$0xf]
        %v2182 = vld [vmem:[%s2144 + $0x94] sm:$0xf]
        %v2183 = vld [vmem:[%s2144 + $0x98] sm:$0xf]
        %v2184 = vld [vmem:[%s2144 + $0x9c] sm:$0xf]
        %v2185 = vld [vmem:[%s2144 + $0xa0] sm:$0xf]
        %v2186 = vld [vmem:[%s2144 + $0xa4] sm:$0xf]
        %v2187 = vld [vmem:[%s2144 + $0xa8] sm:$0xf]
        %v2188 = vld [vmem:[%s2144 + $0xac] sm:$0xf]
        %v2189 = vld [vmem:[%s2144 + $0xb0] sm:$0xf]
        %v2190 = vld [vmem:[%s2144 + $0xb4] sm:$0xf]
        %v2191 = vld [vmem:[%s2144 + $0xb8] sm:$0xf]
        %v2192 = vld [vmem:[%s2144 + $0xbc] sm:$0xf]
        %v2193 = vld [vmem:[%s2144 + $0xc0] sm:$0xf]
        %v2194 = vld [vmem:[%s2144 + $0xc4] sm:$0xf]
        %v2195 = vld [vmem:[%s2144 + $0xc8] sm:$0xf]
        %v2196 = vld [vmem:[%s2144 + $0xcc] sm:$0xf]
        %v2197 = vld [vmem:[%s2144 + $0xd0] sm:$0xf]
        %v2198 = vld [vmem:[%s2144 + $0xd4] sm:$0xf]
        %v2199 = vld [vmem:[%s2144 + $0xd8] sm:$0xf]
        %v2200 = vld [vmem:[%s2144 + $0xdc] sm:$0xf]
        %v2201 = vld [vmem:[%s2144 + $0xe0] sm:$0xf]
        %v2202 = vld [vmem:[%s2144 + $0xe4] sm:$0xf]
        %v2203 = vld [vmem:[%s2144 + $0xe8] sm:$0xf]
        %v2204 = vld [vmem:[%s2144 + $0xec] sm:$0xf]
        %v2205 = vld [vmem:[%s2144 + $0xf0] sm:$0xf]
        %v2206 = vld [vmem:[%s2144 + $0xf4] sm:$0xf]
        %v2207 = vld [vmem:[%s2144 + $0xf8] sm:$0xf]
        %v2208 = vld [vmem:[%s2144 + $0xfc] sm:$0xf]
        %v2209 = vpack.c.b16 %v356, %v352
        %v2210 = vpack.c.b16 %v357, %v353
        %v2211 = vpack.c.b16 %v358, %v354
        %v2212 = vpack.c.b16 %v359, %v355
        %v2213 = vpack.c.b16 %v1792, %v1792
        %v2214 = vpack.c.b16 %v1793, %v1793
        %v2215 = vpack.c.b16 %v1794, %v1794
        %v2216 = vpack.c.b16 %v1795, %v1795
        %v2289 = vunpack.c.l.b16 %v2145
        %v2290 = vunpack.c.l.b16 %v2146
        %v2291 = vunpack.c.l.b16 %v2147
        %v2292 = vunpack.c.l.b16 %v2148
        %v2293 = vunpack.c.l.b16 %v2149
        %v2294 = vunpack.c.l.b16 %v2150
        %v2295 = vunpack.c.l.b16 %v2151
        %v2296 = vunpack.c.l.b16 %v2152
        %v2297 = vunpack.c.l.b16 %v2153
        %v2298 = vunpack.c.l.b16 %v2154
        %v2299 = vunpack.c.l.b16 %v2155
        %v2300 = vunpack.c.l.b16 %v2156
        %v2301 = vunpack.c.l.b16 %v2157
        %v2302 = vunpack.c.l.b16 %v2158
        %v2303 = vunpack.c.l.b16 %v2159
        %v2304 = vunpack.c.l.b16 %v2160
        %v2305 = vunpack.c.l.b16 %v2161
        %v2306 = vunpack.c.l.b16 %v2162
        %v2307 = vunpack.c.l.b16 %v2163
        %v2308 = vunpack.c.l.b16 %v2164
        %v2309 = vunpack.c.l.b16 %v2165
        %v2310 = vunpack.c.l.b16 %v2166
        %v2311 = vunpack.c.l.b16 %v2167
        %v2312 = vunpack.c.l.b16 %v2168
        %v2313 = vunpack.c.l.b16 %v2169
        %v2314 = vunpack.c.l.b16 %v2170
        %v2315 = vunpack.c.l.b16 %v2171
        %v2316 = vunpack.c.l.b16 %v2172
        %v2317 = vunpack.c.l.b16 %v2173
        %v2318 = vunpack.c.l.b16 %v2174
        %v2319 = vunpack.c.l.b16 %v2175
        %v2320 = vunpack.c.l.b16 %v2176
        %v2321 = vunpack.c.l.b16 %v2177
        %v2322 = vunpack.c.l.b16 %v2178
        %v2323 = vunpack.c.l.b16 %v2179
        %v2324 = vunpack.c.l.b16 %v2180
        %v2325 = vunpack.c.l.b16 %v2181
        %v2326 = vunpack.c.l.b16 %v2182
        %v2327 = vunpack.c.l.b16 %v2183
        %v2328 = vunpack.c.l.b16 %v2184
        %v2329 = vunpack.c.l.b16 %v2185
        %v2330 = vunpack.c.l.b16 %v2186
        %v2331 = vunpack.c.l.b16 %v2187
        %v2332 = vunpack.c.l.b16 %v2188
        %v2333 = vunpack.c.l.b16 %v2189
        %v2334 = vunpack.c.l.b16 %v2190
        %v2335 = vunpack.c.l.b16 %v2191
        %v2336 = vunpack.c.l.b16 %v2192
        %v2337 = vunpack.c.l.b16 %v2193
        %v2338 = vunpack.c.l.b16 %v2194
        %v2339 = vunpack.c.l.b16 %v2195
        %v2340 = vunpack.c.l.b16 %v2196
        %v2341 = vunpack.c.l.b16 %v2197
        %v2342 = vunpack.c.l.b16 %v2198
        %v2343 = vunpack.c.l.b16 %v2199
        %v2344 = vunpack.c.l.b16 %v2200
        %v2345 = vunpack.c.l.b16 %v2201
        %v2346 = vunpack.c.l.b16 %v2202
        %v2347 = vunpack.c.l.b16 %v2203
        %v2348 = vunpack.c.l.b16 %v2204
        %v2349 = vunpack.c.l.b16 %v2205
        %v2350 = vunpack.c.l.b16 %v2206
        %v2351 = vunpack.c.l.b16 %v2207
        %v2352 = vunpack.c.l.b16 %v2208
        %v2353 = vpack.c.b16 %v2290, %v2289
        %v2354 = vpack.c.b16 %v2292, %v2291
        %v2355 = vpack.c.b16 %v2294, %v2293
        %v2356 = vpack.c.b16 %v2296, %v2295
        %v2357 = vpack.c.b16 %v2298, %v2297
        %v2358 = vpack.c.b16 %v2300, %v2299
        %v2359 = vpack.c.b16 %v2302, %v2301
        %v2360 = vpack.c.b16 %v2304, %v2303
        %v2361 = vpack.c.b16 %v2306, %v2305
        %v2362 = vpack.c.b16 %v2308, %v2307
        %v2363 = vpack.c.b16 %v2310, %v2309
        %v2364 = vpack.c.b16 %v2312, %v2311
        %v2365 = vpack.c.b16 %v2314, %v2313
        %v2366 = vpack.c.b16 %v2316, %v2315
        %v2367 = vpack.c.b16 %v2318, %v2317
        %v2368 = vpack.c.b16 %v2320, %v2319
        %v2369 = vpack.c.b16 %v2322, %v2321
        %v2370 = vpack.c.b16 %v2324, %v2323
        %v2371 = vpack.c.b16 %v2326, %v2325
        %v2372 = vpack.c.b16 %v2328, %v2327
        %v2373 = vpack.c.b16 %v2330, %v2329
        %v2374 = vpack.c.b16 %v2332, %v2331
        %v2375 = vpack.c.b16 %v2334, %v2333
        %v2376 = vpack.c.b16 %v2336, %v2335
        %v2377 = vpack.c.b16 %v2338, %v2337
        %v2378 = vpack.c.b16 %v2340, %v2339
        %v2379 = vpack.c.b16 %v2342, %v2341
        %v2380 = vpack.c.b16 %v2344, %v2343
        %v2381 = vpack.c.b16 %v2346, %v2345
        %v2382 = vpack.c.b16 %v2348, %v2347
        %v2383 = vpack.c.b16 %v2350, %v2349
        %v2384 = vpack.c.b16 %v2352, %v2351
        %2417 = vmatpush.bf16.msra.mxu0 %v2360
        %2418 = vmatpush.bf16.msra.mxu0 %v2359
        %2419 = vmatpush.bf16.msra.mxu0 %v2358
        %2420 = vmatpush.bf16.msra.mxu0 %v2357
        %2421 = vmatpush.bf16.msra.mxu0 %v2356
        %2422 = vmatpush.bf16.msra.mxu0 %v2355
        %2423 = vmatpush.bf16.msra.mxu0 %v2354
        %2424 = vmatpush.bf16.msra.mxu0 %v2353
        %2425 = vmatmul.bf16.gmra.mxu0 %v2209
        %v2426 = vpop.f32.mrf.mxu0
        %v2427 = vadd.f32 0.0, %v2426
        %v2428 = vpop.f32.mrf.mxu0
        %v2429 = vadd.f32 0.0, %v2428
        %2430 = vmatmul.bf16.gmra.mxu0 %v2213
        %v2431 = vpop.f32.mrf.mxu0
        %v2432 = vadd.f32 0.0, %v2431
        %v2433 = vpop.f32.mrf.mxu0
        %2434 = vdwg.mxu0
        %2435 = vmatpush.bf16.msra.mxu0 %v2368
        %2436 = vmatpush.bf16.msra.mxu0 %v2367
        %2437 = vmatpush.bf16.msra.mxu0 %v2366
        %2438 = vmatpush.bf16.msra.mxu0 %v2365
        %2439 = vmatpush.bf16.msra.mxu0 %v2364
        %2440 = vmatpush.bf16.msra.mxu0 %v2363
        %2441 = vmatpush.bf16.msra.mxu0 %v2362
        %2442 = vmatpush.bf16.msra.mxu0 %v2361
        %2443 = vmatmul.bf16.gmra.mxu0 %v2210
        %v2444 = vpop.f32.mrf.mxu0
        %v2445 = vadd.f32 %v2427, %v2444
        %v2446 = vpop.f32.mrf.mxu0
        %v2447 = vadd.f32 %v2429, %v2446
        %2448 = vmatmul.bf16.gmra.mxu0 %v2214
        %v2449 = vpop.f32.mrf.mxu0
        %v2450 = vadd.f32 %v2432, %v2449
        %v2451 = vpop.f32.mrf.mxu0
        %2452 = vdwg.mxu0
        %2453 = vmatpush.bf16.msra.mxu0 %v2376
        %2454 = vmatpush.bf16.msra.mxu0 %v2375
        %2455 = vmatpush.bf16.msra.mxu0 %v2374
        %2456 = vmatpush.bf16.msra.mxu0 %v2373
        %2457 = vmatpush.bf16.msra.mxu0 %v2372
        %2458 = vmatpush.bf16.msra.mxu0 %v2371
        %2459 = vmatpush.bf16.msra.mxu0 %v2370
        %2460 = vmatpush.bf16.msra.mxu0 %v2369
        %2461 = vmatmul.bf16.gmra.mxu0 %v2211
        %v2462 = vpop.f32.mrf.mxu0
        %v2463 = vadd.f32 %v2445, %v2462
        %v2464 = vpop.f32.mrf.mxu0
        %v2465 = vadd.f32 %v2447, %v2464
        %2466 = vmatmul.bf16.gmra.mxu0 %v2215
        %v2467 = vpop.f32.mrf.mxu0
        %v2468 = vadd.f32 %v2450, %v2467
        %v2469 = vpop.f32.mrf.mxu0
        %2470 = vdwg.mxu0
        %2471 = vmatpush.bf16.msra.mxu0 %v2384
        %2472 = vmatpush.bf16.msra.mxu0 %v2383
        %2473 = vmatpush.bf16.msra.mxu0 %v2382
        %2474 = vmatpush.bf16.msra.mxu0 %v2381
        %2475 = vmatpush.bf16.msra.mxu0 %v2380
        %2476 = vmatpush.bf16.msra.mxu0 %v2379
        %2477 = vmatpush.bf16.msra.mxu0 %v2378
        %2478 = vmatpush.bf16.msra.mxu0 %v2377
        %2479 = vmatmul.bf16.gmra.mxu0 %v2212
        %v2480 = vpop.f32.mrf.mxu0
        %v2481 = vadd.f32 %v2463, %v2480
        %v2482 = vpop.f32.mrf.mxu0
        %v2483 = vadd.f32 %v2465, %v2482
        %2484 = vmatmul.bf16.gmra.mxu0 %v2216
        %v2485 = vpop.f32.mrf.mxu0
        %v2486 = vadd.f32 %v2468, %v2485
        %v2487 = vpop.f32.mrf.mxu0
        %2488 = vdwg.mxu0
        %v2489 = vadd.f32 %v2141, %v2481
        %v2490 = vadd.f32 %v2142, %v2483
        %v2491 = vadd.f32 %v2143, %v2486
        %v2492 = vld [vmem:[%s197 + $0x10] sm:$0xcc]
        %v2493 = vld [vmem:[%s197 + $0x18] sm:$0xcc]
        %v2494 = vld [vmem:[%s197 + $0x20] sm:$0xff]
        %v2495 = vld [vmem:[%s197 + $0x28] sm:$0xff]
        %v2496 = vld [vmem:[%s197 + $0x30] sm:$0xff]
        %v2497 = vld [vmem:[%s197 + $0x38] sm:$0xff]
        %v2498 = vld [vmem:[%s197 + $0x40] sm:$0x33]
        %v2499 = vld [vmem:[%s197 + $0x48] sm:$0x33]
        %s2500 = scalar_lea.vmem [#allocation2], 1536
        %v2501 = vld [vmem:[%s2500] sm:$0xf]
        %v2502 = vld [vmem:[%s2500 + $0x4] sm:$0xf]
        %v2503 = vld [vmem:[%s2500 + $0x8] sm:$0xf]
        %v2504 = vld [vmem:[%s2500 + $0xc] sm:$0xf]
        %v2505 = vld [vmem:[%s2500 + $0x10] sm:$0xf]
        %v2506 = vld [vmem:[%s2500 + $0x14] sm:$0xf]
        %v2507 = vld [vmem:[%s2500 + $0x18] sm:$0xf]
        %v2508 = vld [vmem:[%s2500 + $0x1c] sm:$0xf]
        %v2509 = vld [vmem:[%s2500 + $0x20] sm:$0xf]
        %v2510 = vld [vmem:[%s2500 + $0x24] sm:$0xf]
        %v2511 = vld [vmem:[%s2500 + $0x28] sm:$0xf]
        %v2512 = vld [vmem:[%s2500 + $0x2c] sm:$0xf]
        %v2513 = vld [vmem:[%s2500 + $0x30] sm:$0xf]
        %v2514 = vld [vmem:[%s2500 + $0x34] sm:$0xf]
        %v2515 = vld [vmem:[%s2500 + $0x38] sm:$0xf]
        %v2516 = vld [vmem:[%s2500 + $0x3c] sm:$0xf]
        %v2517 = vld [vmem:[%s2500 + $0x40] sm:$0xf]
        %v2518 = vld [vmem:[%s2500 + $0x44] sm:$0xf]
        %v2519 = vld [vmem:[%s2500 + $0x48] sm:$0xf]
        %v2520 = vld [vmem:[%s2500 + $0x4c] sm:$0xf]
        %v2521 = vld [vmem:[%s2500 + $0x50] sm:$0xf]
        %v2522 = vld [vmem:[%s2500 + $0x54] sm:$0xf]
        %v2523 = vld [vmem:[%s2500 + $0x58] sm:$0xf]
        %v2524 = vld [vmem:[%s2500 + $0x5c] sm:$0xf]
        %v2525 = vld [vmem:[%s2500 + $0x60] sm:$0xf]
        %v2526 = vld [vmem:[%s2500 + $0x64] sm:$0xf]
        %v2527 = vld [vmem:[%s2500 + $0x68] sm:$0xf]
        %v2528 = vld [vmem:[%s2500 + $0x6c] sm:$0xf]
        %v2529 = vld [vmem:[%s2500 + $0x70] sm:$0xf]
        %v2530 = vld [vmem:[%s2500 + $0x74] sm:$0xf]
        %v2531 = vld [vmem:[%s2500 + $0x78] sm:$0xf]
        %v2532 = vld [vmem:[%s2500 + $0x7c] sm:$0xf]
        %v2533 = vld [vmem:[%s2500 + $0x80] sm:$0xf]
        %v2534 = vld [vmem:[%s2500 + $0x84] sm:$0xf]
        %v2535 = vld [vmem:[%s2500 + $0x88] sm:$0xf]
        %v2536 = vld [vmem:[%s2500 + $0x8c] sm:$0xf]
        %v2537 = vld [vmem:[%s2500 + $0x90] sm:$0xf]
        %v2538 = vld [vmem:[%s2500 + $0x94] sm:$0xf]
        %v2539 = vld [vmem:[%s2500 + $0x98] sm:$0xf]
        %v2540 = vld [vmem:[%s2500 + $0x9c] sm:$0xf]
        %v2541 = vld [vmem:[%s2500 + $0xa0] sm:$0xf]
        %v2542 = vld [vmem:[%s2500 + $0xa4] sm:$0xf]
        %v2543 = vld [vmem:[%s2500 + $0xa8] sm:$0xf]
        %v2544 = vld [vmem:[%s2500 + $0xac] sm:$0xf]
        %v2545 = vld [vmem:[%s2500 + $0xb0] sm:$0xf]
        %v2546 = vld [vmem:[%s2500 + $0xb4] sm:$0xf]
        %v2547 = vld [vmem:[%s2500 + $0xb8] sm:$0xf]
        %v2548 = vld [vmem:[%s2500 + $0xbc] sm:$0xf]
        %v2549 = vld [vmem:[%s2500 + $0xc0] sm:$0xf]
        %v2550 = vld [vmem:[%s2500 + $0xc4] sm:$0xf]
        %v2551 = vld [vmem:[%s2500 + $0xc8] sm:$0xf]
        %v2552 = vld [vmem:[%s2500 + $0xcc] sm:$0xf]
        %v2553 = vld [vmem:[%s2500 + $0xd0] sm:$0xf]
        %v2554 = vld [vmem:[%s2500 + $0xd4] sm:$0xf]
        %v2555 = vld [vmem:[%s2500 + $0xd8] sm:$0xf]
        %v2556 = vld [vmem:[%s2500 + $0xdc] sm:$0xf]
        %v2557 = vld [vmem:[%s2500 + $0xe0] sm:$0xf]
        %v2558 = vld [vmem:[%s2500 + $0xe4] sm:$0xf]
        %v2559 = vld [vmem:[%s2500 + $0xe8] sm:$0xf]
        %v2560 = vld [vmem:[%s2500 + $0xec] sm:$0xf]
        %v2561 = vld [vmem:[%s2500 + $0xf0] sm:$0xf]
        %v2562 = vld [vmem:[%s2500 + $0xf4] sm:$0xf]
        %v2563 = vld [vmem:[%s2500 + $0xf8] sm:$0xf]
        %v2564 = vld [vmem:[%s2500 + $0xfc] sm:$0xf]
        %v2573 = vunpack.c.l.b16 %v2492
        %v2574 = vunpack.c.h.b16 %v2492
        %v2575 = vunpack.c.l.b16 %v2493
        %v2576 = vunpack.c.h.b16 %v2493
        %v2577 = vunpack.c.l.b16 %v2494
        %v2578 = vunpack.c.h.b16 %v2494
        %v2579 = vunpack.c.l.b16 %v2495
        %v2580 = vunpack.c.h.b16 %v2495
        %v2581 = vunpack.c.l.b16 %v2496
        %v2582 = vunpack.c.h.b16 %v2496
        %v2583 = vunpack.c.l.b16 %v2497
        %v2584 = vunpack.c.h.b16 %v2497
        %v2585 = vunpack.c.l.b16 %v2498
        %v2586 = vunpack.c.h.b16 %v2498
        %v2587 = vunpack.c.l.b16 %v2499
        %v2588 = vunpack.c.h.b16 %v2499
        %v2589 = vpack.c.b16 %v2577, %v2573
        %v2590 = vpack.c.b16 %v2578, %v2574
        %v2591 = vpack.c.b16 %v2579, %v2575
        %v2592 = vpack.c.b16 %v2580, %v2576
        %v2593 = vpack.c.b16 %v2585, %v2581
        %v2594 = vpack.c.b16 %v2586, %v2582
        %v2595 = vpack.c.b16 %v2587, %v2583
        %v2596 = vpack.c.b16 %v2588, %v2584
        %vm2597 = vcmask 1045504
        %v2598 = vrot.slane %v2589, 2
        %v2599 = vrot.slane %v2593, 2
        %v2600 = vsel %vm2597, %v2598, %v2599
        %v2601 = vrot.slane %v2590, 2
        %v2602 = vrot.slane %v2594, 2
        %v2603 = vsel %vm2597, %v2601, %v2602
        %v2604 = vrot.slane %v2591, 2
        %v2605 = vrot.slane %v2595, 2
        %v2606 = vsel %vm2597, %v2604, %v2605
        %v2607 = vrot.slane %v2592, 2
        %v2608 = vrot.slane %v2596, 2
        %v2609 = vsel %vm2597, %v2607, %v2608
        %v2682 = vunpack.c.l.b16 %v2501
        %v2683 = vunpack.c.l.b16 %v2502
        %v2684 = vunpack.c.l.b16 %v2503
        %v2685 = vunpack.c.l.b16 %v2504
        %v2686 = vunpack.c.l.b16 %v2505
        %v2687 = vunpack.c.l.b16 %v2506
        %v2688 = vunpack.c.l.b16 %v2507
        %v2689 = vunpack.c.l.b16 %v2508
        %v2690 = vunpack.c.l.b16 %v2509
        %v2691 = vunpack.c.l.b16 %v2510
        %v2692 = vunpack.c.l.b16 %v2511
        %v2693 = vunpack.c.l.b16 %v2512
        %v2694 = vunpack.c.l.b16 %v2513
        %v2695 = vunpack.c.l.b16 %v2514
        %v2696 = vunpack.c.l.b16 %v2515
        %v2697 = vunpack.c.l.b16 %v2516
        %v2698 = vunpack.c.l.b16 %v2517
        %v2699 = vunpack.c.l.b16 %v2518
        %v2700 = vunpack.c.l.b16 %v2519
        %v2701 = vunpack.c.l.b16 %v2520
        %v2702 = vunpack.c.l.b16 %v2521
        %v2703 = vunpack.c.l.b16 %v2522
        %v2704 = vunpack.c.l.b16 %v2523
        %v2705 = vunpack.c.l.b16 %v2524
        %v2706 = vunpack.c.l.b16 %v2525
        %v2707 = vunpack.c.l.b16 %v2526
        %v2708 = vunpack.c.l.b16 %v2527
        %v2709 = vunpack.c.l.b16 %v2528
        %v2710 = vunpack.c.l.b16 %v2529
        %v2711 = vunpack.c.l.b16 %v2530
        %v2712 = vunpack.c.l.b16 %v2531
        %v2713 = vunpack.c.l.b16 %v2532
        %v2714 = vunpack.c.l.b16 %v2533
        %v2715 = vunpack.c.l.b16 %v2534
        %v2716 = vunpack.c.l.b16 %v2535
        %v2717 = vunpack.c.l.b16 %v2536
        %v2718 = vunpack.c.l.b16 %v2537
        %v2719 = vunpack.c.l.b16 %v2538
        %v2720 = vunpack.c.l.b16 %v2539
        %v2721 = vunpack.c.l.b16 %v2540
        %v2722 = vunpack.c.l.b16 %v2541
        %v2723 = vunpack.c.l.b16 %v2542
        %v2724 = vunpack.c.l.b16 %v2543
        %v2725 = vunpack.c.l.b16 %v2544
        %v2726 = vunpack.c.l.b16 %v2545
        %v2727 = vunpack.c.l.b16 %v2546
        %v2728 = vunpack.c.l.b16 %v2547
        %v2729 = vunpack.c.l.b16 %v2548
        %v2730 = vunpack.c.l.b16 %v2549
        %v2731 = vunpack.c.l.b16 %v2550
        %v2732 = vunpack.c.l.b16 %v2551
        %v2733 = vunpack.c.l.b16 %v2552
        %v2734 = vunpack.c.l.b16 %v2553
        %v2735 = vunpack.c.l.b16 %v2554
        %v2736 = vunpack.c.l.b16 %v2555
        %v2737 = vunpack.c.l.b16 %v2556
        %v2738 = vunpack.c.l.b16 %v2557
        %v2739 = vunpack.c.l.b16 %v2558
        %v2740 = vunpack.c.l.b16 %v2559
        %v2741 = vunpack.c.l.b16 %v2560
        %v2742 = vunpack.c.l.b16 %v2561
        %v2743 = vunpack.c.l.b16 %v2562
        %v2744 = vunpack.c.l.b16 %v2563
        %v2745 = vunpack.c.l.b16 %v2564
        %v2746 = vpack.c.b16 %v2683, %v2682
        %v2747 = vpack.c.b16 %v2685, %v2684
        %v2748 = vpack.c.b16 %v2687, %v2686
        %v2749 = vpack.c.b16 %v2689, %v2688
        %v2750 = vpack.c.b16 %v2691, %v2690
        %v2751 = vpack.c.b16 %v2693, %v2692
        %v2752 = vpack.c.b16 %v2695, %v2694
        %v2753 = vpack.c.b16 %v2697, %v2696
        %v2754 = vpack.c.b16 %v2699, %v2698
        %v2755 = vpack.c.b16 %v2701, %v2700
        %v2756 = vpack.c.b16 %v2703, %v2702
        %v2757 = vpack.c.b16 %v2705, %v2704
        %v2758 = vpack.c.b16 %v2707, %v2706
        %v2759 = vpack.c.b16 %v2709, %v2708
        %v2760 = vpack.c.b16 %v2711, %v2710
        %v2761 = vpack.c.b16 %v2713, %v2712
        %v2762 = vpack.c.b16 %v2715, %v2714
        %v2763 = vpack.c.b16 %v2717, %v2716
        %v2764 = vpack.c.b16 %v2719, %v2718
        %v2765 = vpack.c.b16 %v2721, %v2720
        %v2766 = vpack.c.b16 %v2723, %v2722
        %v2767 = vpack.c.b16 %v2725, %v2724
        %v2768 = vpack.c.b16 %v2727, %v2726
        %v2769 = vpack.c.b16 %v2729, %v2728
        %v2770 = vpack.c.b16 %v2731, %v2730
        %v2771 = vpack.c.b16 %v2733, %v2732
        %v2772 = vpack.c.b16 %v2735, %v2734
        %v2773 = vpack.c.b16 %v2737, %v2736
        %v2774 = vpack.c.b16 %v2739, %v2738
        %v2775 = vpack.c.b16 %v2741, %v2740
        %v2776 = vpack.c.b16 %v2743, %v2742
        %v2777 = vpack.c.b16 %v2745, %v2744
        %2810 = vmatpush.bf16.msra.mxu0 %v2753
        %2811 = vmatpush.bf16.msra.mxu0 %v2752
        %2812 = vmatpush.bf16.msra.mxu0 %v2751
        %2813 = vmatpush.bf16.msra.mxu0 %v2750
        %2814 = vmatpush.bf16.msra.mxu0 %v2749
        %2815 = vmatpush.bf16.msra.mxu0 %v2748
        %2816 = vmatpush.bf16.msra.mxu0 %v2747
        %2817 = vmatpush.bf16.msra.mxu0 %v2746
        %2818 = vmatmul.bf16.gmra.mxu0 %v2600
        %v2819 = vpop.f32.mrf.mxu0
        %v2820 = vadd.f32 0.0, %v2819
        %v2821 = vpop.f32.mrf.mxu0
        %v2822 = vadd.f32 0.0, %v2821
        %2823 = vmatmul.bf16.gmra.mxu0 %v2599
        %v2824 = vpop.f32.mrf.mxu0
        %v2825 = vadd.f32 0.0, %v2824
        %v2826 = vpop.f32.mrf.mxu0
        %2827 = vdwg.mxu0
        %2828 = vmatpush.bf16.msra.mxu0 %v2761
        %2829 = vmatpush.bf16.msra.mxu0 %v2760
        %2830 = vmatpush.bf16.msra.mxu0 %v2759
        %2831 = vmatpush.bf16.msra.mxu0 %v2758
        %2832 = vmatpush.bf16.msra.mxu0 %v2757
        %2833 = vmatpush.bf16.msra.mxu0 %v2756
        %2834 = vmatpush.bf16.msra.mxu0 %v2755
        %2835 = vmatpush.bf16.msra.mxu0 %v2754
        %2836 = vmatmul.bf16.gmra.mxu0 %v2603
        %v2837 = vpop.f32.mrf.mxu0
        %v2838 = vadd.f32 %v2820, %v2837
        %v2839 = vpop.f32.mrf.mxu0
        %v2840 = vadd.f32 %v2822, %v2839
        %2841 = vmatmul.bf16.gmra.mxu0 %v2602
        %v2842 = vpop.f32.mrf.mxu0
        %v2843 = vadd.f32 %v2825, %v2842
        %v2844 = vpop.f32.mrf.mxu0
        %2845 = vdwg.mxu0
        %2846 = vmatpush.bf16.msra.mxu0 %v2769
        %2847 = vmatpush.bf16.msra.mxu0 %v2768
        %2848 = vmatpush.bf16.msra.mxu0 %v2767
        %2849 = vmatpush.bf16.msra.mxu0 %v2766
        %2850 = vmatpush.bf16.msra.mxu0 %v2765
        %2851 = vmatpush.bf16.msra.mxu0 %v2764
        %2852 = vmatpush.bf16.msra.mxu0 %v2763
        %2853 = vmatpush.bf16.msra.mxu0 %v2762
        %2854 = vmatmul.bf16.gmra.mxu0 %v2606
        %v2855 = vpop.f32.mrf.mxu0
        %v2856 = vadd.f32 %v2838, %v2855
        %v2857 = vpop.f32.mrf.mxu0
        %v2858 = vadd.f32 %v2840, %v2857
        %2859 = vmatmul.bf16.gmra.mxu0 %v2605
        %v2860 = vpop.f32.mrf.mxu0
        %v2861 = vadd.f32 %v2843, %v2860
        %v2862 = vpop.f32.mrf.mxu0
        %2863 = vdwg.mxu0
        %2864 = vmatpush.bf16.msra.mxu0 %v2777
        %2865 = vmatpush.bf16.msra.mxu0 %v2776
        %2866 = vmatpush.bf16.msra.mxu0 %v2775
        %2867 = vmatpush.bf16.msra.mxu0 %v2774
        %2868 = vmatpush.bf16.msra.mxu0 %v2773
        %2869 = vmatpush.bf16.msra.mxu0 %v2772
        %2870 = vmatpush.bf16.msra.mxu0 %v2771
        %2871 = vmatpush.bf16.msra.mxu0 %v2770
        %2872 = vmatmul.bf16.gmra.mxu0 %v2609
        %v2873 = vpop.f32.mrf.mxu0
        %v2874 = vadd.f32 %v2856, %v2873
        %v2875 = vpop.f32.mrf.mxu0
        %v2876 = vadd.f32 %v2858, %v2875
        %2877 = vmatmul.bf16.gmra.mxu0 %v2608
        %v2878 = vpop.f32.mrf.mxu0
        %v2879 = vadd.f32 %v2861, %v2878
        %v2880 = vpop.f32.mrf.mxu0
        %2881 = vdwg.mxu0
        %v2882 = vadd.f32 %v2489, %v2874
        %v2883 = vadd.f32 %v2490, %v2876
        %v2884 = vadd.f32 %v2491, %v2879
        %v2885 = vld [vmem:[%s197 + $0x40] sm:$0x77]
        %v2886 = vld [vmem:[%s197 + $0x48] sm:$0x77]
        %s2887 = scalar_lea.vmem [#allocation2], 1792
        %v2888 = vld [vmem:[%s2887] sm:$0xf]
        %v2889 = vld [vmem:[%s2887 + $0x4] sm:$0xf]
        %v2890 = vld [vmem:[%s2887 + $0x8] sm:$0xf]
        %v2891 = vld [vmem:[%s2887 + $0xc] sm:$0xf]
        %v2892 = vld [vmem:[%s2887 + $0x10] sm:$0xf]
        %v2893 = vld [vmem:[%s2887 + $0x14] sm:$0xf]
        %v2894 = vld [vmem:[%s2887 + $0x18] sm:$0xf]
        %v2895 = vld [vmem:[%s2887 + $0x1c] sm:$0xf]
        %v2896 = vld [vmem:[%s2887 + $0x20] sm:$0xf]
        %v2897 = vld [vmem:[%s2887 + $0x24] sm:$0xf]
        %v2898 = vld [vmem:[%s2887 + $0x28] sm:$0xf]
        %v2899 = vld [vmem:[%s2887 + $0x2c] sm:$0xf]
        %v2900 = vld [vmem:[%s2887 + $0x30] sm:$0xf]
        %v2901 = vld [vmem:[%s2887 + $0x34] sm:$0xf]
        %v2902 = vld [vmem:[%s2887 + $0x38] sm:$0xf]
        %v2903 = vld [vmem:[%s2887 + $0x3c] sm:$0xf]
        %v2904 = vld [vmem:[%s2887 + $0x40] sm:$0xf]
        %v2905 = vld [vmem:[%s2887 + $0x44] sm:$0xf]
        %v2906 = vld [vmem:[%s2887 + $0x48] sm:$0xf]
        %v2907 = vld [vmem:[%s2887 + $0x4c] sm:$0xf]
        %v2908 = vld [vmem:[%s2887 + $0x50] sm:$0xf]
        %v2909 = vld [vmem:[%s2887 + $0x54] sm:$0xf]
        %v2910 = vld [vmem:[%s2887 + $0x58] sm:$0xf]
        %v2911 = vld [vmem:[%s2887 + $0x5c] sm:$0xf]
        %v2912 = vld [vmem:[%s2887 + $0x60] sm:$0xf]
        %v2913 = vld [vmem:[%s2887 + $0x64] sm:$0xf]
        %v2914 = vld [vmem:[%s2887 + $0x68] sm:$0xf]
        %v2915 = vld [vmem:[%s2887 + $0x6c] sm:$0xf]
        %v2916 = vld [vmem:[%s2887 + $0x70] sm:$0xf]
        %v2917 = vld [vmem:[%s2887 + $0x74] sm:$0xf]
        %v2918 = vld [vmem:[%s2887 + $0x78] sm:$0xf]
        %v2919 = vld [vmem:[%s2887 + $0x7c] sm:$0xf]
        %v2920 = vld [vmem:[%s2887 + $0x80] sm:$0xf]
        %v2921 = vld [vmem:[%s2887 + $0x84] sm:$0xf]
        %v2922 = vld [vmem:[%s2887 + $0x88] sm:$0xf]
        %v2923 = vld [vmem:[%s2887 + $0x8c] sm:$0xf]
        %v2924 = vld [vmem:[%s2887 + $0x90] sm:$0xf]
        %v2925 = vld [vmem:[%s2887 + $0x94] sm:$0xf]
        %v2926 = vld [vmem:[%s2887 + $0x98] sm:$0xf]
        %v2927 = vld [vmem:[%s2887 + $0x9c] sm:$0xf]
        %v2928 = vld [vmem:[%s2887 + $0xa0] sm:$0xf]
        %v2929 = vld [vmem:[%s2887 + $0xa4] sm:$0xf]
        %v2930 = vld [vmem:[%s2887 + $0xa8] sm:$0xf]
        %v2931 = vld [vmem:[%s2887 + $0xac] sm:$0xf]
        %v2932 = vld [vmem:[%s2887 + $0xb0] sm:$0xf]
        %v2933 = vld [vmem:[%s2887 + $0xb4] sm:$0xf]
        %v2934 = vld [vmem:[%s2887 + $0xb8] sm:$0xf]
        %v2935 = vld [vmem:[%s2887 + $0xbc] sm:$0xf]
        %v2936 = vld [vmem:[%s2887 + $0xc0] sm:$0xf]
        %v2937 = vld [vmem:[%s2887 + $0xc4] sm:$0xf]
        %v2938 = vld [vmem:[%s2887 + $0xc8] sm:$0xf]
        %v2939 = vld [vmem:[%s2887 + $0xcc] sm:$0xf]
        %v2940 = vld [vmem:[%s2887 + $0xd0] sm:$0xf]
        %v2941 = vld [vmem:[%s2887 + $0xd4] sm:$0xf]
        %v2942 = vld [vmem:[%s2887 + $0xd8] sm:$0xf]
        %v2943 = vld [vmem:[%s2887 + $0xdc] sm:$0xf]
        %v2944 = vld [vmem:[%s2887 + $0xe0] sm:$0xf]
        %v2945 = vld [vmem:[%s2887 + $0xe4] sm:$0xf]
        %v2946 = vld [vmem:[%s2887 + $0xe8] sm:$0xf]
        %v2947 = vld [vmem:[%s2887 + $0xec] sm:$0xf]
        %v2948 = vld [vmem:[%s2887 + $0xf0] sm:$0xf]
        %v2949 = vld [vmem:[%s2887 + $0xf4] sm:$0xf]
        %v2950 = vld [vmem:[%s2887 + $0xf8] sm:$0xf]
        %v2951 = vld [vmem:[%s2887 + $0xfc] sm:$0xf]
        %v2954 = vunpack.c.l.b16 %v2885
        %v2955 = vunpack.c.h.b16 %v2885
        %v2956 = vunpack.c.l.b16 %v2886
        %v2957 = vunpack.c.h.b16 %v2886
        %v2958 = vpack.c.b16 %v2954, %v2581
        %v2959 = vpack.c.b16 %v2955, %v2582
        %v2960 = vpack.c.b16 %v2956, %v2583
        %v2961 = vpack.c.b16 %v2957, %v2584
        %vm2962 = vsmask.f32 5376
        %v2964 = vshrl.u32 %v2589, 16
        %v2966 = vrot.slane %v2964, 2
        %v2967 = vshll.u32 %v2589, 16
        %v2969 = vrot.slane %v2967, 3
        %v2970 = vor.u32 %v2966, %v2969
        %v2972 = vshrl.u32 %v2958, 16
        %v2974 = vrot.slane %v2972, 2
        %v2975 = vshll.u32 %v2958, 16
        %v2977 = vrot.slane %v2975, 3
        %v2978 = vor.u32 %v2974, %v2977
        %v2979 = vsel %vm2962, %v2970, %v2978
        %v2981 = vshrl.u32 %v2590, 16
        %v2983 = vrot.slane %v2981, 2
        %v2984 = vshll.u32 %v2590, 16
        %v2986 = vrot.slane %v2984, 3
        %v2987 = vor.u32 %v2983, %v2986
        %v2989 = vshrl.u32 %v2959, 16
        %v2991 = vrot.slane %v2989, 2
        %v2992 = vshll.u32 %v2959, 16
        %v2994 = vrot.slane %v2992, 3
        %v2995 = vor.u32 %v2991, %v2994
        %v2996 = vsel %vm2962, %v2987, %v2995
        %v2998 = vshrl.u32 %v2591, 16
        %v3000 = vrot.slane %v2998, 2
        %v3001 = vshll.u32 %v2591, 16
        %v3003 = vrot.slane %v3001, 3
        %v3004 = vor.u32 %v3000, %v3003
        %v3006 = vshrl.u32 %v2960, 16
        %v3008 = vrot.slane %v3006, 2
        %v3009 = vshll.u32 %v2960, 16
        %v3011 = vrot.slane %v3009, 3
        %v3012 = vor.u32 %v3008, %v3011
        %v3013 = vsel %vm2962, %v3004, %v3012
        %v3015 = vshrl.u32 %v2592, 16
        %v3017 = vrot.slane %v3015, 2
        %v3018 = vshll.u32 %v2592, 16
        %v3020 = vrot.slane %v3018, 3
        %v3021 = vor.u32 %v3017, %v3020
        %v3023 = vshrl.u32 %v2961, 16
        %v3025 = vrot.slane %v3023, 2
        %v3026 = vshll.u32 %v2961, 16
        %v3028 = vrot.slane %v3026, 3
        %v3029 = vor.u32 %v3025, %v3028
        %v3030 = vsel %vm2962, %v3021, %v3029
        %v3103 = vunpack.c.l.b16 %v2888
        %v3104 = vunpack.c.l.b16 %v2889
        %v3105 = vunpack.c.l.b16 %v2890
        %v3106 = vunpack.c.l.b16 %v2891
        %v3107 = vunpack.c.l.b16 %v2892
        %v3108 = vunpack.c.l.b16 %v2893
        %v3109 = vunpack.c.l.b16 %v2894
        %v3110 = vunpack.c.l.b16 %v2895
        %v3111 = vunpack.c.l.b16 %v2896
        %v3112 = vunpack.c.l.b16 %v2897
        %v3113 = vunpack.c.l.b16 %v2898
        %v3114 = vunpack.c.l.b16 %v2899
        %v3115 = vunpack.c.l.b16 %v2900
        %v3116 = vunpack.c.l.b16 %v2901
        %v3117 = vunpack.c.l.b16 %v2902
        %v3118 = vunpack.c.l.b16 %v2903
        %v3119 = vunpack.c.l.b16 %v2904
        %v3120 = vunpack.c.l.b16 %v2905
        %v3121 = vunpack.c.l.b16 %v2906
        %v3122 = vunpack.c.l.b16 %v2907
        %v3123 = vunpack.c.l.b16 %v2908
        %v3124 = vunpack.c.l.b16 %v2909
        %v3125 = vunpack.c.l.b16 %v2910
        %v3126 = vunpack.c.l.b16 %v2911
        %v3127 = vunpack.c.l.b16 %v2912
        %v3128 = vunpack.c.l.b16 %v2913
        %v3129 = vunpack.c.l.b16 %v2914
        %v3130 = vunpack.c.l.b16 %v2915
        %v3131 = vunpack.c.l.b16 %v2916
        %v3132 = vunpack.c.l.b16 %v2917
        %v3133 = vunpack.c.l.b16 %v2918
        %v3134 = vunpack.c.l.b16 %v2919
        %v3135 = vunpack.c.l.b16 %v2920
        %v3136 = vunpack.c.l.b16 %v2921
        %v3137 = vunpack.c.l.b16 %v2922
        %v3138 = vunpack.c.l.b16 %v2923
        %v3139 = vunpack.c.l.b16 %v2924
        %v3140 = vunpack.c.l.b16 %v2925
        %v3141 = vunpack.c.l.b16 %v2926
        %v3142 = vunpack.c.l.b16 %v2927
        %v3143 = vunpack.c.l.b16 %v2928
        %v3144 = vunpack.c.l.b16 %v2929
        %v3145 = vunpack.c.l.b16 %v2930
        %v3146 = vunpack.c.l.b16 %v2931
        %v3147 = vunpack.c.l.b16 %v2932
        %v3148 = vunpack.c.l.b16 %v2933
        %v3149 = vunpack.c.l.b16 %v2934
        %v3150 = vunpack.c.l.b16 %v2935
        %v3151 = vunpack.c.l.b16 %v2936
        %v3152 = vunpack.c.l.b16 %v2937
        %v3153 = vunpack.c.l.b16 %v2938
        %v3154 = vunpack.c.l.b16 %v2939
        %v3155 = vunpack.c.l.b16 %v2940
        %v3156 = vunpack.c.l.b16 %v2941
        %v3157 = vunpack.c.l.b16 %v2942
        %v3158 = vunpack.c.l.b16 %v2943
        %v3159 = vunpack.c.l.b16 %v2944
        %v3160 = vunpack.c.l.b16 %v2945
        %v3161 = vunpack.c.l.b16 %v2946
        %v3162 = vunpack.c.l.b16 %v2947
        %v3163 = vunpack.c.l.b16 %v2948
        %v3164 = vunpack.c.l.b16 %v2949
        %v3165 = vunpack.c.l.b16 %v2950
        %v3166 = vunpack.c.l.b16 %v2951
        %v3167 = vpack.c.b16 %v3104, %v3103
        %v3168 = vpack.c.b16 %v3106, %v3105
        %v3169 = vpack.c.b16 %v3108, %v3107
        %v3170 = vpack.c.b16 %v3110, %v3109
        %v3171 = vpack.c.b16 %v3112, %v3111
        %v3172 = vpack.c.b16 %v3114, %v3113
        %v3173 = vpack.c.b16 %v3116, %v3115
        %v3174 = vpack.c.b16 %v3118, %v3117
        %v3175 = vpack.c.b16 %v3120, %v3119
        %v3176 = vpack.c.b16 %v3122, %v3121
        %v3177 = vpack.c.b16 %v3124, %v3123
        %v3178 = vpack.c.b16 %v3126, %v3125
        %v3179 = vpack.c.b16 %v3128, %v3127
        %v3180 = vpack.c.b16 %v3130, %v3129
        %v3181 = vpack.c.b16 %v3132, %v3131
        %v3182 = vpack.c.b16 %v3134, %v3133
        %v3183 = vpack.c.b16 %v3136, %v3135
        %v3184 = vpack.c.b16 %v3138, %v3137
        %v3185 = vpack.c.b16 %v3140, %v3139
        %v3186 = vpack.c.b16 %v3142, %v3141
        %v3187 = vpack.c.b16 %v3144, %v3143
        %v3188 = vpack.c.b16 %v3146, %v3145
        %v3189 = vpack.c.b16 %v3148, %v3147
        %v3190 = vpack.c.b16 %v3150, %v3149
        %v3191 = vpack.c.b16 %v3152, %v3151
        %v3192 = vpack.c.b16 %v3154, %v3153
        %v3193 = vpack.c.b16 %v3156, %v3155
        %v3194 = vpack.c.b16 %v3158, %v3157
        %v3195 = vpack.c.b16 %v3160, %v3159
        %v3196 = vpack.c.b16 %v3162, %v3161
        %v3197 = vpack.c.b16 %v3164, %v3163
        %v3198 = vpack.c.b16 %v3166, %v3165
        %3231 = vmatpush.bf16.msra.mxu0 %v3174
        %3232 = vmatpush.bf16.msra.mxu0 %v3173
        %3233 = vmatpush.bf16.msra.mxu0 %v3172
        %3234 = vmatpush.bf16.msra.mxu0 %v3171
        %3235 = vmatpush.bf16.msra.mxu0 %v3170
        %3236 = vmatpush.bf16.msra.mxu0 %v3169
        %3237 = vmatpush.bf16.msra.mxu0 %v3168
        %3238 = vmatpush.bf16.msra.mxu0 %v3167
        %3239 = vmatmul.bf16.gmra.mxu0 %v2979
        %v3240 = vpop.f32.mrf.mxu0
        %v3241 = vadd.f32 0.0, %v3240
        %v3242 = vpop.f32.mrf.mxu0
        %v3243 = vadd.f32 0.0, %v3242
        %3244 = vmatmul.bf16.gmra.mxu0 %v2978
        %v3245 = vpop.f32.mrf.mxu0
        %v3246 = vadd.f32 0.0, %v3245
        %v3247 = vpop.f32.mrf.mxu0
        %3248 = vdwg.mxu0
        %3249 = vmatpush.bf16.msra.mxu0 %v3182
        %3250 = vmatpush.bf16.msra.mxu0 %v3181
        %3251 = vmatpush.bf16.msra.mxu0 %v3180
        %3252 = vmatpush.bf16.msra.mxu0 %v3179
        %3253 = vmatpush.bf16.msra.mxu0 %v3178
        %3254 = vmatpush.bf16.msra.mxu0 %v3177
        %3255 = vmatpush.bf16.msra.mxu0 %v3176
        %3256 = vmatpush.bf16.msra.mxu0 %v3175
        %3257 = vmatmul.bf16.gmra.mxu0 %v2996
        %v3258 = vpop.f32.mrf.mxu0
        %v3259 = vadd.f32 %v3241, %v3258
        %v3260 = vpop.f32.mrf.mxu0
        %v3261 = vadd.f32 %v3243, %v3260
        %3262 = vmatmul.bf16.gmra.mxu0 %v2995
        %v3263 = vpop.f32.mrf.mxu0
        %v3264 = vadd.f32 %v3246, %v3263
        %v3265 = vpop.f32.mrf.mxu0
        %3266 = vdwg.mxu0
        %3267 = vmatpush.bf16.msra.mxu0 %v3190
        %3268 = vmatpush.bf16.msra.mxu0 %v3189
        %3269 = vmatpush.bf16.msra.mxu0 %v3188
        %3270 = vmatpush.bf16.msra.mxu0 %v3187
        %3271 = vmatpush.bf16.msra.mxu0 %v3186
        %3272 = vmatpush.bf16.msra.mxu0 %v3185
        %3273 = vmatpush.bf16.msra.mxu0 %v3184
        %3274 = vmatpush.bf16.msra.mxu0 %v3183
        %3275 = vmatmul.bf16.gmra.mxu0 %v3013
        %v3276 = vpop.f32.mrf.mxu0
        %v3277 = vadd.f32 %v3259, %v3276
        %v3278 = vpop.f32.mrf.mxu0
        %v3279 = vadd.f32 %v3261, %v3278
        %3280 = vmatmul.bf16.gmra.mxu0 %v3012
        %v3281 = vpop.f32.mrf.mxu0
        %v3282 = vadd.f32 %v3264, %v3281
        %v3283 = vpop.f32.mrf.mxu0
        %3284 = vdwg.mxu0
        %3285 = vmatpush.bf16.msra.mxu0 %v3198
        %3286 = vmatpush.bf16.msra.mxu0 %v3197
        %3287 = vmatpush.bf16.msra.mxu0 %v3196
        %3288 = vmatpush.bf16.msra.mxu0 %v3195
        %3289 = vmatpush.bf16.msra.mxu0 %v3194
        %3290 = vmatpush.bf16.msra.mxu0 %v3193
        %3291 = vmatpush.bf16.msra.mxu0 %v3192
        %3292 = vmatpush.bf16.msra.mxu0 %v3191
        %3293 = vmatmul.bf16.gmra.mxu0 %v3030
        %v3294 = vpop.f32.mrf.mxu0
        %v3295 = vadd.f32 %v3277, %v3294
        %v3296 = vpop.f32.mrf.mxu0
        %v3297 = vadd.f32 %v3279, %v3296
        %3298 = vmatmul.bf16.gmra.mxu0 %v3029
        %v3299 = vpop.f32.mrf.mxu0
        %v3300 = vadd.f32 %v3282, %v3299
        %v3301 = vpop.f32.mrf.mxu0
        %3302 = vdwg.mxu0
        %v3303 = vadd.f32 %v2882, %v3295
        %v3304 = vadd.f32 %v2883, %v3297
        %v3305 = vadd.f32 %v2884, %v3300
        %v3306 = vld [vmem:[%s197 + $0x10] sm:$0x88]
        %v3307 = vld [vmem:[%s197 + $0x18] sm:$0x88]
        %s3308 = scalar_lea.vmem [#allocation2], 2048
        %v3309 = vld [vmem:[%s3308] sm:$0xf]
        %v3310 = vld [vmem:[%s3308 + $0x4] sm:$0xf]
        %v3311 = vld [vmem:[%s3308 + $0x8] sm:$0xf]
        %v3312 = vld [vmem:[%s3308 + $0xc] sm:$0xf]
        %v3313 = vld [vmem:[%s3308 + $0x10] sm:$0xf]
        %v3314 = vld [vmem:[%s3308 + $0x14] sm:$0xf]
        %v3315 = vld [vmem:[%s3308 + $0x18] sm:$0xf]
        %v3316 = vld [vmem:[%s3308 + $0x1c] sm:$0xf]
        %v3317 = vld [vmem:[%s3308 + $0x20] sm:$0xf]
        %v3318 = vld [vmem:[%s3308 + $0x24] sm:$0xf]
        %v3319 = vld [vmem:[%s3308 + $0x28] sm:$0xf]
        %v3320 = vld [vmem:[%s3308 + $0x2c] sm:$0xf]
        %v3321 = vld [vmem:[%s3308 + $0x30] sm:$0xf]
        %v3322 = vld [vmem:[%s3308 + $0x34] sm:$0xf]
        %v3323 = vld [vmem:[%s3308 + $0x38] sm:$0xf]
        %v3324 = vld [vmem:[%s3308 + $0x3c] sm:$0xf]
        %v3325 = vld [vmem:[%s3308 + $0x40] sm:$0xf]
        %v3326 = vld [vmem:[%s3308 + $0x44] sm:$0xf]
        %v3327 = vld [vmem:[%s3308 + $0x48] sm:$0xf]
        %v3328 = vld [vmem:[%s3308 + $0x4c] sm:$0xf]
        %v3329 = vld [vmem:[%s3308 + $0x50] sm:$0xf]
        %v3330 = vld [vmem:[%s3308 + $0x54] sm:$0xf]
        %v3331 = vld [vmem:[%s3308 + $0x58] sm:$0xf]
        %v3332 = vld [vmem:[%s3308 + $0x5c] sm:$0xf]
        %v3333 = vld [vmem:[%s3308 + $0x60] sm:$0xf]
        %v3334 = vld [vmem:[%s3308 + $0x64] sm:$0xf]
        %v3335 = vld [vmem:[%s3308 + $0x68] sm:$0xf]
        %v3336 = vld [vmem:[%s3308 + $0x6c] sm:$0xf]
        %v3337 = vld [vmem:[%s3308 + $0x70] sm:$0xf]
        %v3338 = vld [vmem:[%s3308 + $0x74] sm:$0xf]
        %v3339 = vld [vmem:[%s3308 + $0x78] sm:$0xf]
        %v3340 = vld [vmem:[%s3308 + $0x7c] sm:$0xf]
        %v3341 = vld [vmem:[%s3308 + $0x80] sm:$0xf]
        %v3342 = vld [vmem:[%s3308 + $0x84] sm:$0xf]
        %v3343 = vld [vmem:[%s3308 + $0x88] sm:$0xf]
        %v3344 = vld [vmem:[%s3308 + $0x8c] sm:$0xf]
        %v3345 = vld [vmem:[%s3308 + $0x90] sm:$0xf]
        %v3346 = vld [vmem:[%s3308 + $0x94] sm:$0xf]
        %v3347 = vld [vmem:[%s3308 + $0x98] sm:$0xf]
        %v3348 = vld [vmem:[%s3308 + $0x9c] sm:$0xf]
        %v3349 = vld [vmem:[%s3308 + $0xa0] sm:$0xf]
        %v3350 = vld [vmem:[%s3308 + $0xa4] sm:$0xf]
        %v3351 = vld [vmem:[%s3308 + $0xa8] sm:$0xf]
        %v3352 = vld [vmem:[%s3308 + $0xac] sm:$0xf]
        %v3353 = vld [vmem:[%s3308 + $0xb0] sm:$0xf]
        %v3354 = vld [vmem:[%s3308 + $0xb4] sm:$0xf]
        %v3355 = vld [vmem:[%s3308 + $0xb8] sm:$0xf]
        %v3356 = vld [vmem:[%s3308 + $0xbc] sm:$0xf]
        %v3357 = vld [vmem:[%s3308 + $0xc0] sm:$0xf]
        %v3358 = vld [vmem:[%s3308 + $0xc4] sm:$0xf]
        %v3359 = vld [vmem:[%s3308 + $0xc8] sm:$0xf]
        %v3360 = vld [vmem:[%s3308 + $0xcc] sm:$0xf]
        %v3361 = vld [vmem:[%s3308 + $0xd0] sm:$0xf]
        %v3362 = vld [vmem:[%s3308 + $0xd4] sm:$0xf]
        %v3363 = vld [vmem:[%s3308 + $0xd8] sm:$0xf]
        %v3364 = vld [vmem:[%s3308 + $0xdc] sm:$0xf]
        %v3365 = vld [vmem:[%s3308 + $0xe0] sm:$0xf]
        %v3366 = vld [vmem:[%s3308 + $0xe4] sm:$0xf]
        %v3367 = vld [vmem:[%s3308 + $0xe8] sm:$0xf]
        %v3368 = vld [vmem:[%s3308 + $0xec] sm:$0xf]
        %v3369 = vld [vmem:[%s3308 + $0xf0] sm:$0xf]
        %v3370 = vld [vmem:[%s3308 + $0xf4] sm:$0xf]
        %v3371 = vld [vmem:[%s3308 + $0xf8] sm:$0xf]
        %v3372 = vld [vmem:[%s3308 + $0xfc] sm:$0xf]
        %v3375 = vunpack.c.l.b16 %v3306
        %v3376 = vunpack.c.h.b16 %v3306
        %v3377 = vunpack.c.l.b16 %v3307
        %v3378 = vunpack.c.h.b16 %v3307
        %v3379 = vpack.c.b16 %v2577, %v3375
        %v3380 = vpack.c.b16 %v2578, %v3376
        %v3381 = vpack.c.b16 %v2579, %v3377
        %v3382 = vpack.c.b16 %v2580, %v3378
        %v3383 = vrot.slane %v3379, 3
        %v3384 = vrot.slane %v2958, 3
        %v3385 = vsel %vm1435, %v3383, %v3384
        %v3386 = vrot.slane %v3380, 3
        %v3387 = vrot.slane %v2959, 3
        %v3388 = vsel %vm1435, %v3386, %v3387
        %v3389 = vrot.slane %v3381, 3
        %v3390 = vrot.slane %v2960, 3
        %v3391 = vsel %vm1435, %v3389, %v3390
        %v3392 = vrot.slane %v3382, 3
        %v3393 = vrot.slane %v2961, 3
        %v3394 = vsel %vm1435, %v3392, %v3393
        %v3467 = vunpack.c.l.b16 %v3309
        %v3468 = vunpack.c.l.b16 %v3310
        %v3469 = vunpack.c.l.b16 %v3311
        %v3470 = vunpack.c.l.b16 %v3312
        %v3471 = vunpack.c.l.b16 %v3313
        %v3472 = vunpack.c.l.b16 %v3314
        %v3473 = vunpack.c.l.b16 %v3315
        %v3474 = vunpack.c.l.b16 %v3316
        %v3475 = vunpack.c.l.b16 %v3317
        %v3476 = vunpack.c.l.b16 %v3318
        %v3477 = vunpack.c.l.b16 %v3319
        %v3478 = vunpack.c.l.b16 %v3320
        %v3479 = vunpack.c.l.b16 %v3321
        %v3480 = vunpack.c.l.b16 %v3322
        %v3481 = vunpack.c.l.b16 %v3323
        %v3482 = vunpack.c.l.b16 %v3324
        %v3483 = vunpack.c.l.b16 %v3325
        %v3484 = vunpack.c.l.b16 %v3326
        %v3485 = vunpack.c.l.b16 %v3327
        %v3486 = vunpack.c.l.b16 %v3328
        %v3487 = vunpack.c.l.b16 %v3329
        %v3488 = vunpack.c.l.b16 %v3330
        %v3489 = vunpack.c.l.b16 %v3331
        %v3490 = vunpack.c.l.b16 %v3332
        %v3491 = vunpack.c.l.b16 %v3333
        %v3492 = vunpack.c.l.b16 %v3334
        %v3493 = vunpack.c.l.b16 %v3335
        %v3494 = vunpack.c.l.b16 %v3336
        %v3495 = vunpack.c.l.b16 %v3337
        %v3496 = vunpack.c.l.b16 %v3338
        %v3497 = vunpack.c.l.b16 %v3339
        %v3498 = vunpack.c.l.b16 %v3340
        %v3499 = vunpack.c.l.b16 %v3341
        %v3500 = vunpack.c.l.b16 %v3342
        %v3501 = vunpack.c.l.b16 %v3343
        %v3502 = vunpack.c.l.b16 %v3344
        %v3503 = vunpack.c.l.b16 %v3345
        %v3504 = vunpack.c.l.b16 %v3346
        %v3505 = vunpack.c.l.b16 %v3347
        %v3506 = vunpack.c.l.b16 %v3348
        %v3507 = vunpack.c.l.b16 %v3349
        %v3508 = vunpack.c.l.b16 %v3350
        %v3509 = vunpack.c.l.b16 %v3351
        %v3510 = vunpack.c.l.b16 %v3352
        %v3511 = vunpack.c.l.b16 %v3353
        %v3512 = vunpack.c.l.b16 %v3354
        %v3513 = vunpack.c.l.b16 %v3355
        %v3514 = vunpack.c.l.b16 %v3356
        %v3515 = vunpack.c.l.b16 %v3357
        %v3516 = vunpack.c.l.b16 %v3358
        %v3517 = vunpack.c.l.b16 %v3359
        %v3518 = vunpack.c.l.b16 %v3360
        %v3519 = vunpack.c.l.b16 %v3361
        %v3520 = vunpack.c.l.b16 %v3362
        %v3521 = vunpack.c.l.b16 %v3363
        %v3522 = vunpack.c.l.b16 %v3364
        %v3523 = vunpack.c.l.b16 %v3365
        %v3524 = vunpack.c.l.b16 %v3366
        %v3525 = vunpack.c.l.b16 %v3367
        %v3526 = vunpack.c.l.b16 %v3368
        %v3527 = vunpack.c.l.b16 %v3369
        %v3528 = vunpack.c.l.b16 %v3370
        %v3529 = vunpack.c.l.b16 %v3371
        %v3530 = vunpack.c.l.b16 %v3372
        %v3531 = vpack.c.b16 %v3468, %v3467
        %v3532 = vpack.c.b16 %v3470, %v3469
        %v3533 = vpack.c.b16 %v3472, %v3471
        %v3534 = vpack.c.b16 %v3474, %v3473
        %v3535 = vpack.c.b16 %v3476, %v3475
        %v3536 = vpack.c.b16 %v3478, %v3477
        %v3537 = vpack.c.b16 %v3480, %v3479
        %v3538 = vpack.c.b16 %v3482, %v3481
        %v3539 = vpack.c.b16 %v3484, %v3483
        %v3540 = vpack.c.b16 %v3486, %v3485
        %v3541 = vpack.c.b16 %v3488, %v3487
        %v3542 = vpack.c.b16 %v3490, %v3489
        %v3543 = vpack.c.b16 %v3492, %v3491
        %v3544 = vpack.c.b16 %v3494, %v3493
        %v3545 = vpack.c.b16 %v3496, %v3495
        %v3546 = vpack.c.b16 %v3498, %v3497
        %v3547 = vpack.c.b16 %v3500, %v3499
        %v3548 = vpack.c.b16 %v3502, %v3501
        %v3549 = vpack.c.b16 %v3504, %v3503
        %v3550 = vpack.c.b16 %v3506, %v3505
        %v3551 = vpack.c.b16 %v3508, %v3507
        %v3552 = vpack.c.b16 %v3510, %v3509
        %v3553 = vpack.c.b16 %v3512, %v3511
        %v3554 = vpack.c.b16 %v3514, %v3513
        %v3555 = vpack.c.b16 %v3516, %v3515
        %v3556 = vpack.c.b16 %v3518, %v3517
        %v3557 = vpack.c.b16 %v3520, %v3519
        %v3558 = vpack.c.b16 %v3522, %v3521
        %v3559 = vpack.c.b16 %v3524, %v3523
        %v3560 = vpack.c.b16 %v3526, %v3525
        %v3561 = vpack.c.b16 %v3528, %v3527
        %v3562 = vpack.c.b16 %v3530, %v3529
        %3595 = vmatpush.bf16.msra.mxu0 %v3538
        %3596 = vmatpush.bf16.msra.mxu0 %v3537
        %3597 = vmatpush.bf16.msra.mxu0 %v3536
        %3598 = vmatpush.bf16.msra.mxu0 %v3535
        %3599 = vmatpush.bf16.msra.mxu0 %v3534
        %3600 = vmatpush.bf16.msra.mxu0 %v3533
        %3601 = vmatpush.bf16.msra.mxu0 %v3532
        %3602 = vmatpush.bf16.msra.mxu0 %v3531
        %3603 = vmatmul.bf16.gmra.mxu0 %v3385
        %v3604 = vpop.f32.mrf.mxu0
        %v3605 = vadd.f32 0.0, %v3604
        %v3606 = vpop.f32.mrf.mxu0
        %v3607 = vadd.f32 0.0, %v3606
        %3608 = vmatmul.bf16.gmra.mxu0 %v3384
        %v3609 = vpop.f32.mrf.mxu0
        %v3610 = vadd.f32 0.0, %v3609
        %v3611 = vpop.f32.mrf.mxu0
        %3612 = vdwg.mxu0
        %3613 = vmatpush.bf16.msra.mxu0 %v3546
        %3614 = vmatpush.bf16.msra.mxu0 %v3545
        %3615 = vmatpush.bf16.msra.mxu0 %v3544
        %3616 = vmatpush.bf16.msra.mxu0 %v3543
        %3617 = vmatpush.bf16.msra.mxu0 %v3542
        %3618 = vmatpush.bf16.msra.mxu0 %v3541
        %3619 = vmatpush.bf16.msra.mxu0 %v3540
        %3620 = vmatpush.bf16.msra.mxu0 %v3539
        %3621 = vmatmul.bf16.gmra.mxu0 %v3388
        %v3622 = vpop.f32.mrf.mxu0
        %v3623 = vadd.f32 %v3605, %v3622
        %v3624 = vpop.f32.mrf.mxu0
        %v3625 = vadd.f32 %v3607, %v3624
        %3626 = vmatmul.bf16.gmra.mxu0 %v3387
        %v3627 = vpop.f32.mrf.mxu0
        %v3628 = vadd.f32 %v3610, %v3627
        %v3629 = vpop.f32.mrf.mxu0
        %3630 = vdwg.mxu0
        %3631 = vmatpush.bf16.msra.mxu0 %v3554
        %3632 = vmatpush.bf16.msra.mxu0 %v3553
        %3633 = vmatpush.bf16.msra.mxu0 %v3552
        %3634 = vmatpush.bf16.msra.mxu0 %v3551
        %3635 = vmatpush.bf16.msra.mxu0 %v3550
        %3636 = vmatpush.bf16.msra.mxu0 %v3549
        %3637 = vmatpush.bf16.msra.mxu0 %v3548
        %3638 = vmatpush.bf16.msra.mxu0 %v3547
        %3639 = vmatmul.bf16.gmra.mxu0 %v3391
        %v3640 = vpop.f32.mrf.mxu0
        %v3641 = vadd.f32 %v3623, %v3640
        %v3642 = vpop.f32.mrf.mxu0
        %v3643 = vadd.f32 %v3625, %v3642
        %3644 = vmatmul.bf16.gmra.mxu0 %v3390
        %v3645 = vpop.f32.mrf.mxu0
        %v3646 = vadd.f32 %v3628, %v3645
        %v3647 = vpop.f32.mrf.mxu0
        %3648 = vdwg.mxu0
        %3649 = vmatpush.bf16.msra.mxu0 %v3562
        %3650 = vmatpush.bf16.msra.mxu0 %v3561
        %3651 = vmatpush.bf16.msra.mxu0 %v3560
        %3652 = vmatpush.bf16.msra.mxu0 %v3559
        %3653 = vmatpush.bf16.msra.mxu0 %v3558
        %3654 = vmatpush.bf16.msra.mxu0 %v3557
        %3655 = vmatpush.bf16.msra.mxu0 %v3556
        %3656 = vmatpush.bf16.msra.mxu0 %v3555
        %3657 = vmatmul.bf16.gmra.mxu0 %v3394
        %v3658 = vpop.f32.mrf.mxu0
        %v3659 = vadd.f32 %v3641, %v3658
        %v3660 = vpop.f32.mrf.mxu0
        %v3661 = vadd.f32 %v3643, %v3660
        %3662 = vmatmul.bf16.gmra.mxu0 %v3393
        %v3663 = vpop.f32.mrf.mxu0
        %v3664 = vadd.f32 %v3646, %v3663
        %v3665 = vpop.f32.mrf.mxu0
        %3666 = vdwg.mxu0
        %v3667 = vadd.f32 %v3303, %v3659
        %v3668 = vadd.f32 %v3304, %v3661
        %v3669 = vadd.f32 %v3305, %v3664
        %v3670 = vld [vmem:[#allocation4] sm:$0x1]
        %v3672 = vperm.slane %v3670, 0
        %v3674 = vadd.f32 %v3667, %v3672
        %v3675 = vadd.f32 %v3668, %v3672
        %v3676 = vadd.f32 %v3669, %v3672
        %v3677 = vtanh.pop %v3674
        %v3678 = vtanh.pop %v3675
        %v3679 = vtanh.pop %v3676
        %3680 = vst [vmem:[%s202] sm:$0xff] %v3677
        %3681 = vst [vmem:[%s202 + $0x8] sm:$0xff] %v3678
        %3682 = vst [vmem:[%s202 + $0x10] sm:$0xff] %v3679
        %p3683 = scmp.lt.s32.totalorder %s16, 1
        %s3684 = scalar_select %p3683, %s16, 1
        %s3685 = smul.addr %s3684, 3
        %s3686 = smul.addr %s3685, 8
        %s3687 = scalar_lea.vmem %s3, %s3686
        // Predicated region
        $region41: #{generator_forward.5} parent=31 // pred_check
          %p3688 = pneg %p102
        $region42: #{generator_forward.5} parent=31 // pred_check_branch
          %3690 = sbr.rel (%p3688) target = $region44
        $region43: #{generator_forward.5} parent=31 // pred_region
          _
        $region44: #{generator_forward.5} parent=31 // pred_fallthru
          _
      $region32: #{generator_forward.5} parent=5 // pred_fallthru
        _
      %p3691 = scmp.le.s32.totalorder 2, %s11
      // Predicated region
      $region45: #{generator_forward.5} parent=5 // pred_check
        %p3692 = pneg %p3691
      $region46: #{generator_forward.5} parent=5 // pred_check_branch
        %3694 = sbr.rel (%p3692) target = $region48
      $region47: #{generator_forward.5} parent=5 // pred_region
        %s3695 = ssub.s32 %s11, 2
        // Predicated region
        $region49: #{generator_forward.5} parent=47 // pred_check
          %p3696 = pneg %p108
        $region50: #{generator_forward.5} parent=47 // pred_check_branch
          %3698 = sbr.rel (%p3696) target = $region52
        $region51: #{generator_forward.5} parent=47 // pred_region
          %p3699 = scmp.lt.s32.totalorder %s17, 1
          %s3700 = scalar_select %p3699, %s17, 1
          %s3701 = smul.addr %s3700, 3
          %s3702 = smul.addr %s3701, 8
          %s3703 = scalar_lea.vmem %s3, %s3702
        $region52: #{generator_forward.5} parent=47 // pred_fallthru
          _
      $region48: #{generator_forward.5} parent=5 // pred_fallthru
        _
    $region6: #{generator_forward.5} parent=1 // loop_footer
      %s15 = sadd.s32 1, %s11
    $region7: #{generator_forward.5} parent=1 // loop_footer_branch
      %10 = sbr.rel target = $region3
    $region8: #{generator_forward.5} parent=1 // loop_exit
      _
    %3704 = vsyncpa [#allocation3], 1
    %s3705 = scalar_lea.sflag [#allocation3], 1
    %3706 = vsyncpa %s3705, 1
    %3707 = vsyncpa [#allocation5], 1

</llo_original>
